<compile_context>
chip_gen: v5e
topology: v5e:2x2
jax: 0.10.0
libtpu: 0.0.40
codegen_flags: <defaults>
</compile_context>

<pallas_src>
import math

import numpy as np
import jax
import jax.numpy as jnp
from jax.experimental import pallas as pl
from jax.experimental.pallas import tpu as pltpu

# ----------------------------- model config --------------------------------
DIM = 256                # model width
NUM_HEADS = 2
HEAD_DIM = 128           # CausalSelfAttention default head_dim=128
HDIM = NUM_HEADS * HEAD_DIM
MLP_HDIM = 4 * DIM
SEQ_LEN = 128            # T (== max_seq_len here)
MAX_SEQ_LEN = 128
NUM_LAYERS = 4           # number of chained Blocks fused into one pallas_call
ATTN_SCALE = 0.12        # fixed scale used by flex_attention in the reference
EPS = float(jnp.finfo(jnp.float32).eps)   # F.rms_norm default eps for fp32


def _rms_norm(x):
    # F.rms_norm(x, (x.size(-1),)) : x / sqrt(mean(x^2) + eps)
    ms = jnp.mean(x * x, axis=-1, keepdims=True)
    return x * jax.lax.rsqrt(ms + EPS)


def _rms_norm_scaled(x, scale):
    # rms_norm(x) * scale with the scalar folded into the per-row rsqrt (free)
    ms = jnp.mean(x * x, axis=-1, keepdims=True)
    return x * (jax.lax.rsqrt(ms + EPS) * scale)


# ------------------------------- kernel ------------------------------------
def block_stack_kernel(x_ref, x0_ref, ve_ref,
                       wqkv_ref, wo_ref, wfc_ref, wmp_ref,
                       cossin_ref, lam_ref, out_ref):
    f32, bf16 = jnp.float32, jnp.bfloat16
    l = pl.program_id(0)
    T = out_ref.shape[0]

    # layer 0: seed the resident residual stream from the (bf16) input activations
    @pl.when(l == 0)
    def _():
        out_ref[...] = x_ref[...].astype(f32)

    # per-layer scalars from SMEM: [lam_blk0, lam_blk1, lam_attn0, lam_attn1]
    lam_b0 = lam_ref[l, 0]
    lam_b1 = lam_ref[l, 1]
    lam_a0 = lam_ref[l, 2]
    lam_a1 = lam_ref[l, 3]

    # ---- residual stream mixing: x = l0*x + l1*x0 (f32) ----
    x = lam_b0 * out_ref[...] + lam_b1 * x0_ref[...].astype(f32)

    # ================= attention branch: x + attn(norm(x)) =================
    xn = _rms_norm(x)
    qkv = jnp.dot(xn.astype(bf16), wqkv_ref[0], preferred_element_type=f32)  # (T, 3*HDIM)

    cos_full = cossin_ref[0].astype(f32)    # (T, HEAD_DIM): [cos | cos]
    sin_sgn = cossin_ref[1].astype(f32)     # (T, HEAD_DIM): [sin | -sin]

    # additive causal bias built once (shared by both heads)
    row = jax.lax.broadcasted_iota(jnp.int32, (T, T), 0)
    col = jax.lax.broadcasted_iota(jnp.int32, (T, T), 1)
    bias = jnp.where(col <= row, 0.0, -1e30)

    # value mixing for both heads at once (hoisted out of the head loop)
    v_all = lam_a0 * qkv[:, 2 * HDIM:] + lam_a1 * ve_ref[0].astype(f32)      # (T, HDIM)

    def rotary(u):
        # rot(u) = u*[cos,cos] + roll(u, D/2)*[sin,-sin]   (XLU roll, no lane concat)
        return u * cos_full + pltpu.roll(u, HEAD_DIM // 2, axis=1) * sin_sgn

    head_outs = []
    for h in range(NUM_HEADS):                       # static python loop (2 heads)
        q = qkv[:, h * HEAD_DIM:(h + 1) * HEAD_DIM]
        k = qkv[:, HDIM + h * HEAD_DIM: HDIM + (h + 1) * HEAD_DIM]
        v = v_all[:, h * HEAD_DIM:(h + 1) * HEAD_DIM]

        # attention scale folded into q's rms-norm row scale (rotary is linear)
        q = rotary(_rms_norm_scaled(q, ATTN_SCALE))
        k = rotary(_rms_norm(k))

        # s = q @ k.T  (bf16 operands, f32 acc, no explicit transpose op)
        s = jax.lax.dot_general(q.astype(bf16), k.astype(bf16),
                                (((1,), (1,)), ((), ())),
                                preferred_element_type=f32)
        s = s + bias
        m = jnp.max(s, axis=-1, keepdims=True)
        p = jnp.exp(s - m)
        denom = jnp.sum(p, axis=-1, keepdims=True)
        inv_denom = pl.reciprocal(denom, approx=True)    # EUP; normalize after p@v

        o = jnp.dot(p.astype(bf16), v.astype(bf16), preferred_element_type=f32)
        head_outs.append(o * inv_denom)                  # (T, HEAD_DIM)

    # merged output projection: one full-K (T,256)@(256,256) matmul (fills 256-wide MXU)
    o_all = jnp.concatenate(head_outs, axis=-1).astype(bf16)
    attn_out = jnp.dot(o_all, wo_ref[0], preferred_element_type=f32)
    x = x + attn_out

    # =================== MLP branch: x + mlp(norm(x)) ======================
    xn2 = _rms_norm(x)
    hmid = jnp.dot(xn2.astype(bf16), wfc_ref[0], preferred_element_type=f32)
    # relu + square in bf16 (largest elementwise block; feeds a bf16 matmul anyway)
    h_act = jnp.maximum(hmid, 0.0).astype(bf16)
    h_act = h_act * h_act
    mlp_out = jnp.dot(h_act, wmp_ref[0], preferred_element_type=f32)

    out_ref[...] = x + mlp_out


# ------------------------------ wrapper -------------------------------------
@jax.jit
def block_stack_forward(x, x0, ve, params):
    """x, x0: (1, T, DIM) bf16; ve: (L, T, HDIM) bf16; params hold stacked bf16 weights."""
    B, T, D = x.shape
    assert B == 1, "Must use batch size = 1 (same as FlexAttention path)"
    L = ve.shape[0]

    # advisory cost so XLA schedules around the fused call
    flops = L * (2 * T * D * 3 * HDIM                         # qkv projection
                 + NUM_HEADS * 2 * (2 * T * T * HEAD_DIM)     # qk^T and p@v per head
                 + 2 * T * HDIM * D                           # output projection
                 + 2 * T * D * MLP_HDIM + 2 * T * MLP_HDIM * D)
    transcendentals = L * (NUM_HEADS * T * T + 8 * T)
    weight_bytes = L * 2 * (D * 3 * HDIM + HDIM * D + D * MLP_HDIM + MLP_HDIM * D)
    act_bytes = L * 2 * T * HDIM + 2 * (2 * T * D) + 2 * (2 * T * HEAD_DIM) + 4 * T * D
    cost = pl.CostEstimate(flops=flops, transcendentals=transcendentals,
                           bytes_accessed=weight_bytes + act_bytes)

    out2d = pl.pallas_call(
        block_stack_kernel,
        out_shape=jax.ShapeDtypeStruct((T, D), jnp.float32),
        grid=(L,),
        in_specs=[
            pl.BlockSpec((T, D), lambda l: (0, 0)),                 # x (bf16, layer-0 seed)
            pl.BlockSpec((T, D), lambda l: (0, 0)),                 # x0 (bf16)
            pl.BlockSpec((1, T, HDIM), lambda l: (l, 0, 0)),        # ve[l]     (bf16)
            pl.BlockSpec((1, D, 3 * HDIM), lambda l: (l, 0, 0)),    # Wqkv[l]^T (bf16)
            pl.BlockSpec((1, HDIM, D), lambda l: (l, 0, 0)),        # Wo[l]^T   (bf16)
            pl.BlockSpec((1, D, MLP_HDIM), lambda l: (l, 0, 0)),    # Wfc[l]^T  (bf16)
            pl.BlockSpec((1, MLP_HDIM, D), lambda l: (l, 0, 0)),    # Wproj[l]^T(bf16)
            pl.BlockSpec((2, T, HEAD_DIM), lambda l: (0, 0, 0)),    # packed cos/sin (bf16)
            pl.BlockSpec(memory_space=pltpu.MemorySpace.SMEM),      # lambdas (L, 4) f32
        ],
        # residual stream stays resident in VMEM across the whole layer grid
        out_specs=pl.BlockSpec((T, D), lambda l: (0, 0)),
        compiler_params=pltpu.CompilerParams(dimension_semantics=("arbitrary",)),
        cost_estimate=cost,
    )(x[0], x0[0], ve,
      params["wqkv_t"], params["wo_t"], params["wfc_t"], params["wmp_t"],
      params["cossin"], params["lam"])
    return out2d[None]


# --------------------------- parameter setup --------------------------------
def init_params(key, num_layers):
    f32, bf16 = jnp.float32, jnp.bfloat16
    ks = jax.random.split(key, 4 * num_layers)

    std = 0.5 * DIM ** (-0.5)
    bound = math.sqrt(3.0) * std

    wqkv_t, wo_t, wfc_t, wmp_t = [], [], [], []
    for i in range(num_layers):
        k0, k1, k2, k3 = ks[4 * i: 4 * i + 4]
        # qkv_w : (3, HDIM, DIM), uniform(-bound, bound)
        qkv_w = jax.random.uniform(k0, (3, HDIM, DIM), f32, -bound, bound)
        wqkv_t.append(qkv_w.reshape(3 * HDIM, DIM).T)            # (DIM, 3*HDIM)
        # attn c_proj / mlp c_proj are zero-init in the module; small random values
        # here so those paths are actually exercised by the test.
        wo = 0.02 * jax.random.normal(k1, (DIM, HDIM), f32)
        wo_t.append(wo.T)                                        # (HDIM, DIM)
        wfc = jax.random.uniform(k2, (MLP_HDIM, DIM), f32, -bound, bound)
        wfc_t.append(wfc.T)                                      # (DIM, MLP_HDIM)
        wmp = 0.02 * jax.random.normal(k3, (DIM, MLP_HDIM), f32)
        wmp_t.append(wmp.T)                                      # (MLP_HDIM, DIM)

    wqkv_t = jnp.stack(wqkv_t).astype(bf16)     # (L, DIM, 3*HDIM)
    wo_t = jnp.stack(wo_t).astype(bf16)         # (L, HDIM, DIM)
    wfc_t = jnp.stack(wfc_t).astype(bf16)       # (L, DIM, MLP_HDIM)
    wmp_t = jnp.stack(wmp_t).astype(bf16)       # (L, MLP_HDIM, DIM)

    # rotary tables (head_dim = 128 -> 32 non-zero freqs + 32 zeros = 64)
    angular_freq = (1.0 / 1024.0) ** jnp.linspace(0.0, 1.0, HEAD_DIM // 4, dtype=f32)
    angular_freq = jnp.concatenate([angular_freq, jnp.zeros(HEAD_DIM // 4, f32)])
    t = jnp.arange(MAX_SEQ_LEN, dtype=f32)
    theta = t[:, None] * angular_freq[None, :]                   # (max_seq_len, HEAD_DIM//2)
    cos = jnp.cos(theta)[:SEQ_LEN]
    sin = jnp.sin(theta)[:SEQ_LEN]
    # packed full-width tables for the roll-based formulation, shipped as bf16
    cossin = jnp.stack([jnp.concatenate([cos, cos], -1),
                        jnp.concatenate([sin, -sin], -1)]).astype(bf16)   # (2, T, HEAD_DIM)

    # per-layer lambdas: [blk0, blk1, attn0, attn1]
    # (module init is blk=[1.0, 0.0], attn=[0.5, 0.5]; nonzero blk1 here so the
    #  x0-mixing path of the kernel is exercised)
    lam = jnp.stack([jnp.array([1.0 - 0.05 * i, 0.05 * i, 0.5, 0.5], f32)
                     for i in range(num_layers)])                # (L, 4)

    return dict(wqkv_t=wqkv_t, wo_t=wo_t, wfc_t=wfc_t, wmp_t=wmp_t,
                cos=cos, sin=sin, cossin=cossin, lam=lam)


# --------------------------- pure-JAX reference ------------------------------
def blocks_forward_ref(x, x0, ve, p):
    f32 = jnp.float32
    xx = x[0].astype(f32)
    x0f = x0[0].astype(f32)
    L, T = ve.shape[0], xx.shape[0]
    row = np.arange(T)[:, None]
    col = np.arange(T)[None, :]
    causal = jnp.asarray(col <= row)
    cos, sin = p["cos"], p["sin"]

    for li in range(L):
        lam = p["lam"][li]
        wqkv = p["wqkv_t"][li].astype(f32)
        wo = p["wo_t"][li].astype(f32)
        wfc = p["wfc_t"][li].astype(f32)
        wmp = p["wmp_t"][li].astype(f32)
        ve_l = ve[li].astype(f32)

        xx = lam[0] * xx + lam[1] * x0f
        xn = _rms_norm(xx)
        qkv = xn @ wqkv
        outs = []
        for h in range(NUM_HEADS):
            q = qkv[:, h * HEAD_DIM:(h + 1) * HEAD_DIM]
            k = qkv[:, HDIM + h * HEAD_DIM: HDIM + (h + 1) * HEAD_DIM]
            v = qkv[:, 2 * HDIM + h * HEAD_DIM: 2 * HDIM + (h + 1) * HEAD_DIM]

            def rot(u):
                u1, u2 = u[:, :HEAD_DIM // 2], u[:, HEAD_DIM // 2:]
                return jnp.concatenate([u1 * cos + u2 * sin,
                                        -u1 * sin + u2 * cos], -1)

            q, k = rot(_rms_norm(q)), rot(_rms_norm(k))
            ve_h = ve_l[:, h * HEAD_DIM:(h + 1) * HEAD_DIM]
            v = lam[2] * v + lam[3] * ve_h
            s = (q @ k.T) * ATTN_SCALE
            s = jnp.where(causal, s, -jnp.inf)
            pr = jax.nn.softmax(s, axis=-1)
            outs.append(pr @ v)
        y = jnp.concatenate(outs, -1)
        xx = xx + y @ wo
        hmid = jnp.square(jnp.maximum(_rms_norm(xx) @ wfc, 0.0))
        xx = xx + hmid @ wmp
    return xx[None]


# --------------------------------- main --------------------------------------
if __name__ == "__main__":
    key = jax.random.PRNGKey(0)
    kx, kx0, kve, kp = jax.random.split(key, 4)

    x = jax.random.normal(kx, (1, SEQ_LEN, DIM), jnp.float32).astype(jnp.bfloat16)
    x0 = jax.random.normal(kx0, (1, SEQ_LEN, DIM), jnp.float32).astype(jnp.bfloat16)
    ve = jax.random.normal(kve, (NUM_LAYERS, SEQ_LEN, HDIM), jnp.float32).astype(jnp.bfloat16)
    params = init_params(kp, NUM_LAYERS)

    out = block_stack_forward(x, x0, ve, params)
    jax.block_until_ready(out)

    ref = blocks_forward_ref(x, x0, ve, params)
    np.testing.assert_allclose(np.asarray(out), np.asarray(ref), rtol=5e-2, atol=5e-2)

    print("KERNEL_OK")
</pallas_src>

<mosaic_0001>
module attributes {stable_mosaic.version = 11 : i64} {
  func.func @block_stack_kernel(%arg0: i32, %arg1: memref<128x256xbf16, #tpu.memory_space<vmem>>, %arg2: memref<128x256xbf16, #tpu.memory_space<vmem>>, %arg3: memref<1x128x256xbf16, #tpu.memory_space<vmem>>, %arg4: memref<1x256x768xbf16, #tpu.memory_space<vmem>>, %arg5: memref<1x256x256xbf16, #tpu.memory_space<vmem>>, %arg6: memref<1x256x1024xbf16, #tpu.memory_space<vmem>>, %arg7: memref<1x1024x256xbf16, #tpu.memory_space<vmem>>, %arg8: memref<2x128x128xbf16, #tpu.memory_space<vmem>>, %arg9: memref<4x4xf32, #tpu.memory_space<smem>>, %arg10: memref<128x256xf32, #tpu.memory_space<vmem>>) attributes {dimension_semantics = [#tpu.dimension_semantics<arbitrary>], iteration_bounds = array<i64: 4>, scalar_prefetch = 0 : i64, scratch_operands = 0 : i64, tpu.core_type = #tpu.core_type<tc>, window_params = [{pipeline_mode = #tpu.pipeline_mode<synchronous>, transform_indices = @transform_0, window_bounds = array<i64: 128, 256>}, {pipeline_mode = #tpu.pipeline_mode<synchronous>, transform_indices = @transform_1, window_bounds = array<i64: 128, 256>}, {transform_indices = @transform_2, window_bounds = array<i64: 1, 128, 256>}, {transform_indices = @transform_3, window_bounds = array<i64: 1, 256, 768>}, {transform_indices = @transform_4, window_bounds = array<i64: 1, 256, 256>}, {transform_indices = @transform_5, window_bounds = array<i64: 1, 256, 1024>}, {transform_indices = @transform_6, window_bounds = array<i64: 1, 1024, 256>}, {pipeline_mode = #tpu.pipeline_mode<synchronous>, transform_indices = @transform_7, window_bounds = array<i64: 2, 128, 128>}, {transform_indices = @transform_8, window_bounds = array<i64: 4, 4>}, {pipeline_mode = #tpu.pipeline_mode<synchronous>, transform_indices = @transform_9, window_bounds = array<i64: 128, 256>}]} {
    %c0_i32 = arith.constant 0 : i32
    %0 = arith.cmpi eq, %arg0, %c0_i32 : i32
    %1 = arith.extui %0 : i1 to i32
    %c0_i32_0 = arith.constant 0 : i32
    %2 = arith.cmpi ne, %1, %c0_i32_0 : i32
    scf.if %2 {
      %c0_65 = arith.constant 0 : index
      %c0_66 = arith.constant 0 : index
      %183 = vector.load %arg1[%c0_65, %c0_66] : memref<128x256xbf16, #tpu.memory_space<vmem>>, vector<128x256xbf16>
      %184 = arith.extf %183 : vector<128x256xbf16> to vector<128x256xf32>
      %c0_67 = arith.constant 0 : index
      %c0_68 = arith.constant 0 : index
      %185 = vector.load %arg10[%c0_67, %c0_68] : memref<128x256xf32, #tpu.memory_space<vmem>>, vector<128x256xf32>
      tpu.vector_store %arg10[%c0_67, %c0_68], %184 {strides = array<i32>} : memref<128x256xf32, #tpu.memory_space<vmem>>, vector<128x256xf32>,
    } else {
    }
    %3 = arith.index_cast %arg0 : i32 to index
    %c0 = arith.constant 0 : index
    %4 = memref.load %arg9[%3, %c0] : memref<4x4xf32, #tpu.memory_space<smem>>
    %5 = arith.index_cast %arg0 : i32 to index
    %c1 = arith.constant 1 : index
    %6 = memref.load %arg9[%5, %c1] : memref<4x4xf32, #tpu.memory_space<smem>>
    %7 = arith.index_cast %arg0 : i32 to index
    %c2 = arith.constant 2 : index
    %8 = memref.load %arg9[%7, %c2] : memref<4x4xf32, #tpu.memory_space<smem>>
    %9 = arith.index_cast %arg0 : i32 to index
    %c3 = arith.constant 3 : index
    %10 = memref.load %arg9[%9, %c3] : memref<4x4xf32, #tpu.memory_space<smem>>
    %c0_1 = arith.constant 0 : index
    %c0_2 = arith.constant 0 : index
    %11 = vector.load %arg10[%c0_1, %c0_2] : memref<128x256xf32, #tpu.memory_space<vmem>>, vector<128x256xf32>
    %12 = vector.broadcast %4 : f32 to vector<128x256xf32>
    %13 = arith.mulf %12, %11 : vector<128x256xf32>
    %c0_3 = arith.constant 0 : index
    %c0_4 = arith.constant 0 : index
    %14 = vector.load %arg2[%c0_3, %c0_4] : memref<128x256xbf16, #tpu.memory_space<vmem>>, vector<128x256xbf16>
    %15 = arith.extf %14 : vector<128x256xbf16> to vector<128x256xf32>
    %16 = vector.broadcast %6 : f32 to vector<128x256xf32>
    %17 = arith.mulf %16, %15 : vector<128x256xf32>
    %18 = arith.addf %13, %17 : vector<128x256xf32>
    %19 = arith.mulf %18, %18 : vector<128x256xf32>
    %cst = arith.constant dense<0.000000e+00> : vector<128xf32>
    %20 = vector.multi_reduction <add>, %19, %cst [1] : vector<128x256xf32> to vector<128xf32>
    %21 = vector.shape_cast %20 : vector<128xf32> to vector<128x1xf32>
    %cst_5 = arith.constant 2.560000e+02 : f32
    %22 = vector.broadcast %cst_5 : f32 to vector<128x1xf32>
    %23 = arith.divf %21, %22 : vector<128x1xf32>
    %cst_6 = arith.constant 1.1920929E-7 : f32
    %24 = vector.broadcast %cst_6 : f32 to vector<128x1xf32>
    %25 = arith.addf %23, %24 : vector<128x1xf32>
    %26 = math.rsqrt %25 : vector<128x1xf32>
    %27 = vector.broadcast %26 : vector<128x1xf32> to vector<128x256xf32>
    %28 = arith.mulf %18, %27 : vector<128x256xf32>
    %29 = arith.truncf %28 : vector<128x256xf32> to vector<128x256xbf16>
    %c0_7 = arith.constant 0 : index
    %c0_8 = arith.constant 0 : index
    %c0_9 = arith.constant 0 : index
    %30 = vector.load %arg4[%c0_7, %c0_8, %c0_9] : memref<1x256x768xbf16, #tpu.memory_space<vmem>>, vector<1x256x768xbf16>
    %31 = vector.shape_cast %30 : vector<1x256x768xbf16> to vector<256x768xbf16>
    %cst_10 = arith.constant dense<0.000000e+00> : vector<128x768xf32>
    %32 = tpu.matmul %29, %31, %cst_10 {dimension_numbers = #tpu.dot_dimension_numbers<[1], [0], [0], [1], [0, 0, 1, 1], [], []>} : vector<128x256xbf16>, vector<256x768xbf16>, vector<128x768xf32> -> vector<128x768xf32>
    %c0_11 = arith.constant 0 : index
    %c0_12 = arith.constant 0 : index
    %c0_13 = arith.constant 0 : index
    %33 = vector.load %arg8[%c0_11, %c0_12, %c0_13] : memref<2x128x128xbf16, #tpu.memory_space<vmem>>, vector<1x128x128xbf16>
    %34 = vector.shape_cast %33 : vector<1x128x128xbf16> to vector<128x128xbf16>
    %35 = arith.extf %34 : vector<128x128xbf16> to vector<128x128xf32>
    %c1_14 = arith.constant 1 : index
    %c0_15 = arith.constant 0 : index
    %c0_16 = arith.constant 0 : index
    %36 = vector.load %arg8[%c1_14, %c0_15, %c0_16] : memref<2x128x128xbf16, #tpu.memory_space<vmem>>, vector<1x128x128xbf16>
    %37 = vector.shape_cast %36 : vector<1x128x128xbf16> to vector<128x128xbf16>
    %38 = arith.extf %37 : vector<128x128xbf16> to vector<128x128xf32>
    %39 = tpu.iota {dimensions = array<i32: 0>} : vector<128x128xi32>
    %40 = tpu.iota {dimensions = array<i32: 1>} : vector<128x128xi32>
    %41 = arith.cmpi sle, %40, %39 : vector<128x128xi32>
    %cst_17 = arith.constant 0.000000e+00 : f32
    %cst_18 = arith.constant -1.000000e+30 : f32
    %42 = vector.broadcast %cst_17 : f32 to vector<128x128xf32>
    %43 = vector.broadcast %cst_18 : f32 to vector<128x128xf32>
    %44 = arith.select %41, %42, %43 : vector<128x128xi1>, vector<128x128xf32>
    %45 = vector.extract_strided_slice %32 {offsets = [0, 512], sizes = [128, 256], strides = [1, 1]} : vector<128x768xf32> to vector<128x256xf32>
    %46 = vector.broadcast %8 : f32 to vector<128x256xf32>
    %47 = arith.mulf %46, %45 : vector<128x256xf32>
    %c0_19 = arith.constant 0 : index
    %c0_20 = arith.constant 0 : index
    %c0_21 = arith.constant 0 : index
    %48 = vector.load %arg3[%c0_19, %c0_20, %c0_21] : memref<1x128x256xbf16, #tpu.memory_space<vmem>>, vector<1x128x256xbf16>
    %49 = vector.shape_cast %48 : vector<1x128x256xbf16> to vector<128x256xbf16>
    %50 = arith.extf %49 : vector<128x256xbf16> to vector<128x256xf32>
    %51 = vector.broadcast %10 : f32 to vector<128x256xf32>
    %52 = arith.mulf %51, %50 : vector<128x256xf32>
    %53 = arith.addf %47, %52 : vector<128x256xf32>
    %54 = vector.extract_strided_slice %32 {offsets = [0, 0], sizes = [128, 128], strides = [1, 1]} : vector<128x768xf32> to vector<128x128xf32>
    %55 = vector.extract_strided_slice %32 {offsets = [0, 256], sizes = [128, 128], strides = [1, 1]} : vector<128x768xf32> to vector<128x128xf32>
    %56 = vector.extract_strided_slice %53 {offsets = [0, 0], sizes = [128, 128], strides = [1, 1]} : vector<128x256xf32> to vector<128x128xf32>
    %57 = arith.mulf %54, %54 : vector<128x128xf32>
    %cst_22 = arith.constant dense<0.000000e+00> : vector<128xf32>
    %58 = vector.multi_reduction <add>, %57, %cst_22 [1] : vector<128x128xf32> to vector<128xf32>
    %59 = vector.shape_cast %58 : vector<128xf32> to vector<128x1xf32>
    %cst_23 = arith.constant 1.280000e+02 : f32
    %60 = vector.broadcast %cst_23 : f32 to vector<128x1xf32>
    %61 = arith.divf %59, %60 : vector<128x1xf32>
    %cst_24 = arith.constant 1.1920929E-7 : f32
    %62 = vector.broadcast %cst_24 : f32 to vector<128x1xf32>
    %63 = arith.addf %61, %62 : vector<128x1xf32>
    %64 = math.rsqrt %63 : vector<128x1xf32>
    %cst_25 = arith.constant 1.200000e-01 : f32
    %65 = vector.broadcast %cst_25 : f32 to vector<128x1xf32>
    %66 = arith.mulf %64, %65 : vector<128x1xf32>
    %67 = vector.broadcast %66 : vector<128x1xf32> to vector<128x128xf32>
    %68 = arith.mulf %54, %67 : vector<128x128xf32>
    %69 = arith.mulf %68, %35 : vector<128x128xf32>
    %c64_i32 = arith.constant 64 : i32
    %70 = tpu.dynamic_rotate %68 by %c64_i32 dim 1 : vector<128x128xf32>, i32 -> vector<128x128xf32>
    %71 = arith.mulf %70, %38 : vector<128x128xf32>
    %72 = arith.addf %69, %71 : vector<128x128xf32>
    %73 = arith.mulf %55, %55 : vector<128x128xf32>
    %cst_26 = arith.constant dense<0.000000e+00> : vector<128xf32>
    %74 = vector.multi_reduction <add>, %73, %cst_26 [1] : vector<128x128xf32> to vector<128xf32>
    %75 = vector.shape_cast %74 : vector<128xf32> to vector<128x1xf32>
    %cst_27 = arith.constant 1.280000e+02 : f32
    %76 = vector.broadcast %cst_27 : f32 to vector<128x1xf32>
    %77 = arith.divf %75, %76 : vector<128x1xf32>
    %cst_28 = arith.constant 1.1920929E-7 : f32
    %78 = vector.broadcast %cst_28 : f32 to vector<128x1xf32>
    %79 = arith.addf %77, %78 : vector<128x1xf32>
    %80 = math.rsqrt %79 : vector<128x1xf32>
    %81 = vector.broadcast %80 : vector<128x1xf32> to vector<128x128xf32>
    %82 = arith.mulf %55, %81 : vector<128x128xf32>
    %83 = arith.mulf %82, %35 : vector<128x128xf32>
    %c64_i32_29 = arith.constant 64 : i32
    %84 = tpu.dynamic_rotate %82 by %c64_i32_29 dim 1 : vector<128x128xf32>, i32 -> vector<128x128xf32>
    %85 = arith.mulf %84, %38 : vector<128x128xf32>
    %86 = arith.addf %83, %85 : vector<128x128xf32>
    %87 = arith.truncf %72 : vector<128x128xf32> to vector<128x128xbf16>
    %88 = arith.truncf %86 : vector<128x128xf32> to vector<128x128xbf16>
    %cst_30 = arith.constant dense<0.000000e+00> : vector<128x128xf32>
    %89 = tpu.matmul %87, %88, %cst_30 {dimension_numbers = #tpu.dot_dimension_numbers<[1], [1], [0], [0], [0, 0, 1, 0], [], []>} : vector<128x128xbf16>, vector<128x128xbf16>, vector<128x128xf32> -> vector<128x128xf32>
    %90 = arith.addf %89, %44 : vector<128x128xf32>
    %cst_31 = arith.constant dense<0xFF800000> : vector<128xf32>
    %91 = vector.multi_reduction <maximumf>, %90, %cst_31 [1] : vector<128x128xf32> to vector<128xf32>
    %92 = vector.shape_cast %91 : vector<128xf32> to vector<128x1xf32>
    %93 = vector.broadcast %92 : vector<128x1xf32> to vector<128x128xf32>
    %94 = arith.subf %90, %93 : vector<128x128xf32>
    %95 = math.exp %94 : vector<128x128xf32>
    %cst_32 = arith.constant dense<0.000000e+00> : vector<128xf32>
    %96 = vector.multi_reduction <add>, %95, %cst_32 [1] : vector<128x128xf32> to vector<128xf32>
    %97 = vector.shape_cast %96 : vector<128xf32> to vector<128x1xf32>
    %98 = tpu.reciprocal %97 {approx = true} : vector<128x1xf32> -> vector<128x1xf32>
    %99 = arith.truncf %95 : vector<128x128xf32> to vector<128x128xbf16>
    %100 = arith.truncf %56 : vector<128x128xf32> to vector<128x128xbf16>
    %cst_33 = arith.constant dense<0.000000e+00> : vector<128x128xf32>
    %101 = tpu.matmul %99, %100, %cst_33 {dimension_numbers = #tpu.dot_dimension_numbers<[1], [0], [0], [1], [0, 0, 1, 1], [], []>} : vector<128x128xbf16>, vector<128x128xbf16>, vector<128x128xf32> -> vector<128x128xf32>
    %102 = vector.broadcast %98 : vector<128x1xf32> to vector<128x128xf32>
    %103 = arith.mulf %101, %102 : vector<128x128xf32>
    %104 = vector.extract_strided_slice %32 {offsets = [0, 128], sizes = [128, 128], strides = [1, 1]} : vector<128x768xf32> to vector<128x128xf32>
    %105 = vector.extract_strided_slice %32 {offsets = [0, 384], sizes = [128, 128], strides = [1, 1]} : vector<128x768xf32> to vector<128x128xf32>
    %106 = vector.extract_strided_slice %53 {offsets = [0, 128], sizes = [128, 128], strides = [1, 1]} : vector<128x256xf32> to vector<128x128xf32>
    %107 = arith.mulf %104, %104 : vector<128x128xf32>
    %cst_34 = arith.constant dense<0.000000e+00> : vector<128xf32>
    %108 = vector.multi_reduction <add>, %107, %cst_34 [1] : vector<128x128xf32> to vector<128xf32>
    %109 = vector.shape_cast %108 : vector<128xf32> to vector<128x1xf32>
    %cst_35 = arith.constant 1.280000e+02 : f32
    %110 = vector.broadcast %cst_35 : f32 to vector<128x1xf32>
    %111 = arith.divf %109, %110 : vector<128x1xf32>
    %cst_36 = arith.constant 1.1920929E-7 : f32
    %112 = vector.broadcast %cst_36 : f32 to vector<128x1xf32>
    %113 = arith.addf %111, %112 : vector<128x1xf32>
    %114 = math.rsqrt %113 : vector<128x1xf32>
    %cst_37 = arith.constant 1.200000e-01 : f32
    %115 = vector.broadcast %cst_37 : f32 to vector<128x1xf32>
    %116 = arith.mulf %114, %115 : vector<128x1xf32>
    %117 = vector.broadcast %116 : vector<128x1xf32> to vector<128x128xf32>
    %118 = arith.mulf %104, %117 : vector<128x128xf32>
    %119 = arith.mulf %118, %35 : vector<128x128xf32>
    %c64_i32_38 = arith.constant 64 : i32
    %120 = tpu.dynamic_rotate %118 by %c64_i32_38 dim 1 : vector<128x128xf32>, i32 -> vector<128x128xf32>
    %121 = arith.mulf %120, %38 : vector<128x128xf32>
    %122 = arith.addf %119, %121 : vector<128x128xf32>
    %123 = arith.mulf %105, %105 : vector<128x128xf32>
    %cst_39 = arith.constant dense<0.000000e+00> : vector<128xf32>
    %124 = vector.multi_reduction <add>, %123, %cst_39 [1] : vector<128x128xf32> to vector<128xf32>
    %125 = vector.shape_cast %124 : vector<128xf32> to vector<128x1xf32>
    %cst_40 = arith.constant 1.280000e+02 : f32
    %126 = vector.broadcast %cst_40 : f32 to vector<128x1xf32>
    %127 = arith.divf %125, %126 : vector<128x1xf32>
    %cst_41 = arith.constant 1.1920929E-7 : f32
    %128 = vector.broadcast %cst_41 : f32 to vector<128x1xf32>
    %129 = arith.addf %127, %128 : vector<128x1xf32>
    %130 = math.rsqrt %129 : vector<128x1xf32>
    %131 = vector.broadcast %130 : vector<128x1xf32> to vector<128x128xf32>
    %132 = arith.mulf %105, %131 : vector<128x128xf32>
    %133 = arith.mulf %132, %35 : vector<128x128xf32>
    %c64_i32_42 = arith.constant 64 : i32
    %134 = tpu.dynamic_rotate %132 by %c64_i32_42 dim 1 : vector<128x128xf32>, i32 -> vector<128x128xf32>
    %135 = arith.mulf %134, %38 : vector<128x128xf32>
    %136 = arith.addf %133, %135 : vector<128x128xf32>
    %137 = arith.truncf %122 : vector<128x128xf32> to vector<128x128xbf16>
    %138 = arith.truncf %136 : vector<128x128xf32> to vector<128x128xbf16>
    %cst_43 = arith.constant dense<0.000000e+00> : vector<128x128xf32>
    %139 = tpu.matmul %137, %138, %cst_43 {dimension_numbers = #tpu.dot_dimension_numbers<[1], [1], [0], [0], [0, 0, 1, 0], [], []>} : vector<128x128xbf16>, vector<128x128xbf16>, vector<128x128xf32> -> vector<128x128xf32>
    %140 = arith.addf %139, %44 : vector<128x128xf32>
    %cst_44 = arith.constant dense<0xFF800000> : vector<128xf32>
    %141 = vector.multi_reduction <maximumf>, %140, %cst_44 [1] : vector<128x128xf32> to vector<128xf32>
    %142 = vector.shape_cast %141 : vector<128xf32> to vector<128x1xf32>
    %143 = vector.broadcast %142 : vector<128x1xf32> to vector<128x128xf32>
    %144 = arith.subf %140, %143 : vector<128x128xf32>
    %145 = math.exp %144 : vector<128x128xf32>
    %cst_45 = arith.constant dense<0.000000e+00> : vector<128xf32>
    %146 = vector.multi_reduction <add>, %145, %cst_45 [1] : vector<128x128xf32> to vector<128xf32>
    %147 = vector.shape_cast %146 : vector<128xf32> to vector<128x1xf32>
    %148 = tpu.reciprocal %147 {approx = true} : vector<128x1xf32> -> vector<128x1xf32>
    %149 = arith.truncf %145 : vector<128x128xf32> to vector<128x128xbf16>
    %150 = arith.truncf %106 : vector<128x128xf32> to vector<128x128xbf16>
    %cst_46 = arith.constant dense<0.000000e+00> : vector<128x128xf32>
    %151 = tpu.matmul %149, %150, %cst_46 {dimension_numbers = #tpu.dot_dimension_numbers<[1], [0], [0], [1], [0, 0, 1, 1], [], []>} : vector<128x128xbf16>, vector<128x128xbf16>, vector<128x128xf32> -> vector<128x128xf32>
    %152 = vector.broadcast %148 : vector<128x1xf32> to vector<128x128xf32>
    %153 = arith.mulf %151, %152 : vector<128x128xf32>
    %154 = tpu.concatenate %103, %153 in 1 : vector<128x128xf32>, vector<128x128xf32> -> vector<128x256xf32>
    %155 = arith.truncf %154 : vector<128x256xf32> to vector<128x256xbf16>
    %c0_47 = arith.constant 0 : index
    %c0_48 = arith.constant 0 : index
    %c0_49 = arith.constant 0 : index
    %156 = vector.load %arg5[%c0_47, %c0_48, %c0_49] : memref<1x256x256xbf16, #tpu.memory_space<vmem>>, vector<1x256x256xbf16>
    %157 = vector.shape_cast %156 : vector<1x256x256xbf16> to vector<256x256xbf16>
    %cst_50 = arith.constant dense<0.000000e+00> : vector<128x256xf32>
    %158 = tpu.matmul %155, %157, %cst_50 {dimension_numbers = #tpu.dot_dimension_numbers<[1], [0], [0], [1], [0, 0, 1, 1], [], []>} : vector<128x256xbf16>, vector<256x256xbf16>, vector<128x256xf32> -> vector<128x256xf32>
    %159 = arith.addf %18, %158 : vector<128x256xf32>
    %160 = arith.mulf %159, %159 : vector<128x256xf32>
    %cst_51 = arith.constant dense<0.000000e+00> : vector<128xf32>
    %161 = vector.multi_reduction <add>, %160, %cst_51 [1] : vector<128x256xf32> to vector<128xf32>
    %162 = vector.shape_cast %161 : vector<128xf32> to vector<128x1xf32>
    %cst_52 = arith.constant 2.560000e+02 : f32
    %163 = vector.broadcast %cst_52 : f32 to vector<128x1xf32>
    %164 = arith.divf %162, %163 : vector<128x1xf32>
    %cst_53 = arith.constant 1.1920929E-7 : f32
    %165 = vector.broadcast %cst_53 : f32 to vector<128x1xf32>
    %166 = arith.addf %164, %165 : vector<128x1xf32>
    %167 = math.rsqrt %166 : vector<128x1xf32>
    %168 = vector.broadcast %167 : vector<128x1xf32> to vector<128x256xf32>
    %169 = arith.mulf %159, %168 : vector<128x256xf32>
    %170 = arith.truncf %169 : vector<128x256xf32> to vector<128x256xbf16>
    %c0_54 = arith.constant 0 : index
    %c0_55 = arith.constant 0 : index
    %c0_56 = arith.constant 0 : index
    %171 = vector.load %arg6[%c0_54, %c0_55, %c0_56] : memref<1x256x1024xbf16, #tpu.memory_space<vmem>>, vector<1x256x1024xbf16>
    %172 = vector.shape_cast %171 : vector<1x256x1024xbf16> to vector<256x1024xbf16>
    %cst_57 = arith.constant dense<0.000000e+00> : vector<128x1024xf32>
    %173 = tpu.matmul %170, %172, %cst_57 {dimension_numbers = #tpu.dot_dimension_numbers<[1], [0], [0], [1], [0, 0, 1, 1], [], []>} : vector<128x256xbf16>, vector<256x1024xbf16>, vector<128x1024xf32> -> vector<128x1024xf32>
    %cst_58 = arith.constant 0.000000e+00 : f32
    %174 = vector.broadcast %cst_58 : f32 to vector<128x1024xf32>
    %175 = arith.maximumf %173, %174 : vector<128x1024xf32>
    %176 = arith.truncf %175 : vector<128x1024xf32> to vector<128x1024xbf16>
    %177 = arith.mulf %176, %176 : vector<128x1024xbf16>
    %c0_59 = arith.constant 0 : index
    %c0_60 = arith.constant 0 : index
    %c0_61 = arith.constant 0 : index
    %178 = vector.load %arg7[%c0_59, %c0_60, %c0_61] : memref<1x1024x256xbf16, #tpu.memory_space<vmem>>, vector<1x1024x256xbf16>
    %179 = vector.shape_cast %178 : vector<1x1024x256xbf16> to vector<1024x256xbf16>
    %cst_62 = arith.constant dense<0.000000e+00> : vector<128x256xf32>
    %180 = tpu.matmul %177, %179, %cst_62 {dimension_numbers = #tpu.dot_dimension_numbers<[1], [0], [0], [1], [0, 0, 1, 1], [], []>} : vector<128x1024xbf16>, vector<1024x256xbf16>, vector<128x256xf32> -> vector<128x256xf32>
    %181 = arith.addf %159, %180 : vector<128x256xf32>
    %c0_63 = arith.constant 0 : index
    %c0_64 = arith.constant 0 : index
    %182 = vector.load %arg10[%c0_63, %c0_64] : memref<128x256xf32, #tpu.memory_space<vmem>>, vector<128x256xf32>
    tpu.vector_store %arg10[%c0_63, %c0_64], %181 {strides = array<i32>} : memref<128x256xf32, #tpu.memory_space<vmem>>, vector<128x256xf32>,
    return
  }
  func.func @transform_0(%arg0: i32) -> (i32, i32) {
    %c0_i32 = arith.constant 0 : i32
    %c0_i32_0 = arith.constant 0 : i32
    %c0_i32_1 = arith.constant 0 : i32
    return %c0_i32, %c0_i32_0 : i32, i32
  }
  func.func @transform_1(%arg0: i32) -> (i32, i32) {
    %c0_i32 = arith.constant 0 : i32
    %c0_i32_0 = arith.constant 0 : i32
    %c0_i32_1 = arith.constant 0 : i32
    return %c0_i32, %c0_i32_0 : i32, i32
  }
  func.func @transform_2(%arg0: i32) -> (i32, i32, i32) {
    %c0_i32 = arith.constant 0 : i32
    %c0_i32_0 = arith.constant 0 : i32
    %c0_i32_1 = arith.constant 0 : i32
    return %arg0, %c0_i32, %c0_i32_0 : i32, i32, i32
  }
  func.func @transform_3(%arg0: i32) -> (i32, i32, i32) {
    %c0_i32 = arith.constant 0 : i32
    %c0_i32_0 = arith.constant 0 : i32
    %c0_i32_1 = arith.constant 0 : i32
    return %arg0, %c0_i32, %c0_i32_0 : i32, i32, i32
  }
  func.func @transform_4(%arg0: i32) -> (i32, i32, i32) {
    %c0_i32 = arith.constant 0 : i32
    %c0_i32_0 = arith.constant 0 : i32
    %c0_i32_1 = arith.constant 0 : i32
    return %arg0, %c0_i32, %c0_i32_0 : i32, i32, i32
  }
  func.func @transform_5(%arg0: i32) -> (i32, i32, i32) {
    %c0_i32 = arith.constant 0 : i32
    %c0_i32_0 = arith.constant 0 : i32
    %c0_i32_1 = arith.constant 0 : i32
    return %arg0, %c0_i32, %c0_i32_0 : i32, i32, i32
  }
  func.func @transform_6(%arg0: i32) -> (i32, i32, i32) {
    %c0_i32 = arith.constant 0 : i32
    %c0_i32_0 = arith.constant 0 : i32
    %c0_i32_1 = arith.constant 0 : i32
    return %arg0, %c0_i32, %c0_i32_0 : i32, i32, i32
  }
  func.func @transform_7(%arg0: i32) -> (i32, i32, i32) {
    %c0_i32 = arith.constant 0 : i32
    %c0_i32_0 = arith.constant 0 : i32
    %c0_i32_1 = arith.constant 0 : i32
    %c0_i32_2 = arith.constant 0 : i32
    return %c0_i32, %c0_i32_0, %c0_i32_1 : i32, i32, i32
  }
  func.func @transform_8(%arg0: i32) -> (i32, i32) {
    %c0_i32 = arith.constant 0 : i32
    %c0_i32_0 = arith.constant 0 : i32
    %c0_i32_1 = arith.constant 0 : i32
    return %c0_i32, %c0_i32_0 : i32, i32
  }
  func.func @transform_9(%arg0: i32) -> (i32, i32) {
    %c0_i32 = arith.constant 0 : i32
    %c0_i32_0 = arith.constant 0 : i32
    %c0_i32_1 = arith.constant 0 : i32
    return %c0_i32, %c0_i32_0 : i32, i32
  }
}

</mosaic_0001>

<llo_original>
// kernel: block_stack_forward.1
$region0: #{block_stack_forward.1}
  #allocation0 [shape = 'u32[]', space=smem, size = 0x4, offset = 0x4, fixed_abs, tag = 'smem constant byte address 0x4 - core index']
  #allocation1 [shape = 'u32[72,128]{1,0:T(1,128)}', space=vmem, size = 0x9000, scoped, tag = 'internal scratch']
  %s0 = inlined_call_operand.hbm [shape: bf16[128,256], index: 0, kind: input, shape index: {}]
  %s1 = inlined_call_operand.hbm [shape: bf16[128,256], index: 1, kind: input, shape index: {}]
  %s2 = inlined_call_operand.hbm [shape: bf16[4,128,256], index: 2, kind: input, shape index: {}]
  %s3 = inlined_call_operand.hbm [shape: bf16[4,256,768], index: 3, kind: input, shape index: {}]
  %s4 = inlined_call_operand.hbm [shape: bf16[4,256,256], index: 4, kind: input, shape index: {}]
  %s5 = inlined_call_operand.hbm [shape: bf16[4,256,1024], index: 5, kind: input, shape index: {}]
  %s6 = inlined_call_operand.hbm [shape: bf16[4,1024,256], index: 6, kind: input, shape index: {}]
  %s7 = inlined_call_operand.hbm [shape: bf16[2,128,128], index: 7, kind: input, shape index: {}]
  %s8 = inlined_call_operand.hbm [shape: f32[4,4], index: 8, kind: input, shape index: {}]
  %s9 = inlined_call_operand.hbm [shape: f32[128,256], index: 9, kind: output, shape index: {}]
  %s10 = sld [smem:[#allocation0]]
  $region109: #{block_stack_forward.1} parent=0
    _
  %s12 = ssub.s32 1, %s10
  %s13 = scalar_select 0, %s12, %s10
  $region1: #{block_stack_forward.1} parent=0
    #allocation2 [shape = 'u8[65536]{0}', space=vmem, size = 0x10000, scoped, tag = 'input window, operand 0, single buffered']
    #allocation3 [shape = 's32[2]{0}', space=sflag, size = 0x8, scoped, tag = 'scoped memory for block_stack_forward.1']
    #allocation4 [shape = 's32[2]{0}', space=sflag, size = 0x8, scoped, tag = 'scoped memory for block_stack_forward.1']
    #allocation5 [shape = 's32[2]{0}', space=sflag, size = 0x8, scoped, tag = 'scoped memory for block_stack_forward.1']
    #allocation6 [shape = 'u8[65536]{0}', space=vmem, size = 0x10000, scoped, tag = 'input window, operand 1, single buffered']
    #allocation7 [shape = 's32[1]{0}', space=sflag, size = 0x4, scoped, tag = 'scoped memory for block_stack_forward.1']
    #allocation8 [shape = 'u8[131072]{0}', space=vmem, size = 0x20000, scoped, tag = 'input window, operand 2']
    #allocation9 [shape = 'u8[786432]{0}', space=vmem, size = 0xc0000, scoped, tag = 'input window, operand 3']
    #allocation10 [shape = 'u8[262144]{0}', space=vmem, size = 0x40000, scoped, tag = 'input window, operand 4']
    #allocation11 [shape = 'u8[1048576]{0}', space=vmem, size = 0x100000, scoped, tag = 'input window, operand 5']
    #allocation12 [shape = 'u8[1048576]{0}', space=vmem, size = 0x100000, scoped, tag = 'input window, operand 6']
    #allocation13 [shape = 'u8[65536]{0}', space=vmem, size = 0x10000, scoped, tag = 'input window, operand 7, single buffered']
    #allocation14 [shape = 'u8[2048]{0}', space=smem, size = 0x800, scoped, tag = 'input window, operand 8, single buffered']
    #allocation15 [shape = 'u8[131072]{0}', space=vmem, size = 0x20000, scoped, tag = 'output window, operand 0, single buffered']
    %14 = vsyncpa [#allocation3], 0
    %15 = vsyncpa [#allocation7], 0
    %16 = vsyncpa [#allocation5], 0
    %17 = vsyncpa [#allocation4], 0
    loop: start=0, step=1, limit=6
    $region2: #{block_stack_forward.1} parent=1 // loop_pre_header
      _
    $region3: #{block_stack_forward.1} parent=1 // loop_header
      %s19 = sphi 0, %s23
      %p20 = scmp.ge.s32.totalorder %s19, 6
      %s27 = sphi 0, %s27
      %s29 = sphi 0, %s27
      %s30 = sphi 0, %s29
      %s44 = sphi 0, %s30
      %s48 = sphi 0, %s48
      %s50 = sphi 0, %s48
      %s51 = sphi 0, %s50
      %s65 = sphi 0, %s51
      %s71 = sphi 0, %s73
      %s74 = sphi 0, %s71
      %s75 = sphi 0, %s74
      %s91 = sphi 0, %s75
      %s97 = sphi 0, %s99
      %s100 = sphi 0, %s97
      %s101 = sphi 0, %s100
      %s117 = sphi 0, %s101
      %s123 = sphi 0, %s125
      %s126 = sphi 0, %s123
      %s127 = sphi 0, %s126
      %s143 = sphi 0, %s127
      %s149 = sphi 0, %s151
      %s152 = sphi 0, %s149
      %s153 = sphi 0, %s152
      %s169 = sphi 0, %s153
      %s175 = sphi 0, %s177
      %s178 = sphi 0, %s175
      %s179 = sphi 0, %s178
      %s195 = sphi 0, %s179
      %s199 = sphi 0, %s199
      %s201 = sphi 0, %s199
      %s202 = sphi 0, %s201
      %s216 = sphi 0, %s202
      %s220 = sphi 0, %s220
      %s222 = sphi 0, %s220
      %s223 = sphi 0, %s222
      %s237 = sphi 0, %s223
      %s241 = sphi 0, %s241
      %s243 = sphi 0, %s241
      %s244 = sphi 0, %s243
      %s258 = sphi 0, %s244
    $region4: #{block_stack_forward.1} parent=1 // loop_header_branch
      %22 = sbr.rel (%p20) target = $region8
    $region5: #{block_stack_forward.1} parent=1 // loop_body
      %s24 = ssub.s32 %s19, 1
      %s25 = ssub.s32 %s19, 2
      %s26 = sadd.s32 %s19, 1
      %s28 = sadd.s32 %s27, 1
      %p31 = scmp.eq.s32.totalorder %s19, 3
      %p32 = scmp.ne.s32.totalorder %s27, %s29
      %p33 = scmp.eq.s32.totalorder %s19, 0
      %p34 = por %p32, %p33
      %p35 = scmp.ne.s32.totalorder %s27, %s29
      %p36 = scmp.eq.s32.totalorder %s24, 3
      %p37 = por %p35, %p36
      %p38 = scmp.ne.s32.totalorder %s29, %s30
      %p39 = scmp.eq.s32.totalorder %s24, 0
      %p40 = por %p38, %p39
      %p41 = scmp.ne.s32.totalorder %s29, %s30
      %p42 = scmp.eq.s32.totalorder %s25, 3
      %p43 = por %p41, %p42
      %p45 = scmp.ne.s32.totalorder %s30, %s44
      %p46 = scmp.eq.s32.totalorder %s25, 0
      %p47 = por %p45, %p46
      %s49 = sadd.s32 %s48, 1
      %p52 = scmp.eq.s32.totalorder %s19, 3
      %p53 = scmp.ne.s32.totalorder %s48, %s50
      %p54 = scmp.eq.s32.totalorder %s19, 0
      %p55 = por %p53, %p54
      %p56 = scmp.ne.s32.totalorder %s48, %s50
      %p57 = scmp.eq.s32.totalorder %s24, 3
      %p58 = por %p56, %p57
      %p59 = scmp.ne.s32.totalorder %s50, %s51
      %p60 = scmp.eq.s32.totalorder %s24, 0
      %p61 = por %p59, %p60
      %p62 = scmp.ne.s32.totalorder %s50, %s51
      %p63 = scmp.eq.s32.totalorder %s25, 3
      %p64 = por %p62, %p63
      %p66 = scmp.ne.s32.totalorder %s51, %s65
      %p67 = scmp.eq.s32.totalorder %s25, 0
      %p68 = por %p66, %p67
      %s69 = ssub.s32 %s19, %s26
      %p70 = scmp.eq.s32.totalorder %s69, 0
      %s72 = sadd.s32 %s71, 1
      %s73 = scalar_select %p70, %s71, %s72
      %p76 = pneg %p70
      %p77 = scmp.eq.s32.totalorder %s19, 3
      %p78 = por %p76, %p77
      %p79 = scmp.ne.s32.totalorder %s71, %s74
      %p80 = scmp.eq.s32.totalorder %s19, 0
      %p81 = por %p79, %p80
      %p82 = scmp.ne.s32.totalorder %s71, %s74
      %p83 = scmp.eq.s32.totalorder %s24, 3
      %p84 = por %p82, %p83
      %p85 = scmp.ne.s32.totalorder %s74, %s75
      %p86 = scmp.eq.s32.totalorder %s24, 0
      %p87 = por %p85, %p86
      %p88 = scmp.ne.s32.totalorder %s74, %s75
      %p89 = scmp.eq.s32.totalorder %s25, 3
      %p90 = por %p88, %p89
      %p92 = scmp.ne.s32.totalorder %s75, %s91
      %p93 = scmp.eq.s32.totalorder %s25, 0
      %p94 = por %p92, %p93
      %s95 = ssub.s32 %s19, %s26
      %p96 = scmp.eq.s32.totalorder %s95, 0
      %s98 = sadd.s32 %s97, 1
      %s99 = scalar_select %p96, %s97, %s98
      %p102 = pneg %p96
      %p103 = scmp.eq.s32.totalorder %s19, 3
      %p104 = por %p102, %p103
      %p105 = scmp.ne.s32.totalorder %s97, %s100
      %p106 = scmp.eq.s32.totalorder %s19, 0
      %p107 = por %p105, %p106
      %p108 = scmp.ne.s32.totalorder %s97, %s100
      %p109 = scmp.eq.s32.totalorder %s24, 3
      %p110 = por %p108, %p109
      %p111 = scmp.ne.s32.totalorder %s100, %s101
      %p112 = scmp.eq.s32.totalorder %s24, 0
      %p113 = por %p111, %p112
      %p114 = scmp.ne.s32.totalorder %s100, %s101
      %p115 = scmp.eq.s32.totalorder %s25, 3
      %p116 = por %p114, %p115
      %p118 = scmp.ne.s32.totalorder %s101, %s117
      %p119 = scmp.eq.s32.totalorder %s25, 0
      %p120 = por %p118, %p119
      %s121 = ssub.s32 %s19, %s26
      %p122 = scmp.eq.s32.totalorder %s121, 0
      %s124 = sadd.s32 %s123, 1
      %s125 = scalar_select %p122, %s123, %s124
      %p128 = pneg %p122
      %p129 = scmp.eq.s32.totalorder %s19, 3
      %p130 = por %p128, %p129
      %p131 = scmp.ne.s32.totalorder %s123, %s126
      %p132 = scmp.eq.s32.totalorder %s19, 0
      %p133 = por %p131, %p132
      %p134 = scmp.ne.s32.totalorder %s123, %s126
      %p135 = scmp.eq.s32.totalorder %s24, 3
      %p136 = por %p134, %p135
      %p137 = scmp.ne.s32.totalorder %s126, %s127
      %p138 = scmp.eq.s32.totalorder %s24, 0
      %p139 = por %p137, %p138
      %p140 = scmp.ne.s32.totalorder %s126, %s127
      %p141 = scmp.eq.s32.totalorder %s25, 3
      %p142 = por %p140, %p141
      %p144 = scmp.ne.s32.totalorder %s127, %s143
      %p145 = scmp.eq.s32.totalorder %s25, 0
      %p146 = por %p144, %p145
      %s147 = ssub.s32 %s19, %s26
      %p148 = scmp.eq.s32.totalorder %s147, 0
      %s150 = sadd.s32 %s149, 1
      %s151 = scalar_select %p148, %s149, %s150
      %p154 = pneg %p148
      %p155 = scmp.eq.s32.totalorder %s19, 3
      %p156 = por %p154, %p155
      %p157 = scmp.ne.s32.totalorder %s149, %s152
      %p158 = scmp.eq.s32.totalorder %s19, 0
      %p159 = por %p157, %p158
      %p160 = scmp.ne.s32.totalorder %s149, %s152
      %p161 = scmp.eq.s32.totalorder %s24, 3
      %p162 = por %p160, %p161
      %p163 = scmp.ne.s32.totalorder %s152, %s153
      %p164 = scmp.eq.s32.totalorder %s24, 0
      %p165 = por %p163, %p164
      %p166 = scmp.ne.s32.totalorder %s152, %s153
      %p167 = scmp.eq.s32.totalorder %s25, 3
      %p168 = por %p166, %p167
      %p170 = scmp.ne.s32.totalorder %s153, %s169
      %p171 = scmp.eq.s32.totalorder %s25, 0
      %p172 = por %p170, %p171
      %s173 = ssub.s32 %s19, %s26
      %p174 = scmp.eq.s32.totalorder %s173, 0
      %s176 = sadd.s32 %s175, 1
      %s177 = scalar_select %p174, %s175, %s176
      %p180 = pneg %p174
      %p181 = scmp.eq.s32.totalorder %s19, 3
      %p182 = por %p180, %p181
      %p183 = scmp.ne.s32.totalorder %s175, %s178
      %p184 = scmp.eq.s32.totalorder %s19, 0
      %p185 = por %p183, %p184
      %p186 = scmp.ne.s32.totalorder %s175, %s178
      %p187 = scmp.eq.s32.totalorder %s24, 3
      %p188 = por %p186, %p187
      %p189 = scmp.ne.s32.totalorder %s178, %s179
      %p190 = scmp.eq.s32.totalorder %s24, 0
      %p191 = por %p189, %p190
      %p192 = scmp.ne.s32.totalorder %s178, %s179
      %p193 = scmp.eq.s32.totalorder %s25, 3
      %p194 = por %p192, %p193
      %p196 = scmp.ne.s32.totalorder %s179, %s195
      %p197 = scmp.eq.s32.totalorder %s25, 0
      %p198 = por %p196, %p197
      %s200 = sadd.s32 %s199, 1
      %p203 = scmp.eq.s32.totalorder %s19, 3
      %p204 = scmp.ne.s32.totalorder %s199, %s201
      %p205 = scmp.eq.s32.totalorder %s19, 0
      %p206 = por %p204, %p205
      %p207 = scmp.ne.s32.totalorder %s199, %s201
      %p208 = scmp.eq.s32.totalorder %s24, 3
      %p209 = por %p207, %p208
      %p210 = scmp.ne.s32.totalorder %s201, %s202
      %p211 = scmp.eq.s32.totalorder %s24, 0
      %p212 = por %p210, %p211
      %p213 = scmp.ne.s32.totalorder %s201, %s202
      %p214 = scmp.eq.s32.totalorder %s25, 3
      %p215 = por %p213, %p214
      %p217 = scmp.ne.s32.totalorder %s202, %s216
      %p218 = scmp.eq.s32.totalorder %s25, 0
      %p219 = por %p217, %p218
      %s221 = sadd.s32 %s220, 1
      %p224 = scmp.eq.s32.totalorder %s19, 3
      %p225 = scmp.ne.s32.totalorder %s220, %s222
      %p226 = scmp.eq.s32.totalorder %s19, 0
      %p227 = por %p225, %p226
      %p228 = scmp.ne.s32.totalorder %s220, %s222
      %p229 = scmp.eq.s32.totalorder %s24, 3
      %p230 = por %p228, %p229
      %p231 = scmp.ne.s32.totalorder %s222, %s223
      %p232 = scmp.eq.s32.totalorder %s24, 0
      %p233 = por %p231, %p232
      %p234 = scmp.ne.s32.totalorder %s222, %s223
      %p235 = scmp.eq.s32.totalorder %s25, 3
      %p236 = por %p234, %p235
      %p238 = scmp.ne.s32.totalorder %s223, %s237
      %p239 = scmp.eq.s32.totalorder %s25, 0
      %p240 = por %p238, %p239
      %s242 = sadd.s32 %s241, 1
      %p245 = scmp.eq.s32.totalorder %s19, 3
      %p246 = scmp.ne.s32.totalorder %s241, %s243
      %p247 = scmp.eq.s32.totalorder %s19, 0
      %p248 = por %p246, %p247
      %p249 = scmp.ne.s32.totalorder %s241, %s243
      %p250 = scmp.eq.s32.totalorder %s24, 3
      %p251 = por %p249, %p250
      %p252 = scmp.ne.s32.totalorder %s243, %s244
      %p253 = scmp.eq.s32.totalorder %s24, 0
      %p254 = por %p252, %p253
      %p255 = scmp.ne.s32.totalorder %s243, %s244
      %p256 = scmp.eq.s32.totalorder %s25, 3
      %p257 = por %p255, %p256
      %p259 = scmp.ne.s32.totalorder %s244, %s258
      %p260 = scmp.eq.s32.totalorder %s25, 0
      %p261 = por %p259, %p260
      %p262 = scmp.le.s32.totalorder 1, %s19
      %p263 = scmp.lt.s32.totalorder %s19, 5
      %p264 = pnand %p262, %p263
      %p265 = pneg %p264
      // Predicated region
      $region9: #{block_stack_forward.1} parent=5 // pred_check
        _
      $region10: #{block_stack_forward.1} parent=5 // pred_check_branch
        %267 = sbr.rel (%p264) target = $region12
      $region11: #{block_stack_forward.1} parent=5 // pred_region
        %s268 = ssub.s32 %s19, 1
        // Predicated region
        $region13: #{block_stack_forward.1} parent=11 // pred_check
          %p269 = pneg %p40
        $region14: #{block_stack_forward.1} parent=11 // pred_check_branch
          %271 = sbr.rel (%p269) target = $region16
        $region15: #{block_stack_forward.1} parent=11 // pred_region
          %273 = vsyncadd [#allocation3], 0
          %s274 = sshll.u32 %s0, 4
          %s275 = int_to_ptr.hbm [resolvable:$true] %s274
          %s276 = sshll.u32 [#allocation2], 4
          %s277 = int_to_ptr.vmem [resolvable:$true] %s276
          %282 = dma.hbm_to_vmem [thread:$0]  %s275, 2048, %s277, [#allocation3], 128, 128, 8
        $region16: #{block_stack_forward.1} parent=11 // pred_fallthru
          _
        // Predicated region
        $region17: #{block_stack_forward.1} parent=11 // pred_check
          %p283 = pneg %p61
        $region18: #{block_stack_forward.1} parent=11 // pred_check_branch
          %285 = sbr.rel (%p283) target = $region20
        $region19: #{block_stack_forward.1} parent=11 // pred_region
          %287 = vsyncadd [#allocation7], 0
          %s288 = sshll.u32 %s1, 4
          %s289 = int_to_ptr.hbm [resolvable:$true] %s288
          %s290 = sshll.u32 [#allocation6], 4
          %s291 = int_to_ptr.vmem [resolvable:$true] %s290
          %296 = dma.hbm_to_vmem [thread:$0]  %s289, 2048, %s291, [#allocation7], 128, 128, 8
        $region20: #{block_stack_forward.1} parent=11 // pred_fallthru
          _
        // Predicated region
        $region21: #{block_stack_forward.1} parent=11 // pred_check
          %p297 = pneg %p212
        $region22: #{block_stack_forward.1} parent=11 // pred_check_branch
          %299 = sbr.rel (%p297) target = $region24
        $region23: #{block_stack_forward.1} parent=11 // pred_region
          %301 = vsyncadd [#allocation7], 0
          %s302 = sshll.u32 %s7, 4
          %s303 = int_to_ptr.hbm [resolvable:$true] %s302
          %s304 = sshll.u32 [#allocation13], 4
          %s305 = int_to_ptr.vmem [resolvable:$true] %s304
          %310 = dma.hbm_to_vmem [thread:$0]  %s303, 2048, %s305, [#allocation7], 64, 64, 4
        $region24: #{block_stack_forward.1} parent=11 // pred_fallthru
          _
        // Predicated region
        $region25: #{block_stack_forward.1} parent=11 // pred_check
          %p311 = pneg %p233
        $region26: #{block_stack_forward.1} parent=11 // pred_check_branch
          %313 = sbr.rel (%p311) target = $region28
        $region27: #{block_stack_forward.1} parent=11 // pred_region
          %315 = vsyncadd [#allocation5], 0
          %s317 = sshll.u32 %s8, 4
          %s318 = int_to_ptr.hbm [resolvable:$true] %s317
          %320 = dma.hbm_to_smem %s318, 64, [#allocation14], [#allocation5]
        $region28: #{block_stack_forward.1} parent=11 // pred_fallthru
          _
      $region12: #{block_stack_forward.1} parent=5 // pred_fallthru
        _
      %p321 = scmp.lt.s32.totalorder %s19, 4
      // Predicated region
      $region29: #{block_stack_forward.1} parent=5 // pred_check
        %p322 = pneg %p321
      $region30: #{block_stack_forward.1} parent=5 // pred_check_branch
        %324 = sbr.rel (%p322) target = $region32
      $region31: #{block_stack_forward.1} parent=5 // pred_region
        // Predicated region
        $region33: #{block_stack_forward.1} parent=31 // pred_check
          %p325 = pneg %p81
        $region34: #{block_stack_forward.1} parent=31 // pred_check_branch
          %327 = sbr.rel (%p325) target = $region36
        $region35: #{block_stack_forward.1} parent=31 // pred_region
          %s328 = sand.u32 %s19, 1
          %s329 = scalar_lea.sflag [#allocation3], %s328
          %s330 = sand.u32 %s71, 1
          %s331 = smul.addr %s330, 128
          %s332 = scalar_lea.vmem [#allocation8], %s331
          %334 = vsyncadd %s329, 0
          %s335 = smul.addr %s19, 32
          %s336 = smul.addr %s335, 4
          %s337 = scalar_lea.hbm %s2, %s336
          %s338 = sshll.u32 %s337, 4
          %s339 = int_to_ptr.hbm [resolvable:$true] %s338
          %s340 = sshll.u32 %s332, 4
          %s341 = int_to_ptr.vmem [resolvable:$true] %s340
          %346 = dma.hbm_to_vmem [thread:$0]  %s339, 2048, %s341, %s329, 128, 128, 8
        $region36: #{block_stack_forward.1} parent=31 // pred_fallthru
          _
        // Predicated region
        $region37: #{block_stack_forward.1} parent=31 // pred_check
          %p347 = pneg %p107
        $region38: #{block_stack_forward.1} parent=31 // pred_check_branch
          %349 = sbr.rel (%p347) target = $region40
        $region39: #{block_stack_forward.1} parent=31 // pred_region
          %s350 = sand.u32 %s19, 1
          %s351 = scalar_lea.sflag [#allocation3], %s350
          %s352 = sand.u32 %s97, 1
          %s353 = smul.addr %s352, 768
          %s354 = scalar_lea.vmem [#allocation9], %s353
          %356 = vsyncadd %s351, 0
          %s357 = smul.addr %s19, 192
          %s358 = smul.addr %s357, 4
          %s359 = scalar_lea.hbm %s3, %s358
          %s360 = sshll.u32 %s359, 4
          %s361 = int_to_ptr.hbm [resolvable:$true] %s360
          %s362 = sshll.u32 %s354, 4
          %s363 = int_to_ptr.vmem [resolvable:$true] %s362
          %368 = dma.hbm_to_vmem [thread:$0]  %s361, 12288, %s363, %s351, 384, 384, 24
        $region40: #{block_stack_forward.1} parent=31 // pred_fallthru
          _
        // Predicated region
        $region41: #{block_stack_forward.1} parent=31 // pred_check
          %p369 = pneg %p133
        $region42: #{block_stack_forward.1} parent=31 // pred_check_branch
          %371 = sbr.rel (%p369) target = $region44
        $region43: #{block_stack_forward.1} parent=31 // pred_region
          %s372 = sand.u32 %s19, 1
          %s373 = scalar_lea.sflag [#allocation3], %s372
          %s374 = sand.u32 %s123, 1
          %s375 = smul.addr %s374, 256
          %s376 = scalar_lea.vmem [#allocation10], %s375
          %378 = vsyncadd %s373, 0
          %s379 = smul.addr %s19, 64
          %s380 = smul.addr %s379, 4
          %s381 = scalar_lea.hbm %s4, %s380
          %s382 = sshll.u32 %s381, 4
          %s383 = int_to_ptr.hbm [resolvable:$true] %s382
          %s384 = sshll.u32 %s376, 4
          %s385 = int_to_ptr.vmem [resolvable:$true] %s384
          %390 = dma.hbm_to_vmem [thread:$0]  %s383, 4096, %s385, %s373, 128, 128, 8
        $region44: #{block_stack_forward.1} parent=31 // pred_fallthru
          _
        // Predicated region
        $region45: #{block_stack_forward.1} parent=31 // pred_check
          %p391 = pneg %p159
        $region46: #{block_stack_forward.1} parent=31 // pred_check_branch
          %393 = sbr.rel (%p391) target = $region48
        $region47: #{block_stack_forward.1} parent=31 // pred_region
          %s394 = sand.u32 %s19, 1
          %s395 = scalar_lea.sflag [#allocation3], %s394
          %s396 = sand.u32 %s149, 1
          %s397 = smul.addr %s396, 1024
          %s398 = scalar_lea.vmem [#allocation11], %s397
          %400 = vsyncadd %s395, 0
          %s401 = smul.addr %s19, 256
          %s402 = smul.addr %s401, 4
          %s403 = scalar_lea.hbm %s5, %s402
          %s404 = sshll.u32 %s403, 4
          %s405 = int_to_ptr.hbm [resolvable:$true] %s404
          %s406 = sshll.u32 %s398, 4
          %s407 = int_to_ptr.vmem [resolvable:$true] %s406
          %412 = dma.hbm_to_vmem [thread:$0]  %s405, 16384, %s407, %s395, 512, 512, 32
        $region48: #{block_stack_forward.1} parent=31 // pred_fallthru
          _
        // Predicated region
        $region49: #{block_stack_forward.1} parent=31 // pred_check
          %p413 = pneg %p185
        $region50: #{block_stack_forward.1} parent=31 // pred_check_branch
          %415 = sbr.rel (%p413) target = $region52
        $region51: #{block_stack_forward.1} parent=31 // pred_region
          %s416 = sand.u32 %s19, 1
          %s417 = scalar_lea.sflag [#allocation3], %s416
          %s418 = sand.u32 %s175, 1
          %s419 = smul.addr %s418, 1024
          %s420 = scalar_lea.vmem [#allocation12], %s419
          %422 = vsyncadd %s417, 0
          %s423 = smul.addr %s19, 256
          %s424 = smul.addr %s423, 4
          %s425 = scalar_lea.hbm %s6, %s424
          %s426 = sshll.u32 %s425, 4
          %s427 = int_to_ptr.hbm [resolvable:$true] %s426
          %s428 = sshll.u32 %s420, 4
          %s429 = int_to_ptr.vmem [resolvable:$true] %s428
          %434 = dma.hbm_to_vmem [thread:$0]  %s427, 16384, %s429, %s417, 128, 128, 8
        $region52: #{block_stack_forward.1} parent=31 // pred_fallthru
          _
      $region32: #{block_stack_forward.1} parent=5 // pred_fallthru
        _
      %p435 = scmp.le.s32.totalorder 1, %s19
      %p436 = scmp.lt.s32.totalorder %s19, 5
      %p437 = pnand %p435, %p436
      %p438 = pneg %p437
      // Predicated region
      $region53: #{block_stack_forward.1} parent=5 // pred_check
        _
      $region54: #{block_stack_forward.1} parent=5 // pred_check_branch
        %440 = sbr.rel (%p437) target = $region56
      $region55: #{block_stack_forward.1} parent=5 // pred_region
        %s441 = ssub.s32 %s19, 1
        // Predicated region
        $region57: #{block_stack_forward.1} parent=55 // pred_check
          %p442 = pneg %p40
        $region58: #{block_stack_forward.1} parent=55 // pred_check_branch
          %444 = sbr.rel (%p442) target = $region60
        $region59: #{block_stack_forward.1} parent=55 // pred_region
          %446 = dma.done [#allocation3], 2048
        $region60: #{block_stack_forward.1} parent=55 // pred_fallthru
          _
        // Predicated region
        $region61: #{block_stack_forward.1} parent=55 // pred_check
          %p447 = pneg %p61
        $region62: #{block_stack_forward.1} parent=55 // pred_check_branch
          %449 = sbr.rel (%p447) target = $region64
        $region63: #{block_stack_forward.1} parent=55 // pred_region
          %451 = dma.done [#allocation7], 2048
        $region64: #{block_stack_forward.1} parent=55 // pred_fallthru
          _
        %s452 = sand.u32 %s24, 1
        %s453 = scalar_lea.sflag [#allocation3], %s452
        %s454 = sand.u32 %s74, 1
        %s455 = smul.addr %s454, 128
        %s456 = scalar_lea.vmem [#allocation8], %s455
        // Predicated region
        $region65: #{block_stack_forward.1} parent=55 // pred_check
          %p457 = pneg %p87
        $region66: #{block_stack_forward.1} parent=55 // pred_check_branch
          %459 = sbr.rel (%p457) target = $region68
        $region67: #{block_stack_forward.1} parent=55 // pred_region
          %461 = dma.done %s453, 2048
        $region68: #{block_stack_forward.1} parent=55 // pred_fallthru
          _
        %s462 = sand.u32 %s24, 1
        %s463 = scalar_lea.sflag [#allocation3], %s462
        %s464 = sand.u32 %s100, 1
        %s465 = smul.addr %s464, 768
        %s466 = scalar_lea.vmem [#allocation9], %s465
        // Predicated region
        $region69: #{block_stack_forward.1} parent=55 // pred_check
          %p467 = pneg %p113
        $region70: #{block_stack_forward.1} parent=55 // pred_check_branch
          %469 = sbr.rel (%p467) target = $region72
        $region71: #{block_stack_forward.1} parent=55 // pred_region
          %471 = dma.done %s463, 12288
        $region72: #{block_stack_forward.1} parent=55 // pred_fallthru
          _
        %s472 = sand.u32 %s24, 1
        %s473 = scalar_lea.sflag [#allocation3], %s472
        %s474 = sand.u32 %s126, 1
        %s475 = smul.addr %s474, 256
        %s476 = scalar_lea.vmem [#allocation10], %s475
        // Predicated region
        $region73: #{block_stack_forward.1} parent=55 // pred_check
          %p477 = pneg %p139
        $region74: #{block_stack_forward.1} parent=55 // pred_check_branch
          %479 = sbr.rel (%p477) target = $region76
        $region75: #{block_stack_forward.1} parent=55 // pred_region
          %481 = dma.done %s473, 4096
        $region76: #{block_stack_forward.1} parent=55 // pred_fallthru
          _
        %s482 = sand.u32 %s24, 1
        %s483 = scalar_lea.sflag [#allocation3], %s482
        %s484 = sand.u32 %s152, 1
        %s485 = smul.addr %s484, 1024
        %s486 = scalar_lea.vmem [#allocation11], %s485
        // Predicated region
        $region77: #{block_stack_forward.1} parent=55 // pred_check
          %p487 = pneg %p165
        $region78: #{block_stack_forward.1} parent=55 // pred_check_branch
          %489 = sbr.rel (%p487) target = $region80
        $region79: #{block_stack_forward.1} parent=55 // pred_region
          %491 = dma.done %s483, 16384
        $region80: #{block_stack_forward.1} parent=55 // pred_fallthru
          _
        %s492 = sand.u32 %s24, 1
        %s493 = scalar_lea.sflag [#allocation3], %s492
        %s494 = sand.u32 %s178, 1
        %s495 = smul.addr %s494, 1024
        %s496 = scalar_lea.vmem [#allocation12], %s495
        // Predicated region
        $region81: #{block_stack_forward.1} parent=55 // pred_check
          %p497 = pneg %p191
        $region82: #{block_stack_forward.1} parent=55 // pred_check_branch
          %499 = sbr.rel (%p497) target = $region84
        $region83: #{block_stack_forward.1} parent=55 // pred_region
          %501 = dma.done %s493, 16384
        $region84: #{block_stack_forward.1} parent=55 // pred_fallthru
          _
        // Predicated region
        $region85: #{block_stack_forward.1} parent=55 // pred_check
          %p502 = pneg %p212
        $region86: #{block_stack_forward.1} parent=55 // pred_check_branch
          %504 = sbr.rel (%p502) target = $region88
        $region87: #{block_stack_forward.1} parent=55 // pred_region
          %506 = dma.done [#allocation7], 2048
        $region88: #{block_stack_forward.1} parent=55 // pred_fallthru
          _
        // Predicated region
        $region89: #{block_stack_forward.1} parent=55 // pred_check
          %p507 = pneg %p233
        $region90: #{block_stack_forward.1} parent=55 // pred_check_branch
          %509 = sbr.rel (%p507) target = $region92
        $region91: #{block_stack_forward.1} parent=55 // pred_region
          %511 = dma.done [#allocation5], 64
        $region92: #{block_stack_forward.1} parent=55 // pred_fallthru
          _
        %512 = sfence
        %p513 = pneg %p40
        %p514 = pneg %p37
        %p515 = pneg %p61
        %p516 = pneg %p58
        %s517 = sand.u32 %s24, 1
        %s518 = scalar_lea.sflag [#allocation3], %s517
        %s519 = sand.u32 %s74, 1
        %s520 = smul.addr %s519, 128
        %s521 = scalar_lea.vmem [#allocation8], %s520
        %p522 = pneg %p87
        %p523 = pneg %p84
        %s524 = sand.u32 %s24, 1
        %s525 = scalar_lea.sflag [#allocation3], %s524
        %s526 = sand.u32 %s100, 1
        %s527 = smul.addr %s526, 768
        %s528 = scalar_lea.vmem [#allocation9], %s527
        %p529 = pneg %p113
        %p530 = pneg %p110
        %s531 = sand.u32 %s24, 1
        %s532 = scalar_lea.sflag [#allocation3], %s531
        %s533 = sand.u32 %s126, 1
        %s534 = smul.addr %s533, 256
        %s535 = scalar_lea.vmem [#allocation10], %s534
        %p536 = pneg %p139
        %p537 = pneg %p136
        %s538 = sand.u32 %s24, 1
        %s539 = scalar_lea.sflag [#allocation3], %s538
        %s540 = sand.u32 %s152, 1
        %s541 = smul.addr %s540, 1024
        %s542 = scalar_lea.vmem [#allocation11], %s541
        %p543 = pneg %p165
        %p544 = pneg %p162
        %s545 = sand.u32 %s24, 1
        %s546 = scalar_lea.sflag [#allocation3], %s545
        %s547 = sand.u32 %s178, 1
        %s548 = smul.addr %s547, 1024
        %s549 = scalar_lea.vmem [#allocation12], %s548
        %p550 = pneg %p191
        %p551 = pneg %p188
        %p552 = pneg %p212
        %p553 = pneg %p209
        %p554 = pneg %p233
        %p555 = pneg %p230
        %p556 = pneg %p254
        %p557 = pneg %p251
        %p558 = scmp.eq.s32.totalorder %s24, 0
        // Predicated region
        $region93: #{block_stack_forward.1} parent=55 // pred_check
          %p559 = pneg %p558
        $region94: #{block_stack_forward.1} parent=55 // pred_check_branch
          %561 = sbr.rel (%p559) target = $region96
        $region95: #{block_stack_forward.1} parent=55 // pred_region
          %v562 = vld [vmem:[#allocation2] sm:$0xff]
          %v563 = vld [vmem:[#allocation2 + $0x8] sm:$0xff]
          %v564 = vld [vmem:[#allocation2 + $0x10] sm:$0xff]
          %v565 = vld [vmem:[#allocation2 + $0x18] sm:$0xff]
          %v566 = vld [vmem:[#allocation2 + $0x20] sm:$0xff]
          %v567 = vld [vmem:[#allocation2 + $0x28] sm:$0xff]
          %v568 = vld [vmem:[#allocation2 + $0x30] sm:$0xff]
          %v569 = vld [vmem:[#allocation2 + $0x38] sm:$0xff]
          %v570 = vld [vmem:[#allocation2 + $0x40] sm:$0xff]
          %v571 = vld [vmem:[#allocation2 + $0x48] sm:$0xff]
          %v572 = vld [vmem:[#allocation2 + $0x50] sm:$0xff]
          %v573 = vld [vmem:[#allocation2 + $0x58] sm:$0xff]
          %v574 = vld [vmem:[#allocation2 + $0x60] sm:$0xff]
          %v575 = vld [vmem:[#allocation2 + $0x68] sm:$0xff]
          %v576 = vld [vmem:[#allocation2 + $0x70] sm:$0xff]
          %v577 = vld [vmem:[#allocation2 + $0x78] sm:$0xff]
          %v578 = vunpack.c.l.bf16 %v562
          %v579 = vunpack.c.h.bf16 %v562
          %v580 = vunpack.c.l.bf16 %v563
          %v581 = vunpack.c.h.bf16 %v563
          %v582 = vunpack.c.l.bf16 %v564
          %v583 = vunpack.c.h.bf16 %v564
          %v584 = vunpack.c.l.bf16 %v565
          %v585 = vunpack.c.h.bf16 %v565
          %v586 = vunpack.c.l.bf16 %v566
          %v587 = vunpack.c.h.bf16 %v566
          %v588 = vunpack.c.l.bf16 %v567
          %v589 = vunpack.c.h.bf16 %v567
          %v590 = vunpack.c.l.bf16 %v568
          %v591 = vunpack.c.h.bf16 %v568
          %v592 = vunpack.c.l.bf16 %v569
          %v593 = vunpack.c.h.bf16 %v569
          %v594 = vunpack.c.l.bf16 %v570
          %v595 = vunpack.c.h.bf16 %v570
          %v596 = vunpack.c.l.bf16 %v571
          %v597 = vunpack.c.h.bf16 %v571
          %v598 = vunpack.c.l.bf16 %v572
          %v599 = vunpack.c.h.bf16 %v572
          %v600 = vunpack.c.l.bf16 %v573
          %v601 = vunpack.c.h.bf16 %v573
          %v602 = vunpack.c.l.bf16 %v574
          %v603 = vunpack.c.h.bf16 %v574
          %v604 = vunpack.c.l.bf16 %v575
          %v605 = vunpack.c.h.bf16 %v575
          %v606 = vunpack.c.l.bf16 %v576
          %v607 = vunpack.c.h.bf16 %v576
          %v608 = vunpack.c.l.bf16 %v577
          %v609 = vunpack.c.h.bf16 %v577
          %610 = vst [vmem:[#allocation15] sm:$0xff] %v578
          %611 = vst [vmem:[#allocation15 + $0x8] sm:$0xff] %v579
          %612 = vst [vmem:[#allocation15 + $0x10] sm:$0xff] %v580
          %613 = vst [vmem:[#allocation15 + $0x18] sm:$0xff] %v581
          %614 = vst [vmem:[#allocation15 + $0x20] sm:$0xff] %v582
          %615 = vst [vmem:[#allocation15 + $0x28] sm:$0xff] %v583
          %616 = vst [vmem:[#allocation15 + $0x30] sm:$0xff] %v584
          %617 = vst [vmem:[#allocation15 + $0x38] sm:$0xff] %v585
          %618 = vst [vmem:[#allocation15 + $0x40] sm:$0xff] %v586
          %619 = vst [vmem:[#allocation15 + $0x48] sm:$0xff] %v587
          %620 = vst [vmem:[#allocation15 + $0x50] sm:$0xff] %v588
          %621 = vst [vmem:[#allocation15 + $0x58] sm:$0xff] %v589
          %622 = vst [vmem:[#allocation15 + $0x60] sm:$0xff] %v590
          %623 = vst [vmem:[#allocation15 + $0x68] sm:$0xff] %v591
          %624 = vst [vmem:[#allocation15 + $0x70] sm:$0xff] %v592
          %625 = vst [vmem:[#allocation15 + $0x78] sm:$0xff] %v593
          %626 = vst [vmem:[#allocation15 + $0x80] sm:$0xff] %v594
          %627 = vst [vmem:[#allocation15 + $0x88] sm:$0xff] %v595
          %628 = vst [vmem:[#allocation15 + $0x90] sm:$0xff] %v596
          %629 = vst [vmem:[#allocation15 + $0x98] sm:$0xff] %v597
          %630 = vst [vmem:[#allocation15 + $0xa0] sm:$0xff] %v598
          %631 = vst [vmem:[#allocation15 + $0xa8] sm:$0xff] %v599
          %632 = vst [vmem:[#allocation15 + $0xb0] sm:$0xff] %v600
          %633 = vst [vmem:[#allocation15 + $0xb8] sm:$0xff] %v601
          %634 = vst [vmem:[#allocation15 + $0xc0] sm:$0xff] %v602
          %635 = vst [vmem:[#allocation15 + $0xc8] sm:$0xff] %v603
          %636 = vst [vmem:[#allocation15 + $0xd0] sm:$0xff] %v604
          %637 = vst [vmem:[#allocation15 + $0xd8] sm:$0xff] %v605
          %638 = vst [vmem:[#allocation15 + $0xe0] sm:$0xff] %v606
          %639 = vst [vmem:[#allocation15 + $0xe8] sm:$0xff] %v607
          %640 = vst [vmem:[#allocation15 + $0xf0] sm:$0xff] %v608
          %641 = vst [vmem:[#allocation15 + $0xf8] sm:$0xff] %v609
        $region96: #{block_stack_forward.1} parent=55 // pred_fallthru
          _
        %s642 = smul.u32 %s24, 128
        %s643 = sld [smem:[#allocation14 + %s642]]
        %s644 = sadd.s32 %s642, 1
        %s645 = sld [smem:[#allocation14 + %s644]]
        %s646 = sadd.s32 %s642, 2
        %s647 = sld [smem:[#allocation14 + %s646]]
        %s648 = sadd.s32 %s642, 3
        %s649 = sld [smem:[#allocation14 + %s648]]
        %v650 = vld [vmem:[#allocation15] sm:$0xff]
        %v651 = vld [vmem:[#allocation15 + $0x8] sm:$0xff]
        %v652 = vld [vmem:[#allocation15 + $0x10] sm:$0xff]
        %v653 = vld [vmem:[#allocation15 + $0x18] sm:$0xff]
        %v654 = vld [vmem:[#allocation15 + $0x20] sm:$0xff]
        %v655 = vld [vmem:[#allocation15 + $0x28] sm:$0xff]
        %v656 = vld [vmem:[#allocation15 + $0x30] sm:$0xff]
        %v657 = vld [vmem:[#allocation15 + $0x38] sm:$0xff]
        %v658 = vld [vmem:[#allocation15 + $0x40] sm:$0xff]
        %v659 = vld [vmem:[#allocation15 + $0x48] sm:$0xff]
        %v660 = vld [vmem:[#allocation15 + $0x50] sm:$0xff]
        %v661 = vld [vmem:[#allocation15 + $0x58] sm:$0xff]
        %v662 = vld [vmem:[#allocation15 + $0x60] sm:$0xff]
        %v663 = vld [vmem:[#allocation15 + $0x68] sm:$0xff]
        %v664 = vld [vmem:[#allocation15 + $0x70] sm:$0xff]
        %v665 = vld [vmem:[#allocation15 + $0x78] sm:$0xff]
        %v666 = vld [vmem:[#allocation15 + $0x80] sm:$0xff]
        %v667 = vld [vmem:[#allocation15 + $0x88] sm:$0xff]
        %v668 = vld [vmem:[#allocation15 + $0x90] sm:$0xff]
        %v669 = vld [vmem:[#allocation15 + $0x98] sm:$0xff]
        %v670 = vld [vmem:[#allocation15 + $0xa0] sm:$0xff]
        %v671 = vld [vmem:[#allocation15 + $0xa8] sm:$0xff]
        %v672 = vld [vmem:[#allocation15 + $0xb0] sm:$0xff]
        %v673 = vld [vmem:[#allocation15 + $0xb8] sm:$0xff]
        %v674 = vld [vmem:[#allocation15 + $0xc0] sm:$0xff]
        %v675 = vld [vmem:[#allocation15 + $0xc8] sm:$0xff]
        %v676 = vld [vmem:[#allocation15 + $0xd0] sm:$0xff]
        %v677 = vld [vmem:[#allocation15 + $0xd8] sm:$0xff]
        %v678 = vld [vmem:[#allocation15 + $0xe0] sm:$0xff]
        %v679 = vld [vmem:[#allocation15 + $0xe8] sm:$0xff]
        %v680 = vld [vmem:[#allocation15 + $0xf0] sm:$0xff]
        %v681 = vld [vmem:[#allocation15 + $0xf8] sm:$0xff]
        %v682 = vstv %s643
        %v683 = vmul.f32 %v682, %v650
        %v684 = vmul.f32 %v682, %v651
        %v685 = vmul.f32 %v682, %v652
        %v686 = vmul.f32 %v682, %v653
        %v687 = vmul.f32 %v682, %v654
        %v688 = vmul.f32 %v682, %v655
        %v689 = vmul.f32 %v682, %v656
        %v690 = vmul.f32 %v682, %v657
        %v691 = vmul.f32 %v682, %v658
        %v692 = vmul.f32 %v682, %v659
        %v693 = vmul.f32 %v682, %v660
        %v694 = vmul.f32 %v682, %v661
        %v695 = vmul.f32 %v682, %v662
        %v696 = vmul.f32 %v682, %v663
        %v697 = vmul.f32 %v682, %v664
        %v698 = vmul.f32 %v682, %v665
        %v699 = vmul.f32 %v682, %v666
        %v700 = vmul.f32 %v682, %v667
        %v701 = vmul.f32 %v682, %v668
        %v702 = vmul.f32 %v682, %v669
        %v703 = vmul.f32 %v682, %v670
        %v704 = vmul.f32 %v682, %v671
        %v705 = vmul.f32 %v682, %v672
        %v706 = vmul.f32 %v682, %v673
        %v707 = vmul.f32 %v682, %v674
        %v708 = vmul.f32 %v682, %v675
        %v709 = vmul.f32 %v682, %v676
        %v710 = vmul.f32 %v682, %v677
        %v711 = vmul.f32 %v682, %v678
        %v712 = vmul.f32 %v682, %v679
        %v713 = vmul.f32 %v682, %v680
        %v714 = vmul.f32 %v682, %v681
        %v715 = vld [vmem:[#allocation6] sm:$0xff]
        %v716 = vld [vmem:[#allocation6 + $0x8] sm:$0xff]
        %v717 = vld [vmem:[#allocation6 + $0x10] sm:$0xff]
        %v718 = vld [vmem:[#allocation6 + $0x18] sm:$0xff]
        %v719 = vld [vmem:[#allocation6 + $0x20] sm:$0xff]
        %v720 = vld [vmem:[#allocation6 + $0x28] sm:$0xff]
        %v721 = vld [vmem:[#allocation6 + $0x30] sm:$0xff]
        %v722 = vld [vmem:[#allocation6 + $0x38] sm:$0xff]
        %v723 = vld [vmem:[#allocation6 + $0x40] sm:$0xff]
        %v724 = vld [vmem:[#allocation6 + $0x48] sm:$0xff]
        %v725 = vld [vmem:[#allocation6 + $0x50] sm:$0xff]
        %v726 = vld [vmem:[#allocation6 + $0x58] sm:$0xff]
        %v727 = vld [vmem:[#allocation6 + $0x60] sm:$0xff]
        %v728 = vld [vmem:[#allocation6 + $0x68] sm:$0xff]
        %v729 = vld [vmem:[#allocation6 + $0x70] sm:$0xff]
        %v730 = vld [vmem:[#allocation6 + $0x78] sm:$0xff]
        %v731 = vunpack.c.l.bf16 %v715
        %v732 = vunpack.c.h.bf16 %v715
        %v733 = vunpack.c.l.bf16 %v716
        %v734 = vunpack.c.h.bf16 %v716
        %v735 = vunpack.c.l.bf16 %v717
        %v736 = vunpack.c.h.bf16 %v717
        %v737 = vunpack.c.l.bf16 %v718
        %v738 = vunpack.c.h.bf16 %v718
        %v739 = vunpack.c.l.bf16 %v719
        %v740 = vunpack.c.h.bf16 %v719
        %v741 = vunpack.c.l.bf16 %v720
        %v742 = vunpack.c.h.bf16 %v720
        %v743 = vunpack.c.l.bf16 %v721
        %v744 = vunpack.c.h.bf16 %v721
        %v745 = vunpack.c.l.bf16 %v722
        %v746 = vunpack.c.h.bf16 %v722
        %v747 = vunpack.c.l.bf16 %v723
        %v748 = vunpack.c.h.bf16 %v723
        %v749 = vunpack.c.l.bf16 %v724
        %v750 = vunpack.c.h.bf16 %v724
        %v751 = vunpack.c.l.bf16 %v725
        %v752 = vunpack.c.h.bf16 %v725
        %v753 = vunpack.c.l.bf16 %v726
        %v754 = vunpack.c.h.bf16 %v726
        %v755 = vunpack.c.l.bf16 %v727
        %v756 = vunpack.c.h.bf16 %v727
        %v757 = vunpack.c.l.bf16 %v728
        %v758 = vunpack.c.h.bf16 %v728
        %v759 = vunpack.c.l.bf16 %v729
        %v760 = vunpack.c.h.bf16 %v729
        %v761 = vunpack.c.l.bf16 %v730
        %v762 = vunpack.c.h.bf16 %v730
        %v763 = vstv %s645
        %v764 = vmul.f32 %v763, %v731
        %v765 = vmul.f32 %v763, %v732
        %v766 = vmul.f32 %v763, %v733
        %v767 = vmul.f32 %v763, %v734
        %v768 = vmul.f32 %v763, %v735
        %v769 = vmul.f32 %v763, %v736
        %v770 = vmul.f32 %v763, %v737
        %v771 = vmul.f32 %v763, %v738
        %v772 = vmul.f32 %v763, %v739
        %v773 = vmul.f32 %v763, %v740
        %v774 = vmul.f32 %v763, %v741
        %v775 = vmul.f32 %v763, %v742
        %v776 = vmul.f32 %v763, %v743
        %v777 = vmul.f32 %v763, %v744
        %v778 = vmul.f32 %v763, %v745
        %v779 = vmul.f32 %v763, %v746
        %v780 = vmul.f32 %v763, %v747
        %v781 = vmul.f32 %v763, %v748
        %v782 = vmul.f32 %v763, %v749
        %v783 = vmul.f32 %v763, %v750
        %v784 = vmul.f32 %v763, %v751
        %v785 = vmul.f32 %v763, %v752
        %v786 = vmul.f32 %v763, %v753
        %v787 = vmul.f32 %v763, %v754
        %v788 = vmul.f32 %v763, %v755
        %v789 = vmul.f32 %v763, %v756
        %v790 = vmul.f32 %v763, %v757
        %v791 = vmul.f32 %v763, %v758
        %v792 = vmul.f32 %v763, %v759
        %v793 = vmul.f32 %v763, %v760
        %v794 = vmul.f32 %v763, %v761
        %v795 = vmul.f32 %v763, %v762
        %v796 = vadd.f32 %v683, %v764
        %v797 = vadd.f32 %v684, %v765
        %v798 = vadd.f32 %v685, %v766
        %v799 = vadd.f32 %v686, %v767
        %v800 = vadd.f32 %v687, %v768
        %v801 = vadd.f32 %v688, %v769
        %v802 = vadd.f32 %v689, %v770
        %v803 = vadd.f32 %v690, %v771
        %v804 = vadd.f32 %v691, %v772
        %v805 = vadd.f32 %v692, %v773
        %v806 = vadd.f32 %v693, %v774
        %v807 = vadd.f32 %v694, %v775
        %v808 = vadd.f32 %v695, %v776
        %v809 = vadd.f32 %v696, %v777
        %v810 = vadd.f32 %v697, %v778
        %v811 = vadd.f32 %v698, %v779
        %v812 = vadd.f32 %v699, %v780
        %v813 = vadd.f32 %v700, %v781
        %v814 = vadd.f32 %v701, %v782
        %v815 = vadd.f32 %v702, %v783
        %v816 = vadd.f32 %v703, %v784
        %v817 = vadd.f32 %v704, %v785
        %v818 = vadd.f32 %v705, %v786
        %v819 = vadd.f32 %v706, %v787
        %v820 = vadd.f32 %v707, %v788
        %v821 = vadd.f32 %v708, %v789
        %v822 = vadd.f32 %v709, %v790
        %v823 = vadd.f32 %v710, %v791
        %v824 = vadd.f32 %v711, %v792
        %v825 = vadd.f32 %v712, %v793
        %v826 = vadd.f32 %v713, %v794
        %v827 = vadd.f32 %v714, %v795
        %v828 = vmul.f32 %v796, %v796
        %v829 = vmul.f32 %v797, %v797
        %v830 = vmul.f32 %v798, %v798
        %v831 = vmul.f32 %v799, %v799
        %v832 = vmul.f32 %v800, %v800
        %v833 = vmul.f32 %v801, %v801
        %v834 = vmul.f32 %v802, %v802
        %v835 = vmul.f32 %v803, %v803
        %v836 = vmul.f32 %v804, %v804
        %v837 = vmul.f32 %v805, %v805
        %v838 = vmul.f32 %v806, %v806
        %v839 = vmul.f32 %v807, %v807
        %v840 = vmul.f32 %v808, %v808
        %v841 = vmul.f32 %v809, %v809
        %v842 = vmul.f32 %v810, %v810
        %v843 = vmul.f32 %v811, %v811
        %v844 = vmul.f32 %v812, %v812
        %v845 = vmul.f32 %v813, %v813
        %v846 = vmul.f32 %v814, %v814
        %v847 = vmul.f32 %v815, %v815
        %v848 = vmul.f32 %v816, %v816
        %v849 = vmul.f32 %v817, %v817
        %v850 = vmul.f32 %v818, %v818
        %v851 = vmul.f32 %v819, %v819
        %v852 = vmul.f32 %v820, %v820
        %v853 = vmul.f32 %v821, %v821
        %v854 = vmul.f32 %v822, %v822
        %v855 = vmul.f32 %v823, %v823
        %v856 = vmul.f32 %v824, %v824
        %v857 = vmul.f32 %v825, %v825
        %v858 = vmul.f32 %v826, %v826
        %v859 = vmul.f32 %v827, %v827
        %v860 = vadd.f32 %v828, %v829
        %861 = vadd.xlane.f32.xlu0 %v860
        %v862 = vpop.xlane.xlu0 %861
        %v863 = vadd.f32 %v830, %v831
        %864 = vadd.xlane.f32.xlu0 %v863
        %v865 = vpop.xlane.xlu0 %864
        %v866 = vadd.f32 %v832, %v833
        %867 = vadd.xlane.f32.xlu0 %v866
        %v868 = vpop.xlane.xlu0 %867
        %v869 = vadd.f32 %v834, %v835
        %870 = vadd.xlane.f32.xlu0 %v869
        %v871 = vpop.xlane.xlu0 %870
        %v872 = vadd.f32 %v836, %v837
        %873 = vadd.xlane.f32.xlu0 %v872
        %v874 = vpop.xlane.xlu0 %873
        %v875 = vadd.f32 %v838, %v839
        %876 = vadd.xlane.f32.xlu0 %v875
        %v877 = vpop.xlane.xlu0 %876
        %v878 = vadd.f32 %v840, %v841
        %879 = vadd.xlane.f32.xlu0 %v878
        %v880 = vpop.xlane.xlu0 %879
        %v881 = vadd.f32 %v842, %v843
        %882 = vadd.xlane.f32.xlu0 %v881
        %v883 = vpop.xlane.xlu0 %882
        %v884 = vadd.f32 %v844, %v845
        %885 = vadd.xlane.f32.xlu0 %v884
        %v886 = vpop.xlane.xlu0 %885
        %v887 = vadd.f32 %v846, %v847
        %888 = vadd.xlane.f32.xlu0 %v887
        %v889 = vpop.xlane.xlu0 %888
        %v890 = vadd.f32 %v848, %v849
        %891 = vadd.xlane.f32.xlu0 %v890
        %v892 = vpop.xlane.xlu0 %891
        %v893 = vadd.f32 %v850, %v851
        %894 = vadd.xlane.f32.xlu0 %v893
        %v895 = vpop.xlane.xlu0 %894
        %v896 = vadd.f32 %v852, %v853
        %897 = vadd.xlane.f32.xlu0 %v896
        %v898 = vpop.xlane.xlu0 %897
        %v899 = vadd.f32 %v854, %v855
        %900 = vadd.xlane.f32.xlu0 %v899
        %v901 = vpop.xlane.xlu0 %900
        %v902 = vadd.f32 %v856, %v857
        %903 = vadd.xlane.f32.xlu0 %v902
        %v904 = vpop.xlane.xlu0 %903
        %v905 = vadd.f32 %v858, %v859
        %906 = vadd.xlane.f32.xlu0 %v905
        %v907 = vpop.xlane.xlu0 %906
        %v908 = vrcp.pop 256.0
        %v909 = vmul.f32 256.0, %v908
        %v910 = vsub.f32 1.0, %v909
        %v911 = vmul.f32 %v908, %v910
        %v912 = vadd.f32 %v908, %v911
        %vm913 = vweird.f32 %v908
        %v914 = vsel %vm913, %v908, %v912
        %v915 = vmul.f32 %v862, %v914
        %v916 = vmul.f32 %v865, %v914
        %v917 = vmul.f32 %v868, %v914
        %v918 = vmul.f32 %v871, %v914
        %v919 = vmul.f32 %v874, %v914
        %v920 = vmul.f32 %v877, %v914
        %v921 = vmul.f32 %v880, %v914
        %v922 = vmul.f32 %v883, %v914
        %v923 = vmul.f32 %v886, %v914
        %v924 = vmul.f32 %v889, %v914
        %v925 = vmul.f32 %v892, %v914
        %v926 = vmul.f32 %v895, %v914
        %v927 = vmul.f32 %v898, %v914
        %v928 = vmul.f32 %v901, %v914
        %v929 = vmul.f32 %v904, %v914
        %v930 = vmul.f32 %v907, %v914
        %v931 = vadd.f32 %v915, 1.1920929e-07
        %v932 = vadd.f32 %v916, 1.1920929e-07
        %v933 = vadd.f32 %v917, 1.1920929e-07
        %v934 = vadd.f32 %v918, 1.1920929e-07
        %v935 = vadd.f32 %v919, 1.1920929e-07
        %v936 = vadd.f32 %v920, 1.1920929e-07
        %v937 = vadd.f32 %v921, 1.1920929e-07
        %v938 = vadd.f32 %v922, 1.1920929e-07
        %v939 = vadd.f32 %v923, 1.1920929e-07
        %v940 = vadd.f32 %v924, 1.1920929e-07
        %v941 = vadd.f32 %v925, 1.1920929e-07
        %v942 = vadd.f32 %v926, 1.1920929e-07
        %v943 = vadd.f32 %v927, 1.1920929e-07
        %v944 = vadd.f32 %v928, 1.1920929e-07
        %v945 = vadd.f32 %v929, 1.1920929e-07
        %v946 = vadd.f32 %v930, 1.1920929e-07
        %v947 = vrsqrt.pop %v931
        %v948 = vmul.f32 %v947, %v931
        %v949 = vmul.f32 %v948, %v947
        %v950 = vmul.f32 0.5, %v949
        %v951 = vsub.f32 1.5, %v950
        %v952 = vmul.f32 %v947, %v951
        %vm953 = vweird.f32 %v931
        %vm954 = vweird.f32 %v947
        %vm955 = vmor %vm953, %vm954
        %v956 = vsel %vm955, %v947, %v952
        %v957 = vrsqrt.pop %v932
        %v958 = vmul.f32 %v957, %v932
        %v959 = vmul.f32 %v958, %v957
        %v960 = vmul.f32 0.5, %v959
        %v961 = vsub.f32 1.5, %v960
        %v962 = vmul.f32 %v957, %v961
        %vm963 = vweird.f32 %v932
        %vm964 = vweird.f32 %v957
        %vm965 = vmor %vm963, %vm964
        %v966 = vsel %vm965, %v957, %v962
        %v967 = vrsqrt.pop %v933
        %v968 = vmul.f32 %v967, %v933
        %v969 = vmul.f32 %v968, %v967
        %v970 = vmul.f32 0.5, %v969
        %v971 = vsub.f32 1.5, %v970
        %v972 = vmul.f32 %v967, %v971
        %vm973 = vweird.f32 %v933
        %vm974 = vweird.f32 %v967
        %vm975 = vmor %vm973, %vm974
        %v976 = vsel %vm975, %v967, %v972
        %v977 = vrsqrt.pop %v934
        %v978 = vmul.f32 %v977, %v934
        %v979 = vmul.f32 %v978, %v977
        %v980 = vmul.f32 0.5, %v979
        %v981 = vsub.f32 1.5, %v980
        %v982 = vmul.f32 %v977, %v981
        %vm983 = vweird.f32 %v934
        %vm984 = vweird.f32 %v977
        %vm985 = vmor %vm983, %vm984
        %v986 = vsel %vm985, %v977, %v982
        %v987 = vrsqrt.pop %v935
        %v988 = vmul.f32 %v987, %v935
        %v989 = vmul.f32 %v988, %v987
        %v990 = vmul.f32 0.5, %v989
        %v991 = vsub.f32 1.5, %v990
        %v992 = vmul.f32 %v987, %v991
        %vm993 = vweird.f32 %v935
        %vm994 = vweird.f32 %v987
        %vm995 = vmor %vm993, %vm994
        %v996 = vsel %vm995, %v987, %v992
        %v997 = vrsqrt.pop %v936
        %v998 = vmul.f32 %v997, %v936
        %v999 = vmul.f32 %v998, %v997
        %v1000 = vmul.f32 0.5, %v999
        %v1001 = vsub.f32 1.5, %v1000
        %v1002 = vmul.f32 %v997, %v1001
        %vm1003 = vweird.f32 %v936
        %vm1004 = vweird.f32 %v997
        %vm1005 = vmor %vm1003, %vm1004
        %v1006 = vsel %vm1005, %v997, %v1002
        %v1007 = vrsqrt.pop %v937
        %v1008 = vmul.f32 %v1007, %v937
        %v1009 = vmul.f32 %v1008, %v1007
        %v1010 = vmul.f32 0.5, %v1009
        %v1011 = vsub.f32 1.5, %v1010
        %v1012 = vmul.f32 %v1007, %v1011
        %vm1013 = vweird.f32 %v937
        %vm1014 = vweird.f32 %v1007
        %vm1015 = vmor %vm1013, %vm1014
        %v1016 = vsel %vm1015, %v1007, %v1012
        %v1017 = vrsqrt.pop %v938
        %v1018 = vmul.f32 %v1017, %v938
        %v1019 = vmul.f32 %v1018, %v1017
        %v1020 = vmul.f32 0.5, %v1019
        %v1021 = vsub.f32 1.5, %v1020
        %v1022 = vmul.f32 %v1017, %v1021
        %vm1023 = vweird.f32 %v938
        %vm1024 = vweird.f32 %v1017
        %vm1025 = vmor %vm1023, %vm1024
        %v1026 = vsel %vm1025, %v1017, %v1022
        %v1027 = vrsqrt.pop %v939
        %v1028 = vmul.f32 %v1027, %v939
        %v1029 = vmul.f32 %v1028, %v1027
        %v1030 = vmul.f32 0.5, %v1029
        %v1031 = vsub.f32 1.5, %v1030
        %v1032 = vmul.f32 %v1027, %v1031
        %vm1033 = vweird.f32 %v939
        %vm1034 = vweird.f32 %v1027
        %vm1035 = vmor %vm1033, %vm1034
        %v1036 = vsel %vm1035, %v1027, %v1032
        %v1037 = vrsqrt.pop %v940
        %v1038 = vmul.f32 %v1037, %v940
        %v1039 = vmul.f32 %v1038, %v1037
        %v1040 = vmul.f32 0.5, %v1039
        %v1041 = vsub.f32 1.5, %v1040
        %v1042 = vmul.f32 %v1037, %v1041
        %vm1043 = vweird.f32 %v940
        %vm1044 = vweird.f32 %v1037
        %vm1045 = vmor %vm1043, %vm1044
        %v1046 = vsel %vm1045, %v1037, %v1042
        %v1047 = vrsqrt.pop %v941
        %v1048 = vmul.f32 %v1047, %v941
        %v1049 = vmul.f32 %v1048, %v1047
        %v1050 = vmul.f32 0.5, %v1049
        %v1051 = vsub.f32 1.5, %v1050
        %v1052 = vmul.f32 %v1047, %v1051
        %vm1053 = vweird.f32 %v941
        %vm1054 = vweird.f32 %v1047
        %vm1055 = vmor %vm1053, %vm1054
        %v1056 = vsel %vm1055, %v1047, %v1052
        %v1057 = vrsqrt.pop %v942
        %v1058 = vmul.f32 %v1057, %v942
        %v1059 = vmul.f32 %v1058, %v1057
        %v1060 = vmul.f32 0.5, %v1059
        %v1061 = vsub.f32 1.5, %v1060
        %v1062 = vmul.f32 %v1057, %v1061
        %vm1063 = vweird.f32 %v942
        %vm1064 = vweird.f32 %v1057
        %vm1065 = vmor %vm1063, %vm1064
        %v1066 = vsel %vm1065, %v1057, %v1062
        %v1067 = vrsqrt.pop %v943
        %v1068 = vmul.f32 %v1067, %v943
        %v1069 = vmul.f32 %v1068, %v1067
        %v1070 = vmul.f32 0.5, %v1069
        %v1071 = vsub.f32 1.5, %v1070
        %v1072 = vmul.f32 %v1067, %v1071
        %vm1073 = vweird.f32 %v943
        %vm1074 = vweird.f32 %v1067
        %vm1075 = vmor %vm1073, %vm1074
        %v1076 = vsel %vm1075, %v1067, %v1072
        %v1077 = vrsqrt.pop %v944
        %v1078 = vmul.f32 %v1077, %v944
        %v1079 = vmul.f32 %v1078, %v1077
        %v1080 = vmul.f32 0.5, %v1079
        %v1081 = vsub.f32 1.5, %v1080
        %v1082 = vmul.f32 %v1077, %v1081
        %vm1083 = vweird.f32 %v944
        %vm1084 = vweird.f32 %v1077
        %vm1085 = vmor %vm1083, %vm1084
        %v1086 = vsel %vm1085, %v1077, %v1082
        %v1087 = vrsqrt.pop %v945
        %v1088 = vmul.f32 %v1087, %v945
        %v1089 = vmul.f32 %v1088, %v1087
        %v1090 = vmul.f32 0.5, %v1089
        %v1091 = vsub.f32 1.5, %v1090
        %v1092 = vmul.f32 %v1087, %v1091
        %vm1093 = vweird.f32 %v945
        %vm1094 = vweird.f32 %v1087
        %vm1095 = vmor %vm1093, %vm1094
        %v1096 = vsel %vm1095, %v1087, %v1092
        %v1097 = vrsqrt.pop %v946
        %v1098 = vmul.f32 %v1097, %v946
        %v1099 = vmul.f32 %v1098, %v1097
        %v1100 = vmul.f32 0.5, %v1099
        %v1101 = vsub.f32 1.5, %v1100
        %v1102 = vmul.f32 %v1097, %v1101
        %vm1103 = vweird.f32 %v946
        %vm1104 = vweird.f32 %v1097
        %vm1105 = vmor %vm1103, %vm1104
        %v1106 = vsel %vm1105, %v1097, %v1102
        %v1107 = vmul.f32 %v796, %v956
        %v1108 = vmul.f32 %v797, %v956
        %v1109 = vmul.f32 %v798, %v966
        %v1110 = vmul.f32 %v799, %v966
        %v1111 = vmul.f32 %v800, %v976
        %v1112 = vmul.f32 %v801, %v976
        %v1113 = vmul.f32 %v802, %v986
        %v1114 = vmul.f32 %v803, %v986
        %v1115 = vmul.f32 %v804, %v996
        %v1116 = vmul.f32 %v805, %v996
        %v1117 = vmul.f32 %v806, %v1006
        %v1118 = vmul.f32 %v807, %v1006
        %v1119 = vmul.f32 %v808, %v1016
        %v1120 = vmul.f32 %v809, %v1016
        %v1121 = vmul.f32 %v810, %v1026
        %v1122 = vmul.f32 %v811, %v1026
        %v1123 = vmul.f32 %v812, %v1036
        %v1124 = vmul.f32 %v813, %v1036
        %v1125 = vmul.f32 %v814, %v1046
        %v1126 = vmul.f32 %v815, %v1046
        %v1127 = vmul.f32 %v816, %v1056
        %v1128 = vmul.f32 %v817, %v1056
        %v1129 = vmul.f32 %v818, %v1066
        %v1130 = vmul.f32 %v819, %v1066
        %v1131 = vmul.f32 %v820, %v1076
        %v1132 = vmul.f32 %v821, %v1076
        %v1133 = vmul.f32 %v822, %v1086
        %v1134 = vmul.f32 %v823, %v1086
        %v1135 = vmul.f32 %v824, %v1096
        %v1136 = vmul.f32 %v825, %v1096
        %v1137 = vmul.f32 %v826, %v1106
        %v1138 = vmul.f32 %v827, %v1106
        %v1139 = vpack.c.bf16 %v1109, %v1107
        %v1140 = vpack.c.bf16 %v1110, %v1108
        %v1141 = vpack.c.bf16 %v1113, %v1111
        %v1142 = vpack.c.bf16 %v1114, %v1112
        %v1143 = vpack.c.bf16 %v1117, %v1115
        %v1144 = vpack.c.bf16 %v1118, %v1116
        %v1145 = vpack.c.bf16 %v1121, %v1119
        %v1146 = vpack.c.bf16 %v1122, %v1120
        %v1147 = vpack.c.bf16 %v1125, %v1123
        %v1148 = vpack.c.bf16 %v1126, %v1124
        %v1149 = vpack.c.bf16 %v1129, %v1127
        %v1150 = vpack.c.bf16 %v1130, %v1128
        %v1151 = vpack.c.bf16 %v1133, %v1131
        %v1152 = vpack.c.bf16 %v1134, %v1132
        %v1153 = vpack.c.bf16 %v1137, %v1135
        %v1154 = vpack.c.bf16 %v1138, %v1136
        %v1155 = vld [vmem:[%s466] sm:$0xff]
        %v1156 = vld [vmem:[%s466 + $0x8] sm:$0xff]
        %v1157 = vld [vmem:[%s466 + $0x10] sm:$0xff]
        %v1158 = vld [vmem:[%s466 + $0x18] sm:$0xff]
        %v1159 = vld [vmem:[%s466 + $0x20] sm:$0xff]
        %v1160 = vld [vmem:[%s466 + $0x28] sm:$0xff]
        %v1161 = vld [vmem:[%s466 + $0x30] sm:$0xff]
        %v1162 = vld [vmem:[%s466 + $0x38] sm:$0xff]
        %v1163 = vld [vmem:[%s466 + $0x40] sm:$0xff]
        %v1164 = vld [vmem:[%s466 + $0x48] sm:$0xff]
        %v1165 = vld [vmem:[%s466 + $0x50] sm:$0xff]
        %v1166 = vld [vmem:[%s466 + $0x58] sm:$0xff]
        %v1167 = vld [vmem:[%s466 + $0x60] sm:$0xff]
        %v1168 = vld [vmem:[%s466 + $0x68] sm:$0xff]
        %v1169 = vld [vmem:[%s466 + $0x70] sm:$0xff]
        %v1170 = vld [vmem:[%s466 + $0x78] sm:$0xff]
        %v1171 = vld [vmem:[%s466 + $0x80] sm:$0xff]
        %v1172 = vld [vmem:[%s466 + $0x88] sm:$0xff]
        %v1173 = vld [vmem:[%s466 + $0x90] sm:$0xff]
        %v1174 = vld [vmem:[%s466 + $0x98] sm:$0xff]
        %v1175 = vld [vmem:[%s466 + $0xa0] sm:$0xff]
        %v1176 = vld [vmem:[%s466 + $0xa8] sm:$0xff]
        %v1177 = vld [vmem:[%s466 + $0xb0] sm:$0xff]
        %v1178 = vld [vmem:[%s466 + $0xb8] sm:$0xff]
        %v1179 = vld [vmem:[%s466 + $0xc0] sm:$0xff]
        %v1180 = vld [vmem:[%s466 + $0xc8] sm:$0xff]
        %v1181 = vld [vmem:[%s466 + $0xd0] sm:$0xff]
        %v1182 = vld [vmem:[%s466 + $0xd8] sm:$0xff]
        %v1183 = vld [vmem:[%s466 + $0xe0] sm:$0xff]
        %v1184 = vld [vmem:[%s466 + $0xe8] sm:$0xff]
        %v1185 = vld [vmem:[%s466 + $0xf0] sm:$0xff]
        %v1186 = vld [vmem:[%s466 + $0xf8] sm:$0xff]
        %v1187 = vld [vmem:[%s466 + $0x100] sm:$0xff]
        %v1188 = vld [vmem:[%s466 + $0x108] sm:$0xff]
        %v1189 = vld [vmem:[%s466 + $0x110] sm:$0xff]
        %v1190 = vld [vmem:[%s466 + $0x118] sm:$0xff]
        %v1191 = vld [vmem:[%s466 + $0x120] sm:$0xff]
        %v1192 = vld [vmem:[%s466 + $0x128] sm:$0xff]
        %v1193 = vld [vmem:[%s466 + $0x130] sm:$0xff]
        %v1194 = vld [vmem:[%s466 + $0x138] sm:$0xff]
        %v1195 = vld [vmem:[%s466 + $0x140] sm:$0xff]
        %v1196 = vld [vmem:[%s466 + $0x148] sm:$0xff]
        %v1197 = vld [vmem:[%s466 + $0x150] sm:$0xff]
        %v1198 = vld [vmem:[%s466 + $0x158] sm:$0xff]
        %v1199 = vld [vmem:[%s466 + $0x160] sm:$0xff]
        %v1200 = vld [vmem:[%s466 + $0x168] sm:$0xff]
        %v1201 = vld [vmem:[%s466 + $0x170] sm:$0xff]
        %v1202 = vld [vmem:[%s466 + $0x178] sm:$0xff]
        %v1203 = vld [vmem:[%s466 + $0x180] sm:$0xff]
        %v1204 = vld [vmem:[%s466 + $0x188] sm:$0xff]
        %v1205 = vld [vmem:[%s466 + $0x190] sm:$0xff]
        %v1206 = vld [vmem:[%s466 + $0x198] sm:$0xff]
        %v1207 = vld [vmem:[%s466 + $0x1a0] sm:$0xff]
        %v1208 = vld [vmem:[%s466 + $0x1a8] sm:$0xff]
        %v1209 = vld [vmem:[%s466 + $0x1b0] sm:$0xff]
        %v1210 = vld [vmem:[%s466 + $0x1b8] sm:$0xff]
        %v1211 = vld [vmem:[%s466 + $0x1c0] sm:$0xff]
        %v1212 = vld [vmem:[%s466 + $0x1c8] sm:$0xff]
        %v1213 = vld [vmem:[%s466 + $0x1d0] sm:$0xff]
        %v1214 = vld [vmem:[%s466 + $0x1d8] sm:$0xff]
        %v1215 = vld [vmem:[%s466 + $0x1e0] sm:$0xff]
        %v1216 = vld [vmem:[%s466 + $0x1e8] sm:$0xff]
        %v1217 = vld [vmem:[%s466 + $0x1f0] sm:$0xff]
        %v1218 = vld [vmem:[%s466 + $0x1f8] sm:$0xff]
        %v1219 = vld [vmem:[%s466 + $0x200] sm:$0xff]
        %v1220 = vld [vmem:[%s466 + $0x208] sm:$0xff]
        %v1221 = vld [vmem:[%s466 + $0x210] sm:$0xff]
        %v1222 = vld [vmem:[%s466 + $0x218] sm:$0xff]
        %v1223 = vld [vmem:[%s466 + $0x220] sm:$0xff]
        %v1224 = vld [vmem:[%s466 + $0x228] sm:$0xff]
        %v1225 = vld [vmem:[%s466 + $0x230] sm:$0xff]
        %v1226 = vld [vmem:[%s466 + $0x238] sm:$0xff]
        %v1227 = vld [vmem:[%s466 + $0x240] sm:$0xff]
        %v1228 = vld [vmem:[%s466 + $0x248] sm:$0xff]
        %v1229 = vld [vmem:[%s466 + $0x250] sm:$0xff]
        %v1230 = vld [vmem:[%s466 + $0x258] sm:$0xff]
        %v1231 = vld [vmem:[%s466 + $0x260] sm:$0xff]
        %v1232 = vld [vmem:[%s466 + $0x268] sm:$0xff]
        %v1233 = vld [vmem:[%s466 + $0x270] sm:$0xff]
        %v1234 = vld [vmem:[%s466 + $0x278] sm:$0xff]
        %v1235 = vld [vmem:[%s466 + $0x280] sm:$0xff]
        %v1236 = vld [vmem:[%s466 + $0x288] sm:$0xff]
        %v1237 = vld [vmem:[%s466 + $0x290] sm:$0xff]
        %v1238 = vld [vmem:[%s466 + $0x298] sm:$0xff]
        %v1239 = vld [vmem:[%s466 + $0x2a0] sm:$0xff]
        %v1240 = vld [vmem:[%s466 + $0x2a8] sm:$0xff]
        %v1241 = vld [vmem:[%s466 + $0x2b0] sm:$0xff]
        %v1242 = vld [vmem:[%s466 + $0x2b8] sm:$0xff]
        %v1243 = vld [vmem:[%s466 + $0x2c0] sm:$0xff]
        %v1244 = vld [vmem:[%s466 + $0x2c8] sm:$0xff]
        %v1245 = vld [vmem:[%s466 + $0x2d0] sm:$0xff]
        %v1246 = vld [vmem:[%s466 + $0x2d8] sm:$0xff]
        %v1247 = vld [vmem:[%s466 + $0x2e0] sm:$0xff]
        %v1248 = vld [vmem:[%s466 + $0x2e8] sm:$0xff]
        %v1249 = vld [vmem:[%s466 + $0x2f0] sm:$0xff]
        %v1250 = vld [vmem:[%s466 + $0x2f8] sm:$0xff]
        %v1347 = vunpack.c.l.b16 %v1155
        %v1348 = vunpack.c.h.b16 %v1155
        %v1349 = vunpack.c.l.b16 %v1156
        %v1350 = vunpack.c.h.b16 %v1156
        %v1351 = vunpack.c.l.b16 %v1157
        %v1352 = vunpack.c.h.b16 %v1157
        %v1353 = vunpack.c.l.b16 %v1158
        %v1354 = vunpack.c.h.b16 %v1158
        %v1355 = vunpack.c.l.b16 %v1159
        %v1356 = vunpack.c.h.b16 %v1159
        %v1357 = vunpack.c.l.b16 %v1160
        %v1358 = vunpack.c.h.b16 %v1160
        %v1359 = vunpack.c.l.b16 %v1161
        %v1360 = vunpack.c.h.b16 %v1161
        %v1361 = vunpack.c.l.b16 %v1162
        %v1362 = vunpack.c.h.b16 %v1162
        %v1363 = vunpack.c.l.b16 %v1163
        %v1364 = vunpack.c.h.b16 %v1163
        %v1365 = vunpack.c.l.b16 %v1164
        %v1366 = vunpack.c.h.b16 %v1164
        %v1367 = vunpack.c.l.b16 %v1165
        %v1368 = vunpack.c.h.b16 %v1165
        %v1369 = vunpack.c.l.b16 %v1166
        %v1370 = vunpack.c.h.b16 %v1166
        %v1371 = vunpack.c.l.b16 %v1167
        %v1372 = vunpack.c.h.b16 %v1167
        %v1373 = vunpack.c.l.b16 %v1168
        %v1374 = vunpack.c.h.b16 %v1168
        %v1375 = vunpack.c.l.b16 %v1169
        %v1376 = vunpack.c.h.b16 %v1169
        %v1377 = vunpack.c.l.b16 %v1170
        %v1378 = vunpack.c.h.b16 %v1170
        %v1379 = vunpack.c.l.b16 %v1171
        %v1380 = vunpack.c.h.b16 %v1171
        %v1381 = vunpack.c.l.b16 %v1172
        %v1382 = vunpack.c.h.b16 %v1172
        %v1383 = vunpack.c.l.b16 %v1173
        %v1384 = vunpack.c.h.b16 %v1173
        %v1385 = vunpack.c.l.b16 %v1174
        %v1386 = vunpack.c.h.b16 %v1174
        %v1387 = vunpack.c.l.b16 %v1175
        %v1388 = vunpack.c.h.b16 %v1175
        %v1389 = vunpack.c.l.b16 %v1176
        %v1390 = vunpack.c.h.b16 %v1176
        %v1391 = vunpack.c.l.b16 %v1177
        %v1392 = vunpack.c.h.b16 %v1177
        %v1393 = vunpack.c.l.b16 %v1178
        %v1394 = vunpack.c.h.b16 %v1178
        %v1395 = vunpack.c.l.b16 %v1179
        %v1396 = vunpack.c.h.b16 %v1179
        %v1397 = vunpack.c.l.b16 %v1180
        %v1398 = vunpack.c.h.b16 %v1180
        %v1399 = vunpack.c.l.b16 %v1181
        %v1400 = vunpack.c.h.b16 %v1181
        %v1401 = vunpack.c.l.b16 %v1182
        %v1402 = vunpack.c.h.b16 %v1182
        %v1403 = vunpack.c.l.b16 %v1183
        %v1404 = vunpack.c.h.b16 %v1183
        %v1405 = vunpack.c.l.b16 %v1184
        %v1406 = vunpack.c.h.b16 %v1184
        %v1407 = vunpack.c.l.b16 %v1185
        %v1408 = vunpack.c.h.b16 %v1185
        %v1409 = vunpack.c.l.b16 %v1186
        %v1410 = vunpack.c.h.b16 %v1186
        %v1411 = vunpack.c.l.b16 %v1187
        %v1412 = vunpack.c.h.b16 %v1187
        %v1413 = vunpack.c.l.b16 %v1188
        %v1414 = vunpack.c.h.b16 %v1188
        %v1415 = vunpack.c.l.b16 %v1189
        %v1416 = vunpack.c.h.b16 %v1189
        %v1417 = vunpack.c.l.b16 %v1190
        %v1418 = vunpack.c.h.b16 %v1190
        %v1419 = vunpack.c.l.b16 %v1191
        %v1420 = vunpack.c.h.b16 %v1191
        %v1421 = vunpack.c.l.b16 %v1192
        %v1422 = vunpack.c.h.b16 %v1192
        %v1423 = vunpack.c.l.b16 %v1193
        %v1424 = vunpack.c.h.b16 %v1193
        %v1425 = vunpack.c.l.b16 %v1194
        %v1426 = vunpack.c.h.b16 %v1194
        %v1427 = vunpack.c.l.b16 %v1195
        %v1428 = vunpack.c.h.b16 %v1195
        %v1429 = vunpack.c.l.b16 %v1196
        %v1430 = vunpack.c.h.b16 %v1196
        %v1431 = vunpack.c.l.b16 %v1197
        %v1432 = vunpack.c.h.b16 %v1197
        %v1433 = vunpack.c.l.b16 %v1198
        %v1434 = vunpack.c.h.b16 %v1198
        %v1435 = vunpack.c.l.b16 %v1199
        %v1436 = vunpack.c.h.b16 %v1199
        %v1437 = vunpack.c.l.b16 %v1200
        %v1438 = vunpack.c.h.b16 %v1200
        %v1439 = vunpack.c.l.b16 %v1201
        %v1440 = vunpack.c.h.b16 %v1201
        %v1441 = vunpack.c.l.b16 %v1202
        %v1442 = vunpack.c.h.b16 %v1202
        %v1443 = vunpack.c.l.b16 %v1203
        %v1444 = vunpack.c.h.b16 %v1203
        %v1445 = vunpack.c.l.b16 %v1204
        %v1446 = vunpack.c.h.b16 %v1204
        %v1447 = vunpack.c.l.b16 %v1205
        %v1448 = vunpack.c.h.b16 %v1205
        %v1449 = vunpack.c.l.b16 %v1206
        %v1450 = vunpack.c.h.b16 %v1206
        %v1451 = vunpack.c.l.b16 %v1207
        %v1452 = vunpack.c.h.b16 %v1207
        %v1453 = vunpack.c.l.b16 %v1208
        %v1454 = vunpack.c.h.b16 %v1208
        %v1455 = vunpack.c.l.b16 %v1209
        %v1456 = vunpack.c.h.b16 %v1209
        %v1457 = vunpack.c.l.b16 %v1210
        %v1458 = vunpack.c.h.b16 %v1210
        %v1459 = vunpack.c.l.b16 %v1211
        %v1460 = vunpack.c.h.b16 %v1211
        %v1461 = vunpack.c.l.b16 %v1212
        %v1462 = vunpack.c.h.b16 %v1212
        %v1463 = vunpack.c.l.b16 %v1213
        %v1464 = vunpack.c.h.b16 %v1213
        %v1465 = vunpack.c.l.b16 %v1214
        %v1466 = vunpack.c.h.b16 %v1214
        %v1467 = vunpack.c.l.b16 %v1215
        %v1468 = vunpack.c.h.b16 %v1215
        %v1469 = vunpack.c.l.b16 %v1216
        %v1470 = vunpack.c.h.b16 %v1216
        %v1471 = vunpack.c.l.b16 %v1217
        %v1472 = vunpack.c.h.b16 %v1217
        %v1473 = vunpack.c.l.b16 %v1218
        %v1474 = vunpack.c.h.b16 %v1218
        %v1475 = vunpack.c.l.b16 %v1219
        %v1476 = vunpack.c.h.b16 %v1219
        %v1477 = vunpack.c.l.b16 %v1220
        %v1478 = vunpack.c.h.b16 %v1220
        %v1479 = vunpack.c.l.b16 %v1221
        %v1480 = vunpack.c.h.b16 %v1221
        %v1481 = vunpack.c.l.b16 %v1222
        %v1482 = vunpack.c.h.b16 %v1222
        %v1483 = vunpack.c.l.b16 %v1223
        %v1484 = vunpack.c.h.b16 %v1223
        %v1485 = vunpack.c.l.b16 %v1224
        %v1486 = vunpack.c.h.b16 %v1224
        %v1487 = vunpack.c.l.b16 %v1225
        %v1488 = vunpack.c.h.b16 %v1225
        %v1489 = vunpack.c.l.b16 %v1226
        %v1490 = vunpack.c.h.b16 %v1226
        %v1491 = vunpack.c.l.b16 %v1227
        %v1492 = vunpack.c.h.b16 %v1227
        %v1493 = vunpack.c.l.b16 %v1228
        %v1494 = vunpack.c.h.b16 %v1228
        %v1495 = vunpack.c.l.b16 %v1229
        %v1496 = vunpack.c.h.b16 %v1229
        %v1497 = vunpack.c.l.b16 %v1230
        %v1498 = vunpack.c.h.b16 %v1230
        %v1499 = vunpack.c.l.b16 %v1231
        %v1500 = vunpack.c.h.b16 %v1231
        %v1501 = vunpack.c.l.b16 %v1232
        %v1502 = vunpack.c.h.b16 %v1232
        %v1503 = vunpack.c.l.b16 %v1233
        %v1504 = vunpack.c.h.b16 %v1233
        %v1505 = vunpack.c.l.b16 %v1234
        %v1506 = vunpack.c.h.b16 %v1234
        %v1507 = vunpack.c.l.b16 %v1235
        %v1508 = vunpack.c.h.b16 %v1235
        %v1509 = vunpack.c.l.b16 %v1236
        %v1510 = vunpack.c.h.b16 %v1236
        %v1511 = vunpack.c.l.b16 %v1237
        %v1512 = vunpack.c.h.b16 %v1237
        %v1513 = vunpack.c.l.b16 %v1238
        %v1514 = vunpack.c.h.b16 %v1238
        %v1515 = vunpack.c.l.b16 %v1239
        %v1516 = vunpack.c.h.b16 %v1239
        %v1517 = vunpack.c.l.b16 %v1240
        %v1518 = vunpack.c.h.b16 %v1240
        %v1519 = vunpack.c.l.b16 %v1241
        %v1520 = vunpack.c.h.b16 %v1241
        %v1521 = vunpack.c.l.b16 %v1242
        %v1522 = vunpack.c.h.b16 %v1242
        %v1523 = vunpack.c.l.b16 %v1243
        %v1524 = vunpack.c.h.b16 %v1243
        %v1525 = vunpack.c.l.b16 %v1244
        %v1526 = vunpack.c.h.b16 %v1244
        %v1527 = vunpack.c.l.b16 %v1245
        %v1528 = vunpack.c.h.b16 %v1245
        %v1529 = vunpack.c.l.b16 %v1246
        %v1530 = vunpack.c.h.b16 %v1246
        %v1531 = vunpack.c.l.b16 %v1247
        %v1532 = vunpack.c.h.b16 %v1247
        %v1533 = vunpack.c.l.b16 %v1248
        %v1534 = vunpack.c.h.b16 %v1248
        %v1535 = vunpack.c.l.b16 %v1249
        %v1536 = vunpack.c.h.b16 %v1249
        %v1537 = vunpack.c.l.b16 %v1250
        %v1538 = vunpack.c.h.b16 %v1250
        %v1539 = vpack.c.b16 %v1353, %v1347
        %v1540 = vpack.c.b16 %v1354, %v1348
        %v1541 = vpack.c.b16 %v1355, %v1349
        %v1542 = vpack.c.b16 %v1356, %v1350
        %v1543 = vpack.c.b16 %v1357, %v1351
        %v1544 = vpack.c.b16 %v1358, %v1352
        %v1545 = vpack.c.b16 %v1365, %v1359
        %v1546 = vpack.c.b16 %v1366, %v1360
        %v1547 = vpack.c.b16 %v1367, %v1361
        %v1548 = vpack.c.b16 %v1368, %v1362
        %v1549 = vpack.c.b16 %v1369, %v1363
        %v1550 = vpack.c.b16 %v1370, %v1364
        %v1551 = vpack.c.b16 %v1377, %v1371
        %v1552 = vpack.c.b16 %v1378, %v1372
        %v1553 = vpack.c.b16 %v1379, %v1373
        %v1554 = vpack.c.b16 %v1380, %v1374
        %v1555 = vpack.c.b16 %v1381, %v1375
        %v1556 = vpack.c.b16 %v1382, %v1376
        %v1557 = vpack.c.b16 %v1389, %v1383
        %v1558 = vpack.c.b16 %v1390, %v1384
        %v1559 = vpack.c.b16 %v1391, %v1385
        %v1560 = vpack.c.b16 %v1392, %v1386
        %v1561 = vpack.c.b16 %v1393, %v1387
        %v1562 = vpack.c.b16 %v1394, %v1388
        %v1563 = vpack.c.b16 %v1401, %v1395
        %v1564 = vpack.c.b16 %v1402, %v1396
        %v1565 = vpack.c.b16 %v1403, %v1397
        %v1566 = vpack.c.b16 %v1404, %v1398
        %v1567 = vpack.c.b16 %v1405, %v1399
        %v1568 = vpack.c.b16 %v1406, %v1400
        %v1569 = vpack.c.b16 %v1413, %v1407
        %v1570 = vpack.c.b16 %v1414, %v1408
        %v1571 = vpack.c.b16 %v1415, %v1409
        %v1572 = vpack.c.b16 %v1416, %v1410
        %v1573 = vpack.c.b16 %v1417, %v1411
        %v1574 = vpack.c.b16 %v1418, %v1412
        %v1575 = vpack.c.b16 %v1425, %v1419
        %v1576 = vpack.c.b16 %v1426, %v1420
        %v1577 = vpack.c.b16 %v1427, %v1421
        %v1578 = vpack.c.b16 %v1428, %v1422
        %v1579 = vpack.c.b16 %v1429, %v1423
        %v1580 = vpack.c.b16 %v1430, %v1424
        %v1581 = vpack.c.b16 %v1437, %v1431
        %v1582 = vpack.c.b16 %v1438, %v1432
        %v1583 = vpack.c.b16 %v1439, %v1433
        %v1584 = vpack.c.b16 %v1440, %v1434
        %v1585 = vpack.c.b16 %v1441, %v1435
        %v1586 = vpack.c.b16 %v1442, %v1436
        %v1587 = vpack.c.b16 %v1449, %v1443
        %v1588 = vpack.c.b16 %v1450, %v1444
        %v1589 = vpack.c.b16 %v1451, %v1445
        %v1590 = vpack.c.b16 %v1452, %v1446
        %v1591 = vpack.c.b16 %v1453, %v1447
        %v1592 = vpack.c.b16 %v1454, %v1448
        %v1593 = vpack.c.b16 %v1461, %v1455
        %v1594 = vpack.c.b16 %v1462, %v1456
        %v1595 = vpack.c.b16 %v1463, %v1457
        %v1596 = vpack.c.b16 %v1464, %v1458
        %v1597 = vpack.c.b16 %v1465, %v1459
        %v1598 = vpack.c.b16 %v1466, %v1460
        %v1599 = vpack.c.b16 %v1473, %v1467
        %v1600 = vpack.c.b16 %v1474, %v1468
        %v1601 = vpack.c.b16 %v1475, %v1469
        %v1602 = vpack.c.b16 %v1476, %v1470
        %v1603 = vpack.c.b16 %v1477, %v1471
        %v1604 = vpack.c.b16 %v1478, %v1472
        %v1605 = vpack.c.b16 %v1485, %v1479
        %v1606 = vpack.c.b16 %v1486, %v1480
        %v1607 = vpack.c.b16 %v1487, %v1481
        %v1608 = vpack.c.b16 %v1488, %v1482
        %v1609 = vpack.c.b16 %v1489, %v1483
        %v1610 = vpack.c.b16 %v1490, %v1484
        %v1611 = vpack.c.b16 %v1497, %v1491
        %v1612 = vpack.c.b16 %v1498, %v1492
        %v1613 = vpack.c.b16 %v1499, %v1493
        %v1614 = vpack.c.b16 %v1500, %v1494
        %v1615 = vpack.c.b16 %v1501, %v1495
        %v1616 = vpack.c.b16 %v1502, %v1496
        %v1617 = vpack.c.b16 %v1509, %v1503
        %v1618 = vpack.c.b16 %v1510, %v1504
        %v1619 = vpack.c.b16 %v1511, %v1505
        %v1620 = vpack.c.b16 %v1512, %v1506
        %v1621 = vpack.c.b16 %v1513, %v1507
        %v1622 = vpack.c.b16 %v1514, %v1508
        %v1623 = vpack.c.b16 %v1521, %v1515
        %v1624 = vpack.c.b16 %v1522, %v1516
        %v1625 = vpack.c.b16 %v1523, %v1517
        %v1626 = vpack.c.b16 %v1524, %v1518
        %v1627 = vpack.c.b16 %v1525, %v1519
        %v1628 = vpack.c.b16 %v1526, %v1520
        %v1629 = vpack.c.b16 %v1533, %v1527
        %v1630 = vpack.c.b16 %v1534, %v1528
        %v1631 = vpack.c.b16 %v1535, %v1529
        %v1632 = vpack.c.b16 %v1536, %v1530
        %v1633 = vpack.c.b16 %v1537, %v1531
        %v1634 = vpack.c.b16 %v1538, %v1532
        %1731 = vmatpush.bf16.msra.mxu0 %v1581
        %1732 = vmatpush.bf16.msra.mxu0 %v1575
        %1733 = vmatpush.bf16.msra.mxu0 %v1569
        %1734 = vmatpush.bf16.msra.mxu0 %v1563
        %1735 = vmatpush.bf16.msra.mxu0 %v1557
        %1736 = vmatpush.bf16.msra.mxu0 %v1551
        %1737 = vmatpush.bf16.msra.mxu0 %v1545
        %1738 = vmatpush.bf16.msra.mxu0 %v1539
        %1739 = vmatmul.bf16.gmra.mxu0 %v1139
        %v1740 = vpop.f32.mrf.mxu0
        %v1741 = vadd.f32 0.0, %v1740
        %v1742 = vpop.f32.mrf.mxu0
        %v1743 = vadd.f32 0.0, %v1742
        %1744 = vmatmul.bf16.gmra.mxu0 %v1141
        %v1745 = vpop.f32.mrf.mxu0
        %v1746 = vadd.f32 0.0, %v1745
        %v1747 = vpop.f32.mrf.mxu0
        %v1748 = vadd.f32 0.0, %v1747
        %1749 = vmatmul.bf16.gmra.mxu0 %v1143
        %v1750 = vpop.f32.mrf.mxu0
        %v1751 = vadd.f32 0.0, %v1750
        %v1752 = vpop.f32.mrf.mxu0
        %v1753 = vadd.f32 0.0, %v1752
        %1754 = vmatmul.bf16.gmra.mxu0 %v1145
        %v1755 = vpop.f32.mrf.mxu0
        %v1756 = vadd.f32 0.0, %v1755
        %v1757 = vpop.f32.mrf.mxu0
        %v1758 = vadd.f32 0.0, %v1757
        %1759 = vmatmul.bf16.gmra.mxu0 %v1147
        %v1760 = vpop.f32.mrf.mxu0
        %v1761 = vadd.f32 0.0, %v1760
        %v1762 = vpop.f32.mrf.mxu0
        %v1763 = vadd.f32 0.0, %v1762
        %1764 = vmatmul.bf16.gmra.mxu0 %v1149
        %v1765 = vpop.f32.mrf.mxu0
        %v1766 = vadd.f32 0.0, %v1765
        %v1767 = vpop.f32.mrf.mxu0
        %v1768 = vadd.f32 0.0, %v1767
        %1769 = vmatmul.bf16.gmra.mxu0 %v1151
        %v1770 = vpop.f32.mrf.mxu0
        %v1771 = vadd.f32 0.0, %v1770
        %v1772 = vpop.f32.mrf.mxu0
        %v1773 = vadd.f32 0.0, %v1772
        %1774 = vmatmul.bf16.gmra.mxu0 %v1153
        %v1775 = vpop.f32.mrf.mxu0
        %v1776 = vadd.f32 0.0, %v1775
        %v1777 = vpop.f32.mrf.mxu0
        %v1778 = vadd.f32 0.0, %v1777
        %1779 = vdwg.mxu0
        %1780 = vmatpush.bf16.msra.mxu0 %v1629
        %1781 = vmatpush.bf16.msra.mxu0 %v1623
        %1782 = vmatpush.bf16.msra.mxu0 %v1617
        %1783 = vmatpush.bf16.msra.mxu0 %v1611
        %1784 = vmatpush.bf16.msra.mxu0 %v1605
        %1785 = vmatpush.bf16.msra.mxu0 %v1599
        %1786 = vmatpush.bf16.msra.mxu0 %v1593
        %1787 = vmatpush.bf16.msra.mxu0 %v1587
        %1788 = vmatmul.bf16.gmra.mxu0 %v1140
        %v1789 = vpop.f32.mrf.mxu0
        %v1790 = vadd.f32 %v1741, %v1789
        %v1791 = vpop.f32.mrf.mxu0
        %v1792 = vadd.f32 %v1743, %v1791
        %1793 = vmatmul.bf16.gmra.mxu0 %v1142
        %v1794 = vpop.f32.mrf.mxu0
        %v1795 = vadd.f32 %v1746, %v1794
        %v1796 = vpop.f32.mrf.mxu0
        %v1797 = vadd.f32 %v1748, %v1796
        %1798 = vmatmul.bf16.gmra.mxu0 %v1144
        %v1799 = vpop.f32.mrf.mxu0
        %v1800 = vadd.f32 %v1751, %v1799
        %v1801 = vpop.f32.mrf.mxu0
        %v1802 = vadd.f32 %v1753, %v1801
        %1803 = vmatmul.bf16.gmra.mxu0 %v1146
        %v1804 = vpop.f32.mrf.mxu0
        %v1805 = vadd.f32 %v1756, %v1804
        %v1806 = vpop.f32.mrf.mxu0
        %v1807 = vadd.f32 %v1758, %v1806
        %1808 = vmatmul.bf16.gmra.mxu0 %v1148
        %v1809 = vpop.f32.mrf.mxu0
        %v1810 = vadd.f32 %v1761, %v1809
        %v1811 = vpop.f32.mrf.mxu0
        %v1812 = vadd.f32 %v1763, %v1811
        %1813 = vmatmul.bf16.gmra.mxu0 %v1150
        %v1814 = vpop.f32.mrf.mxu0
        %v1815 = vadd.f32 %v1766, %v1814
        %v1816 = vpop.f32.mrf.mxu0
        %v1817 = vadd.f32 %v1768, %v1816
        %1818 = vmatmul.bf16.gmra.mxu0 %v1152
        %v1819 = vpop.f32.mrf.mxu0
        %v1820 = vadd.f32 %v1771, %v1819
        %v1821 = vpop.f32.mrf.mxu0
        %v1822 = vadd.f32 %v1773, %v1821
        %1823 = vmatmul.bf16.gmra.mxu0 %v1154
        %v1824 = vpop.f32.mrf.mxu0
        %v1825 = vadd.f32 %v1776, %v1824
        %v1826 = vpop.f32.mrf.mxu0
        %v1827 = vadd.f32 %v1778, %v1826
        %1828 = vdwg.mxu0
        %1829 = vmatpush.bf16.msra.mxu0 %v1582
        %1830 = vmatpush.bf16.msra.mxu0 %v1576
        %1831 = vmatpush.bf16.msra.mxu0 %v1570
        %1832 = vmatpush.bf16.msra.mxu0 %v1564
        %1833 = vmatpush.bf16.msra.mxu0 %v1558
        %1834 = vmatpush.bf16.msra.mxu0 %v1552
        %1835 = vmatpush.bf16.msra.mxu0 %v1546
        %1836 = vmatpush.bf16.msra.mxu0 %v1540
        %1837 = vmatmul.bf16.gmra.mxu0 %v1139
        %v1838 = vpop.f32.mrf.mxu0
        %v1839 = vadd.f32 0.0, %v1838
        %v1840 = vpop.f32.mrf.mxu0
        %v1841 = vadd.f32 0.0, %v1840
        %1842 = vmatmul.bf16.gmra.mxu0 %v1141
        %v1843 = vpop.f32.mrf.mxu0
        %v1844 = vadd.f32 0.0, %v1843
        %v1845 = vpop.f32.mrf.mxu0
        %v1846 = vadd.f32 0.0, %v1845
        %1847 = vmatmul.bf16.gmra.mxu0 %v1143
        %v1848 = vpop.f32.mrf.mxu0
        %v1849 = vadd.f32 0.0, %v1848
        %v1850 = vpop.f32.mrf.mxu0
        %v1851 = vadd.f32 0.0, %v1850
        %1852 = vmatmul.bf16.gmra.mxu0 %v1145
        %v1853 = vpop.f32.mrf.mxu0
        %v1854 = vadd.f32 0.0, %v1853
        %v1855 = vpop.f32.mrf.mxu0
        %v1856 = vadd.f32 0.0, %v1855
        %1857 = vmatmul.bf16.gmra.mxu0 %v1147
        %v1858 = vpop.f32.mrf.mxu0
        %v1859 = vadd.f32 0.0, %v1858
        %v1860 = vpop.f32.mrf.mxu0
        %v1861 = vadd.f32 0.0, %v1860
        %1862 = vmatmul.bf16.gmra.mxu0 %v1149
        %v1863 = vpop.f32.mrf.mxu0
        %v1864 = vadd.f32 0.0, %v1863
        %v1865 = vpop.f32.mrf.mxu0
        %v1866 = vadd.f32 0.0, %v1865
        %1867 = vmatmul.bf16.gmra.mxu0 %v1151
        %v1868 = vpop.f32.mrf.mxu0
        %v1869 = vadd.f32 0.0, %v1868
        %v1870 = vpop.f32.mrf.mxu0
        %v1871 = vadd.f32 0.0, %v1870
        %1872 = vmatmul.bf16.gmra.mxu0 %v1153
        %v1873 = vpop.f32.mrf.mxu0
        %v1874 = vadd.f32 0.0, %v1873
        %v1875 = vpop.f32.mrf.mxu0
        %v1876 = vadd.f32 0.0, %v1875
        %1877 = vdwg.mxu0
        %1878 = vmatpush.bf16.msra.mxu0 %v1630
        %1879 = vmatpush.bf16.msra.mxu0 %v1624
        %1880 = vmatpush.bf16.msra.mxu0 %v1618
        %1881 = vmatpush.bf16.msra.mxu0 %v1612
        %1882 = vmatpush.bf16.msra.mxu0 %v1606
        %1883 = vmatpush.bf16.msra.mxu0 %v1600
        %1884 = vmatpush.bf16.msra.mxu0 %v1594
        %1885 = vmatpush.bf16.msra.mxu0 %v1588
        %1886 = vmatmul.bf16.gmra.mxu0 %v1140
        %v1887 = vpop.f32.mrf.mxu0
        %v1888 = vadd.f32 %v1839, %v1887
        %v1889 = vpop.f32.mrf.mxu0
        %v1890 = vadd.f32 %v1841, %v1889
        %1891 = vmatmul.bf16.gmra.mxu0 %v1142
        %v1892 = vpop.f32.mrf.mxu0
        %v1893 = vadd.f32 %v1844, %v1892
        %v1894 = vpop.f32.mrf.mxu0
        %v1895 = vadd.f32 %v1846, %v1894
        %1896 = vmatmul.bf16.gmra.mxu0 %v1144
        %v1897 = vpop.f32.mrf.mxu0
        %v1898 = vadd.f32 %v1849, %v1897
        %v1899 = vpop.f32.mrf.mxu0
        %v1900 = vadd.f32 %v1851, %v1899
        %1901 = vmatmul.bf16.gmra.mxu0 %v1146
        %v1902 = vpop.f32.mrf.mxu0
        %v1903 = vadd.f32 %v1854, %v1902
        %v1904 = vpop.f32.mrf.mxu0
        %v1905 = vadd.f32 %v1856, %v1904
        %1906 = vmatmul.bf16.gmra.mxu0 %v1148
        %v1907 = vpop.f32.mrf.mxu0
        %v1908 = vadd.f32 %v1859, %v1907
        %v1909 = vpop.f32.mrf.mxu0
        %v1910 = vadd.f32 %v1861, %v1909
        %1911 = vmatmul.bf16.gmra.mxu0 %v1150
        %v1912 = vpop.f32.mrf.mxu0
        %v1913 = vadd.f32 %v1864, %v1912
        %v1914 = vpop.f32.mrf.mxu0
        %v1915 = vadd.f32 %v1866, %v1914
        %1916 = vmatmul.bf16.gmra.mxu0 %v1152
        %v1917 = vpop.f32.mrf.mxu0
        %v1918 = vadd.f32 %v1869, %v1917
        %v1919 = vpop.f32.mrf.mxu0
        %v1920 = vadd.f32 %v1871, %v1919
        %1921 = vmatmul.bf16.gmra.mxu0 %v1154
        %v1922 = vpop.f32.mrf.mxu0
        %v1923 = vadd.f32 %v1874, %v1922
        %v1924 = vpop.f32.mrf.mxu0
        %v1925 = vadd.f32 %v1876, %v1924
        %1926 = vdwg.mxu0
        %1927 = vmatpush.bf16.msra.mxu0 %v1583
        %1928 = vmatpush.bf16.msra.mxu0 %v1577
        %1929 = vmatpush.bf16.msra.mxu0 %v1571
        %1930 = vmatpush.bf16.msra.mxu0 %v1565
        %1931 = vmatpush.bf16.msra.mxu0 %v1559
        %1932 = vmatpush.bf16.msra.mxu0 %v1553
        %1933 = vmatpush.bf16.msra.mxu0 %v1547
        %1934 = vmatpush.bf16.msra.mxu0 %v1541
        %1935 = vmatmul.bf16.gmra.mxu0 %v1139
        %v1936 = vpop.f32.mrf.mxu0
        %v1937 = vadd.f32 0.0, %v1936
        %v1938 = vpop.f32.mrf.mxu0
        %v1939 = vadd.f32 0.0, %v1938
        %1940 = vmatmul.bf16.gmra.mxu0 %v1141
        %v1941 = vpop.f32.mrf.mxu0
        %v1942 = vadd.f32 0.0, %v1941
        %v1943 = vpop.f32.mrf.mxu0
        %v1944 = vadd.f32 0.0, %v1943
        %1945 = vmatmul.bf16.gmra.mxu0 %v1143
        %v1946 = vpop.f32.mrf.mxu0
        %v1947 = vadd.f32 0.0, %v1946
        %v1948 = vpop.f32.mrf.mxu0
        %v1949 = vadd.f32 0.0, %v1948
        %1950 = vmatmul.bf16.gmra.mxu0 %v1145
        %v1951 = vpop.f32.mrf.mxu0
        %v1952 = vadd.f32 0.0, %v1951
        %v1953 = vpop.f32.mrf.mxu0
        %v1954 = vadd.f32 0.0, %v1953
        %1955 = vmatmul.bf16.gmra.mxu0 %v1147
        %v1956 = vpop.f32.mrf.mxu0
        %v1957 = vadd.f32 0.0, %v1956
        %v1958 = vpop.f32.mrf.mxu0
        %v1959 = vadd.f32 0.0, %v1958
        %1960 = vmatmul.bf16.gmra.mxu0 %v1149
        %v1961 = vpop.f32.mrf.mxu0
        %v1962 = vadd.f32 0.0, %v1961
        %v1963 = vpop.f32.mrf.mxu0
        %v1964 = vadd.f32 0.0, %v1963
        %1965 = vmatmul.bf16.gmra.mxu0 %v1151
        %v1966 = vpop.f32.mrf.mxu0
        %v1967 = vadd.f32 0.0, %v1966
        %v1968 = vpop.f32.mrf.mxu0
        %v1969 = vadd.f32 0.0, %v1968
        %1970 = vmatmul.bf16.gmra.mxu0 %v1153
        %v1971 = vpop.f32.mrf.mxu0
        %v1972 = vadd.f32 0.0, %v1971
        %v1973 = vpop.f32.mrf.mxu0
        %v1974 = vadd.f32 0.0, %v1973
        %1975 = vdwg.mxu0
        %1976 = vmatpush.bf16.msra.mxu0 %v1631
        %1977 = vmatpush.bf16.msra.mxu0 %v1625
        %1978 = vmatpush.bf16.msra.mxu0 %v1619
        %1979 = vmatpush.bf16.msra.mxu0 %v1613
        %1980 = vmatpush.bf16.msra.mxu0 %v1607
        %1981 = vmatpush.bf16.msra.mxu0 %v1601
        %1982 = vmatpush.bf16.msra.mxu0 %v1595
        %1983 = vmatpush.bf16.msra.mxu0 %v1589
        %1984 = vmatmul.bf16.gmra.mxu0 %v1140
        %v1985 = vpop.f32.mrf.mxu0
        %v1986 = vadd.f32 %v1937, %v1985
        %v1987 = vpop.f32.mrf.mxu0
        %v1988 = vadd.f32 %v1939, %v1987
        %1989 = vmatmul.bf16.gmra.mxu0 %v1142
        %v1990 = vpop.f32.mrf.mxu0
        %v1991 = vadd.f32 %v1942, %v1990
        %v1992 = vpop.f32.mrf.mxu0
        %v1993 = vadd.f32 %v1944, %v1992
        %1994 = vmatmul.bf16.gmra.mxu0 %v1144
        %v1995 = vpop.f32.mrf.mxu0
        %v1996 = vadd.f32 %v1947, %v1995
        %v1997 = vpop.f32.mrf.mxu0
        %v1998 = vadd.f32 %v1949, %v1997
        %1999 = vmatmul.bf16.gmra.mxu0 %v1146
        %v2000 = vpop.f32.mrf.mxu0
        %v2001 = vadd.f32 %v1952, %v2000
        %v2002 = vpop.f32.mrf.mxu0
        %v2003 = vadd.f32 %v1954, %v2002
        %2004 = vmatmul.bf16.gmra.mxu0 %v1148
        %v2005 = vpop.f32.mrf.mxu0
        %v2006 = vadd.f32 %v1957, %v2005
        %v2007 = vpop.f32.mrf.mxu0
        %v2008 = vadd.f32 %v1959, %v2007
        %2009 = vmatmul.bf16.gmra.mxu0 %v1150
        %v2010 = vpop.f32.mrf.mxu0
        %v2011 = vadd.f32 %v1962, %v2010
        %v2012 = vpop.f32.mrf.mxu0
        %v2013 = vadd.f32 %v1964, %v2012
        %2014 = vmatmul.bf16.gmra.mxu0 %v1152
        %v2015 = vpop.f32.mrf.mxu0
        %v2016 = vadd.f32 %v1967, %v2015
        %v2017 = vpop.f32.mrf.mxu0
        %v2018 = vadd.f32 %v1969, %v2017
        %2019 = vmatmul.bf16.gmra.mxu0 %v1154
        %v2020 = vpop.f32.mrf.mxu0
        %v2021 = vadd.f32 %v1972, %v2020
        %v2022 = vpop.f32.mrf.mxu0
        %v2023 = vadd.f32 %v1974, %v2022
        %2024 = vdwg.mxu0
        %2025 = vmatpush.bf16.msra.mxu0 %v1584
        %2026 = vmatpush.bf16.msra.mxu0 %v1578
        %2027 = vmatpush.bf16.msra.mxu0 %v1572
        %2028 = vmatpush.bf16.msra.mxu0 %v1566
        %2029 = vmatpush.bf16.msra.mxu0 %v1560
        %2030 = vmatpush.bf16.msra.mxu0 %v1554
        %2031 = vmatpush.bf16.msra.mxu0 %v1548
        %2032 = vmatpush.bf16.msra.mxu0 %v1542
        %2033 = vmatmul.bf16.gmra.mxu0 %v1139
        %v2034 = vpop.f32.mrf.mxu0
        %v2035 = vadd.f32 0.0, %v2034
        %v2036 = vpop.f32.mrf.mxu0
        %v2037 = vadd.f32 0.0, %v2036
        %2038 = vmatmul.bf16.gmra.mxu0 %v1141
        %v2039 = vpop.f32.mrf.mxu0
        %v2040 = vadd.f32 0.0, %v2039
        %v2041 = vpop.f32.mrf.mxu0
        %v2042 = vadd.f32 0.0, %v2041
        %2043 = vmatmul.bf16.gmra.mxu0 %v1143
        %v2044 = vpop.f32.mrf.mxu0
        %v2045 = vadd.f32 0.0, %v2044
        %v2046 = vpop.f32.mrf.mxu0
        %v2047 = vadd.f32 0.0, %v2046
        %2048 = vmatmul.bf16.gmra.mxu0 %v1145
        %v2049 = vpop.f32.mrf.mxu0
        %v2050 = vadd.f32 0.0, %v2049
        %v2051 = vpop.f32.mrf.mxu0
        %v2052 = vadd.f32 0.0, %v2051
        %2053 = vmatmul.bf16.gmra.mxu0 %v1147
        %v2054 = vpop.f32.mrf.mxu0
        %v2055 = vadd.f32 0.0, %v2054
        %v2056 = vpop.f32.mrf.mxu0
        %v2057 = vadd.f32 0.0, %v2056
        %2058 = vmatmul.bf16.gmra.mxu0 %v1149
        %v2059 = vpop.f32.mrf.mxu0
        %v2060 = vadd.f32 0.0, %v2059
        %v2061 = vpop.f32.mrf.mxu0
        %v2062 = vadd.f32 0.0, %v2061
        %2063 = vmatmul.bf16.gmra.mxu0 %v1151
        %v2064 = vpop.f32.mrf.mxu0
        %v2065 = vadd.f32 0.0, %v2064
        %v2066 = vpop.f32.mrf.mxu0
        %v2067 = vadd.f32 0.0, %v2066
        %2068 = vmatmul.bf16.gmra.mxu0 %v1153
        %v2069 = vpop.f32.mrf.mxu0
        %v2070 = vadd.f32 0.0, %v2069
        %v2071 = vpop.f32.mrf.mxu0
        %v2072 = vadd.f32 0.0, %v2071
        %2073 = vdwg.mxu0
        %2074 = vmatpush.bf16.msra.mxu0 %v1632
        %2075 = vmatpush.bf16.msra.mxu0 %v1626
        %2076 = vmatpush.bf16.msra.mxu0 %v1620
        %2077 = vmatpush.bf16.msra.mxu0 %v1614
        %2078 = vmatpush.bf16.msra.mxu0 %v1608
        %2079 = vmatpush.bf16.msra.mxu0 %v1602
        %2080 = vmatpush.bf16.msra.mxu0 %v1596
        %2081 = vmatpush.bf16.msra.mxu0 %v1590
        %2082 = vmatmul.bf16.gmra.mxu0 %v1140
        %v2083 = vpop.f32.mrf.mxu0
        %v2084 = vadd.f32 %v2035, %v2083
        %v2085 = vpop.f32.mrf.mxu0
        %v2086 = vadd.f32 %v2037, %v2085
        %2087 = vmatmul.bf16.gmra.mxu0 %v1142
        %v2088 = vpop.f32.mrf.mxu0
        %v2089 = vadd.f32 %v2040, %v2088
        %v2090 = vpop.f32.mrf.mxu0
        %v2091 = vadd.f32 %v2042, %v2090
        %2092 = vmatmul.bf16.gmra.mxu0 %v1144
        %v2093 = vpop.f32.mrf.mxu0
        %v2094 = vadd.f32 %v2045, %v2093
        %v2095 = vpop.f32.mrf.mxu0
        %v2096 = vadd.f32 %v2047, %v2095
        %2097 = vmatmul.bf16.gmra.mxu0 %v1146
        %v2098 = vpop.f32.mrf.mxu0
        %v2099 = vadd.f32 %v2050, %v2098
        %v2100 = vpop.f32.mrf.mxu0
        %v2101 = vadd.f32 %v2052, %v2100
        %2102 = vmatmul.bf16.gmra.mxu0 %v1148
        %v2103 = vpop.f32.mrf.mxu0
        %v2104 = vadd.f32 %v2055, %v2103
        %v2105 = vpop.f32.mrf.mxu0
        %v2106 = vadd.f32 %v2057, %v2105
        %2107 = vmatmul.bf16.gmra.mxu0 %v1150
        %v2108 = vpop.f32.mrf.mxu0
        %v2109 = vadd.f32 %v2060, %v2108
        %v2110 = vpop.f32.mrf.mxu0
        %v2111 = vadd.f32 %v2062, %v2110
        %2112 = vmatmul.bf16.gmra.mxu0 %v1152
        %v2113 = vpop.f32.mrf.mxu0
        %v2114 = vadd.f32 %v2065, %v2113
        %v2115 = vpop.f32.mrf.mxu0
        %v2116 = vadd.f32 %v2067, %v2115
        %2117 = vmatmul.bf16.gmra.mxu0 %v1154
        %v2118 = vpop.f32.mrf.mxu0
        %v2119 = vadd.f32 %v2070, %v2118
        %v2120 = vpop.f32.mrf.mxu0
        %v2121 = vadd.f32 %v2072, %v2120
        %2122 = vdwg.mxu0
        %2123 = vmatpush.bf16.msra.mxu0 %v1585
        %2124 = vmatpush.bf16.msra.mxu0 %v1579
        %2125 = vmatpush.bf16.msra.mxu0 %v1573
        %2126 = vmatpush.bf16.msra.mxu0 %v1567
        %2127 = vmatpush.bf16.msra.mxu0 %v1561
        %2128 = vmatpush.bf16.msra.mxu0 %v1555
        %2129 = vmatpush.bf16.msra.mxu0 %v1549
        %2130 = vmatpush.bf16.msra.mxu0 %v1543
        %2131 = vmatmul.bf16.gmra.mxu0 %v1139
        %v2132 = vpop.f32.mrf.mxu0
        %v2133 = vadd.f32 0.0, %v2132
        %v2134 = vpop.f32.mrf.mxu0
        %v2135 = vadd.f32 0.0, %v2134
        %2136 = vmatmul.bf16.gmra.mxu0 %v1141
        %v2137 = vpop.f32.mrf.mxu0
        %v2138 = vadd.f32 0.0, %v2137
        %v2139 = vpop.f32.mrf.mxu0
        %v2140 = vadd.f32 0.0, %v2139
        %2141 = vmatmul.bf16.gmra.mxu0 %v1143
        %v2142 = vpop.f32.mrf.mxu0
        %v2143 = vadd.f32 0.0, %v2142
        %v2144 = vpop.f32.mrf.mxu0
        %v2145 = vadd.f32 0.0, %v2144
        %2146 = vmatmul.bf16.gmra.mxu0 %v1145
        %v2147 = vpop.f32.mrf.mxu0
        %v2148 = vadd.f32 0.0, %v2147
        %v2149 = vpop.f32.mrf.mxu0
        %v2150 = vadd.f32 0.0, %v2149
        %2151 = vmatmul.bf16.gmra.mxu0 %v1147
        %v2152 = vpop.f32.mrf.mxu0
        %v2153 = vadd.f32 0.0, %v2152
        %v2154 = vpop.f32.mrf.mxu0
        %v2155 = vadd.f32 0.0, %v2154
        %2156 = vmatmul.bf16.gmra.mxu0 %v1149
        %v2157 = vpop.f32.mrf.mxu0
        %v2158 = vadd.f32 0.0, %v2157
        %v2159 = vpop.f32.mrf.mxu0
        %v2160 = vadd.f32 0.0, %v2159
        %2161 = vmatmul.bf16.gmra.mxu0 %v1151
        %v2162 = vpop.f32.mrf.mxu0
        %v2163 = vadd.f32 0.0, %v2162
        %v2164 = vpop.f32.mrf.mxu0
        %v2165 = vadd.f32 0.0, %v2164
        %2166 = vmatmul.bf16.gmra.mxu0 %v1153
        %v2167 = vpop.f32.mrf.mxu0
        %v2168 = vadd.f32 0.0, %v2167
        %v2169 = vpop.f32.mrf.mxu0
        %v2170 = vadd.f32 0.0, %v2169
        %2171 = vdwg.mxu0
        %2172 = vmatpush.bf16.msra.mxu0 %v1633
        %2173 = vmatpush.bf16.msra.mxu0 %v1627
        %2174 = vmatpush.bf16.msra.mxu0 %v1621
        %2175 = vmatpush.bf16.msra.mxu0 %v1615
        %2176 = vmatpush.bf16.msra.mxu0 %v1609
        %2177 = vmatpush.bf16.msra.mxu0 %v1603
        %2178 = vmatpush.bf16.msra.mxu0 %v1597
        %2179 = vmatpush.bf16.msra.mxu0 %v1591
        %2180 = vmatmul.bf16.gmra.mxu0 %v1140
        %v2181 = vpop.f32.mrf.mxu0
        %v2182 = vadd.f32 %v2133, %v2181
        %v2183 = vpop.f32.mrf.mxu0
        %v2184 = vadd.f32 %v2135, %v2183
        %2185 = vmatmul.bf16.gmra.mxu0 %v1142
        %v2186 = vpop.f32.mrf.mxu0
        %v2187 = vadd.f32 %v2138, %v2186
        %v2188 = vpop.f32.mrf.mxu0
        %v2189 = vadd.f32 %v2140, %v2188
        %2190 = vmatmul.bf16.gmra.mxu0 %v1144
        %v2191 = vpop.f32.mrf.mxu0
        %v2192 = vadd.f32 %v2143, %v2191
        %v2193 = vpop.f32.mrf.mxu0
        %v2194 = vadd.f32 %v2145, %v2193
        %2195 = vmatmul.bf16.gmra.mxu0 %v1146
        %v2196 = vpop.f32.mrf.mxu0
        %v2197 = vadd.f32 %v2148, %v2196
        %v2198 = vpop.f32.mrf.mxu0
        %v2199 = vadd.f32 %v2150, %v2198
        %2200 = vmatmul.bf16.gmra.mxu0 %v1148
        %v2201 = vpop.f32.mrf.mxu0
        %v2202 = vadd.f32 %v2153, %v2201
        %v2203 = vpop.f32.mrf.mxu0
        %v2204 = vadd.f32 %v2155, %v2203
        %2205 = vmatmul.bf16.gmra.mxu0 %v1150
        %v2206 = vpop.f32.mrf.mxu0
        %v2207 = vadd.f32 %v2158, %v2206
        %v2208 = vpop.f32.mrf.mxu0
        %v2209 = vadd.f32 %v2160, %v2208
        %2210 = vmatmul.bf16.gmra.mxu0 %v1152
        %v2211 = vpop.f32.mrf.mxu0
        %v2212 = vadd.f32 %v2163, %v2211
        %v2213 = vpop.f32.mrf.mxu0
        %v2214 = vadd.f32 %v2165, %v2213
        %2215 = vmatmul.bf16.gmra.mxu0 %v1154
        %v2216 = vpop.f32.mrf.mxu0
        %v2217 = vadd.f32 %v2168, %v2216
        %v2218 = vpop.f32.mrf.mxu0
        %v2219 = vadd.f32 %v2170, %v2218
        %2220 = vdwg.mxu0
        %2221 = vmatpush.bf16.msra.mxu0 %v1586
        %2222 = vmatpush.bf16.msra.mxu0 %v1580
        %2223 = vmatpush.bf16.msra.mxu0 %v1574
        %2224 = vmatpush.bf16.msra.mxu0 %v1568
        %2225 = vmatpush.bf16.msra.mxu0 %v1562
        %2226 = vmatpush.bf16.msra.mxu0 %v1556
        %2227 = vmatpush.bf16.msra.mxu0 %v1550
        %2228 = vmatpush.bf16.msra.mxu0 %v1544
        %2229 = vmatmul.bf16.gmra.mxu0 %v1139
        %v2230 = vpop.f32.mrf.mxu0
        %v2231 = vadd.f32 0.0, %v2230
        %v2232 = vpop.f32.mrf.mxu0
        %v2233 = vadd.f32 0.0, %v2232
        %2234 = vmatmul.bf16.gmra.mxu0 %v1141
        %v2235 = vpop.f32.mrf.mxu0
        %v2236 = vadd.f32 0.0, %v2235
        %v2237 = vpop.f32.mrf.mxu0
        %v2238 = vadd.f32 0.0, %v2237
        %2239 = vmatmul.bf16.gmra.mxu0 %v1143
        %v2240 = vpop.f32.mrf.mxu0
        %v2241 = vadd.f32 0.0, %v2240
        %v2242 = vpop.f32.mrf.mxu0
        %v2243 = vadd.f32 0.0, %v2242
        %2244 = vmatmul.bf16.gmra.mxu0 %v1145
        %v2245 = vpop.f32.mrf.mxu0
        %v2246 = vadd.f32 0.0, %v2245
        %v2247 = vpop.f32.mrf.mxu0
        %v2248 = vadd.f32 0.0, %v2247
        %2249 = vmatmul.bf16.gmra.mxu0 %v1147
        %v2250 = vpop.f32.mrf.mxu0
        %v2251 = vadd.f32 0.0, %v2250
        %v2252 = vpop.f32.mrf.mxu0
        %v2253 = vadd.f32 0.0, %v2252
        %2254 = vmatmul.bf16.gmra.mxu0 %v1149
        %v2255 = vpop.f32.mrf.mxu0
        %v2256 = vadd.f32 0.0, %v2255
        %v2257 = vpop.f32.mrf.mxu0
        %v2258 = vadd.f32 0.0, %v2257
        %2259 = vmatmul.bf16.gmra.mxu0 %v1151
        %v2260 = vpop.f32.mrf.mxu0
        %v2261 = vadd.f32 0.0, %v2260
        %v2262 = vpop.f32.mrf.mxu0
        %v2263 = vadd.f32 0.0, %v2262
        %2264 = vmatmul.bf16.gmra.mxu0 %v1153
        %v2265 = vpop.f32.mrf.mxu0
        %v2266 = vadd.f32 0.0, %v2265
        %v2267 = vpop.f32.mrf.mxu0
        %v2268 = vadd.f32 0.0, %v2267
        %2269 = vdwg.mxu0
        %2270 = vmatpush.bf16.msra.mxu0 %v1634
        %2271 = vmatpush.bf16.msra.mxu0 %v1628
        %2272 = vmatpush.bf16.msra.mxu0 %v1622
        %2273 = vmatpush.bf16.msra.mxu0 %v1616
        %2274 = vmatpush.bf16.msra.mxu0 %v1610
        %2275 = vmatpush.bf16.msra.mxu0 %v1604
        %2276 = vmatpush.bf16.msra.mxu0 %v1598
        %2277 = vmatpush.bf16.msra.mxu0 %v1592
        %2278 = vmatmul.bf16.gmra.mxu0 %v1140
        %v2279 = vpop.f32.mrf.mxu0
        %v2280 = vadd.f32 %v2231, %v2279
        %v2281 = vpop.f32.mrf.mxu0
        %v2282 = vadd.f32 %v2233, %v2281
        %2283 = vmatmul.bf16.gmra.mxu0 %v1142
        %v2284 = vpop.f32.mrf.mxu0
        %v2285 = vadd.f32 %v2236, %v2284
        %v2286 = vpop.f32.mrf.mxu0
        %v2287 = vadd.f32 %v2238, %v2286
        %2288 = vmatmul.bf16.gmra.mxu0 %v1144
        %v2289 = vpop.f32.mrf.mxu0
        %v2290 = vadd.f32 %v2241, %v2289
        %v2291 = vpop.f32.mrf.mxu0
        %v2292 = vadd.f32 %v2243, %v2291
        %2293 = vmatmul.bf16.gmra.mxu0 %v1146
        %v2294 = vpop.f32.mrf.mxu0
        %v2295 = vadd.f32 %v2246, %v2294
        %v2296 = vpop.f32.mrf.mxu0
        %v2297 = vadd.f32 %v2248, %v2296
        %2298 = vmatmul.bf16.gmra.mxu0 %v1148
        %v2299 = vpop.f32.mrf.mxu0
        %v2300 = vadd.f32 %v2251, %v2299
        %v2301 = vpop.f32.mrf.mxu0
        %v2302 = vadd.f32 %v2253, %v2301
        %2303 = vmatmul.bf16.gmra.mxu0 %v1150
        %v2304 = vpop.f32.mrf.mxu0
        %v2305 = vadd.f32 %v2256, %v2304
        %v2306 = vpop.f32.mrf.mxu0
        %v2307 = vadd.f32 %v2258, %v2306
        %2308 = vmatmul.bf16.gmra.mxu0 %v1152
        %v2309 = vpop.f32.mrf.mxu0
        %v2310 = vadd.f32 %v2261, %v2309
        %v2311 = vpop.f32.mrf.mxu0
        %v2312 = vadd.f32 %v2263, %v2311
        %2313 = vmatmul.bf16.gmra.mxu0 %v1154
        %v2314 = vpop.f32.mrf.mxu0
        %v2315 = vadd.f32 %v2266, %v2314
        %v2316 = vpop.f32.mrf.mxu0
        %v2317 = vadd.f32 %v2268, %v2316
        %2318 = vdwg.mxu0
        %v2319 = vld [vmem:[#allocation13] sm:$0xf]
        %v2320 = vld [vmem:[#allocation13 + $0x4] sm:$0xf]
        %v2321 = vld [vmem:[#allocation13 + $0x8] sm:$0xf]
        %v2322 = vld [vmem:[#allocation13 + $0xc] sm:$0xf]
        %v2323 = vld [vmem:[#allocation13 + $0x10] sm:$0xf]
        %v2324 = vld [vmem:[#allocation13 + $0x14] sm:$0xf]
        %v2325 = vld [vmem:[#allocation13 + $0x18] sm:$0xf]
        %v2326 = vld [vmem:[#allocation13 + $0x1c] sm:$0xf]
        %v2327 = vld [vmem:[#allocation13 + $0x20] sm:$0xf]
        %v2328 = vld [vmem:[#allocation13 + $0x24] sm:$0xf]
        %v2329 = vld [vmem:[#allocation13 + $0x28] sm:$0xf]
        %v2330 = vld [vmem:[#allocation13 + $0x2c] sm:$0xf]
        %v2331 = vld [vmem:[#allocation13 + $0x30] sm:$0xf]
        %v2332 = vld [vmem:[#allocation13 + $0x34] sm:$0xf]
        %v2333 = vld [vmem:[#allocation13 + $0x38] sm:$0xf]
        %v2334 = vld [vmem:[#allocation13 + $0x3c] sm:$0xf]
        %v2335 = vunpack.c.l.bf16 %v2319
        %v2336 = vunpack.c.l.bf16 %v2320
        %v2337 = vunpack.c.l.bf16 %v2321
        %v2338 = vunpack.c.l.bf16 %v2322
        %v2339 = vunpack.c.l.bf16 %v2323
        %v2340 = vunpack.c.l.bf16 %v2324
        %v2341 = vunpack.c.l.bf16 %v2325
        %v2342 = vunpack.c.l.bf16 %v2326
        %v2343 = vunpack.c.l.bf16 %v2327
        %v2344 = vunpack.c.l.bf16 %v2328
        %v2345 = vunpack.c.l.bf16 %v2329
        %v2346 = vunpack.c.l.bf16 %v2330
        %v2347 = vunpack.c.l.bf16 %v2331
        %v2348 = vunpack.c.l.bf16 %v2332
        %v2349 = vunpack.c.l.bf16 %v2333
        %v2350 = vunpack.c.l.bf16 %v2334
        %s2351 = scalar_lea.vmem [#allocation13], 64
        %v2352 = vld [vmem:[%s2351] sm:$0xf]
        %v2353 = vld [vmem:[%s2351 + $0x4] sm:$0xf]
        %v2354 = vld [vmem:[%s2351 + $0x8] sm:$0xf]
        %v2355 = vld [vmem:[%s2351 + $0xc] sm:$0xf]
        %v2356 = vld [vmem:[%s2351 + $0x10] sm:$0xf]
        %v2357 = vld [vmem:[%s2351 + $0x14] sm:$0xf]
        %v2358 = vld [vmem:[%s2351 + $0x18] sm:$0xf]
        %v2359 = vld [vmem:[%s2351 + $0x1c] sm:$0xf]
        %v2360 = vld [vmem:[%s2351 + $0x20] sm:$0xf]
        %v2361 = vld [vmem:[%s2351 + $0x24] sm:$0xf]
        %v2362 = vld [vmem:[%s2351 + $0x28] sm:$0xf]
        %v2363 = vld [vmem:[%s2351 + $0x2c] sm:$0xf]
        %v2364 = vld [vmem:[%s2351 + $0x30] sm:$0xf]
        %v2365 = vld [vmem:[%s2351 + $0x34] sm:$0xf]
        %v2366 = vld [vmem:[%s2351 + $0x38] sm:$0xf]
        %v2367 = vld [vmem:[%s2351 + $0x3c] sm:$0xf]
        %v2368 = vunpack.c.l.bf16 %v2352
        %v2369 = vunpack.c.l.bf16 %v2353
        %v2370 = vunpack.c.l.bf16 %v2354
        %v2371 = vunpack.c.l.bf16 %v2355
        %v2372 = vunpack.c.l.bf16 %v2356
        %v2373 = vunpack.c.l.bf16 %v2357
        %v2374 = vunpack.c.l.bf16 %v2358
        %v2375 = vunpack.c.l.bf16 %v2359
        %v2376 = vunpack.c.l.bf16 %v2360
        %v2377 = vunpack.c.l.bf16 %v2361
        %v2378 = vunpack.c.l.bf16 %v2362
        %v2379 = vunpack.c.l.bf16 %v2363
        %v2380 = vunpack.c.l.bf16 %v2364
        %v2381 = vunpack.c.l.bf16 %v2365
        %v2382 = vunpack.c.l.bf16 %v2366
        %v2383 = vunpack.c.l.bf16 %v2367
        %v2384 = vlaneseq
        %v2385 = vshrl.u32 %v2384, 7
        %v2386 = vadd.s32 %v2385, 8
        %v2387 = vadd.s32 %v2385, 16
        %v2388 = vadd.s32 %v2385, 24
        %v2389 = vadd.s32 %v2385, 32
        %v2390 = vadd.s32 %v2385, 40
        %v2391 = vadd.s32 %v2385, 48
        %v2392 = vadd.s32 %v2385, 56
        %v2393 = vadd.s32 %v2385, 64
        %v2394 = vadd.s32 %v2385, 72
        %v2395 = vadd.s32 %v2385, 80
        %v2396 = vadd.s32 %v2385, 88
        %v2397 = vadd.s32 %v2385, 96
        %v2398 = vadd.s32 %v2385, 104
        %v2399 = vadd.s32 %v2385, 112
        %v2400 = vadd.s32 %v2385, 120
        %v2401 = vlaneseq
        %v2402 = vand.u32 %v2401, 127
        %vm2403 = vcmp.le.s32.totalorder %v2402, %v2385
        %vm2404 = vcmp.le.s32.totalorder %v2402, %v2386
        %vm2405 = vcmp.le.s32.totalorder %v2402, %v2387
        %vm2406 = vcmp.le.s32.totalorder %v2402, %v2388
        %vm2407 = vcmp.le.s32.totalorder %v2402, %v2389
        %vm2408 = vcmp.le.s32.totalorder %v2402, %v2390
        %vm2409 = vcmp.le.s32.totalorder %v2402, %v2391
        %vm2410 = vcmp.le.s32.totalorder %v2402, %v2392
        %vm2411 = vcmp.le.s32.totalorder %v2402, %v2393
        %vm2412 = vcmp.le.s32.totalorder %v2402, %v2394
        %vm2413 = vcmp.le.s32.totalorder %v2402, %v2395
        %vm2414 = vcmp.le.s32.totalorder %v2402, %v2396
        %vm2415 = vcmp.le.s32.totalorder %v2402, %v2397
        %vm2416 = vcmp.le.s32.totalorder %v2402, %v2398
        %vm2417 = vcmp.le.s32.totalorder %v2402, %v2399
        %vm2418 = vcmp.le.s32.totalorder %v2402, %v2400
        %v2419 = vsel %vm2403, 0.0, -1e+30
        %v2420 = vsel %vm2404, 0.0, -1e+30
        %v2421 = vsel %vm2405, 0.0, -1e+30
        %v2422 = vsel %vm2406, 0.0, -1e+30
        %v2423 = vsel %vm2407, 0.0, -1e+30
        %v2424 = vsel %vm2408, 0.0, -1e+30
        %v2425 = vsel %vm2409, 0.0, -1e+30
        %v2426 = vsel %vm2410, 0.0, -1e+30
        %v2427 = vsel %vm2411, 0.0, -1e+30
        %v2428 = vsel %vm2412, 0.0, -1e+30
        %v2429 = vsel %vm2413, 0.0, -1e+30
        %v2430 = vsel %vm2414, 0.0, -1e+30
        %v2431 = vsel %vm2415, 0.0, -1e+30
        %v2432 = vsel %vm2416, 0.0, -1e+30
        %v2433 = vsel %vm2417, 0.0, -1e+30
        %v2434 = vsel %vm2418, 0.0, -1e+30
        %v2435 = vstv %s647
        %v2436 = vmul.f32 %v2435, %v2182
        %v2437 = vmul.f32 %v2435, %v2280
        %v2438 = vmul.f32 %v2435, %v2184
        %v2439 = vmul.f32 %v2435, %v2282
        %v2440 = vmul.f32 %v2435, %v2187
        %v2441 = vmul.f32 %v2435, %v2285
        %v2442 = vmul.f32 %v2435, %v2189
        %v2443 = vmul.f32 %v2435, %v2287
        %v2444 = vmul.f32 %v2435, %v2192
        %v2445 = vmul.f32 %v2435, %v2290
        %v2446 = vmul.f32 %v2435, %v2194
        %v2447 = vmul.f32 %v2435, %v2292
        %v2448 = vmul.f32 %v2435, %v2197
        %v2449 = vmul.f32 %v2435, %v2295
        %v2450 = vmul.f32 %v2435, %v2199
        %v2451 = vmul.f32 %v2435, %v2297
        %v2452 = vmul.f32 %v2435, %v2202
        %v2453 = vmul.f32 %v2435, %v2300
        %v2454 = vmul.f32 %v2435, %v2204
        %v2455 = vmul.f32 %v2435, %v2302
        %v2456 = vmul.f32 %v2435, %v2207
        %v2457 = vmul.f32 %v2435, %v2305
        %v2458 = vmul.f32 %v2435, %v2209
        %v2459 = vmul.f32 %v2435, %v2307
        %v2460 = vmul.f32 %v2435, %v2212
        %v2461 = vmul.f32 %v2435, %v2310
        %v2462 = vmul.f32 %v2435, %v2214
        %v2463 = vmul.f32 %v2435, %v2312
        %v2464 = vmul.f32 %v2435, %v2217
        %v2465 = vmul.f32 %v2435, %v2315
        %v2466 = vmul.f32 %v2435, %v2219
        %v2467 = vmul.f32 %v2435, %v2317
        %v2468 = vld [vmem:[%s456] sm:$0xff]
        %v2469 = vld [vmem:[%s456 + $0x8] sm:$0xff]
        %v2470 = vld [vmem:[%s456 + $0x10] sm:$0xff]
        %v2471 = vld [vmem:[%s456 + $0x18] sm:$0xff]
        %v2472 = vld [vmem:[%s456 + $0x20] sm:$0xff]
        %v2473 = vld [vmem:[%s456 + $0x28] sm:$0xff]
        %v2474 = vld [vmem:[%s456 + $0x30] sm:$0xff]
        %v2475 = vld [vmem:[%s456 + $0x38] sm:$0xff]
        %v2476 = vld [vmem:[%s456 + $0x40] sm:$0xff]
        %v2477 = vld [vmem:[%s456 + $0x48] sm:$0xff]
        %v2478 = vld [vmem:[%s456 + $0x50] sm:$0xff]
        %v2479 = vld [vmem:[%s456 + $0x58] sm:$0xff]
        %v2480 = vld [vmem:[%s456 + $0x60] sm:$0xff]
        %v2481 = vld [vmem:[%s456 + $0x68] sm:$0xff]
        %v2482 = vld [vmem:[%s456 + $0x70] sm:$0xff]
        %v2483 = vld [vmem:[%s456 + $0x78] sm:$0xff]
        %v2484 = vunpack.c.l.bf16 %v2468
        %v2485 = vunpack.c.h.bf16 %v2468
        %v2486 = vunpack.c.l.bf16 %v2469
        %v2487 = vunpack.c.h.bf16 %v2469
        %v2488 = vunpack.c.l.bf16 %v2470
        %v2489 = vunpack.c.h.bf16 %v2470
        %v2490 = vunpack.c.l.bf16 %v2471
        %v2491 = vunpack.c.h.bf16 %v2471
        %v2492 = vunpack.c.l.bf16 %v2472
        %v2493 = vunpack.c.h.bf16 %v2472
        %v2494 = vunpack.c.l.bf16 %v2473
        %v2495 = vunpack.c.h.bf16 %v2473
        %v2496 = vunpack.c.l.bf16 %v2474
        %v2497 = vunpack.c.h.bf16 %v2474
        %v2498 = vunpack.c.l.bf16 %v2475
        %v2499 = vunpack.c.h.bf16 %v2475
        %v2500 = vunpack.c.l.bf16 %v2476
        %v2501 = vunpack.c.h.bf16 %v2476
        %v2502 = vunpack.c.l.bf16 %v2477
        %v2503 = vunpack.c.h.bf16 %v2477
        %v2504 = vunpack.c.l.bf16 %v2478
        %v2505 = vunpack.c.h.bf16 %v2478
        %v2506 = vunpack.c.l.bf16 %v2479
        %v2507 = vunpack.c.h.bf16 %v2479
        %v2508 = vunpack.c.l.bf16 %v2480
        %v2509 = vunpack.c.h.bf16 %v2480
        %v2510 = vunpack.c.l.bf16 %v2481
        %v2511 = vunpack.c.h.bf16 %v2481
        %v2512 = vunpack.c.l.bf16 %v2482
        %v2513 = vunpack.c.h.bf16 %v2482
        %v2514 = vunpack.c.l.bf16 %v2483
        %v2515 = vunpack.c.h.bf16 %v2483
        %v2516 = vstv %s649
        %v2517 = vmul.f32 %v2516, %v2484
        %v2518 = vmul.f32 %v2516, %v2485
        %v2519 = vmul.f32 %v2516, %v2486
        %v2520 = vmul.f32 %v2516, %v2487
        %v2521 = vmul.f32 %v2516, %v2488
        %v2522 = vmul.f32 %v2516, %v2489
        %v2523 = vmul.f32 %v2516, %v2490
        %v2524 = vmul.f32 %v2516, %v2491
        %v2525 = vmul.f32 %v2516, %v2492
        %v2526 = vmul.f32 %v2516, %v2493
        %v2527 = vmul.f32 %v2516, %v2494
        %v2528 = vmul.f32 %v2516, %v2495
        %v2529 = vmul.f32 %v2516, %v2496
        %v2530 = vmul.f32 %v2516, %v2497
        %v2531 = vmul.f32 %v2516, %v2498
        %v2532 = vmul.f32 %v2516, %v2499
        %v2533 = vmul.f32 %v2516, %v2500
        %v2534 = vmul.f32 %v2516, %v2501
        %v2535 = vmul.f32 %v2516, %v2502
        %v2536 = vmul.f32 %v2516, %v2503
        %v2537 = vmul.f32 %v2516, %v2504
        %v2538 = vmul.f32 %v2516, %v2505
        %v2539 = vmul.f32 %v2516, %v2506
        %v2540 = vmul.f32 %v2516, %v2507
        %v2541 = vmul.f32 %v2516, %v2508
        %v2542 = vmul.f32 %v2516, %v2509
        %v2543 = vmul.f32 %v2516, %v2510
        %v2544 = vmul.f32 %v2516, %v2511
        %v2545 = vmul.f32 %v2516, %v2512
        %v2546 = vmul.f32 %v2516, %v2513
        %v2547 = vmul.f32 %v2516, %v2514
        %v2548 = vmul.f32 %v2516, %v2515
        %v2549 = vadd.f32 %v2436, %v2517
        %v2550 = vadd.f32 %v2437, %v2518
        %v2551 = vadd.f32 %v2438, %v2519
        %v2552 = vadd.f32 %v2439, %v2520
        %v2553 = vadd.f32 %v2440, %v2521
        %v2554 = vadd.f32 %v2441, %v2522
        %v2555 = vadd.f32 %v2442, %v2523
        %v2556 = vadd.f32 %v2443, %v2524
        %v2557 = vadd.f32 %v2444, %v2525
        %v2558 = vadd.f32 %v2445, %v2526
        %v2559 = vadd.f32 %v2446, %v2527
        %v2560 = vadd.f32 %v2447, %v2528
        %v2561 = vadd.f32 %v2448, %v2529
        %v2562 = vadd.f32 %v2449, %v2530
        %v2563 = vadd.f32 %v2450, %v2531
        %v2564 = vadd.f32 %v2451, %v2532
        %v2565 = vadd.f32 %v2452, %v2533
        %v2566 = vadd.f32 %v2453, %v2534
        %v2567 = vadd.f32 %v2454, %v2535
        %v2568 = vadd.f32 %v2455, %v2536
        %v2569 = vadd.f32 %v2456, %v2537
        %v2570 = vadd.f32 %v2457, %v2538
        %v2571 = vadd.f32 %v2458, %v2539
        %v2572 = vadd.f32 %v2459, %v2540
        %v2573 = vadd.f32 %v2460, %v2541
        %v2574 = vadd.f32 %v2461, %v2542
        %v2575 = vadd.f32 %v2462, %v2543
        %v2576 = vadd.f32 %v2463, %v2544
        %v2577 = vadd.f32 %v2464, %v2545
        %v2578 = vadd.f32 %v2465, %v2546
        %v2579 = vadd.f32 %v2466, %v2547
        %v2580 = vadd.f32 %v2467, %v2548
        %v2581 = vmul.f32 %v1790, %v1790
        %v2582 = vmul.f32 %v1792, %v1792
        %v2583 = vmul.f32 %v1795, %v1795
        %v2584 = vmul.f32 %v1797, %v1797
        %v2585 = vmul.f32 %v1800, %v1800
        %v2586 = vmul.f32 %v1802, %v1802
        %v2587 = vmul.f32 %v1805, %v1805
        %v2588 = vmul.f32 %v1807, %v1807
        %v2589 = vmul.f32 %v1810, %v1810
        %v2590 = vmul.f32 %v1812, %v1812
        %v2591 = vmul.f32 %v1815, %v1815
        %v2592 = vmul.f32 %v1817, %v1817
        %v2593 = vmul.f32 %v1820, %v1820
        %v2594 = vmul.f32 %v1822, %v1822
        %v2595 = vmul.f32 %v1825, %v1825
        %v2596 = vmul.f32 %v1827, %v1827
        %2597 = vadd.xlane.f32.xlu0 %v2581
        %v2598 = vpop.xlane.xlu0 %2597
        %2599 = vadd.xlane.f32.xlu0 %v2582
        %v2600 = vpop.xlane.xlu0 %2599
        %2601 = vadd.xlane.f32.xlu0 %v2583
        %v2602 = vpop.xlane.xlu0 %2601
        %2603 = vadd.xlane.f32.xlu0 %v2584
        %v2604 = vpop.xlane.xlu0 %2603
        %2605 = vadd.xlane.f32.xlu0 %v2585
        %v2606 = vpop.xlane.xlu0 %2605
        %2607 = vadd.xlane.f32.xlu0 %v2586
        %v2608 = vpop.xlane.xlu0 %2607
        %2609 = vadd.xlane.f32.xlu0 %v2587
        %v2610 = vpop.xlane.xlu0 %2609
        %2611 = vadd.xlane.f32.xlu0 %v2588
        %v2612 = vpop.xlane.xlu0 %2611
        %2613 = vadd.xlane.f32.xlu0 %v2589
        %v2614 = vpop.xlane.xlu0 %2613
        %2615 = vadd.xlane.f32.xlu0 %v2590
        %v2616 = vpop.xlane.xlu0 %2615
        %2617 = vadd.xlane.f32.xlu0 %v2591
        %v2618 = vpop.xlane.xlu0 %2617
        %2619 = vadd.xlane.f32.xlu0 %v2592
        %v2620 = vpop.xlane.xlu0 %2619
        %2621 = vadd.xlane.f32.xlu0 %v2593
        %v2622 = vpop.xlane.xlu0 %2621
        %2623 = vadd.xlane.f32.xlu0 %v2594
        %v2624 = vpop.xlane.xlu0 %2623
        %2625 = vadd.xlane.f32.xlu0 %v2595
        %v2626 = vpop.xlane.xlu0 %2625
        %2627 = vadd.xlane.f32.xlu0 %v2596
        %v2628 = vpop.xlane.xlu0 %2627
        %v2629 = vrcp.pop 128.0
        %v2630 = vmul.f32 128.0, %v2629
        %v2631 = vsub.f32 1.0, %v2630
        %v2632 = vmul.f32 %v2629, %v2631
        %v2633 = vadd.f32 %v2629, %v2632
        %vm2634 = vweird.f32 %v2629
        %v2635 = vsel %vm2634, %v2629, %v2633
        %v2636 = vmul.f32 %v2598, %v2635
        %v2637 = vmul.f32 %v2600, %v2635
        %v2638 = vmul.f32 %v2602, %v2635
        %v2639 = vmul.f32 %v2604, %v2635
        %v2640 = vmul.f32 %v2606, %v2635
        %v2641 = vmul.f32 %v2608, %v2635
        %v2642 = vmul.f32 %v2610, %v2635
        %v2643 = vmul.f32 %v2612, %v2635
        %v2644 = vmul.f32 %v2614, %v2635
        %v2645 = vmul.f32 %v2616, %v2635
        %v2646 = vmul.f32 %v2618, %v2635
        %v2647 = vmul.f32 %v2620, %v2635
        %v2648 = vmul.f32 %v2622, %v2635
        %v2649 = vmul.f32 %v2624, %v2635
        %v2650 = vmul.f32 %v2626, %v2635
        %v2651 = vmul.f32 %v2628, %v2635
        %v2652 = vadd.f32 %v2636, 1.1920929e-07
        %v2653 = vadd.f32 %v2637, 1.1920929e-07
        %v2654 = vadd.f32 %v2638, 1.1920929e-07
        %v2655 = vadd.f32 %v2639, 1.1920929e-07
        %v2656 = vadd.f32 %v2640, 1.1920929e-07
        %v2657 = vadd.f32 %v2641, 1.1920929e-07
        %v2658 = vadd.f32 %v2642, 1.1920929e-07
        %v2659 = vadd.f32 %v2643, 1.1920929e-07
        %v2660 = vadd.f32 %v2644, 1.1920929e-07
        %v2661 = vadd.f32 %v2645, 1.1920929e-07
        %v2662 = vadd.f32 %v2646, 1.1920929e-07
        %v2663 = vadd.f32 %v2647, 1.1920929e-07
        %v2664 = vadd.f32 %v2648, 1.1920929e-07
        %v2665 = vadd.f32 %v2649, 1.1920929e-07
        %v2666 = vadd.f32 %v2650, 1.1920929e-07
        %v2667 = vadd.f32 %v2651, 1.1920929e-07
        %v2668 = vrsqrt.pop %v2652
        %v2669 = vmul.f32 %v2668, %v2652
        %v2670 = vmul.f32 %v2669, %v2668
        %v2671 = vmul.f32 0.5, %v2670
        %v2672 = vsub.f32 1.5, %v2671
        %v2673 = vmul.f32 %v2668, %v2672
        %vm2674 = vweird.f32 %v2652
        %vm2675 = vweird.f32 %v2668
        %vm2676 = vmor %vm2674, %vm2675
        %v2677 = vsel %vm2676, %v2668, %v2673
        %v2678 = vrsqrt.pop %v2653
        %v2679 = vmul.f32 %v2678, %v2653
        %v2680 = vmul.f32 %v2679, %v2678
        %v2681 = vmul.f32 0.5, %v2680
        %v2682 = vsub.f32 1.5, %v2681
        %v2683 = vmul.f32 %v2678, %v2682
        %vm2684 = vweird.f32 %v2653
        %vm2685 = vweird.f32 %v2678
        %vm2686 = vmor %vm2684, %vm2685
        %v2687 = vsel %vm2686, %v2678, %v2683
        %v2688 = vrsqrt.pop %v2654
        %v2689 = vmul.f32 %v2688, %v2654
        %v2690 = vmul.f32 %v2689, %v2688
        %v2691 = vmul.f32 0.5, %v2690
        %v2692 = vsub.f32 1.5, %v2691
        %v2693 = vmul.f32 %v2688, %v2692
        %vm2694 = vweird.f32 %v2654
        %vm2695 = vweird.f32 %v2688
        %vm2696 = vmor %vm2694, %vm2695
        %v2697 = vsel %vm2696, %v2688, %v2693
        %v2698 = vrsqrt.pop %v2655
        %v2699 = vmul.f32 %v2698, %v2655
        %v2700 = vmul.f32 %v2699, %v2698
        %v2701 = vmul.f32 0.5, %v2700
        %v2702 = vsub.f32 1.5, %v2701
        %v2703 = vmul.f32 %v2698, %v2702
        %vm2704 = vweird.f32 %v2655
        %vm2705 = vweird.f32 %v2698
        %vm2706 = vmor %vm2704, %vm2705
        %v2707 = vsel %vm2706, %v2698, %v2703
        %v2708 = vrsqrt.pop %v2656
        %v2709 = vmul.f32 %v2708, %v2656
        %v2710 = vmul.f32 %v2709, %v2708
        %v2711 = vmul.f32 0.5, %v2710
        %v2712 = vsub.f32 1.5, %v2711
        %v2713 = vmul.f32 %v2708, %v2712
        %vm2714 = vweird.f32 %v2656
        %vm2715 = vweird.f32 %v2708
        %vm2716 = vmor %vm2714, %vm2715
        %v2717 = vsel %vm2716, %v2708, %v2713
        %v2718 = vrsqrt.pop %v2657
        %v2719 = vmul.f32 %v2718, %v2657
        %v2720 = vmul.f32 %v2719, %v2718
        %v2721 = vmul.f32 0.5, %v2720
        %v2722 = vsub.f32 1.5, %v2721
        %v2723 = vmul.f32 %v2718, %v2722
        %vm2724 = vweird.f32 %v2657
        %vm2725 = vweird.f32 %v2718
        %vm2726 = vmor %vm2724, %vm2725
        %v2727 = vsel %vm2726, %v2718, %v2723
        %v2728 = vrsqrt.pop %v2658
        %v2729 = vmul.f32 %v2728, %v2658
        %v2730 = vmul.f32 %v2729, %v2728
        %v2731 = vmul.f32 0.5, %v2730
        %v2732 = vsub.f32 1.5, %v2731
        %v2733 = vmul.f32 %v2728, %v2732
        %vm2734 = vweird.f32 %v2658
        %vm2735 = vweird.f32 %v2728
        %vm2736 = vmor %vm2734, %vm2735
        %v2737 = vsel %vm2736, %v2728, %v2733
        %v2738 = vrsqrt.pop %v2659
        %v2739 = vmul.f32 %v2738, %v2659
        %v2740 = vmul.f32 %v2739, %v2738
        %v2741 = vmul.f32 0.5, %v2740
        %v2742 = vsub.f32 1.5, %v2741
        %v2743 = vmul.f32 %v2738, %v2742
        %vm2744 = vweird.f32 %v2659
        %vm2745 = vweird.f32 %v2738
        %vm2746 = vmor %vm2744, %vm2745
        %v2747 = vsel %vm2746, %v2738, %v2743
        %v2748 = vrsqrt.pop %v2660
        %v2749 = vmul.f32 %v2748, %v2660
        %v2750 = vmul.f32 %v2749, %v2748
        %v2751 = vmul.f32 0.5, %v2750
        %v2752 = vsub.f32 1.5, %v2751
        %v2753 = vmul.f32 %v2748, %v2752
        %vm2754 = vweird.f32 %v2660
        %vm2755 = vweird.f32 %v2748
        %vm2756 = vmor %vm2754, %vm2755
        %v2757 = vsel %vm2756, %v2748, %v2753
        %v2758 = vrsqrt.pop %v2661
        %v2759 = vmul.f32 %v2758, %v2661
        %v2760 = vmul.f32 %v2759, %v2758
        %v2761 = vmul.f32 0.5, %v2760
        %v2762 = vsub.f32 1.5, %v2761
        %v2763 = vmul.f32 %v2758, %v2762
        %vm2764 = vweird.f32 %v2661
        %vm2765 = vweird.f32 %v2758
        %vm2766 = vmor %vm2764, %vm2765
        %v2767 = vsel %vm2766, %v2758, %v2763
        %v2768 = vrsqrt.pop %v2662
        %v2769 = vmul.f32 %v2768, %v2662
        %v2770 = vmul.f32 %v2769, %v2768
        %v2771 = vmul.f32 0.5, %v2770
        %v2772 = vsub.f32 1.5, %v2771
        %v2773 = vmul.f32 %v2768, %v2772
        %vm2774 = vweird.f32 %v2662
        %vm2775 = vweird.f32 %v2768
        %vm2776 = vmor %vm2774, %vm2775
        %v2777 = vsel %vm2776, %v2768, %v2773
        %v2778 = vrsqrt.pop %v2663
        %v2779 = vmul.f32 %v2778, %v2663
        %v2780 = vmul.f32 %v2779, %v2778
        %v2781 = vmul.f32 0.5, %v2780
        %v2782 = vsub.f32 1.5, %v2781
        %v2783 = vmul.f32 %v2778, %v2782
        %vm2784 = vweird.f32 %v2663
        %vm2785 = vweird.f32 %v2778
        %vm2786 = vmor %vm2784, %vm2785
        %v2787 = vsel %vm2786, %v2778, %v2783
        %v2788 = vrsqrt.pop %v2664
        %v2789 = vmul.f32 %v2788, %v2664
        %v2790 = vmul.f32 %v2789, %v2788
        %v2791 = vmul.f32 0.5, %v2790
        %v2792 = vsub.f32 1.5, %v2791
        %v2793 = vmul.f32 %v2788, %v2792
        %vm2794 = vweird.f32 %v2664
        %vm2795 = vweird.f32 %v2788
        %vm2796 = vmor %vm2794, %vm2795
        %v2797 = vsel %vm2796, %v2788, %v2793
        %v2798 = vrsqrt.pop %v2665
        %v2799 = vmul.f32 %v2798, %v2665
        %v2800 = vmul.f32 %v2799, %v2798
        %v2801 = vmul.f32 0.5, %v2800
        %v2802 = vsub.f32 1.5, %v2801
        %v2803 = vmul.f32 %v2798, %v2802
        %vm2804 = vweird.f32 %v2665
        %vm2805 = vweird.f32 %v2798
        %vm2806 = vmor %vm2804, %vm2805
        %v2807 = vsel %vm2806, %v2798, %v2803
        %v2808 = vrsqrt.pop %v2666
        %v2809 = vmul.f32 %v2808, %v2666
        %v2810 = vmul.f32 %v2809, %v2808
        %v2811 = vmul.f32 0.5, %v2810
        %v2812 = vsub.f32 1.5, %v2811
        %v2813 = vmul.f32 %v2808, %v2812
        %vm2814 = vweird.f32 %v2666
        %vm2815 = vweird.f32 %v2808
        %vm2816 = vmor %vm2814, %vm2815
        %v2817 = vsel %vm2816, %v2808, %v2813
        %v2818 = vrsqrt.pop %v2667
        %v2819 = vmul.f32 %v2818, %v2667
        %v2820 = vmul.f32 %v2819, %v2818
        %v2821 = vmul.f32 0.5, %v2820
        %v2822 = vsub.f32 1.5, %v2821
        %v2823 = vmul.f32 %v2818, %v2822
        %vm2824 = vweird.f32 %v2667
        %vm2825 = vweird.f32 %v2818
        %vm2826 = vmor %vm2824, %vm2825
        %v2827 = vsel %vm2826, %v2818, %v2823
        %v2828 = vmul.f32 %v2677, 0.12
        %v2829 = vmul.f32 %v2687, 0.12
        %v2830 = vmul.f32 %v2697, 0.12
        %v2831 = vmul.f32 %v2707, 0.12
        %v2832 = vmul.f32 %v2717, 0.12
        %v2833 = vmul.f32 %v2727, 0.12
        %v2834 = vmul.f32 %v2737, 0.12
        %v2835 = vmul.f32 %v2747, 0.12
        %v2836 = vmul.f32 %v2757, 0.12
        %v2837 = vmul.f32 %v2767, 0.12
        %v2838 = vmul.f32 %v2777, 0.12
        %v2839 = vmul.f32 %v2787, 0.12
        %v2840 = vmul.f32 %v2797, 0.12
        %v2841 = vmul.f32 %v2807, 0.12
        %v2842 = vmul.f32 %v2817, 0.12
        %v2843 = vmul.f32 %v2827, 0.12
        %v2844 = vmul.f32 %v1790, %v2828
        %v2845 = vmul.f32 %v1792, %v2829
        %v2846 = vmul.f32 %v1795, %v2830
        %v2847 = vmul.f32 %v1797, %v2831
        %v2848 = vmul.f32 %v1800, %v2832
        %v2849 = vmul.f32 %v1802, %v2833
        %v2850 = vmul.f32 %v1805, %v2834
        %v2851 = vmul.f32 %v1807, %v2835
        %v2852 = vmul.f32 %v1810, %v2836
        %v2853 = vmul.f32 %v1812, %v2837
        %v2854 = vmul.f32 %v1815, %v2838
        %v2855 = vmul.f32 %v1817, %v2839
        %v2856 = vmul.f32 %v1820, %v2840
        %v2857 = vmul.f32 %v1822, %v2841
        %v2858 = vmul.f32 %v1825, %v2842
        %v2859 = vmul.f32 %v1827, %v2843
        %v2860 = vmul.f32 %v2844, %v2335
        %v2861 = vmul.f32 %v2845, %v2336
        %v2862 = vmul.f32 %v2846, %v2337
        %v2863 = vmul.f32 %v2847, %v2338
        %v2864 = vmul.f32 %v2848, %v2339
        %v2865 = vmul.f32 %v2849, %v2340
        %v2866 = vmul.f32 %v2850, %v2341
        %v2867 = vmul.f32 %v2851, %v2342
        %v2868 = vmul.f32 %v2852, %v2343
        %v2869 = vmul.f32 %v2853, %v2344
        %v2870 = vmul.f32 %v2854, %v2345
        %v2871 = vmul.f32 %v2855, %v2346
        %v2872 = vmul.f32 %v2856, %v2347
        %v2873 = vmul.f32 %v2857, %v2348
        %v2874 = vmul.f32 %v2858, %v2349
        %v2875 = vmul.f32 %v2859, %v2350
        %2876 = vrot.lane.b32.xlu0 %v2844, 64
        %v2877 = vpop.permute.xlu0 %2876
        %2878 = vrot.lane.b32.xlu0 %v2845, 64
        %v2879 = vpop.permute.xlu0 %2878
        %2880 = vrot.lane.b32.xlu0 %v2846, 64
        %v2881 = vpop.permute.xlu0 %2880
        %2882 = vrot.lane.b32.xlu0 %v2847, 64
        %v2883 = vpop.permute.xlu0 %2882
        %2884 = vrot.lane.b32.xlu0 %v2848, 64
        %v2885 = vpop.permute.xlu0 %2884
        %2886 = vrot.lane.b32.xlu0 %v2849, 64
        %v2887 = vpop.permute.xlu0 %2886
        %2888 = vrot.lane.b32.xlu0 %v2850, 64
        %v2889 = vpop.permute.xlu0 %2888
        %2890 = vrot.lane.b32.xlu0 %v2851, 64
        %v2891 = vpop.permute.xlu0 %2890
        %2892 = vrot.lane.b32.xlu0 %v2852, 64
        %v2893 = vpop.permute.xlu0 %2892
        %2894 = vrot.lane.b32.xlu0 %v2853, 64
        %v2895 = vpop.permute.xlu0 %2894
        %2896 = vrot.lane.b32.xlu0 %v2854, 64
        %v2897 = vpop.permute.xlu0 %2896
        %2898 = vrot.lane.b32.xlu0 %v2855, 64
        %v2899 = vpop.permute.xlu0 %2898
        %2900 = vrot.lane.b32.xlu0 %v2856, 64
        %v2901 = vpop.permute.xlu0 %2900
        %2902 = vrot.lane.b32.xlu0 %v2857, 64
        %v2903 = vpop.permute.xlu0 %2902
        %2904 = vrot.lane.b32.xlu0 %v2858, 64
        %v2905 = vpop.permute.xlu0 %2904
        %2906 = vrot.lane.b32.xlu0 %v2859, 64
        %v2907 = vpop.permute.xlu0 %2906
        %v2908 = vmul.f32 %v2877, %v2368
        %v2909 = vmul.f32 %v2879, %v2369
        %v2910 = vmul.f32 %v2881, %v2370
        %v2911 = vmul.f32 %v2883, %v2371
        %v2912 = vmul.f32 %v2885, %v2372
        %v2913 = vmul.f32 %v2887, %v2373
        %v2914 = vmul.f32 %v2889, %v2374
        %v2915 = vmul.f32 %v2891, %v2375
        %v2916 = vmul.f32 %v2893, %v2376
        %v2917 = vmul.f32 %v2895, %v2377
        %v2918 = vmul.f32 %v2897, %v2378
        %v2919 = vmul.f32 %v2899, %v2379
        %v2920 = vmul.f32 %v2901, %v2380
        %v2921 = vmul.f32 %v2903, %v2381
        %v2922 = vmul.f32 %v2905, %v2382
        %v2923 = vmul.f32 %v2907, %v2383
        %v2924 = vadd.f32 %v2860, %v2908
        %v2925 = vadd.f32 %v2861, %v2909
        %v2926 = vadd.f32 %v2862, %v2910
        %v2927 = vadd.f32 %v2863, %v2911
        %v2928 = vadd.f32 %v2864, %v2912
        %v2929 = vadd.f32 %v2865, %v2913
        %v2930 = vadd.f32 %v2866, %v2914
        %v2931 = vadd.f32 %v2867, %v2915
        %v2932 = vadd.f32 %v2868, %v2916
        %v2933 = vadd.f32 %v2869, %v2917
        %v2934 = vadd.f32 %v2870, %v2918
        %v2935 = vadd.f32 %v2871, %v2919
        %v2936 = vadd.f32 %v2872, %v2920
        %v2937 = vadd.f32 %v2873, %v2921
        %v2938 = vadd.f32 %v2874, %v2922
        %v2939 = vadd.f32 %v2875, %v2923
        %v2940 = vmul.f32 %v1986, %v1986
        %v2941 = vmul.f32 %v1988, %v1988
        %v2942 = vmul.f32 %v1991, %v1991
        %v2943 = vmul.f32 %v1993, %v1993
        %v2944 = vmul.f32 %v1996, %v1996
        %v2945 = vmul.f32 %v1998, %v1998
        %v2946 = vmul.f32 %v2001, %v2001
        %v2947 = vmul.f32 %v2003, %v2003
        %v2948 = vmul.f32 %v2006, %v2006
        %v2949 = vmul.f32 %v2008, %v2008
        %v2950 = vmul.f32 %v2011, %v2011
        %v2951 = vmul.f32 %v2013, %v2013
        %v2952 = vmul.f32 %v2016, %v2016
        %v2953 = vmul.f32 %v2018, %v2018
        %v2954 = vmul.f32 %v2021, %v2021
        %v2955 = vmul.f32 %v2023, %v2023
        %2956 = vadd.xlane.f32.xlu0 %v2940
        %v2957 = vpop.xlane.xlu0 %2956
        %2958 = vadd.xlane.f32.xlu0 %v2941
        %v2959 = vpop.xlane.xlu0 %2958
        %2960 = vadd.xlane.f32.xlu0 %v2942
        %v2961 = vpop.xlane.xlu0 %2960
        %2962 = vadd.xlane.f32.xlu0 %v2943
        %v2963 = vpop.xlane.xlu0 %2962
        %2964 = vadd.xlane.f32.xlu0 %v2944
        %v2965 = vpop.xlane.xlu0 %2964
        %2966 = vadd.xlane.f32.xlu0 %v2945
        %v2967 = vpop.xlane.xlu0 %2966
        %2968 = vadd.xlane.f32.xlu0 %v2946
        %v2969 = vpop.xlane.xlu0 %2968
        %2970 = vadd.xlane.f32.xlu0 %v2947
        %v2971 = vpop.xlane.xlu0 %2970
        %2972 = vadd.xlane.f32.xlu0 %v2948
        %v2973 = vpop.xlane.xlu0 %2972
        %2974 = vadd.xlane.f32.xlu0 %v2949
        %v2975 = vpop.xlane.xlu0 %2974
        %2976 = vadd.xlane.f32.xlu0 %v2950
        %v2977 = vpop.xlane.xlu0 %2976
        %2978 = vadd.xlane.f32.xlu0 %v2951
        %v2979 = vpop.xlane.xlu0 %2978
        %2980 = vadd.xlane.f32.xlu0 %v2952
        %v2981 = vpop.xlane.xlu0 %2980
        %2982 = vadd.xlane.f32.xlu0 %v2953
        %v2983 = vpop.xlane.xlu0 %2982
        %2984 = vadd.xlane.f32.xlu0 %v2954
        %v2985 = vpop.xlane.xlu0 %2984
        %2986 = vadd.xlane.f32.xlu0 %v2955
        %v2987 = vpop.xlane.xlu0 %2986
        %v2988 = vmul.f32 %v2957, %v2635
        %v2989 = vmul.f32 %v2959, %v2635
        %v2990 = vmul.f32 %v2961, %v2635
        %v2991 = vmul.f32 %v2963, %v2635
        %v2992 = vmul.f32 %v2965, %v2635
        %v2993 = vmul.f32 %v2967, %v2635
        %v2994 = vmul.f32 %v2969, %v2635
        %v2995 = vmul.f32 %v2971, %v2635
        %v2996 = vmul.f32 %v2973, %v2635
        %v2997 = vmul.f32 %v2975, %v2635
        %v2998 = vmul.f32 %v2977, %v2635
        %v2999 = vmul.f32 %v2979, %v2635
        %v3000 = vmul.f32 %v2981, %v2635
        %v3001 = vmul.f32 %v2983, %v2635
        %v3002 = vmul.f32 %v2985, %v2635
        %v3003 = vmul.f32 %v2987, %v2635
        %v3004 = vadd.f32 %v2988, 1.1920929e-07
        %v3005 = vadd.f32 %v2989, 1.1920929e-07
        %v3006 = vadd.f32 %v2990, 1.1920929e-07
        %v3007 = vadd.f32 %v2991, 1.1920929e-07
        %v3008 = vadd.f32 %v2992, 1.1920929e-07
        %v3009 = vadd.f32 %v2993, 1.1920929e-07
        %v3010 = vadd.f32 %v2994, 1.1920929e-07
        %v3011 = vadd.f32 %v2995, 1.1920929e-07
        %v3012 = vadd.f32 %v2996, 1.1920929e-07
        %v3013 = vadd.f32 %v2997, 1.1920929e-07
        %v3014 = vadd.f32 %v2998, 1.1920929e-07
        %v3015 = vadd.f32 %v2999, 1.1920929e-07
        %v3016 = vadd.f32 %v3000, 1.1920929e-07
        %v3017 = vadd.f32 %v3001, 1.1920929e-07
        %v3018 = vadd.f32 %v3002, 1.1920929e-07
        %v3019 = vadd.f32 %v3003, 1.1920929e-07
        %v3020 = vrsqrt.pop %v3004
        %v3021 = vmul.f32 %v3020, %v3004
        %v3022 = vmul.f32 %v3021, %v3020
        %v3023 = vmul.f32 0.5, %v3022
        %v3024 = vsub.f32 1.5, %v3023
        %v3025 = vmul.f32 %v3020, %v3024
        %vm3026 = vweird.f32 %v3004
        %vm3027 = vweird.f32 %v3020
        %vm3028 = vmor %vm3026, %vm3027
        %v3029 = vsel %vm3028, %v3020, %v3025
        %v3030 = vrsqrt.pop %v3005
        %v3031 = vmul.f32 %v3030, %v3005
        %v3032 = vmul.f32 %v3031, %v3030
        %v3033 = vmul.f32 0.5, %v3032
        %v3034 = vsub.f32 1.5, %v3033
        %v3035 = vmul.f32 %v3030, %v3034
        %vm3036 = vweird.f32 %v3005
        %vm3037 = vweird.f32 %v3030
        %vm3038 = vmor %vm3036, %vm3037
        %v3039 = vsel %vm3038, %v3030, %v3035
        %v3040 = vrsqrt.pop %v3006
        %v3041 = vmul.f32 %v3040, %v3006
        %v3042 = vmul.f32 %v3041, %v3040
        %v3043 = vmul.f32 0.5, %v3042
        %v3044 = vsub.f32 1.5, %v3043
        %v3045 = vmul.f32 %v3040, %v3044
        %vm3046 = vweird.f32 %v3006
        %vm3047 = vweird.f32 %v3040
        %vm3048 = vmor %vm3046, %vm3047
        %v3049 = vsel %vm3048, %v3040, %v3045
        %v3050 = vrsqrt.pop %v3007
        %v3051 = vmul.f32 %v3050, %v3007
        %v3052 = vmul.f32 %v3051, %v3050
        %v3053 = vmul.f32 0.5, %v3052
        %v3054 = vsub.f32 1.5, %v3053
        %v3055 = vmul.f32 %v3050, %v3054
        %vm3056 = vweird.f32 %v3007
        %vm3057 = vweird.f32 %v3050
        %vm3058 = vmor %vm3056, %vm3057
        %v3059 = vsel %vm3058, %v3050, %v3055
        %v3060 = vrsqrt.pop %v3008
        %v3061 = vmul.f32 %v3060, %v3008
        %v3062 = vmul.f32 %v3061, %v3060
        %v3063 = vmul.f32 0.5, %v3062
        %v3064 = vsub.f32 1.5, %v3063
        %v3065 = vmul.f32 %v3060, %v3064
        %vm3066 = vweird.f32 %v3008
        %vm3067 = vweird.f32 %v3060
        %vm3068 = vmor %vm3066, %vm3067
        %v3069 = vsel %vm3068, %v3060, %v3065
        %v3070 = vrsqrt.pop %v3009
        %v3071 = vmul.f32 %v3070, %v3009
        %v3072 = vmul.f32 %v3071, %v3070
        %v3073 = vmul.f32 0.5, %v3072
        %v3074 = vsub.f32 1.5, %v3073
        %v3075 = vmul.f32 %v3070, %v3074
        %vm3076 = vweird.f32 %v3009
        %vm3077 = vweird.f32 %v3070
        %vm3078 = vmor %vm3076, %vm3077
        %v3079 = vsel %vm3078, %v3070, %v3075
        %v3080 = vrsqrt.pop %v3010
        %v3081 = vmul.f32 %v3080, %v3010
        %v3082 = vmul.f32 %v3081, %v3080
        %v3083 = vmul.f32 0.5, %v3082
        %v3084 = vsub.f32 1.5, %v3083
        %v3085 = vmul.f32 %v3080, %v3084
        %vm3086 = vweird.f32 %v3010
        %vm3087 = vweird.f32 %v3080
        %vm3088 = vmor %vm3086, %vm3087
        %v3089 = vsel %vm3088, %v3080, %v3085
        %v3090 = vrsqrt.pop %v3011
        %v3091 = vmul.f32 %v3090, %v3011
        %v3092 = vmul.f32 %v3091, %v3090
        %v3093 = vmul.f32 0.5, %v3092
        %v3094 = vsub.f32 1.5, %v3093
        %v3095 = vmul.f32 %v3090, %v3094
        %vm3096 = vweird.f32 %v3011
        %vm3097 = vweird.f32 %v3090
        %vm3098 = vmor %vm3096, %vm3097
        %v3099 = vsel %vm3098, %v3090, %v3095
        %v3100 = vrsqrt.pop %v3012
        %v3101 = vmul.f32 %v3100, %v3012
        %v3102 = vmul.f32 %v3101, %v3100
        %v3103 = vmul.f32 0.5, %v3102
        %v3104 = vsub.f32 1.5, %v3103
        %v3105 = vmul.f32 %v3100, %v3104
        %vm3106 = vweird.f32 %v3012
        %vm3107 = vweird.f32 %v3100
        %vm3108 = vmor %vm3106, %vm3107
        %v3109 = vsel %vm3108, %v3100, %v3105
        %v3110 = vrsqrt.pop %v3013
        %v3111 = vmul.f32 %v3110, %v3013
        %v3112 = vmul.f32 %v3111, %v3110
        %v3113 = vmul.f32 0.5, %v3112
        %v3114 = vsub.f32 1.5, %v3113
        %v3115 = vmul.f32 %v3110, %v3114
        %vm3116 = vweird.f32 %v3013
        %vm3117 = vweird.f32 %v3110
        %vm3118 = vmor %vm3116, %vm3117
        %v3119 = vsel %vm3118, %v3110, %v3115
        %v3120 = vrsqrt.pop %v3014
        %v3121 = vmul.f32 %v3120, %v3014
        %v3122 = vmul.f32 %v3121, %v3120
        %v3123 = vmul.f32 0.5, %v3122
        %v3124 = vsub.f32 1.5, %v3123
        %v3125 = vmul.f32 %v3120, %v3124
        %vm3126 = vweird.f32 %v3014
        %vm3127 = vweird.f32 %v3120
        %vm3128 = vmor %vm3126, %vm3127
        %v3129 = vsel %vm3128, %v3120, %v3125
        %v3130 = vrsqrt.pop %v3015
        %v3131 = vmul.f32 %v3130, %v3015
        %v3132 = vmul.f32 %v3131, %v3130
        %v3133 = vmul.f32 0.5, %v3132
        %v3134 = vsub.f32 1.5, %v3133
        %v3135 = vmul.f32 %v3130, %v3134
        %vm3136 = vweird.f32 %v3015
        %vm3137 = vweird.f32 %v3130
        %vm3138 = vmor %vm3136, %vm3137
        %v3139 = vsel %vm3138, %v3130, %v3135
        %v3140 = vrsqrt.pop %v3016
        %v3141 = vmul.f32 %v3140, %v3016
        %v3142 = vmul.f32 %v3141, %v3140
        %v3143 = vmul.f32 0.5, %v3142
        %v3144 = vsub.f32 1.5, %v3143
        %v3145 = vmul.f32 %v3140, %v3144
        %vm3146 = vweird.f32 %v3016
        %vm3147 = vweird.f32 %v3140
        %vm3148 = vmor %vm3146, %vm3147
        %v3149 = vsel %vm3148, %v3140, %v3145
        %v3150 = vrsqrt.pop %v3017
        %v3151 = vmul.f32 %v3150, %v3017
        %v3152 = vmul.f32 %v3151, %v3150
        %v3153 = vmul.f32 0.5, %v3152
        %v3154 = vsub.f32 1.5, %v3153
        %v3155 = vmul.f32 %v3150, %v3154
        %vm3156 = vweird.f32 %v3017
        %vm3157 = vweird.f32 %v3150
        %vm3158 = vmor %vm3156, %vm3157
        %v3159 = vsel %vm3158, %v3150, %v3155
        %v3160 = vrsqrt.pop %v3018
        %v3161 = vmul.f32 %v3160, %v3018
        %v3162 = vmul.f32 %v3161, %v3160
        %v3163 = vmul.f32 0.5, %v3162
        %v3164 = vsub.f32 1.5, %v3163
        %v3165 = vmul.f32 %v3160, %v3164
        %vm3166 = vweird.f32 %v3018
        %vm3167 = vweird.f32 %v3160
        %vm3168 = vmor %vm3166, %vm3167
        %v3169 = vsel %vm3168, %v3160, %v3165
        %v3170 = vrsqrt.pop %v3019
        %v3171 = vmul.f32 %v3170, %v3019
        %v3172 = vmul.f32 %v3171, %v3170
        %v3173 = vmul.f32 0.5, %v3172
        %v3174 = vsub.f32 1.5, %v3173
        %v3175 = vmul.f32 %v3170, %v3174
        %vm3176 = vweird.f32 %v3019
        %vm3177 = vweird.f32 %v3170
        %vm3178 = vmor %vm3176, %vm3177
        %v3179 = vsel %vm3178, %v3170, %v3175
        %v3180 = vmul.f32 %v1986, %v3029
        %v3181 = vmul.f32 %v1988, %v3039
        %v3182 = vmul.f32 %v1991, %v3049
        %v3183 = vmul.f32 %v1993, %v3059
        %v3184 = vmul.f32 %v1996, %v3069
        %v3185 = vmul.f32 %v1998, %v3079
        %v3186 = vmul.f32 %v2001, %v3089
        %v3187 = vmul.f32 %v2003, %v3099
        %v3188 = vmul.f32 %v2006, %v3109
        %v3189 = vmul.f32 %v2008, %v3119
        %v3190 = vmul.f32 %v2011, %v3129
        %v3191 = vmul.f32 %v2013, %v3139
        %v3192 = vmul.f32 %v2016, %v3149
        %v3193 = vmul.f32 %v2018, %v3159
        %v3194 = vmul.f32 %v2021, %v3169
        %v3195 = vmul.f32 %v2023, %v3179
        %v3196 = vmul.f32 %v3180, %v2335
        %v3197 = vmul.f32 %v3181, %v2336
        %v3198 = vmul.f32 %v3182, %v2337
        %v3199 = vmul.f32 %v3183, %v2338
        %v3200 = vmul.f32 %v3184, %v2339
        %v3201 = vmul.f32 %v3185, %v2340
        %v3202 = vmul.f32 %v3186, %v2341
        %v3203 = vmul.f32 %v3187, %v2342
        %v3204 = vmul.f32 %v3188, %v2343
        %v3205 = vmul.f32 %v3189, %v2344
        %v3206 = vmul.f32 %v3190, %v2345
        %v3207 = vmul.f32 %v3191, %v2346
        %v3208 = vmul.f32 %v3192, %v2347
        %v3209 = vmul.f32 %v3193, %v2348
        %v3210 = vmul.f32 %v3194, %v2349
        %v3211 = vmul.f32 %v3195, %v2350
        %3212 = vrot.lane.b32.xlu0 %v3180, 64
        %v3213 = vpop.permute.xlu0 %3212
        %3214 = vrot.lane.b32.xlu0 %v3181, 64
        %v3215 = vpop.permute.xlu0 %3214
        %3216 = vrot.lane.b32.xlu0 %v3182, 64
        %v3217 = vpop.permute.xlu0 %3216
        %3218 = vrot.lane.b32.xlu0 %v3183, 64
        %v3219 = vpop.permute.xlu0 %3218
        %3220 = vrot.lane.b32.xlu0 %v3184, 64
        %v3221 = vpop.permute.xlu0 %3220
        %3222 = vrot.lane.b32.xlu0 %v3185, 64
        %v3223 = vpop.permute.xlu0 %3222
        %3224 = vrot.lane.b32.xlu0 %v3186, 64
        %v3225 = vpop.permute.xlu0 %3224
        %3226 = vrot.lane.b32.xlu0 %v3187, 64
        %v3227 = vpop.permute.xlu0 %3226
        %3228 = vrot.lane.b32.xlu0 %v3188, 64
        %v3229 = vpop.permute.xlu0 %3228
        %3230 = vrot.lane.b32.xlu0 %v3189, 64
        %v3231 = vpop.permute.xlu0 %3230
        %3232 = vrot.lane.b32.xlu0 %v3190, 64
        %v3233 = vpop.permute.xlu0 %3232
        %3234 = vrot.lane.b32.xlu0 %v3191, 64
        %v3235 = vpop.permute.xlu0 %3234
        %3236 = vrot.lane.b32.xlu0 %v3192, 64
        %v3237 = vpop.permute.xlu0 %3236
        %3238 = vrot.lane.b32.xlu0 %v3193, 64
        %v3239 = vpop.permute.xlu0 %3238
        %3240 = vrot.lane.b32.xlu0 %v3194, 64
        %v3241 = vpop.permute.xlu0 %3240
        %3242 = vrot.lane.b32.xlu0 %v3195, 64
        %v3243 = vpop.permute.xlu0 %3242
        %v3244 = vmul.f32 %v3213, %v2368
        %v3245 = vmul.f32 %v3215, %v2369
        %v3246 = vmul.f32 %v3217, %v2370
        %v3247 = vmul.f32 %v3219, %v2371
        %v3248 = vmul.f32 %v3221, %v2372
        %v3249 = vmul.f32 %v3223, %v2373
        %v3250 = vmul.f32 %v3225, %v2374
        %v3251 = vmul.f32 %v3227, %v2375
        %v3252 = vmul.f32 %v3229, %v2376
        %v3253 = vmul.f32 %v3231, %v2377
        %v3254 = vmul.f32 %v3233, %v2378
        %v3255 = vmul.f32 %v3235, %v2379
        %v3256 = vmul.f32 %v3237, %v2380
        %v3257 = vmul.f32 %v3239, %v2381
        %v3258 = vmul.f32 %v3241, %v2382
        %v3259 = vmul.f32 %v3243, %v2383
        %v3260 = vadd.f32 %v3196, %v3244
        %v3261 = vadd.f32 %v3197, %v3245
        %v3262 = vadd.f32 %v3198, %v3246
        %v3263 = vadd.f32 %v3199, %v3247
        %v3264 = vadd.f32 %v3200, %v3248
        %v3265 = vadd.f32 %v3201, %v3249
        %v3266 = vadd.f32 %v3202, %v3250
        %v3267 = vadd.f32 %v3203, %v3251
        %v3268 = vadd.f32 %v3204, %v3252
        %v3269 = vadd.f32 %v3205, %v3253
        %v3270 = vadd.f32 %v3206, %v3254
        %v3271 = vadd.f32 %v3207, %v3255
        %v3272 = vadd.f32 %v3208, %v3256
        %v3273 = vadd.f32 %v3209, %v3257
        %v3274 = vadd.f32 %v3210, %v3258
        %v3275 = vadd.f32 %v3211, %v3259
        %v3276 = vpack.c.bf16 %v2925, %v2924
        %v3277 = vpack.c.bf16 %v2927, %v2926
        %v3278 = vpack.c.bf16 %v2929, %v2928
        %v3279 = vpack.c.bf16 %v2931, %v2930
        %v3280 = vpack.c.bf16 %v2933, %v2932
        %v3281 = vpack.c.bf16 %v2935, %v2934
        %v3282 = vpack.c.bf16 %v2937, %v2936
        %v3283 = vpack.c.bf16 %v2939, %v2938
        %v3284 = vpack.c.bf16 %v3261, %v3260
        %v3285 = vpack.c.bf16 %v3263, %v3262
        %v3286 = vpack.c.bf16 %v3265, %v3264
        %v3287 = vpack.c.bf16 %v3267, %v3266
        %v3288 = vpack.c.bf16 %v3269, %v3268
        %v3289 = vpack.c.bf16 %v3271, %v3270
        %v3290 = vpack.c.bf16 %v3273, %v3272
        %v3291 = vpack.c.bf16 %v3275, %v3274
        %3292 = vmatpush.bf16.xpose.msra.mxu0 %v3291
        %3293 = vmatpush.bf16.xpose.msra.mxu0 %v3290
        %3294 = vmatpush.bf16.xpose.msra.mxu0 %v3289
        %3295 = vmatpush.bf16.xpose.msra.mxu0 %v3288
        %3296 = vmatpush.bf16.xpose.msra.mxu0 %v3287
        %3297 = vmatpush.bf16.xpose.msra.mxu0 %v3286
        %3298 = vmatpush.bf16.xpose.msra.mxu0 %v3285
        %3299 = vmatpush.bf16.xpose.msra.mxu0 %v3284
        %3300 = vmatmul.bf16.gmra.mxu0 %v3276
        %v3301 = vpop.f32.mrf.mxu0
        %v3302 = vadd.f32 %v2419, %v3301
        %v3303 = vpop.f32.mrf.mxu0
        %v3304 = vadd.f32 %v2420, %v3303
        %3305 = vmatmul.bf16.gmra.mxu0 %v3277
        %v3306 = vpop.f32.mrf.mxu0
        %v3307 = vadd.f32 %v2421, %v3306
        %v3308 = vpop.f32.mrf.mxu0
        %v3309 = vadd.f32 %v2422, %v3308
        %3310 = vmatmul.bf16.gmra.mxu0 %v3278
        %v3311 = vpop.f32.mrf.mxu0
        %v3312 = vadd.f32 %v2423, %v3311
        %v3313 = vpop.f32.mrf.mxu0
        %v3314 = vadd.f32 %v2424, %v3313
        %3315 = vmatmul.bf16.gmra.mxu0 %v3279
        %v3316 = vpop.f32.mrf.mxu0
        %v3317 = vadd.f32 %v2425, %v3316
        %v3318 = vpop.f32.mrf.mxu0
        %v3319 = vadd.f32 %v2426, %v3318
        %3320 = vmatmul.bf16.gmra.mxu0 %v3280
        %v3321 = vpop.f32.mrf.mxu0
        %v3322 = vadd.f32 %v2427, %v3321
        %v3323 = vpop.f32.mrf.mxu0
        %v3324 = vadd.f32 %v2428, %v3323
        %3325 = vmatmul.bf16.gmra.mxu0 %v3281
        %v3326 = vpop.f32.mrf.mxu0
        %v3327 = vadd.f32 %v2429, %v3326
        %v3328 = vpop.f32.mrf.mxu0
        %v3329 = vadd.f32 %v2430, %v3328
        %3330 = vmatmul.bf16.gmra.mxu0 %v3282
        %v3331 = vpop.f32.mrf.mxu0
        %v3332 = vadd.f32 %v2431, %v3331
        %v3333 = vpop.f32.mrf.mxu0
        %v3334 = vadd.f32 %v2432, %v3333
        %3335 = vmatmul.bf16.gmra.mxu0 %v3283
        %v3336 = vpop.f32.mrf.mxu0
        %v3337 = vadd.f32 %v2433, %v3336
        %v3338 = vpop.f32.mrf.mxu0
        %v3339 = vadd.f32 %v2434, %v3338
        %3340 = vdwg.mxu0
        %3341 = vmax.xlane.f32.xlu0 %v3302
        %v3342 = vpop.xlane.xlu0 %3341
        %3343 = vmax.xlane.f32.xlu0 %v3304
        %v3344 = vpop.xlane.xlu0 %3343
        %3345 = vmax.xlane.f32.xlu0 %v3307
        %v3346 = vpop.xlane.xlu0 %3345
        %3347 = vmax.xlane.f32.xlu0 %v3309
        %v3348 = vpop.xlane.xlu0 %3347
        %3349 = vmax.xlane.f32.xlu0 %v3312
        %v3350 = vpop.xlane.xlu0 %3349
        %3351 = vmax.xlane.f32.xlu0 %v3314
        %v3352 = vpop.xlane.xlu0 %3351
        %3353 = vmax.xlane.f32.xlu0 %v3317
        %v3354 = vpop.xlane.xlu0 %3353
        %3355 = vmax.xlane.f32.xlu0 %v3319
        %v3356 = vpop.xlane.xlu0 %3355
        %3357 = vmax.xlane.f32.xlu0 %v3322
        %v3358 = vpop.xlane.xlu0 %3357
        %3359 = vmax.xlane.f32.xlu0 %v3324
        %v3360 = vpop.xlane.xlu0 %3359
        %3361 = vmax.xlane.f32.xlu0 %v3327
        %v3362 = vpop.xlane.xlu0 %3361
        %3363 = vmax.xlane.f32.xlu0 %v3329
        %v3364 = vpop.xlane.xlu0 %3363
        %3365 = vmax.xlane.f32.xlu0 %v3332
        %v3366 = vpop.xlane.xlu0 %3365
        %3367 = vmax.xlane.f32.xlu0 %v3334
        %v3368 = vpop.xlane.xlu0 %3367
        %3369 = vmax.xlane.f32.xlu0 %v3337
        %v3370 = vpop.xlane.xlu0 %3369
        %3371 = vmax.xlane.f32.xlu0 %v3339
        %v3372 = vpop.xlane.xlu0 %3371
        %v3373 = vsub.f32 %v3302, %v3342
        %v3374 = vsub.f32 %v3304, %v3344
        %v3375 = vsub.f32 %v3307, %v3346
        %v3376 = vsub.f32 %v3309, %v3348
        %v3377 = vsub.f32 %v3312, %v3350
        %v3378 = vsub.f32 %v3314, %v3352
        %v3379 = vsub.f32 %v3317, %v3354
        %v3380 = vsub.f32 %v3319, %v3356
        %v3381 = vsub.f32 %v3322, %v3358
        %v3382 = vsub.f32 %v3324, %v3360
        %v3383 = vsub.f32 %v3327, %v3362
        %v3384 = vsub.f32 %v3329, %v3364
        %v3385 = vsub.f32 %v3332, %v3366
        %v3386 = vsub.f32 %v3334, %v3368
        %v3387 = vsub.f32 %v3337, %v3370
        %v3388 = vsub.f32 %v3339, %v3372
        %v3389 = vmul.f32 %v3373, 1.442695
        %v3390 = vpow.pop %v3389
        %v3391 = vmul.f32 %v3374, 1.442695
        %v3392 = vpow.pop %v3391
        %v3393 = vmul.f32 %v3375, 1.442695
        %v3394 = vpow.pop %v3393
        %v3395 = vmul.f32 %v3376, 1.442695
        %v3396 = vpow.pop %v3395
        %v3397 = vmul.f32 %v3377, 1.442695
        %v3398 = vpow.pop %v3397
        %v3399 = vmul.f32 %v3378, 1.442695
        %v3400 = vpow.pop %v3399
        %v3401 = vmul.f32 %v3379, 1.442695
        %v3402 = vpow.pop %v3401
        %v3403 = vmul.f32 %v3380, 1.442695
        %v3404 = vpow.pop %v3403
        %v3405 = vmul.f32 %v3381, 1.442695
        %v3406 = vpow.pop %v3405
        %v3407 = vmul.f32 %v3382, 1.442695
        %v3408 = vpow.pop %v3407
        %v3409 = vmul.f32 %v3383, 1.442695
        %v3410 = vpow.pop %v3409
        %v3411 = vmul.f32 %v3384, 1.442695
        %v3412 = vpow.pop %v3411
        %v3413 = vmul.f32 %v3385, 1.442695
        %v3414 = vpow.pop %v3413
        %v3415 = vmul.f32 %v3386, 1.442695
        %v3416 = vpow.pop %v3415
        %v3417 = vmul.f32 %v3387, 1.442695
        %v3418 = vpow.pop %v3417
        %v3419 = vmul.f32 %v3388, 1.442695
        %v3420 = vpow.pop %v3419
        %3421 = vadd.xlane.f32.xlu0 %v3390
        %v3422 = vpop.xlane.xlu0 %3421
        %3423 = vadd.xlane.f32.xlu0 %v3392
        %v3424 = vpop.xlane.xlu0 %3423
        %3425 = vadd.xlane.f32.xlu0 %v3394
        %v3426 = vpop.xlane.xlu0 %3425
        %3427 = vadd.xlane.f32.xlu0 %v3396
        %v3428 = vpop.xlane.xlu0 %3427
        %3429 = vadd.xlane.f32.xlu0 %v3398
        %v3430 = vpop.xlane.xlu0 %3429
        %3431 = vadd.xlane.f32.xlu0 %v3400
        %v3432 = vpop.xlane.xlu0 %3431
        %3433 = vadd.xlane.f32.xlu0 %v3402
        %v3434 = vpop.xlane.xlu0 %3433
        %3435 = vadd.xlane.f32.xlu0 %v3404
        %v3436 = vpop.xlane.xlu0 %3435
        %3437 = vadd.xlane.f32.xlu0 %v3406
        %v3438 = vpop.xlane.xlu0 %3437
        %3439 = vadd.xlane.f32.xlu0 %v3408
        %v3440 = vpop.xlane.xlu0 %3439
        %3441 = vadd.xlane.f32.xlu0 %v3410
        %v3442 = vpop.xlane.xlu0 %3441
        %3443 = vadd.xlane.f32.xlu0 %v3412
        %v3444 = vpop.xlane.xlu0 %3443
        %3445 = vadd.xlane.f32.xlu0 %v3414
        %v3446 = vpop.xlane.xlu0 %3445
        %3447 = vadd.xlane.f32.xlu0 %v3416
        %v3448 = vpop.xlane.xlu0 %3447
        %3449 = vadd.xlane.f32.xlu0 %v3418
        %v3450 = vpop.xlane.xlu0 %3449
        %3451 = vadd.xlane.f32.xlu0 %v3420
        %v3452 = vpop.xlane.xlu0 %3451
        %v3453 = vrcp.pop %v3422
        %v3454 = vrcp.pop %v3424
        %v3455 = vrcp.pop %v3426
        %v3456 = vrcp.pop %v3428
        %v3457 = vrcp.pop %v3430
        %v3458 = vrcp.pop %v3432
        %v3459 = vrcp.pop %v3434
        %v3460 = vrcp.pop %v3436
        %v3461 = vrcp.pop %v3438
        %v3462 = vrcp.pop %v3440
        %v3463 = vrcp.pop %v3442
        %v3464 = vrcp.pop %v3444
        %v3465 = vrcp.pop %v3446
        %v3466 = vrcp.pop %v3448
        %v3467 = vrcp.pop %v3450
        %v3468 = vrcp.pop %v3452
        %v3469 = vpack.c.bf16 %v3392, %v3390
        %v3470 = vpack.c.bf16 %v3396, %v3394
        %v3471 = vpack.c.bf16 %v3400, %v3398
        %v3472 = vpack.c.bf16 %v3404, %v3402
        %v3473 = vpack.c.bf16 %v3408, %v3406
        %v3474 = vpack.c.bf16 %v3412, %v3410
        %v3475 = vpack.c.bf16 %v3416, %v3414
        %v3476 = vpack.c.bf16 %v3420, %v3418
        %v3477 = vpack.c.bf16 %v2551, %v2549
        %v3478 = vpack.c.bf16 %v2555, %v2553
        %v3479 = vpack.c.bf16 %v2559, %v2557
        %v3480 = vpack.c.bf16 %v2563, %v2561
        %v3481 = vpack.c.bf16 %v2567, %v2565
        %v3482 = vpack.c.bf16 %v2571, %v2569
        %v3483 = vpack.c.bf16 %v2575, %v2573
        %v3484 = vpack.c.bf16 %v2579, %v2577
        %3485 = vmatpush.bf16.msra.mxu0 %v3484
        %3486 = vmatpush.bf16.msra.mxu0 %v3483
        %3487 = vmatpush.bf16.msra.mxu0 %v3482
        %3488 = vmatpush.bf16.msra.mxu0 %v3481
        %3489 = vmatpush.bf16.msra.mxu0 %v3480
        %3490 = vmatpush.bf16.msra.mxu0 %v3479
        %3491 = vmatpush.bf16.msra.mxu0 %v3478
        %3492 = vmatpush.bf16.msra.mxu0 %v3477
        %3493 = vmatmul.bf16.gmra.mxu0 %v3469
        %v3494 = vpop.f32.mrf.mxu0
        %v3495 = vadd.f32 0.0, %v3494
        %v3496 = vpop.f32.mrf.mxu0
        %v3497 = vadd.f32 0.0, %v3496
        %3498 = vmatmul.bf16.gmra.mxu0 %v3470
        %v3499 = vpop.f32.mrf.mxu0
        %v3500 = vadd.f32 0.0, %v3499
        %v3501 = vpop.f32.mrf.mxu0
        %v3502 = vadd.f32 0.0, %v3501
        %3503 = vmatmul.bf16.gmra.mxu0 %v3471
        %v3504 = vpop.f32.mrf.mxu0
        %v3505 = vadd.f32 0.0, %v3504
        %v3506 = vpop.f32.mrf.mxu0
        %v3507 = vadd.f32 0.0, %v3506
        %3508 = vmatmul.bf16.gmra.mxu0 %v3472
        %v3509 = vpop.f32.mrf.mxu0
        %v3510 = vadd.f32 0.0, %v3509
        %v3511 = vpop.f32.mrf.mxu0
        %v3512 = vadd.f32 0.0, %v3511
        %3513 = vmatmul.bf16.gmra.mxu0 %v3473
        %v3514 = vpop.f32.mrf.mxu0
        %v3515 = vadd.f32 0.0, %v3514
        %v3516 = vpop.f32.mrf.mxu0
        %v3517 = vadd.f32 0.0, %v3516
        %3518 = vmatmul.bf16.gmra.mxu0 %v3474
        %v3519 = vpop.f32.mrf.mxu0
        %v3520 = vadd.f32 0.0, %v3519
        %v3521 = vpop.f32.mrf.mxu0
        %v3522 = vadd.f32 0.0, %v3521
        %3523 = vmatmul.bf16.gmra.mxu0 %v3475
        %v3524 = vpop.f32.mrf.mxu0
        %v3525 = vadd.f32 0.0, %v3524
        %v3526 = vpop.f32.mrf.mxu0
        %v3527 = vadd.f32 0.0, %v3526
        %3528 = vmatmul.bf16.gmra.mxu0 %v3476
        %v3529 = vpop.f32.mrf.mxu0
        %v3530 = vadd.f32 0.0, %v3529
        %v3531 = vpop.f32.mrf.mxu0
        %v3532 = vadd.f32 0.0, %v3531
        %3533 = vdwg.mxu0
        %v3534 = vmul.f32 %v3495, %v3453
        %v3535 = vmul.f32 %v3497, %v3454
        %v3536 = vmul.f32 %v3500, %v3455
        %v3537 = vmul.f32 %v3502, %v3456
        %v3538 = vmul.f32 %v3505, %v3457
        %v3539 = vmul.f32 %v3507, %v3458
        %v3540 = vmul.f32 %v3510, %v3459
        %v3541 = vmul.f32 %v3512, %v3460
        %v3542 = vmul.f32 %v3515, %v3461
        %v3543 = vmul.f32 %v3517, %v3462
        %v3544 = vmul.f32 %v3520, %v3463
        %v3545 = vmul.f32 %v3522, %v3464
        %v3546 = vmul.f32 %v3525, %v3465
        %v3547 = vmul.f32 %v3527, %v3466
        %v3548 = vmul.f32 %v3530, %v3467
        %v3549 = vmul.f32 %v3532, %v3468
        %v3550 = vmul.f32 %v1888, %v1888
        %v3551 = vmul.f32 %v1890, %v1890
        %v3552 = vmul.f32 %v1893, %v1893
        %v3553 = vmul.f32 %v1895, %v1895
        %v3554 = vmul.f32 %v1898, %v1898
        %v3555 = vmul.f32 %v1900, %v1900
        %v3556 = vmul.f32 %v1903, %v1903
        %v3557 = vmul.f32 %v1905, %v1905
        %v3558 = vmul.f32 %v1908, %v1908
        %v3559 = vmul.f32 %v1910, %v1910
        %v3560 = vmul.f32 %v1913, %v1913
        %v3561 = vmul.f32 %v1915, %v1915
        %v3562 = vmul.f32 %v1918, %v1918
        %v3563 = vmul.f32 %v1920, %v1920
        %v3564 = vmul.f32 %v1923, %v1923
        %v3565 = vmul.f32 %v1925, %v1925
        %3566 = vadd.xlane.f32.xlu0 %v3550
        %v3567 = vpop.xlane.xlu0 %3566
        %3568 = vadd.xlane.f32.xlu0 %v3551
        %v3569 = vpop.xlane.xlu0 %3568
        %3570 = vadd.xlane.f32.xlu0 %v3552
        %v3571 = vpop.xlane.xlu0 %3570
        %3572 = vadd.xlane.f32.xlu0 %v3553
        %v3573 = vpop.xlane.xlu0 %3572
        %3574 = vadd.xlane.f32.xlu0 %v3554
        %v3575 = vpop.xlane.xlu0 %3574
        %3576 = vadd.xlane.f32.xlu0 %v3555
        %v3577 = vpop.xlane.xlu0 %3576
        %3578 = vadd.xlane.f32.xlu0 %v3556
        %v3579 = vpop.xlane.xlu0 %3578
        %3580 = vadd.xlane.f32.xlu0 %v3557
        %v3581 = vpop.xlane.xlu0 %3580
        %3582 = vadd.xlane.f32.xlu0 %v3558
        %v3583 = vpop.xlane.xlu0 %3582
        %3584 = vadd.xlane.f32.xlu0 %v3559
        %v3585 = vpop.xlane.xlu0 %3584
        %3586 = vadd.xlane.f32.xlu0 %v3560
        %v3587 = vpop.xlane.xlu0 %3586
        %3588 = vadd.xlane.f32.xlu0 %v3561
        %v3589 = vpop.xlane.xlu0 %3588
        %3590 = vadd.xlane.f32.xlu0 %v3562
        %v3591 = vpop.xlane.xlu0 %3590
        %3592 = vadd.xlane.f32.xlu0 %v3563
        %v3593 = vpop.xlane.xlu0 %3592
        %3594 = vadd.xlane.f32.xlu0 %v3564
        %v3595 = vpop.xlane.xlu0 %3594
        %3596 = vadd.xlane.f32.xlu0 %v3565
        %v3597 = vpop.xlane.xlu0 %3596
        %v3598 = vmul.f32 %v3567, %v2635
        %v3599 = vmul.f32 %v3569, %v2635
        %v3600 = vmul.f32 %v3571, %v2635
        %v3601 = vmul.f32 %v3573, %v2635
        %v3602 = vmul.f32 %v3575, %v2635
        %v3603 = vmul.f32 %v3577, %v2635
        %v3604 = vmul.f32 %v3579, %v2635
        %v3605 = vmul.f32 %v3581, %v2635
        %v3606 = vmul.f32 %v3583, %v2635
        %v3607 = vmul.f32 %v3585, %v2635
        %v3608 = vmul.f32 %v3587, %v2635
        %v3609 = vmul.f32 %v3589, %v2635
        %v3610 = vmul.f32 %v3591, %v2635
        %v3611 = vmul.f32 %v3593, %v2635
        %v3612 = vmul.f32 %v3595, %v2635
        %v3613 = vmul.f32 %v3597, %v2635
        %v3614 = vadd.f32 %v3598, 1.1920929e-07
        %v3615 = vadd.f32 %v3599, 1.1920929e-07
        %v3616 = vadd.f32 %v3600, 1.1920929e-07
        %v3617 = vadd.f32 %v3601, 1.1920929e-07
        %v3618 = vadd.f32 %v3602, 1.1920929e-07
        %v3619 = vadd.f32 %v3603, 1.1920929e-07
        %v3620 = vadd.f32 %v3604, 1.1920929e-07
        %v3621 = vadd.f32 %v3605, 1.1920929e-07
        %v3622 = vadd.f32 %v3606, 1.1920929e-07
        %v3623 = vadd.f32 %v3607, 1.1920929e-07
        %v3624 = vadd.f32 %v3608, 1.1920929e-07
        %v3625 = vadd.f32 %v3609, 1.1920929e-07
        %v3626 = vadd.f32 %v3610, 1.1920929e-07
        %v3627 = vadd.f32 %v3611, 1.1920929e-07
        %v3628 = vadd.f32 %v3612, 1.1920929e-07
        %v3629 = vadd.f32 %v3613, 1.1920929e-07
        %v3630 = vrsqrt.pop %v3614
        %v3631 = vmul.f32 %v3630, %v3614
        %v3632 = vmul.f32 %v3631, %v3630
        %v3633 = vmul.f32 0.5, %v3632
        %v3634 = vsub.f32 1.5, %v3633
        %v3635 = vmul.f32 %v3630, %v3634
        %vm3636 = vweird.f32 %v3614
        %vm3637 = vweird.f32 %v3630
        %vm3638 = vmor %vm3636, %vm3637
        %v3639 = vsel %vm3638, %v3630, %v3635
        %v3640 = vrsqrt.pop %v3615
        %v3641 = vmul.f32 %v3640, %v3615
        %v3642 = vmul.f32 %v3641, %v3640
        %v3643 = vmul.f32 0.5, %v3642
        %v3644 = vsub.f32 1.5, %v3643
        %v3645 = vmul.f32 %v3640, %v3644
        %vm3646 = vweird.f32 %v3615
        %vm3647 = vweird.f32 %v3640
        %vm3648 = vmor %vm3646, %vm3647
        %v3649 = vsel %vm3648, %v3640, %v3645
        %v3650 = vrsqrt.pop %v3616
        %v3651 = vmul.f32 %v3650, %v3616
        %v3652 = vmul.f32 %v3651, %v3650
        %v3653 = vmul.f32 0.5, %v3652
        %v3654 = vsub.f32 1.5, %v3653
        %v3655 = vmul.f32 %v3650, %v3654
        %vm3656 = vweird.f32 %v3616
        %vm3657 = vweird.f32 %v3650
        %vm3658 = vmor %vm3656, %vm3657
        %v3659 = vsel %vm3658, %v3650, %v3655
        %v3660 = vrsqrt.pop %v3617
        %v3661 = vmul.f32 %v3660, %v3617
        %v3662 = vmul.f32 %v3661, %v3660
        %v3663 = vmul.f32 0.5, %v3662
        %v3664 = vsub.f32 1.5, %v3663
        %v3665 = vmul.f32 %v3660, %v3664
        %vm3666 = vweird.f32 %v3617
        %vm3667 = vweird.f32 %v3660
        %vm3668 = vmor %vm3666, %vm3667
        %v3669 = vsel %vm3668, %v3660, %v3665
        %v3670 = vrsqrt.pop %v3618
        %v3671 = vmul.f32 %v3670, %v3618
        %v3672 = vmul.f32 %v3671, %v3670
        %v3673 = vmul.f32 0.5, %v3672
        %v3674 = vsub.f32 1.5, %v3673
        %v3675 = vmul.f32 %v3670, %v3674
        %vm3676 = vweird.f32 %v3618
        %vm3677 = vweird.f32 %v3670
        %vm3678 = vmor %vm3676, %vm3677
        %v3679 = vsel %vm3678, %v3670, %v3675
        %v3680 = vrsqrt.pop %v3619
        %v3681 = vmul.f32 %v3680, %v3619
        %v3682 = vmul.f32 %v3681, %v3680
        %v3683 = vmul.f32 0.5, %v3682
        %v3684 = vsub.f32 1.5, %v3683
        %v3685 = vmul.f32 %v3680, %v3684
        %vm3686 = vweird.f32 %v3619
        %vm3687 = vweird.f32 %v3680
        %vm3688 = vmor %vm3686, %vm3687
        %v3689 = vsel %vm3688, %v3680, %v3685
        %v3690 = vrsqrt.pop %v3620
        %v3691 = vmul.f32 %v3690, %v3620
        %v3692 = vmul.f32 %v3691, %v3690
        %v3693 = vmul.f32 0.5, %v3692
        %v3694 = vsub.f32 1.5, %v3693
        %v3695 = vmul.f32 %v3690, %v3694
        %vm3696 = vweird.f32 %v3620
        %vm3697 = vweird.f32 %v3690
        %vm3698 = vmor %vm3696, %vm3697
        %v3699 = vsel %vm3698, %v3690, %v3695
        %v3700 = vrsqrt.pop %v3621
        %v3701 = vmul.f32 %v3700, %v3621
        %v3702 = vmul.f32 %v3701, %v3700
        %v3703 = vmul.f32 0.5, %v3702
        %v3704 = vsub.f32 1.5, %v3703
        %v3705 = vmul.f32 %v3700, %v3704
        %vm3706 = vweird.f32 %v3621
        %vm3707 = vweird.f32 %v3700
        %vm3708 = vmor %vm3706, %vm3707
        %v3709 = vsel %vm3708, %v3700, %v3705
        %v3710 = vrsqrt.pop %v3622
        %v3711 = vmul.f32 %v3710, %v3622
        %v3712 = vmul.f32 %v3711, %v3710
        %v3713 = vmul.f32 0.5, %v3712
        %v3714 = vsub.f32 1.5, %v3713
        %v3715 = vmul.f32 %v3710, %v3714
        %vm3716 = vweird.f32 %v3622
        %vm3717 = vweird.f32 %v3710
        %vm3718 = vmor %vm3716, %vm3717
        %v3719 = vsel %vm3718, %v3710, %v3715
        %v3720 = vrsqrt.pop %v3623
        %v3721 = vmul.f32 %v3720, %v3623
        %v3722 = vmul.f32 %v3721, %v3720
        %v3723 = vmul.f32 0.5, %v3722
        %v3724 = vsub.f32 1.5, %v3723
        %v3725 = vmul.f32 %v3720, %v3724
        %vm3726 = vweird.f32 %v3623
        %vm3727 = vweird.f32 %v3720
        %vm3728 = vmor %vm3726, %vm3727
        %v3729 = vsel %vm3728, %v3720, %v3725
        %v3730 = vrsqrt.pop %v3624
        %v3731 = vmul.f32 %v3730, %v3624
        %v3732 = vmul.f32 %v3731, %v3730
        %v3733 = vmul.f32 0.5, %v3732
        %v3734 = vsub.f32 1.5, %v3733
        %v3735 = vmul.f32 %v3730, %v3734
        %vm3736 = vweird.f32 %v3624
        %vm3737 = vweird.f32 %v3730
        %vm3738 = vmor %vm3736, %vm3737
        %v3739 = vsel %vm3738, %v3730, %v3735
        %v3740 = vrsqrt.pop %v3625
        %v3741 = vmul.f32 %v3740, %v3625
        %v3742 = vmul.f32 %v3741, %v3740
        %v3743 = vmul.f32 0.5, %v3742
        %v3744 = vsub.f32 1.5, %v3743
        %v3745 = vmul.f32 %v3740, %v3744
        %vm3746 = vweird.f32 %v3625
        %vm3747 = vweird.f32 %v3740
        %vm3748 = vmor %vm3746, %vm3747
        %v3749 = vsel %vm3748, %v3740, %v3745
        %v3750 = vrsqrt.pop %v3626
        %v3751 = vmul.f32 %v3750, %v3626
        %v3752 = vmul.f32 %v3751, %v3750
        %v3753 = vmul.f32 0.5, %v3752
        %v3754 = vsub.f32 1.5, %v3753
        %v3755 = vmul.f32 %v3750, %v3754
        %vm3756 = vweird.f32 %v3626
        %vm3757 = vweird.f32 %v3750
        %vm3758 = vmor %vm3756, %vm3757
        %v3759 = vsel %vm3758, %v3750, %v3755
        %v3760 = vrsqrt.pop %v3627
        %v3761 = vmul.f32 %v3760, %v3627
        %v3762 = vmul.f32 %v3761, %v3760
        %v3763 = vmul.f32 0.5, %v3762
        %v3764 = vsub.f32 1.5, %v3763
        %v3765 = vmul.f32 %v3760, %v3764
        %vm3766 = vweird.f32 %v3627
        %vm3767 = vweird.f32 %v3760
        %vm3768 = vmor %vm3766, %vm3767
        %v3769 = vsel %vm3768, %v3760, %v3765
        %v3770 = vrsqrt.pop %v3628
        %v3771 = vmul.f32 %v3770, %v3628
        %v3772 = vmul.f32 %v3771, %v3770
        %v3773 = vmul.f32 0.5, %v3772
        %v3774 = vsub.f32 1.5, %v3773
        %v3775 = vmul.f32 %v3770, %v3774
        %vm3776 = vweird.f32 %v3628
        %vm3777 = vweird.f32 %v3770
        %vm3778 = vmor %vm3776, %vm3777
        %v3779 = vsel %vm3778, %v3770, %v3775
        %v3780 = vrsqrt.pop %v3629
        %v3781 = vmul.f32 %v3780, %v3629
        %v3782 = vmul.f32 %v3781, %v3780
        %v3783 = vmul.f32 0.5, %v3782
        %v3784 = vsub.f32 1.5, %v3783
        %v3785 = vmul.f32 %v3780, %v3784
        %vm3786 = vweird.f32 %v3629
        %vm3787 = vweird.f32 %v3780
        %vm3788 = vmor %vm3786, %vm3787
        %v3789 = vsel %vm3788, %v3780, %v3785
        %v3790 = vmul.f32 %v3639, 0.12
        %v3791 = vmul.f32 %v3649, 0.12
        %v3792 = vmul.f32 %v3659, 0.12
        %v3793 = vmul.f32 %v3669, 0.12
        %v3794 = vmul.f32 %v3679, 0.12
        %v3795 = vmul.f32 %v3689, 0.12
        %v3796 = vmul.f32 %v3699, 0.12
        %v3797 = vmul.f32 %v3709, 0.12
        %v3798 = vmul.f32 %v3719, 0.12
        %v3799 = vmul.f32 %v3729, 0.12
        %v3800 = vmul.f32 %v3739, 0.12
        %v3801 = vmul.f32 %v3749, 0.12
        %v3802 = vmul.f32 %v3759, 0.12
        %v3803 = vmul.f32 %v3769, 0.12
        %v3804 = vmul.f32 %v3779, 0.12
        %v3805 = vmul.f32 %v3789, 0.12
        %v3806 = vmul.f32 %v1888, %v3790
        %v3807 = vmul.f32 %v1890, %v3791
        %v3808 = vmul.f32 %v1893, %v3792
        %v3809 = vmul.f32 %v1895, %v3793
        %v3810 = vmul.f32 %v1898, %v3794
        %v3811 = vmul.f32 %v1900, %v3795
        %v3812 = vmul.f32 %v1903, %v3796
        %v3813 = vmul.f32 %v1905, %v3797
        %v3814 = vmul.f32 %v1908, %v3798
        %v3815 = vmul.f32 %v1910, %v3799
        %v3816 = vmul.f32 %v1913, %v3800
        %v3817 = vmul.f32 %v1915, %v3801
        %v3818 = vmul.f32 %v1918, %v3802
        %v3819 = vmul.f32 %v1920, %v3803
        %v3820 = vmul.f32 %v1923, %v3804
        %v3821 = vmul.f32 %v1925, %v3805
        %v3822 = vmul.f32 %v3806, %v2335
        %v3823 = vmul.f32 %v3807, %v2336
        %v3824 = vmul.f32 %v3808, %v2337
        %v3825 = vmul.f32 %v3809, %v2338
        %v3826 = vmul.f32 %v3810, %v2339
        %v3827 = vmul.f32 %v3811, %v2340
        %v3828 = vmul.f32 %v3812, %v2341
        %v3829 = vmul.f32 %v3813, %v2342
        %v3830 = vmul.f32 %v3814, %v2343
        %v3831 = vmul.f32 %v3815, %v2344
        %v3832 = vmul.f32 %v3816, %v2345
        %v3833 = vmul.f32 %v3817, %v2346
        %v3834 = vmul.f32 %v3818, %v2347
        %v3835 = vmul.f32 %v3819, %v2348
        %v3836 = vmul.f32 %v3820, %v2349
        %v3837 = vmul.f32 %v3821, %v2350
        %3838 = vrot.lane.b32.xlu0 %v3806, 64
        %v3839 = vpop.permute.xlu0 %3838
        %3840 = vrot.lane.b32.xlu0 %v3807, 64
        %v3841 = vpop.permute.xlu0 %3840
        %3842 = vrot.lane.b32.xlu0 %v3808, 64
        %v3843 = vpop.permute.xlu0 %3842
        %3844 = vrot.lane.b32.xlu0 %v3809, 64
        %v3845 = vpop.permute.xlu0 %3844
        %3846 = vrot.lane.b32.xlu0 %v3810, 64
        %v3847 = vpop.permute.xlu0 %3846
        %3848 = vrot.lane.b32.xlu0 %v3811, 64
        %v3849 = vpop.permute.xlu0 %3848
        %3850 = vrot.lane.b32.xlu0 %v3812, 64
        %v3851 = vpop.permute.xlu0 %3850
        %3852 = vrot.lane.b32.xlu0 %v3813, 64
        %v3853 = vpop.permute.xlu0 %3852
        %3854 = vrot.lane.b32.xlu0 %v3814, 64
        %v3855 = vpop.permute.xlu0 %3854
        %3856 = vrot.lane.b32.xlu0 %v3815, 64
        %v3857 = vpop.permute.xlu0 %3856
        %3858 = vrot.lane.b32.xlu0 %v3816, 64
        %v3859 = vpop.permute.xlu0 %3858
        %3860 = vrot.lane.b32.xlu0 %v3817, 64
        %v3861 = vpop.permute.xlu0 %3860
        %3862 = vrot.lane.b32.xlu0 %v3818, 64
        %v3863 = vpop.permute.xlu0 %3862
        %3864 = vrot.lane.b32.xlu0 %v3819, 64
        %v3865 = vpop.permute.xlu0 %3864
        %3866 = vrot.lane.b32.xlu0 %v3820, 64
        %v3867 = vpop.permute.xlu0 %3866
        %3868 = vrot.lane.b32.xlu0 %v3821, 64
        %v3869 = vpop.permute.xlu0 %3868
        %v3870 = vmul.f32 %v3839, %v2368
        %v3871 = vmul.f32 %v3841, %v2369
        %v3872 = vmul.f32 %v3843, %v2370
        %v3873 = vmul.f32 %v3845, %v2371
        %v3874 = vmul.f32 %v3847, %v2372
        %v3875 = vmul.f32 %v3849, %v2373
        %v3876 = vmul.f32 %v3851, %v2374
        %v3877 = vmul.f32 %v3853, %v2375
        %v3878 = vmul.f32 %v3855, %v2376
        %v3879 = vmul.f32 %v3857, %v2377
        %v3880 = vmul.f32 %v3859, %v2378
        %v3881 = vmul.f32 %v3861, %v2379
        %v3882 = vmul.f32 %v3863, %v2380
        %v3883 = vmul.f32 %v3865, %v2381
        %v3884 = vmul.f32 %v3867, %v2382
        %v3885 = vmul.f32 %v3869, %v2383
        %v3886 = vadd.f32 %v3822, %v3870
        %v3887 = vadd.f32 %v3823, %v3871
        %v3888 = vadd.f32 %v3824, %v3872
        %v3889 = vadd.f32 %v3825, %v3873
        %v3890 = vadd.f32 %v3826, %v3874
        %v3891 = vadd.f32 %v3827, %v3875
        %v3892 = vadd.f32 %v3828, %v3876
        %v3893 = vadd.f32 %v3829, %v3877
        %v3894 = vadd.f32 %v3830, %v3878
        %v3895 = vadd.f32 %v3831, %v3879
        %v3896 = vadd.f32 %v3832, %v3880
        %v3897 = vadd.f32 %v3833, %v3881
        %v3898 = vadd.f32 %v3834, %v3882
        %v3899 = vadd.f32 %v3835, %v3883
        %v3900 = vadd.f32 %v3836, %v3884
        %v3901 = vadd.f32 %v3837, %v3885
        %v3902 = vmul.f32 %v2084, %v2084
        %v3903 = vmul.f32 %v2086, %v2086
        %v3904 = vmul.f32 %v2089, %v2089
        %v3905 = vmul.f32 %v2091, %v2091
        %v3906 = vmul.f32 %v2094, %v2094
        %v3907 = vmul.f32 %v2096, %v2096
        %v3908 = vmul.f32 %v2099, %v2099
        %v3909 = vmul.f32 %v2101, %v2101
        %v3910 = vmul.f32 %v2104, %v2104
        %v3911 = vmul.f32 %v2106, %v2106
        %v3912 = vmul.f32 %v2109, %v2109
        %v3913 = vmul.f32 %v2111, %v2111
        %v3914 = vmul.f32 %v2114, %v2114
        %v3915 = vmul.f32 %v2116, %v2116
        %v3916 = vmul.f32 %v2119, %v2119
        %v3917 = vmul.f32 %v2121, %v2121
        %3918 = vadd.xlane.f32.xlu0 %v3902
        %v3919 = vpop.xlane.xlu0 %3918
        %3920 = vadd.xlane.f32.xlu0 %v3903
        %v3921 = vpop.xlane.xlu0 %3920
        %3922 = vadd.xlane.f32.xlu0 %v3904
        %v3923 = vpop.xlane.xlu0 %3922
        %3924 = vadd.xlane.f32.xlu0 %v3905
        %v3925 = vpop.xlane.xlu0 %3924
        %3926 = vadd.xlane.f32.xlu0 %v3906
        %v3927 = vpop.xlane.xlu0 %3926
        %3928 = vadd.xlane.f32.xlu0 %v3907
        %v3929 = vpop.xlane.xlu0 %3928
        %3930 = vadd.xlane.f32.xlu0 %v3908
        %v3931 = vpop.xlane.xlu0 %3930
        %3932 = vadd.xlane.f32.xlu0 %v3909
        %v3933 = vpop.xlane.xlu0 %3932
        %3934 = vadd.xlane.f32.xlu0 %v3910
        %v3935 = vpop.xlane.xlu0 %3934
        %3936 = vadd.xlane.f32.xlu0 %v3911
        %v3937 = vpop.xlane.xlu0 %3936
        %3938 = vadd.xlane.f32.xlu0 %v3912
        %v3939 = vpop.xlane.xlu0 %3938
        %3940 = vadd.xlane.f32.xlu0 %v3913
        %v3941 = vpop.xlane.xlu0 %3940
        %3942 = vadd.xlane.f32.xlu0 %v3914
        %v3943 = vpop.xlane.xlu0 %3942
        %3944 = vadd.xlane.f32.xlu0 %v3915
        %v3945 = vpop.xlane.xlu0 %3944
        %3946 = vadd.xlane.f32.xlu0 %v3916
        %v3947 = vpop.xlane.xlu0 %3946
        %3948 = vadd.xlane.f32.xlu0 %v3917
        %v3949 = vpop.xlane.xlu0 %3948
        %v3950 = vmul.f32 %v3919, %v2635
        %v3951 = vmul.f32 %v3921, %v2635
        %v3952 = vmul.f32 %v3923, %v2635
        %v3953 = vmul.f32 %v3925, %v2635
        %v3954 = vmul.f32 %v3927, %v2635
        %v3955 = vmul.f32 %v3929, %v2635
        %v3956 = vmul.f32 %v3931, %v2635
        %v3957 = vmul.f32 %v3933, %v2635
        %v3958 = vmul.f32 %v3935, %v2635
        %v3959 = vmul.f32 %v3937, %v2635
        %v3960 = vmul.f32 %v3939, %v2635
        %v3961 = vmul.f32 %v3941, %v2635
        %v3962 = vmul.f32 %v3943, %v2635
        %v3963 = vmul.f32 %v3945, %v2635
        %v3964 = vmul.f32 %v3947, %v2635
        %v3965 = vmul.f32 %v3949, %v2635
        %v3966 = vadd.f32 %v3950, 1.1920929e-07
        %v3967 = vadd.f32 %v3951, 1.1920929e-07
        %v3968 = vadd.f32 %v3952, 1.1920929e-07
        %v3969 = vadd.f32 %v3953, 1.1920929e-07
        %v3970 = vadd.f32 %v3954, 1.1920929e-07
        %v3971 = vadd.f32 %v3955, 1.1920929e-07
        %v3972 = vadd.f32 %v3956, 1.1920929e-07
        %v3973 = vadd.f32 %v3957, 1.1920929e-07
        %v3974 = vadd.f32 %v3958, 1.1920929e-07
        %v3975 = vadd.f32 %v3959, 1.1920929e-07
        %v3976 = vadd.f32 %v3960, 1.1920929e-07
        %v3977 = vadd.f32 %v3961, 1.1920929e-07
        %v3978 = vadd.f32 %v3962, 1.1920929e-07
        %v3979 = vadd.f32 %v3963, 1.1920929e-07
        %v3980 = vadd.f32 %v3964, 1.1920929e-07
        %v3981 = vadd.f32 %v3965, 1.1920929e-07
        %v3982 = vrsqrt.pop %v3966
        %v3983 = vmul.f32 %v3982, %v3966
        %v3984 = vmul.f32 %v3983, %v3982
        %v3985 = vmul.f32 0.5, %v3984
        %v3986 = vsub.f32 1.5, %v3985
        %v3987 = vmul.f32 %v3982, %v3986
        %vm3988 = vweird.f32 %v3966
        %vm3989 = vweird.f32 %v3982
        %vm3990 = vmor %vm3988, %vm3989
        %v3991 = vsel %vm3990, %v3982, %v3987
        %v3992 = vrsqrt.pop %v3967
        %v3993 = vmul.f32 %v3992, %v3967
        %v3994 = vmul.f32 %v3993, %v3992
        %v3995 = vmul.f32 0.5, %v3994
        %v3996 = vsub.f32 1.5, %v3995
        %v3997 = vmul.f32 %v3992, %v3996
        %vm3998 = vweird.f32 %v3967
        %vm3999 = vweird.f32 %v3992
        %vm4000 = vmor %vm3998, %vm3999
        %v4001 = vsel %vm4000, %v3992, %v3997
        %v4002 = vrsqrt.pop %v3968
        %v4003 = vmul.f32 %v4002, %v3968
        %v4004 = vmul.f32 %v4003, %v4002
        %v4005 = vmul.f32 0.5, %v4004
        %v4006 = vsub.f32 1.5, %v4005
        %v4007 = vmul.f32 %v4002, %v4006
        %vm4008 = vweird.f32 %v3968
        %vm4009 = vweird.f32 %v4002
        %vm4010 = vmor %vm4008, %vm4009
        %v4011 = vsel %vm4010, %v4002, %v4007
        %v4012 = vrsqrt.pop %v3969
        %v4013 = vmul.f32 %v4012, %v3969
        %v4014 = vmul.f32 %v4013, %v4012
        %v4015 = vmul.f32 0.5, %v4014
        %v4016 = vsub.f32 1.5, %v4015
        %v4017 = vmul.f32 %v4012, %v4016
        %vm4018 = vweird.f32 %v3969
        %vm4019 = vweird.f32 %v4012
        %vm4020 = vmor %vm4018, %vm4019
        %v4021 = vsel %vm4020, %v4012, %v4017
        %v4022 = vrsqrt.pop %v3970
        %v4023 = vmul.f32 %v4022, %v3970
        %v4024 = vmul.f32 %v4023, %v4022
        %v4025 = vmul.f32 0.5, %v4024
        %v4026 = vsub.f32 1.5, %v4025
        %v4027 = vmul.f32 %v4022, %v4026
        %vm4028 = vweird.f32 %v3970
        %vm4029 = vweird.f32 %v4022
        %vm4030 = vmor %vm4028, %vm4029
        %v4031 = vsel %vm4030, %v4022, %v4027
        %v4032 = vrsqrt.pop %v3971
        %v4033 = vmul.f32 %v4032, %v3971
        %v4034 = vmul.f32 %v4033, %v4032
        %v4035 = vmul.f32 0.5, %v4034
        %v4036 = vsub.f32 1.5, %v4035
        %v4037 = vmul.f32 %v4032, %v4036
        %vm4038 = vweird.f32 %v3971
        %vm4039 = vweird.f32 %v4032
        %vm4040 = vmor %vm4038, %vm4039
        %v4041 = vsel %vm4040, %v4032, %v4037
        %v4042 = vrsqrt.pop %v3972
        %v4043 = vmul.f32 %v4042, %v3972
        %v4044 = vmul.f32 %v4043, %v4042
        %v4045 = vmul.f32 0.5, %v4044
        %v4046 = vsub.f32 1.5, %v4045
        %v4047 = vmul.f32 %v4042, %v4046
        %vm4048 = vweird.f32 %v3972
        %vm4049 = vweird.f32 %v4042
        %vm4050 = vmor %vm4048, %vm4049
        %v4051 = vsel %vm4050, %v4042, %v4047
        %v4052 = vrsqrt.pop %v3973
        %v4053 = vmul.f32 %v4052, %v3973
        %v4054 = vmul.f32 %v4053, %v4052
        %v4055 = vmul.f32 0.5, %v4054
        %v4056 = vsub.f32 1.5, %v4055
        %v4057 = vmul.f32 %v4052, %v4056
        %vm4058 = vweird.f32 %v3973
        %vm4059 = vweird.f32 %v4052
        %vm4060 = vmor %vm4058, %vm4059
        %v4061 = vsel %vm4060, %v4052, %v4057
        %v4062 = vrsqrt.pop %v3974
        %v4063 = vmul.f32 %v4062, %v3974
        %v4064 = vmul.f32 %v4063, %v4062
        %v4065 = vmul.f32 0.5, %v4064
        %v4066 = vsub.f32 1.5, %v4065
        %v4067 = vmul.f32 %v4062, %v4066
        %vm4068 = vweird.f32 %v3974
        %vm4069 = vweird.f32 %v4062
        %vm4070 = vmor %vm4068, %vm4069
        %v4071 = vsel %vm4070, %v4062, %v4067
        %v4072 = vrsqrt.pop %v3975
        %v4073 = vmul.f32 %v4072, %v3975
        %v4074 = vmul.f32 %v4073, %v4072
        %v4075 = vmul.f32 0.5, %v4074
        %v4076 = vsub.f32 1.5, %v4075
        %v4077 = vmul.f32 %v4072, %v4076
        %vm4078 = vweird.f32 %v3975
        %vm4079 = vweird.f32 %v4072
        %vm4080 = vmor %vm4078, %vm4079
        %v4081 = vsel %vm4080, %v4072, %v4077
        %v4082 = vrsqrt.pop %v3976
        %v4083 = vmul.f32 %v4082, %v3976
        %v4084 = vmul.f32 %v4083, %v4082
        %v4085 = vmul.f32 0.5, %v4084
        %v4086 = vsub.f32 1.5, %v4085
        %v4087 = vmul.f32 %v4082, %v4086
        %vm4088 = vweird.f32 %v3976
        %vm4089 = vweird.f32 %v4082
        %vm4090 = vmor %vm4088, %vm4089
        %v4091 = vsel %vm4090, %v4082, %v4087
        %v4092 = vrsqrt.pop %v3977
        %v4093 = vmul.f32 %v4092, %v3977
        %v4094 = vmul.f32 %v4093, %v4092
        %v4095 = vmul.f32 0.5, %v4094
        %v4096 = vsub.f32 1.5, %v4095
        %v4097 = vmul.f32 %v4092, %v4096
        %vm4098 = vweird.f32 %v3977
        %vm4099 = vweird.f32 %v4092
        %vm4100 = vmor %vm4098, %vm4099
        %v4101 = vsel %vm4100, %v4092, %v4097
        %v4102 = vrsqrt.pop %v3978
        %v4103 = vmul.f32 %v4102, %v3978
        %v4104 = vmul.f32 %v4103, %v4102
        %v4105 = vmul.f32 0.5, %v4104
        %v4106 = vsub.f32 1.5, %v4105
        %v4107 = vmul.f32 %v4102, %v4106
        %vm4108 = vweird.f32 %v3978
        %vm4109 = vweird.f32 %v4102
        %vm4110 = vmor %vm4108, %vm4109
        %v4111 = vsel %vm4110, %v4102, %v4107
        %v4112 = vrsqrt.pop %v3979
        %v4113 = vmul.f32 %v4112, %v3979
        %v4114 = vmul.f32 %v4113, %v4112
        %v4115 = vmul.f32 0.5, %v4114
        %v4116 = vsub.f32 1.5, %v4115
        %v4117 = vmul.f32 %v4112, %v4116
        %vm4118 = vweird.f32 %v3979
        %vm4119 = vweird.f32 %v4112
        %vm4120 = vmor %vm4118, %vm4119
        %v4121 = vsel %vm4120, %v4112, %v4117
        %v4122 = vrsqrt.pop %v3980
        %v4123 = vmul.f32 %v4122, %v3980
        %v4124 = vmul.f32 %v4123, %v4122
        %v4125 = vmul.f32 0.5, %v4124
        %v4126 = vsub.f32 1.5, %v4125
        %v4127 = vmul.f32 %v4122, %v4126
        %vm4128 = vweird.f32 %v3980
        %vm4129 = vweird.f32 %v4122
        %vm4130 = vmor %vm4128, %vm4129
        %v4131 = vsel %vm4130, %v4122, %v4127
        %v4132 = vrsqrt.pop %v3981
        %v4133 = vmul.f32 %v4132, %v3981
        %v4134 = vmul.f32 %v4133, %v4132
        %v4135 = vmul.f32 0.5, %v4134
        %v4136 = vsub.f32 1.5, %v4135
        %v4137 = vmul.f32 %v4132, %v4136
        %vm4138 = vweird.f32 %v3981
        %vm4139 = vweird.f32 %v4132
        %vm4140 = vmor %vm4138, %vm4139
        %v4141 = vsel %vm4140, %v4132, %v4137
        %v4142 = vmul.f32 %v2084, %v3991
        %v4143 = vmul.f32 %v2086, %v4001
        %v4144 = vmul.f32 %v2089, %v4011
        %v4145 = vmul.f32 %v2091, %v4021
        %v4146 = vmul.f32 %v2094, %v4031
        %v4147 = vmul.f32 %v2096, %v4041
        %v4148 = vmul.f32 %v2099, %v4051
        %v4149 = vmul.f32 %v2101, %v4061
        %v4150 = vmul.f32 %v2104, %v4071
        %v4151 = vmul.f32 %v2106, %v4081
        %v4152 = vmul.f32 %v2109, %v4091
        %v4153 = vmul.f32 %v2111, %v4101
        %v4154 = vmul.f32 %v2114, %v4111
        %v4155 = vmul.f32 %v2116, %v4121
        %v4156 = vmul.f32 %v2119, %v4131
        %v4157 = vmul.f32 %v2121, %v4141
        %v4158 = vmul.f32 %v4142, %v2335
        %v4159 = vmul.f32 %v4143, %v2336
        %v4160 = vmul.f32 %v4144, %v2337
        %v4161 = vmul.f32 %v4145, %v2338
        %v4162 = vmul.f32 %v4146, %v2339
        %v4163 = vmul.f32 %v4147, %v2340
        %v4164 = vmul.f32 %v4148, %v2341
        %v4165 = vmul.f32 %v4149, %v2342
        %v4166 = vmul.f32 %v4150, %v2343
        %v4167 = vmul.f32 %v4151, %v2344
        %v4168 = vmul.f32 %v4152, %v2345
        %v4169 = vmul.f32 %v4153, %v2346
        %v4170 = vmul.f32 %v4154, %v2347
        %v4171 = vmul.f32 %v4155, %v2348
        %v4172 = vmul.f32 %v4156, %v2349
        %v4173 = vmul.f32 %v4157, %v2350
        %4174 = vrot.lane.b32.xlu0 %v4142, 64
        %v4175 = vpop.permute.xlu0 %4174
        %4176 = vrot.lane.b32.xlu0 %v4143, 64
        %v4177 = vpop.permute.xlu0 %4176
        %4178 = vrot.lane.b32.xlu0 %v4144, 64
        %v4179 = vpop.permute.xlu0 %4178
        %4180 = vrot.lane.b32.xlu0 %v4145, 64
        %v4181 = vpop.permute.xlu0 %4180
        %4182 = vrot.lane.b32.xlu0 %v4146, 64
        %v4183 = vpop.permute.xlu0 %4182
        %4184 = vrot.lane.b32.xlu0 %v4147, 64
        %v4185 = vpop.permute.xlu0 %4184
        %4186 = vrot.lane.b32.xlu0 %v4148, 64
        %v4187 = vpop.permute.xlu0 %4186
        %4188 = vrot.lane.b32.xlu0 %v4149, 64
        %v4189 = vpop.permute.xlu0 %4188
        %4190 = vrot.lane.b32.xlu0 %v4150, 64
        %v4191 = vpop.permute.xlu0 %4190
        %4192 = vrot.lane.b32.xlu0 %v4151, 64
        %v4193 = vpop.permute.xlu0 %4192
        %4194 = vrot.lane.b32.xlu0 %v4152, 64
        %v4195 = vpop.permute.xlu0 %4194
        %4196 = vrot.lane.b32.xlu0 %v4153, 64
        %v4197 = vpop.permute.xlu0 %4196
        %4198 = vrot.lane.b32.xlu0 %v4154, 64
        %v4199 = vpop.permute.xlu0 %4198
        %4200 = vrot.lane.b32.xlu0 %v4155, 64
        %v4201 = vpop.permute.xlu0 %4200
        %4202 = vrot.lane.b32.xlu0 %v4156, 64
        %v4203 = vpop.permute.xlu0 %4202
        %4204 = vrot.lane.b32.xlu0 %v4157, 64
        %v4205 = vpop.permute.xlu0 %4204
        %v4206 = vmul.f32 %v4175, %v2368
        %v4207 = vmul.f32 %v4177, %v2369
        %v4208 = vmul.f32 %v4179, %v2370
        %v4209 = vmul.f32 %v4181, %v2371
        %v4210 = vmul.f32 %v4183, %v2372
        %v4211 = vmul.f32 %v4185, %v2373
        %v4212 = vmul.f32 %v4187, %v2374
        %v4213 = vmul.f32 %v4189, %v2375
        %v4214 = vmul.f32 %v4191, %v2376
        %v4215 = vmul.f32 %v4193, %v2377
        %v4216 = vmul.f32 %v4195, %v2378
        %v4217 = vmul.f32 %v4197, %v2379
        %v4218 = vmul.f32 %v4199, %v2380
        %v4219 = vmul.f32 %v4201, %v2381
        %v4220 = vmul.f32 %v4203, %v2382
        %v4221 = vmul.f32 %v4205, %v2383
        %v4222 = vadd.f32 %v4158, %v4206
        %v4223 = vadd.f32 %v4159, %v4207
        %v4224 = vadd.f32 %v4160, %v4208
        %v4225 = vadd.f32 %v4161, %v4209
        %v4226 = vadd.f32 %v4162, %v4210
        %v4227 = vadd.f32 %v4163, %v4211
        %v4228 = vadd.f32 %v4164, %v4212
        %v4229 = vadd.f32 %v4165, %v4213
        %v4230 = vadd.f32 %v4166, %v4214
        %v4231 = vadd.f32 %v4167, %v4215
        %v4232 = vadd.f32 %v4168, %v4216
        %v4233 = vadd.f32 %v4169, %v4217
        %v4234 = vadd.f32 %v4170, %v4218
        %v4235 = vadd.f32 %v4171, %v4219
        %v4236 = vadd.f32 %v4172, %v4220
        %v4237 = vadd.f32 %v4173, %v4221
        %v4238 = vpack.c.bf16 %v3887, %v3886
        %v4239 = vpack.c.bf16 %v3889, %v3888
        %v4240 = vpack.c.bf16 %v3891, %v3890
        %v4241 = vpack.c.bf16 %v3893, %v3892
        %v4242 = vpack.c.bf16 %v3895, %v3894
        %v4243 = vpack.c.bf16 %v3897, %v3896
        %v4244 = vpack.c.bf16 %v3899, %v3898
        %v4245 = vpack.c.bf16 %v3901, %v3900
        %v4246 = vpack.c.bf16 %v4223, %v4222
        %v4247 = vpack.c.bf16 %v4225, %v4224
        %v4248 = vpack.c.bf16 %v4227, %v4226
        %v4249 = vpack.c.bf16 %v4229, %v4228
        %v4250 = vpack.c.bf16 %v4231, %v4230
        %v4251 = vpack.c.bf16 %v4233, %v4232
        %v4252 = vpack.c.bf16 %v4235, %v4234
        %v4253 = vpack.c.bf16 %v4237, %v4236
        %4254 = vmatpush.bf16.xpose.msra.mxu0 %v4253
        %4255 = vmatpush.bf16.xpose.msra.mxu0 %v4252
        %4256 = vmatpush.bf16.xpose.msra.mxu0 %v4251
        %4257 = vmatpush.bf16.xpose.msra.mxu0 %v4250
        %4258 = vmatpush.bf16.xpose.msra.mxu0 %v4249
        %4259 = vmatpush.bf16.xpose.msra.mxu0 %v4248
        %4260 = vmatpush.bf16.xpose.msra.mxu0 %v4247
        %4261 = vmatpush.bf16.xpose.msra.mxu0 %v4246
        %4262 = vmatmul.bf16.gmra.mxu0 %v4238
        %v4263 = vpop.f32.mrf.mxu0
        %v4264 = vadd.f32 %v2419, %v4263
        %v4265 = vpop.f32.mrf.mxu0
        %v4266 = vadd.f32 %v2420, %v4265
        %4267 = vmatmul.bf16.gmra.mxu0 %v4239
        %v4268 = vpop.f32.mrf.mxu0
        %v4269 = vadd.f32 %v2421, %v4268
        %v4270 = vpop.f32.mrf.mxu0
        %v4271 = vadd.f32 %v2422, %v4270
        %4272 = vmatmul.bf16.gmra.mxu0 %v4240
        %v4273 = vpop.f32.mrf.mxu0
        %v4274 = vadd.f32 %v2423, %v4273
        %v4275 = vpop.f32.mrf.mxu0
        %v4276 = vadd.f32 %v2424, %v4275
        %4277 = vmatmul.bf16.gmra.mxu0 %v4241
        %v4278 = vpop.f32.mrf.mxu0
        %v4279 = vadd.f32 %v2425, %v4278
        %v4280 = vpop.f32.mrf.mxu0
        %v4281 = vadd.f32 %v2426, %v4280
        %4282 = vmatmul.bf16.gmra.mxu0 %v4242
        %v4283 = vpop.f32.mrf.mxu0
        %v4284 = vadd.f32 %v2427, %v4283
        %v4285 = vpop.f32.mrf.mxu0
        %v4286 = vadd.f32 %v2428, %v4285
        %4287 = vmatmul.bf16.gmra.mxu0 %v4243
        %v4288 = vpop.f32.mrf.mxu0
        %v4289 = vadd.f32 %v2429, %v4288
        %v4290 = vpop.f32.mrf.mxu0
        %v4291 = vadd.f32 %v2430, %v4290
        %4292 = vmatmul.bf16.gmra.mxu0 %v4244
        %v4293 = vpop.f32.mrf.mxu0
        %v4294 = vadd.f32 %v2431, %v4293
        %v4295 = vpop.f32.mrf.mxu0
        %v4296 = vadd.f32 %v2432, %v4295
        %4297 = vmatmul.bf16.gmra.mxu0 %v4245
        %v4298 = vpop.f32.mrf.mxu0
        %v4299 = vadd.f32 %v2433, %v4298
        %v4300 = vpop.f32.mrf.mxu0
        %v4301 = vadd.f32 %v2434, %v4300
        %4302 = vdwg.mxu0
        %4303 = vmax.xlane.f32.xlu0 %v4264
        %v4304 = vpop.xlane.xlu0 %4303
        %4305 = vmax.xlane.f32.xlu0 %v4266
        %v4306 = vpop.xlane.xlu0 %4305
        %4307 = vmax.xlane.f32.xlu0 %v4269
        %v4308 = vpop.xlane.xlu0 %4307
        %4309 = vmax.xlane.f32.xlu0 %v4271
        %v4310 = vpop.xlane.xlu0 %4309
        %4311 = vmax.xlane.f32.xlu0 %v4274
        %v4312 = vpop.xlane.xlu0 %4311
        %4313 = vmax.xlane.f32.xlu0 %v4276
        %v4314 = vpop.xlane.xlu0 %4313
        %4315 = vmax.xlane.f32.xlu0 %v4279
        %v4316 = vpop.xlane.xlu0 %4315
        %4317 = vmax.xlane.f32.xlu0 %v4281
        %v4318 = vpop.xlane.xlu0 %4317
        %4319 = vmax.xlane.f32.xlu0 %v4284
        %v4320 = vpop.xlane.xlu0 %4319
        %4321 = vmax.xlane.f32.xlu0 %v4286
        %v4322 = vpop.xlane.xlu0 %4321
        %4323 = vmax.xlane.f32.xlu0 %v4289
        %v4324 = vpop.xlane.xlu0 %4323
        %4325 = vmax.xlane.f32.xlu0 %v4291
        %v4326 = vpop.xlane.xlu0 %4325
        %4327 = vmax.xlane.f32.xlu0 %v4294
        %v4328 = vpop.xlane.xlu0 %4327
        %4329 = vmax.xlane.f32.xlu0 %v4296
        %v4330 = vpop.xlane.xlu0 %4329
        %4331 = vmax.xlane.f32.xlu0 %v4299
        %v4332 = vpop.xlane.xlu0 %4331
        %4333 = vmax.xlane.f32.xlu0 %v4301
        %v4334 = vpop.xlane.xlu0 %4333
        %v4335 = vsub.f32 %v4264, %v4304
        %v4336 = vsub.f32 %v4266, %v4306
        %v4337 = vsub.f32 %v4269, %v4308
        %v4338 = vsub.f32 %v4271, %v4310
        %v4339 = vsub.f32 %v4274, %v4312
        %v4340 = vsub.f32 %v4276, %v4314
        %v4341 = vsub.f32 %v4279, %v4316
        %v4342 = vsub.f32 %v4281, %v4318
        %v4343 = vsub.f32 %v4284, %v4320
        %v4344 = vsub.f32 %v4286, %v4322
        %v4345 = vsub.f32 %v4289, %v4324
        %v4346 = vsub.f32 %v4291, %v4326
        %v4347 = vsub.f32 %v4294, %v4328
        %v4348 = vsub.f32 %v4296, %v4330
        %v4349 = vsub.f32 %v4299, %v4332
        %v4350 = vsub.f32 %v4301, %v4334
        %v4351 = vmul.f32 %v4335, 1.442695
        %v4352 = vpow.pop %v4351
        %v4353 = vmul.f32 %v4336, 1.442695
        %v4354 = vpow.pop %v4353
        %v4355 = vmul.f32 %v4337, 1.442695
        %v4356 = vpow.pop %v4355
        %v4357 = vmul.f32 %v4338, 1.442695
        %v4358 = vpow.pop %v4357
        %v4359 = vmul.f32 %v4339, 1.442695
        %v4360 = vpow.pop %v4359
        %v4361 = vmul.f32 %v4340, 1.442695
        %v4362 = vpow.pop %v4361
        %v4363 = vmul.f32 %v4341, 1.442695
        %v4364 = vpow.pop %v4363
        %v4365 = vmul.f32 %v4342, 1.442695
        %v4366 = vpow.pop %v4365
        %v4367 = vmul.f32 %v4343, 1.442695
        %v4368 = vpow.pop %v4367
        %v4369 = vmul.f32 %v4344, 1.442695
        %v4370 = vpow.pop %v4369
        %v4371 = vmul.f32 %v4345, 1.442695
        %v4372 = vpow.pop %v4371
        %v4373 = vmul.f32 %v4346, 1.442695
        %v4374 = vpow.pop %v4373
        %v4375 = vmul.f32 %v4347, 1.442695
        %v4376 = vpow.pop %v4375
        %v4377 = vmul.f32 %v4348, 1.442695
        %v4378 = vpow.pop %v4377
        %v4379 = vmul.f32 %v4349, 1.442695
        %v4380 = vpow.pop %v4379
        %v4381 = vmul.f32 %v4350, 1.442695
        %v4382 = vpow.pop %v4381
        %4383 = vadd.xlane.f32.xlu0 %v4352
        %v4384 = vpop.xlane.xlu0 %4383
        %4385 = vadd.xlane.f32.xlu0 %v4354
        %v4386 = vpop.xlane.xlu0 %4385
        %4387 = vadd.xlane.f32.xlu0 %v4356
        %v4388 = vpop.xlane.xlu0 %4387
        %4389 = vadd.xlane.f32.xlu0 %v4358
        %v4390 = vpop.xlane.xlu0 %4389
        %4391 = vadd.xlane.f32.xlu0 %v4360
        %v4392 = vpop.xlane.xlu0 %4391
        %4393 = vadd.xlane.f32.xlu0 %v4362
        %v4394 = vpop.xlane.xlu0 %4393
        %4395 = vadd.xlane.f32.xlu0 %v4364
        %v4396 = vpop.xlane.xlu0 %4395
        %4397 = vadd.xlane.f32.xlu0 %v4366
        %v4398 = vpop.xlane.xlu0 %4397
        %4399 = vadd.xlane.f32.xlu0 %v4368
        %v4400 = vpop.xlane.xlu0 %4399
        %4401 = vadd.xlane.f32.xlu0 %v4370
        %v4402 = vpop.xlane.xlu0 %4401
        %4403 = vadd.xlane.f32.xlu0 %v4372
        %v4404 = vpop.xlane.xlu0 %4403
        %4405 = vadd.xlane.f32.xlu0 %v4374
        %v4406 = vpop.xlane.xlu0 %4405
        %4407 = vadd.xlane.f32.xlu0 %v4376
        %v4408 = vpop.xlane.xlu0 %4407
        %4409 = vadd.xlane.f32.xlu0 %v4378
        %v4410 = vpop.xlane.xlu0 %4409
        %4411 = vadd.xlane.f32.xlu0 %v4380
        %v4412 = vpop.xlane.xlu0 %4411
        %4413 = vadd.xlane.f32.xlu0 %v4382
        %v4414 = vpop.xlane.xlu0 %4413
        %v4415 = vrcp.pop %v4384
        %v4416 = vrcp.pop %v4386
        %v4417 = vrcp.pop %v4388
        %v4418 = vrcp.pop %v4390
        %v4419 = vrcp.pop %v4392
        %v4420 = vrcp.pop %v4394
        %v4421 = vrcp.pop %v4396
        %v4422 = vrcp.pop %v4398
        %v4423 = vrcp.pop %v4400
        %v4424 = vrcp.pop %v4402
        %v4425 = vrcp.pop %v4404
        %v4426 = vrcp.pop %v4406
        %v4427 = vrcp.pop %v4408
        %v4428 = vrcp.pop %v4410
        %v4429 = vrcp.pop %v4412
        %v4430 = vrcp.pop %v4414
        %v4431 = vpack.c.bf16 %v4354, %v4352
        %v4432 = vpack.c.bf16 %v4358, %v4356
        %v4433 = vpack.c.bf16 %v4362, %v4360
        %v4434 = vpack.c.bf16 %v4366, %v4364
        %v4435 = vpack.c.bf16 %v4370, %v4368
        %v4436 = vpack.c.bf16 %v4374, %v4372
        %v4437 = vpack.c.bf16 %v4378, %v4376
        %v4438 = vpack.c.bf16 %v4382, %v4380
        %v4439 = vpack.c.bf16 %v2552, %v2550
        %v4440 = vpack.c.bf16 %v2556, %v2554
        %v4441 = vpack.c.bf16 %v2560, %v2558
        %v4442 = vpack.c.bf16 %v2564, %v2562
        %v4443 = vpack.c.bf16 %v2568, %v2566
        %v4444 = vpack.c.bf16 %v2572, %v2570
        %v4445 = vpack.c.bf16 %v2576, %v2574
        %v4446 = vpack.c.bf16 %v2580, %v2578
        %4447 = vmatpush.bf16.msra.mxu0 %v4446
        %4448 = vmatpush.bf16.msra.mxu0 %v4445
        %4449 = vmatpush.bf16.msra.mxu0 %v4444
        %4450 = vmatpush.bf16.msra.mxu0 %v4443
        %4451 = vmatpush.bf16.msra.mxu0 %v4442
        %4452 = vmatpush.bf16.msra.mxu0 %v4441
        %4453 = vmatpush.bf16.msra.mxu0 %v4440
        %4454 = vmatpush.bf16.msra.mxu0 %v4439
        %4455 = vmatmul.bf16.gmra.mxu0 %v4431
        %v4456 = vpop.f32.mrf.mxu0
        %v4457 = vadd.f32 0.0, %v4456
        %v4458 = vpop.f32.mrf.mxu0
        %v4459 = vadd.f32 0.0, %v4458
        %4460 = vmatmul.bf16.gmra.mxu0 %v4432
        %v4461 = vpop.f32.mrf.mxu0
        %v4462 = vadd.f32 0.0, %v4461
        %v4463 = vpop.f32.mrf.mxu0
        %v4464 = vadd.f32 0.0, %v4463
        %4465 = vmatmul.bf16.gmra.mxu0 %v4433
        %v4466 = vpop.f32.mrf.mxu0
        %v4467 = vadd.f32 0.0, %v4466
        %v4468 = vpop.f32.mrf.mxu0
        %v4469 = vadd.f32 0.0, %v4468
        %4470 = vmatmul.bf16.gmra.mxu0 %v4434
        %v4471 = vpop.f32.mrf.mxu0
        %v4472 = vadd.f32 0.0, %v4471
        %v4473 = vpop.f32.mrf.mxu0
        %v4474 = vadd.f32 0.0, %v4473
        %4475 = vmatmul.bf16.gmra.mxu0 %v4435
        %v4476 = vpop.f32.mrf.mxu0
        %v4477 = vadd.f32 0.0, %v4476
        %v4478 = vpop.f32.mrf.mxu0
        %v4479 = vadd.f32 0.0, %v4478
        %4480 = vmatmul.bf16.gmra.mxu0 %v4436
        %v4481 = vpop.f32.mrf.mxu0
        %v4482 = vadd.f32 0.0, %v4481
        %v4483 = vpop.f32.mrf.mxu0
        %v4484 = vadd.f32 0.0, %v4483
        %4485 = vmatmul.bf16.gmra.mxu0 %v4437
        %v4486 = vpop.f32.mrf.mxu0
        %v4487 = vadd.f32 0.0, %v4486
        %v4488 = vpop.f32.mrf.mxu0
        %v4489 = vadd.f32 0.0, %v4488
        %4490 = vmatmul.bf16.gmra.mxu0 %v4438
        %v4491 = vpop.f32.mrf.mxu0
        %v4492 = vadd.f32 0.0, %v4491
        %v4493 = vpop.f32.mrf.mxu0
        %v4494 = vadd.f32 0.0, %v4493
        %4495 = vdwg.mxu0
        %v4496 = vmul.f32 %v4457, %v4415
        %v4497 = vmul.f32 %v4459, %v4416
        %v4498 = vmul.f32 %v4462, %v4417
        %v4499 = vmul.f32 %v4464, %v4418
        %v4500 = vmul.f32 %v4467, %v4419
        %v4501 = vmul.f32 %v4469, %v4420
        %v4502 = vmul.f32 %v4472, %v4421
        %v4503 = vmul.f32 %v4474, %v4422
        %v4504 = vmul.f32 %v4477, %v4423
        %v4505 = vmul.f32 %v4479, %v4424
        %v4506 = vmul.f32 %v4482, %v4425
        %v4507 = vmul.f32 %v4484, %v4426
        %v4508 = vmul.f32 %v4487, %v4427
        %v4509 = vmul.f32 %v4489, %v4428
        %v4510 = vmul.f32 %v4492, %v4429
        %v4511 = vmul.f32 %v4494, %v4430
        %v4512 = vpack.c.bf16 %v3535, %v3534
        %v4513 = vpack.c.bf16 %v4497, %v4496
        %v4514 = vpack.c.bf16 %v3537, %v3536
        %v4515 = vpack.c.bf16 %v4499, %v4498
        %v4516 = vpack.c.bf16 %v3539, %v3538
        %v4517 = vpack.c.bf16 %v4501, %v4500
        %v4518 = vpack.c.bf16 %v3541, %v3540
        %v4519 = vpack.c.bf16 %v4503, %v4502
        %v4520 = vpack.c.bf16 %v3543, %v3542
        %v4521 = vpack.c.bf16 %v4505, %v4504
        %v4522 = vpack.c.bf16 %v3545, %v3544
        %v4523 = vpack.c.bf16 %v4507, %v4506
        %v4524 = vpack.c.bf16 %v3547, %v3546
        %v4525 = vpack.c.bf16 %v4509, %v4508
        %v4526 = vpack.c.bf16 %v3549, %v3548
        %v4527 = vpack.c.bf16 %v4511, %v4510
        %v4528 = vld [vmem:[%s476] sm:$0xff]
        %v4529 = vld [vmem:[%s476 + $0x8] sm:$0xff]
        %v4530 = vld [vmem:[%s476 + $0x10] sm:$0xff]
        %v4531 = vld [vmem:[%s476 + $0x18] sm:$0xff]
        %v4532 = vld [vmem:[%s476 + $0x20] sm:$0xff]
        %v4533 = vld [vmem:[%s476 + $0x28] sm:$0xff]
        %v4534 = vld [vmem:[%s476 + $0x30] sm:$0xff]
        %v4535 = vld [vmem:[%s476 + $0x38] sm:$0xff]
        %v4536 = vld [vmem:[%s476 + $0x40] sm:$0xff]
        %v4537 = vld [vmem:[%s476 + $0x48] sm:$0xff]
        %v4538 = vld [vmem:[%s476 + $0x50] sm:$0xff]
        %v4539 = vld [vmem:[%s476 + $0x58] sm:$0xff]
        %v4540 = vld [vmem:[%s476 + $0x60] sm:$0xff]
        %v4541 = vld [vmem:[%s476 + $0x68] sm:$0xff]
        %v4542 = vld [vmem:[%s476 + $0x70] sm:$0xff]
        %v4543 = vld [vmem:[%s476 + $0x78] sm:$0xff]
        %v4544 = vld [vmem:[%s476 + $0x80] sm:$0xff]
        %v4545 = vld [vmem:[%s476 + $0x88] sm:$0xff]
        %v4546 = vld [vmem:[%s476 + $0x90] sm:$0xff]
        %v4547 = vld [vmem:[%s476 + $0x98] sm:$0xff]
        %v4548 = vld [vmem:[%s476 + $0xa0] sm:$0xff]
        %v4549 = vld [vmem:[%s476 + $0xa8] sm:$0xff]
        %v4550 = vld [vmem:[%s476 + $0xb0] sm:$0xff]
        %v4551 = vld [vmem:[%s476 + $0xb8] sm:$0xff]
        %v4552 = vld [vmem:[%s476 + $0xc0] sm:$0xff]
        %v4553 = vld [vmem:[%s476 + $0xc8] sm:$0xff]
        %v4554 = vld [vmem:[%s476 + $0xd0] sm:$0xff]
        %v4555 = vld [vmem:[%s476 + $0xd8] sm:$0xff]
        %v4556 = vld [vmem:[%s476 + $0xe0] sm:$0xff]
        %v4557 = vld [vmem:[%s476 + $0xe8] sm:$0xff]
        %v4558 = vld [vmem:[%s476 + $0xf0] sm:$0xff]
        %v4559 = vld [vmem:[%s476 + $0xf8] sm:$0xff]
        %v4592 = vunpack.c.l.b16 %v4528
        %v4593 = vunpack.c.h.b16 %v4528
        %v4594 = vunpack.c.l.b16 %v4529
        %v4595 = vunpack.c.h.b16 %v4529
        %v4596 = vunpack.c.l.b16 %v4530
        %v4597 = vunpack.c.h.b16 %v4530
        %v4598 = vunpack.c.l.b16 %v4531
        %v4599 = vunpack.c.h.b16 %v4531
        %v4600 = vunpack.c.l.b16 %v4532
        %v4601 = vunpack.c.h.b16 %v4532
        %v4602 = vunpack.c.l.b16 %v4533
        %v4603 = vunpack.c.h.b16 %v4533
        %v4604 = vunpack.c.l.b16 %v4534
        %v4605 = vunpack.c.h.b16 %v4534
        %v4606 = vunpack.c.l.b16 %v4535
        %v4607 = vunpack.c.h.b16 %v4535
        %v4608 = vunpack.c.l.b16 %v4536
        %v4609 = vunpack.c.h.b16 %v4536
        %v4610 = vunpack.c.l.b16 %v4537
        %v4611 = vunpack.c.h.b16 %v4537
        %v4612 = vunpack.c.l.b16 %v4538
        %v4613 = vunpack.c.h.b16 %v4538
        %v4614 = vunpack.c.l.b16 %v4539
        %v4615 = vunpack.c.h.b16 %v4539
        %v4616 = vunpack.c.l.b16 %v4540
        %v4617 = vunpack.c.h.b16 %v4540
        %v4618 = vunpack.c.l.b16 %v4541
        %v4619 = vunpack.c.h.b16 %v4541
        %v4620 = vunpack.c.l.b16 %v4542
        %v4621 = vunpack.c.h.b16 %v4542
        %v4622 = vunpack.c.l.b16 %v4543
        %v4623 = vunpack.c.h.b16 %v4543
        %v4624 = vunpack.c.l.b16 %v4544
        %v4625 = vunpack.c.h.b16 %v4544
        %v4626 = vunpack.c.l.b16 %v4545
        %v4627 = vunpack.c.h.b16 %v4545
        %v4628 = vunpack.c.l.b16 %v4546
        %v4629 = vunpack.c.h.b16 %v4546
        %v4630 = vunpack.c.l.b16 %v4547
        %v4631 = vunpack.c.h.b16 %v4547
        %v4632 = vunpack.c.l.b16 %v4548
        %v4633 = vunpack.c.h.b16 %v4548
        %v4634 = vunpack.c.l.b16 %v4549
        %v4635 = vunpack.c.h.b16 %v4549
        %v4636 = vunpack.c.l.b16 %v4550
        %v4637 = vunpack.c.h.b16 %v4550
        %v4638 = vunpack.c.l.b16 %v4551
        %v4639 = vunpack.c.h.b16 %v4551
        %v4640 = vunpack.c.l.b16 %v4552
        %v4641 = vunpack.c.h.b16 %v4552
        %v4642 = vunpack.c.l.b16 %v4553
        %v4643 = vunpack.c.h.b16 %v4553
        %v4644 = vunpack.c.l.b16 %v4554
        %v4645 = vunpack.c.h.b16 %v4554
        %v4646 = vunpack.c.l.b16 %v4555
        %v4647 = vunpack.c.h.b16 %v4555
        %v4648 = vunpack.c.l.b16 %v4556
        %v4649 = vunpack.c.h.b16 %v4556
        %v4650 = vunpack.c.l.b16 %v4557
        %v4651 = vunpack.c.h.b16 %v4557
        %v4652 = vunpack.c.l.b16 %v4558
        %v4653 = vunpack.c.h.b16 %v4558
        %v4654 = vunpack.c.l.b16 %v4559
        %v4655 = vunpack.c.h.b16 %v4559
        %v4656 = vpack.c.b16 %v4594, %v4592
        %v4657 = vpack.c.b16 %v4595, %v4593
        %v4658 = vpack.c.b16 %v4598, %v4596
        %v4659 = vpack.c.b16 %v4599, %v4597
        %v4660 = vpack.c.b16 %v4602, %v4600
        %v4661 = vpack.c.b16 %v4603, %v4601
        %v4662 = vpack.c.b16 %v4606, %v4604
        %v4663 = vpack.c.b16 %v4607, %v4605
        %v4664 = vpack.c.b16 %v4610, %v4608
        %v4665 = vpack.c.b16 %v4611, %v4609
        %v4666 = vpack.c.b16 %v4614, %v4612
        %v4667 = vpack.c.b16 %v4615, %v4613
        %v4668 = vpack.c.b16 %v4618, %v4616
        %v4669 = vpack.c.b16 %v4619, %v4617
        %v4670 = vpack.c.b16 %v4622, %v4620
        %v4671 = vpack.c.b16 %v4623, %v4621
        %v4672 = vpack.c.b16 %v4626, %v4624
        %v4673 = vpack.c.b16 %v4627, %v4625
        %v4674 = vpack.c.b16 %v4630, %v4628
        %v4675 = vpack.c.b16 %v4631, %v4629
        %v4676 = vpack.c.b16 %v4634, %v4632
        %v4677 = vpack.c.b16 %v4635, %v4633
        %v4678 = vpack.c.b16 %v4638, %v4636
        %v4679 = vpack.c.b16 %v4639, %v4637
        %v4680 = vpack.c.b16 %v4642, %v4640
        %v4681 = vpack.c.b16 %v4643, %v4641
        %v4682 = vpack.c.b16 %v4646, %v4644
        %v4683 = vpack.c.b16 %v4647, %v4645
        %v4684 = vpack.c.b16 %v4650, %v4648
        %v4685 = vpack.c.b16 %v4651, %v4649
        %v4686 = vpack.c.b16 %v4654, %v4652
        %v4687 = vpack.c.b16 %v4655, %v4653
        %4720 = vmatpush.bf16.msra.mxu0 %v4670
        %4721 = vmatpush.bf16.msra.mxu0 %v4668
        %4722 = vmatpush.bf16.msra.mxu0 %v4666
        %4723 = vmatpush.bf16.msra.mxu0 %v4664
        %4724 = vmatpush.bf16.msra.mxu0 %v4662
        %4725 = vmatpush.bf16.msra.mxu0 %v4660
        %4726 = vmatpush.bf16.msra.mxu0 %v4658
        %4727 = vmatpush.bf16.msra.mxu0 %v4656
        %4728 = vmatmul.bf16.gmra.mxu0 %v4512
        %v4729 = vpop.f32.mrf.mxu0
        %v4730 = vadd.f32 0.0, %v4729
        %v4731 = vpop.f32.mrf.mxu0
        %v4732 = vadd.f32 0.0, %v4731
        %4733 = vmatmul.bf16.gmra.mxu0 %v4514
        %v4734 = vpop.f32.mrf.mxu0
        %v4735 = vadd.f32 0.0, %v4734
        %v4736 = vpop.f32.mrf.mxu0
        %v4737 = vadd.f32 0.0, %v4736
        %4738 = vmatmul.bf16.gmra.mxu0 %v4516
        %v4739 = vpop.f32.mrf.mxu0
        %v4740 = vadd.f32 0.0, %v4739
        %v4741 = vpop.f32.mrf.mxu0
        %v4742 = vadd.f32 0.0, %v4741
        %4743 = vmatmul.bf16.gmra.mxu0 %v4518
        %v4744 = vpop.f32.mrf.mxu0
        %v4745 = vadd.f32 0.0, %v4744
        %v4746 = vpop.f32.mrf.mxu0
        %v4747 = vadd.f32 0.0, %v4746
        %4748 = vmatmul.bf16.gmra.mxu0 %v4520
        %v4749 = vpop.f32.mrf.mxu0
        %v4750 = vadd.f32 0.0, %v4749
        %v4751 = vpop.f32.mrf.mxu0
        %v4752 = vadd.f32 0.0, %v4751
        %4753 = vmatmul.bf16.gmra.mxu0 %v4522
        %v4754 = vpop.f32.mrf.mxu0
        %v4755 = vadd.f32 0.0, %v4754
        %v4756 = vpop.f32.mrf.mxu0
        %v4757 = vadd.f32 0.0, %v4756
        %4758 = vmatmul.bf16.gmra.mxu0 %v4524
        %v4759 = vpop.f32.mrf.mxu0
        %v4760 = vadd.f32 0.0, %v4759
        %v4761 = vpop.f32.mrf.mxu0
        %v4762 = vadd.f32 0.0, %v4761
        %4763 = vmatmul.bf16.gmra.mxu0 %v4526
        %v4764 = vpop.f32.mrf.mxu0
        %v4765 = vadd.f32 0.0, %v4764
        %v4766 = vpop.f32.mrf.mxu0
        %v4767 = vadd.f32 0.0, %v4766
        %4768 = vdwg.mxu0
        %4769 = vmatpush.bf16.msra.mxu0 %v4686
        %4770 = vmatpush.bf16.msra.mxu0 %v4684
        %4771 = vmatpush.bf16.msra.mxu0 %v4682
        %4772 = vmatpush.bf16.msra.mxu0 %v4680
        %4773 = vmatpush.bf16.msra.mxu0 %v4678
        %4774 = vmatpush.bf16.msra.mxu0 %v4676
        %4775 = vmatpush.bf16.msra.mxu0 %v4674
        %4776 = vmatpush.bf16.msra.mxu0 %v4672
        %4777 = vmatmul.bf16.gmra.mxu0 %v4513
        %v4778 = vpop.f32.mrf.mxu0
        %v4779 = vadd.f32 %v4730, %v4778
        %v4780 = vpop.f32.mrf.mxu0
        %v4781 = vadd.f32 %v4732, %v4780
        %4782 = vmatmul.bf16.gmra.mxu0 %v4515
        %v4783 = vpop.f32.mrf.mxu0
        %v4784 = vadd.f32 %v4735, %v4783
        %v4785 = vpop.f32.mrf.mxu0
        %v4786 = vadd.f32 %v4737, %v4785
        %4787 = vmatmul.bf16.gmra.mxu0 %v4517
        %v4788 = vpop.f32.mrf.mxu0
        %v4789 = vadd.f32 %v4740, %v4788
        %v4790 = vpop.f32.mrf.mxu0
        %v4791 = vadd.f32 %v4742, %v4790
        %4792 = vmatmul.bf16.gmra.mxu0 %v4519
        %v4793 = vpop.f32.mrf.mxu0
        %v4794 = vadd.f32 %v4745, %v4793
        %v4795 = vpop.f32.mrf.mxu0
        %v4796 = vadd.f32 %v4747, %v4795
        %4797 = vmatmul.bf16.gmra.mxu0 %v4521
        %v4798 = vpop.f32.mrf.mxu0
        %v4799 = vadd.f32 %v4750, %v4798
        %v4800 = vpop.f32.mrf.mxu0
        %v4801 = vadd.f32 %v4752, %v4800
        %4802 = vmatmul.bf16.gmra.mxu0 %v4523
        %v4803 = vpop.f32.mrf.mxu0
        %v4804 = vadd.f32 %v4755, %v4803
        %v4805 = vpop.f32.mrf.mxu0
        %v4806 = vadd.f32 %v4757, %v4805
        %4807 = vmatmul.bf16.gmra.mxu0 %v4525
        %v4808 = vpop.f32.mrf.mxu0
        %v4809 = vadd.f32 %v4760, %v4808
        %v4810 = vpop.f32.mrf.mxu0
        %v4811 = vadd.f32 %v4762, %v4810
        %4812 = vmatmul.bf16.gmra.mxu0 %v4527
        %v4813 = vpop.f32.mrf.mxu0
        %v4814 = vadd.f32 %v4765, %v4813
        %v4815 = vpop.f32.mrf.mxu0
        %v4816 = vadd.f32 %v4767, %v4815
        %4817 = vdwg.mxu0
        %4818 = vmatpush.bf16.msra.mxu0 %v4671
        %4819 = vmatpush.bf16.msra.mxu0 %v4669
        %4820 = vmatpush.bf16.msra.mxu0 %v4667
        %4821 = vmatpush.bf16.msra.mxu0 %v4665
        %4822 = vmatpush.bf16.msra.mxu0 %v4663
        %4823 = vmatpush.bf16.msra.mxu0 %v4661
        %4824 = vmatpush.bf16.msra.mxu0 %v4659
        %4825 = vmatpush.bf16.msra.mxu0 %v4657
        %4826 = vmatmul.bf16.gmra.mxu0 %v4512
        %v4827 = vpop.f32.mrf.mxu0
        %v4828 = vadd.f32 0.0, %v4827
        %v4829 = vpop.f32.mrf.mxu0
        %v4830 = vadd.f32 0.0, %v4829
        %4831 = vmatmul.bf16.gmra.mxu0 %v4514
        %v4832 = vpop.f32.mrf.mxu0
        %v4833 = vadd.f32 0.0, %v4832
        %v4834 = vpop.f32.mrf.mxu0
        %v4835 = vadd.f32 0.0, %v4834
        %4836 = vmatmul.bf16.gmra.mxu0 %v4516
        %v4837 = vpop.f32.mrf.mxu0
        %v4838 = vadd.f32 0.0, %v4837
        %v4839 = vpop.f32.mrf.mxu0
        %v4840 = vadd.f32 0.0, %v4839
        %4841 = vmatmul.bf16.gmra.mxu0 %v4518
        %v4842 = vpop.f32.mrf.mxu0
        %v4843 = vadd.f32 0.0, %v4842
        %v4844 = vpop.f32.mrf.mxu0
        %v4845 = vadd.f32 0.0, %v4844
        %4846 = vmatmul.bf16.gmra.mxu0 %v4520
        %v4847 = vpop.f32.mrf.mxu0
        %v4848 = vadd.f32 0.0, %v4847
        %v4849 = vpop.f32.mrf.mxu0
        %v4850 = vadd.f32 0.0, %v4849
        %4851 = vmatmul.bf16.gmra.mxu0 %v4522
        %v4852 = vpop.f32.mrf.mxu0
        %v4853 = vadd.f32 0.0, %v4852
        %v4854 = vpop.f32.mrf.mxu0
        %v4855 = vadd.f32 0.0, %v4854
        %4856 = vmatmul.bf16.gmra.mxu0 %v4524
        %v4857 = vpop.f32.mrf.mxu0
        %v4858 = vadd.f32 0.0, %v4857
        %v4859 = vpop.f32.mrf.mxu0
        %v4860 = vadd.f32 0.0, %v4859
        %4861 = vmatmul.bf16.gmra.mxu0 %v4526
        %v4862 = vpop.f32.mrf.mxu0
        %v4863 = vadd.f32 0.0, %v4862
        %v4864 = vpop.f32.mrf.mxu0
        %v4865 = vadd.f32 0.0, %v4864
        %4866 = vdwg.mxu0
        %4867 = vmatpush.bf16.msra.mxu0 %v4687
        %4868 = vmatpush.bf16.msra.mxu0 %v4685
        %4869 = vmatpush.bf16.msra.mxu0 %v4683
        %4870 = vmatpush.bf16.msra.mxu0 %v4681
        %4871 = vmatpush.bf16.msra.mxu0 %v4679
        %4872 = vmatpush.bf16.msra.mxu0 %v4677
        %4873 = vmatpush.bf16.msra.mxu0 %v4675
        %4874 = vmatpush.bf16.msra.mxu0 %v4673
        %4875 = vmatmul.bf16.gmra.mxu0 %v4513
        %v4876 = vpop.f32.mrf.mxu0
        %v4877 = vadd.f32 %v4828, %v4876
        %v4878 = vpop.f32.mrf.mxu0
        %v4879 = vadd.f32 %v4830, %v4878
        %4880 = vmatmul.bf16.gmra.mxu0 %v4515
        %v4881 = vpop.f32.mrf.mxu0
        %v4882 = vadd.f32 %v4833, %v4881
        %v4883 = vpop.f32.mrf.mxu0
        %v4884 = vadd.f32 %v4835, %v4883
        %4885 = vmatmul.bf16.gmra.mxu0 %v4517
        %v4886 = vpop.f32.mrf.mxu0
        %v4887 = vadd.f32 %v4838, %v4886
        %v4888 = vpop.f32.mrf.mxu0
        %v4889 = vadd.f32 %v4840, %v4888
        %4890 = vmatmul.bf16.gmra.mxu0 %v4519
        %v4891 = vpop.f32.mrf.mxu0
        %v4892 = vadd.f32 %v4843, %v4891
        %v4893 = vpop.f32.mrf.mxu0
        %v4894 = vadd.f32 %v4845, %v4893
        %4895 = vmatmul.bf16.gmra.mxu0 %v4521
        %v4896 = vpop.f32.mrf.mxu0
        %v4897 = vadd.f32 %v4848, %v4896
        %v4898 = vpop.f32.mrf.mxu0
        %v4899 = vadd.f32 %v4850, %v4898
        %4900 = vmatmul.bf16.gmra.mxu0 %v4523
        %v4901 = vpop.f32.mrf.mxu0
        %v4902 = vadd.f32 %v4853, %v4901
        %v4903 = vpop.f32.mrf.mxu0
        %v4904 = vadd.f32 %v4855, %v4903
        %4905 = vmatmul.bf16.gmra.mxu0 %v4525
        %v4906 = vpop.f32.mrf.mxu0
        %v4907 = vadd.f32 %v4858, %v4906
        %v4908 = vpop.f32.mrf.mxu0
        %v4909 = vadd.f32 %v4860, %v4908
        %4910 = vmatmul.bf16.gmra.mxu0 %v4527
        %v4911 = vpop.f32.mrf.mxu0
        %v4912 = vadd.f32 %v4863, %v4911
        %v4913 = vpop.f32.mrf.mxu0
        %v4914 = vadd.f32 %v4865, %v4913
        %4915 = vdwg.mxu0
        %v4916 = vadd.f32 %v796, %v4779
        %v4917 = vadd.f32 %v797, %v4877
        %v4918 = vadd.f32 %v798, %v4781
        %v4919 = vadd.f32 %v799, %v4879
        %v4920 = vadd.f32 %v800, %v4784
        %v4921 = vadd.f32 %v801, %v4882
        %v4922 = vadd.f32 %v802, %v4786
        %v4923 = vadd.f32 %v803, %v4884
        %v4924 = vadd.f32 %v804, %v4789
        %v4925 = vadd.f32 %v805, %v4887
        %v4926 = vadd.f32 %v806, %v4791
        %v4927 = vadd.f32 %v807, %v4889
        %v4928 = vadd.f32 %v808, %v4794
        %v4929 = vadd.f32 %v809, %v4892
        %v4930 = vadd.f32 %v810, %v4796
        %v4931 = vadd.f32 %v811, %v4894
        %v4932 = vadd.f32 %v812, %v4799
        %v4933 = vadd.f32 %v813, %v4897
        %v4934 = vadd.f32 %v814, %v4801
        %v4935 = vadd.f32 %v815, %v4899
        %v4936 = vadd.f32 %v816, %v4804
        %v4937 = vadd.f32 %v817, %v4902
        %v4938 = vadd.f32 %v818, %v4806
        %v4939 = vadd.f32 %v819, %v4904
        %v4940 = vadd.f32 %v820, %v4809
        %v4941 = vadd.f32 %v821, %v4907
        %v4942 = vadd.f32 %v822, %v4811
        %v4943 = vadd.f32 %v823, %v4909
        %v4944 = vadd.f32 %v824, %v4814
        %v4945 = vadd.f32 %v825, %v4912
        %v4946 = vadd.f32 %v826, %v4816
        %v4947 = vadd.f32 %v827, %v4914
        %v4948 = vmul.f32 %v4916, %v4916
        %v4949 = vmul.f32 %v4917, %v4917
        %v4950 = vmul.f32 %v4918, %v4918
        %v4951 = vmul.f32 %v4919, %v4919
        %v4952 = vmul.f32 %v4920, %v4920
        %v4953 = vmul.f32 %v4921, %v4921
        %v4954 = vmul.f32 %v4922, %v4922
        %v4955 = vmul.f32 %v4923, %v4923
        %v4956 = vmul.f32 %v4924, %v4924
        %v4957 = vmul.f32 %v4925, %v4925
        %v4958 = vmul.f32 %v4926, %v4926
        %v4959 = vmul.f32 %v4927, %v4927
        %v4960 = vmul.f32 %v4928, %v4928
        %v4961 = vmul.f32 %v4929, %v4929
        %v4962 = vmul.f32 %v4930, %v4930
        %v4963 = vmul.f32 %v4931, %v4931
        %v4964 = vmul.f32 %v4932, %v4932
        %v4965 = vmul.f32 %v4933, %v4933
        %v4966 = vmul.f32 %v4934, %v4934
        %v4967 = vmul.f32 %v4935, %v4935
        %v4968 = vmul.f32 %v4936, %v4936
        %v4969 = vmul.f32 %v4937, %v4937
        %v4970 = vmul.f32 %v4938, %v4938
        %v4971 = vmul.f32 %v4939, %v4939
        %v4972 = vmul.f32 %v4940, %v4940
        %v4973 = vmul.f32 %v4941, %v4941
        %v4974 = vmul.f32 %v4942, %v4942
        %v4975 = vmul.f32 %v4943, %v4943
        %v4976 = vmul.f32 %v4944, %v4944
        %v4977 = vmul.f32 %v4945, %v4945
        %v4978 = vmul.f32 %v4946, %v4946
        %v4979 = vmul.f32 %v4947, %v4947
        %v4980 = vadd.f32 %v4948, %v4949
        %4981 = vadd.xlane.f32.xlu0 %v4980
        %v4982 = vpop.xlane.xlu0 %4981
        %v4983 = vadd.f32 %v4950, %v4951
        %4984 = vadd.xlane.f32.xlu0 %v4983
        %v4985 = vpop.xlane.xlu0 %4984
        %v4986 = vadd.f32 %v4952, %v4953
        %4987 = vadd.xlane.f32.xlu0 %v4986
        %v4988 = vpop.xlane.xlu0 %4987
        %v4989 = vadd.f32 %v4954, %v4955
        %4990 = vadd.xlane.f32.xlu0 %v4989
        %v4991 = vpop.xlane.xlu0 %4990
        %v4992 = vadd.f32 %v4956, %v4957
        %4993 = vadd.xlane.f32.xlu0 %v4992
        %v4994 = vpop.xlane.xlu0 %4993
        %v4995 = vadd.f32 %v4958, %v4959
        %4996 = vadd.xlane.f32.xlu0 %v4995
        %v4997 = vpop.xlane.xlu0 %4996
        %v4998 = vadd.f32 %v4960, %v4961
        %4999 = vadd.xlane.f32.xlu0 %v4998
        %v5000 = vpop.xlane.xlu0 %4999
        %v5001 = vadd.f32 %v4962, %v4963
        %5002 = vadd.xlane.f32.xlu0 %v5001
        %v5003 = vpop.xlane.xlu0 %5002
        %v5004 = vadd.f32 %v4964, %v4965
        %5005 = vadd.xlane.f32.xlu0 %v5004
        %v5006 = vpop.xlane.xlu0 %5005
        %v5007 = vadd.f32 %v4966, %v4967
        %5008 = vadd.xlane.f32.xlu0 %v5007
        %v5009 = vpop.xlane.xlu0 %5008
        %v5010 = vadd.f32 %v4968, %v4969
        %5011 = vadd.xlane.f32.xlu0 %v5010
        %v5012 = vpop.xlane.xlu0 %5011
        %v5013 = vadd.f32 %v4970, %v4971
        %5014 = vadd.xlane.f32.xlu0 %v5013
        %v5015 = vpop.xlane.xlu0 %5014
        %v5016 = vadd.f32 %v4972, %v4973
        %5017 = vadd.xlane.f32.xlu0 %v5016
        %v5018 = vpop.xlane.xlu0 %5017
        %v5019 = vadd.f32 %v4974, %v4975
        %5020 = vadd.xlane.f32.xlu0 %v5019
        %v5021 = vpop.xlane.xlu0 %5020
        %v5022 = vadd.f32 %v4976, %v4977
        %5023 = vadd.xlane.f32.xlu0 %v5022
        %v5024 = vpop.xlane.xlu0 %5023
        %v5025 = vadd.f32 %v4978, %v4979
        %5026 = vadd.xlane.f32.xlu0 %v5025
        %v5027 = vpop.xlane.xlu0 %5026
        %v5028 = vmul.f32 %v4982, %v914
        %v5029 = vmul.f32 %v4985, %v914
        %v5030 = vmul.f32 %v4988, %v914
        %v5031 = vmul.f32 %v4991, %v914
        %v5032 = vmul.f32 %v4994, %v914
        %v5033 = vmul.f32 %v4997, %v914
        %v5034 = vmul.f32 %v5000, %v914
        %v5035 = vmul.f32 %v5003, %v914
        %v5036 = vmul.f32 %v5006, %v914
        %v5037 = vmul.f32 %v5009, %v914
        %v5038 = vmul.f32 %v5012, %v914
        %v5039 = vmul.f32 %v5015, %v914
        %v5040 = vmul.f32 %v5018, %v914
        %v5041 = vmul.f32 %v5021, %v914
        %v5042 = vmul.f32 %v5024, %v914
        %v5043 = vmul.f32 %v5027, %v914
        %v5044 = vadd.f32 %v5028, 1.1920929e-07
        %v5045 = vadd.f32 %v5029, 1.1920929e-07
        %v5046 = vadd.f32 %v5030, 1.1920929e-07
        %v5047 = vadd.f32 %v5031, 1.1920929e-07
        %v5048 = vadd.f32 %v5032, 1.1920929e-07
        %v5049 = vadd.f32 %v5033, 1.1920929e-07
        %v5050 = vadd.f32 %v5034, 1.1920929e-07
        %v5051 = vadd.f32 %v5035, 1.1920929e-07
        %v5052 = vadd.f32 %v5036, 1.1920929e-07
        %v5053 = vadd.f32 %v5037, 1.1920929e-07
        %v5054 = vadd.f32 %v5038, 1.1920929e-07
        %v5055 = vadd.f32 %v5039, 1.1920929e-07
        %v5056 = vadd.f32 %v5040, 1.1920929e-07
        %v5057 = vadd.f32 %v5041, 1.1920929e-07
        %v5058 = vadd.f32 %v5042, 1.1920929e-07
        %v5059 = vadd.f32 %v5043, 1.1920929e-07
        %v5060 = vrsqrt.pop %v5044
        %v5061 = vmul.f32 %v5060, %v5044
        %v5062 = vmul.f32 %v5061, %v5060
        %v5063 = vmul.f32 0.5, %v5062
        %v5064 = vsub.f32 1.5, %v5063
        %v5065 = vmul.f32 %v5060, %v5064
        %vm5066 = vweird.f32 %v5044
        %vm5067 = vweird.f32 %v5060
        %vm5068 = vmor %vm5066, %vm5067
        %v5069 = vsel %vm5068, %v5060, %v5065
        %v5070 = vrsqrt.pop %v5045
        %v5071 = vmul.f32 %v5070, %v5045
        %v5072 = vmul.f32 %v5071, %v5070
        %v5073 = vmul.f32 0.5, %v5072
        %v5074 = vsub.f32 1.5, %v5073
        %v5075 = vmul.f32 %v5070, %v5074
        %vm5076 = vweird.f32 %v5045
        %vm5077 = vweird.f32 %v5070
        %vm5078 = vmor %vm5076, %vm5077
        %v5079 = vsel %vm5078, %v5070, %v5075
        %v5080 = vrsqrt.pop %v5046
        %v5081 = vmul.f32 %v5080, %v5046
        %v5082 = vmul.f32 %v5081, %v5080
        %v5083 = vmul.f32 0.5, %v5082
        %v5084 = vsub.f32 1.5, %v5083
        %v5085 = vmul.f32 %v5080, %v5084
        %vm5086 = vweird.f32 %v5046
        %vm5087 = vweird.f32 %v5080
        %vm5088 = vmor %vm5086, %vm5087
        %v5089 = vsel %vm5088, %v5080, %v5085
        %v5090 = vrsqrt.pop %v5047
        %v5091 = vmul.f32 %v5090, %v5047
        %v5092 = vmul.f32 %v5091, %v5090
        %v5093 = vmul.f32 0.5, %v5092
        %v5094 = vsub.f32 1.5, %v5093
        %v5095 = vmul.f32 %v5090, %v5094
        %vm5096 = vweird.f32 %v5047
        %vm5097 = vweird.f32 %v5090
        %vm5098 = vmor %vm5096, %vm5097
        %v5099 = vsel %vm5098, %v5090, %v5095
        %v5100 = vrsqrt.pop %v5048
        %v5101 = vmul.f32 %v5100, %v5048
        %v5102 = vmul.f32 %v5101, %v5100
        %v5103 = vmul.f32 0.5, %v5102
        %v5104 = vsub.f32 1.5, %v5103
        %v5105 = vmul.f32 %v5100, %v5104
        %vm5106 = vweird.f32 %v5048
        %vm5107 = vweird.f32 %v5100
        %vm5108 = vmor %vm5106, %vm5107
        %v5109 = vsel %vm5108, %v5100, %v5105
        %v5110 = vrsqrt.pop %v5049
        %v5111 = vmul.f32 %v5110, %v5049
        %v5112 = vmul.f32 %v5111, %v5110
        %v5113 = vmul.f32 0.5, %v5112
        %v5114 = vsub.f32 1.5, %v5113
        %v5115 = vmul.f32 %v5110, %v5114
        %vm5116 = vweird.f32 %v5049
        %vm5117 = vweird.f32 %v5110
        %vm5118 = vmor %vm5116, %vm5117
        %v5119 = vsel %vm5118, %v5110, %v5115
        %v5120 = vrsqrt.pop %v5050
        %v5121 = vmul.f32 %v5120, %v5050
        %v5122 = vmul.f32 %v5121, %v5120
        %v5123 = vmul.f32 0.5, %v5122
        %v5124 = vsub.f32 1.5, %v5123
        %v5125 = vmul.f32 %v5120, %v5124
        %vm5126 = vweird.f32 %v5050
        %vm5127 = vweird.f32 %v5120
        %vm5128 = vmor %vm5126, %vm5127
        %v5129 = vsel %vm5128, %v5120, %v5125
        %v5130 = vrsqrt.pop %v5051
        %v5131 = vmul.f32 %v5130, %v5051
        %v5132 = vmul.f32 %v5131, %v5130
        %v5133 = vmul.f32 0.5, %v5132
        %v5134 = vsub.f32 1.5, %v5133
        %v5135 = vmul.f32 %v5130, %v5134
        %vm5136 = vweird.f32 %v5051
        %vm5137 = vweird.f32 %v5130
        %vm5138 = vmor %vm5136, %vm5137
        %v5139 = vsel %vm5138, %v5130, %v5135
        %v5140 = vrsqrt.pop %v5052
        %v5141 = vmul.f32 %v5140, %v5052
        %v5142 = vmul.f32 %v5141, %v5140
        %v5143 = vmul.f32 0.5, %v5142
        %v5144 = vsub.f32 1.5, %v5143
        %v5145 = vmul.f32 %v5140, %v5144
        %vm5146 = vweird.f32 %v5052
        %vm5147 = vweird.f32 %v5140
        %vm5148 = vmor %vm5146, %vm5147
        %v5149 = vsel %vm5148, %v5140, %v5145
        %v5150 = vrsqrt.pop %v5053
        %v5151 = vmul.f32 %v5150, %v5053
        %v5152 = vmul.f32 %v5151, %v5150
        %v5153 = vmul.f32 0.5, %v5152
        %v5154 = vsub.f32 1.5, %v5153
        %v5155 = vmul.f32 %v5150, %v5154
        %vm5156 = vweird.f32 %v5053
        %vm5157 = vweird.f32 %v5150
        %vm5158 = vmor %vm5156, %vm5157
        %v5159 = vsel %vm5158, %v5150, %v5155
        %v5160 = vrsqrt.pop %v5054
        %v5161 = vmul.f32 %v5160, %v5054
        %v5162 = vmul.f32 %v5161, %v5160
        %v5163 = vmul.f32 0.5, %v5162
        %v5164 = vsub.f32 1.5, %v5163
        %v5165 = vmul.f32 %v5160, %v5164
        %vm5166 = vweird.f32 %v5054
        %vm5167 = vweird.f32 %v5160
        %vm5168 = vmor %vm5166, %vm5167
        %v5169 = vsel %vm5168, %v5160, %v5165
        %v5170 = vrsqrt.pop %v5055
        %v5171 = vmul.f32 %v5170, %v5055
        %v5172 = vmul.f32 %v5171, %v5170
        %v5173 = vmul.f32 0.5, %v5172
        %v5174 = vsub.f32 1.5, %v5173
        %v5175 = vmul.f32 %v5170, %v5174
        %vm5176 = vweird.f32 %v5055
        %vm5177 = vweird.f32 %v5170
        %vm5178 = vmor %vm5176, %vm5177
        %v5179 = vsel %vm5178, %v5170, %v5175
        %v5180 = vrsqrt.pop %v5056
        %v5181 = vmul.f32 %v5180, %v5056
        %v5182 = vmul.f32 %v5181, %v5180
        %v5183 = vmul.f32 0.5, %v5182
        %v5184 = vsub.f32 1.5, %v5183
        %v5185 = vmul.f32 %v5180, %v5184
        %vm5186 = vweird.f32 %v5056
        %vm5187 = vweird.f32 %v5180
        %vm5188 = vmor %vm5186, %vm5187
        %v5189 = vsel %vm5188, %v5180, %v5185
        %v5190 = vrsqrt.pop %v5057
        %v5191 = vmul.f32 %v5190, %v5057
        %v5192 = vmul.f32 %v5191, %v5190
        %v5193 = vmul.f32 0.5, %v5192
        %v5194 = vsub.f32 1.5, %v5193
        %v5195 = vmul.f32 %v5190, %v5194
        %vm5196 = vweird.f32 %v5057
        %vm5197 = vweird.f32 %v5190
        %vm5198 = vmor %vm5196, %vm5197
        %v5199 = vsel %vm5198, %v5190, %v5195
        %v5200 = vrsqrt.pop %v5058
        %v5201 = vmul.f32 %v5200, %v5058
        %v5202 = vmul.f32 %v5201, %v5200
        %v5203 = vmul.f32 0.5, %v5202
        %v5204 = vsub.f32 1.5, %v5203
        %v5205 = vmul.f32 %v5200, %v5204
        %vm5206 = vweird.f32 %v5058
        %vm5207 = vweird.f32 %v5200
        %vm5208 = vmor %vm5206, %vm5207
        %v5209 = vsel %vm5208, %v5200, %v5205
        %v5210 = vrsqrt.pop %v5059
        %v5211 = vmul.f32 %v5210, %v5059
        %v5212 = vmul.f32 %v5211, %v5210
        %v5213 = vmul.f32 0.5, %v5212
        %v5214 = vsub.f32 1.5, %v5213
        %v5215 = vmul.f32 %v5210, %v5214
        %vm5216 = vweird.f32 %v5059
        %vm5217 = vweird.f32 %v5210
        %vm5218 = vmor %vm5216, %vm5217
        %v5219 = vsel %vm5218, %v5210, %v5215
        %v5220 = vmul.f32 %v4916, %v5069
        %v5221 = vmul.f32 %v4917, %v5069
        %v5222 = vmul.f32 %v4918, %v5079
        %v5223 = vmul.f32 %v4919, %v5079
        %v5224 = vmul.f32 %v4920, %v5089
        %v5225 = vmul.f32 %v4921, %v5089
        %v5226 = vmul.f32 %v4922, %v5099
        %v5227 = vmul.f32 %v4923, %v5099
        %v5228 = vmul.f32 %v4924, %v5109
        %v5229 = vmul.f32 %v4925, %v5109
        %v5230 = vmul.f32 %v4926, %v5119
        %v5231 = vmul.f32 %v4927, %v5119
        %v5232 = vmul.f32 %v4928, %v5129
        %v5233 = vmul.f32 %v4929, %v5129
        %v5234 = vmul.f32 %v4930, %v5139
        %v5235 = vmul.f32 %v4931, %v5139
        %v5236 = vmul.f32 %v4932, %v5149
        %v5237 = vmul.f32 %v4933, %v5149
        %v5238 = vmul.f32 %v4934, %v5159
        %v5239 = vmul.f32 %v4935, %v5159
        %v5240 = vmul.f32 %v4936, %v5169
        %v5241 = vmul.f32 %v4937, %v5169
        %v5242 = vmul.f32 %v4938, %v5179
        %v5243 = vmul.f32 %v4939, %v5179
        %v5244 = vmul.f32 %v4940, %v5189
        %v5245 = vmul.f32 %v4941, %v5189
        %v5246 = vmul.f32 %v4942, %v5199
        %v5247 = vmul.f32 %v4943, %v5199
        %v5248 = vmul.f32 %v4944, %v5209
        %v5249 = vmul.f32 %v4945, %v5209
        %v5250 = vmul.f32 %v4946, %v5219
        %v5251 = vmul.f32 %v4947, %v5219
        %v5252 = vpack.c.bf16 %v5222, %v5220
        %v5253 = vpack.c.bf16 %v5223, %v5221
        %v5254 = vpack.c.bf16 %v5226, %v5224
        %v5255 = vpack.c.bf16 %v5227, %v5225
        %v5256 = vpack.c.bf16 %v5230, %v5228
        %v5257 = vpack.c.bf16 %v5231, %v5229
        %v5258 = vpack.c.bf16 %v5234, %v5232
        %v5259 = vpack.c.bf16 %v5235, %v5233
        %v5260 = vpack.c.bf16 %v5238, %v5236
        %v5261 = vpack.c.bf16 %v5239, %v5237
        %v5262 = vpack.c.bf16 %v5242, %v5240
        %v5263 = vpack.c.bf16 %v5243, %v5241
        %v5264 = vpack.c.bf16 %v5246, %v5244
        %v5265 = vpack.c.bf16 %v5247, %v5245
        %v5266 = vpack.c.bf16 %v5250, %v5248
        %v5267 = vpack.c.bf16 %v5251, %v5249
        %v5268 = vld [vmem:[%s486] sm:$0xff]
        %v5269 = vld [vmem:[%s486 + $0x8] sm:$0xff]
        %v5270 = vld [vmem:[%s486 + $0x10] sm:$0xff]
        %v5271 = vld [vmem:[%s486 + $0x18] sm:$0xff]
        %v5272 = vld [vmem:[%s486 + $0x20] sm:$0xff]
        %v5273 = vld [vmem:[%s486 + $0x28] sm:$0xff]
        %v5274 = vld [vmem:[%s486 + $0x30] sm:$0xff]
        %v5275 = vld [vmem:[%s486 + $0x38] sm:$0xff]
        %v5276 = vld [vmem:[%s486 + $0x40] sm:$0xff]
        %v5277 = vld [vmem:[%s486 + $0x48] sm:$0xff]
        %v5278 = vld [vmem:[%s486 + $0x50] sm:$0xff]
        %v5279 = vld [vmem:[%s486 + $0x58] sm:$0xff]
        %v5280 = vld [vmem:[%s486 + $0x60] sm:$0xff]
        %v5281 = vld [vmem:[%s486 + $0x68] sm:$0xff]
        %v5282 = vld [vmem:[%s486 + $0x70] sm:$0xff]
        %v5283 = vld [vmem:[%s486 + $0x78] sm:$0xff]
        %v5284 = vld [vmem:[%s486 + $0x80] sm:$0xff]
        %v5285 = vld [vmem:[%s486 + $0x88] sm:$0xff]
        %v5286 = vld [vmem:[%s486 + $0x90] sm:$0xff]
        %v5287 = vld [vmem:[%s486 + $0x98] sm:$0xff]
        %v5288 = vld [vmem:[%s486 + $0xa0] sm:$0xff]
        %v5289 = vld [vmem:[%s486 + $0xa8] sm:$0xff]
        %v5290 = vld [vmem:[%s486 + $0xb0] sm:$0xff]
        %v5291 = vld [vmem:[%s486 + $0xb8] sm:$0xff]
        %v5292 = vld [vmem:[%s486 + $0xc0] sm:$0xff]
        %v5293 = vld [vmem:[%s486 + $0xc8] sm:$0xff]
        %v5294 = vld [vmem:[%s486 + $0xd0] sm:$0xff]
        %v5295 = vld [vmem:[%s486 + $0xd8] sm:$0xff]
        %v5296 = vld [vmem:[%s486 + $0xe0] sm:$0xff]
        %v5297 = vld [vmem:[%s486 + $0xe8] sm:$0xff]
        %v5298 = vld [vmem:[%s486 + $0xf0] sm:$0xff]
        %v5299 = vld [vmem:[%s486 + $0xf8] sm:$0xff]
        %v5300 = vld [vmem:[%s486 + $0x100] sm:$0xff]
        %v5301 = vld [vmem:[%s486 + $0x108] sm:$0xff]
        %v5302 = vld [vmem:[%s486 + $0x110] sm:$0xff]
        %v5303 = vld [vmem:[%s486 + $0x118] sm:$0xff]
        %v5304 = vld [vmem:[%s486 + $0x120] sm:$0xff]
        %v5305 = vld [vmem:[%s486 + $0x128] sm:$0xff]
        %v5306 = vld [vmem:[%s486 + $0x130] sm:$0xff]
        %v5307 = vld [vmem:[%s486 + $0x138] sm:$0xff]
        %v5308 = vld [vmem:[%s486 + $0x140] sm:$0xff]
        %v5309 = vld [vmem:[%s486 + $0x148] sm:$0xff]
        %v5310 = vld [vmem:[%s486 + $0x150] sm:$0xff]
        %v5311 = vld [vmem:[%s486 + $0x158] sm:$0xff]
        %v5312 = vld [vmem:[%s486 + $0x160] sm:$0xff]
        %v5313 = vld [vmem:[%s486 + $0x168] sm:$0xff]
        %v5314 = vld [vmem:[%s486 + $0x170] sm:$0xff]
        %v5315 = vld [vmem:[%s486 + $0x178] sm:$0xff]
        %v5316 = vld [vmem:[%s486 + $0x180] sm:$0xff]
        %v5317 = vld [vmem:[%s486 + $0x188] sm:$0xff]
        %v5318 = vld [vmem:[%s486 + $0x190] sm:$0xff]
        %v5319 = vld [vmem:[%s486 + $0x198] sm:$0xff]
        %v5320 = vld [vmem:[%s486 + $0x1a0] sm:$0xff]
        %v5321 = vld [vmem:[%s486 + $0x1a8] sm:$0xff]
        %v5322 = vld [vmem:[%s486 + $0x1b0] sm:$0xff]
        %v5323 = vld [vmem:[%s486 + $0x1b8] sm:$0xff]
        %v5324 = vld [vmem:[%s486 + $0x1c0] sm:$0xff]
        %v5325 = vld [vmem:[%s486 + $0x1c8] sm:$0xff]
        %v5326 = vld [vmem:[%s486 + $0x1d0] sm:$0xff]
        %v5327 = vld [vmem:[%s486 + $0x1d8] sm:$0xff]
        %v5328 = vld [vmem:[%s486 + $0x1e0] sm:$0xff]
        %v5329 = vld [vmem:[%s486 + $0x1e8] sm:$0xff]
        %v5330 = vld [vmem:[%s486 + $0x1f0] sm:$0xff]
        %v5331 = vld [vmem:[%s486 + $0x1f8] sm:$0xff]
        %v5332 = vld [vmem:[%s486 + $0x200] sm:$0xff]
        %v5333 = vld [vmem:[%s486 + $0x208] sm:$0xff]
        %v5334 = vld [vmem:[%s486 + $0x210] sm:$0xff]
        %v5335 = vld [vmem:[%s486 + $0x218] sm:$0xff]
        %v5336 = vld [vmem:[%s486 + $0x220] sm:$0xff]
        %v5337 = vld [vmem:[%s486 + $0x228] sm:$0xff]
        %v5338 = vld [vmem:[%s486 + $0x230] sm:$0xff]
        %v5339 = vld [vmem:[%s486 + $0x238] sm:$0xff]
        %v5340 = vld [vmem:[%s486 + $0x240] sm:$0xff]
        %v5341 = vld [vmem:[%s486 + $0x248] sm:$0xff]
        %v5342 = vld [vmem:[%s486 + $0x250] sm:$0xff]
        %v5343 = vld [vmem:[%s486 + $0x258] sm:$0xff]
        %v5344 = vld [vmem:[%s486 + $0x260] sm:$0xff]
        %v5345 = vld [vmem:[%s486 + $0x268] sm:$0xff]
        %v5346 = vld [vmem:[%s486 + $0x270] sm:$0xff]
        %v5347 = vld [vmem:[%s486 + $0x278] sm:$0xff]
        %v5348 = vld [vmem:[%s486 + $0x280] sm:$0xff]
        %v5349 = vld [vmem:[%s486 + $0x288] sm:$0xff]
        %v5350 = vld [vmem:[%s486 + $0x290] sm:$0xff]
        %v5351 = vld [vmem:[%s486 + $0x298] sm:$0xff]
        %v5352 = vld [vmem:[%s486 + $0x2a0] sm:$0xff]
        %v5353 = vld [vmem:[%s486 + $0x2a8] sm:$0xff]
        %v5354 = vld [vmem:[%s486 + $0x2b0] sm:$0xff]
        %v5355 = vld [vmem:[%s486 + $0x2b8] sm:$0xff]
        %v5356 = vld [vmem:[%s486 + $0x2c0] sm:$0xff]
        %v5357 = vld [vmem:[%s486 + $0x2c8] sm:$0xff]
        %v5358 = vld [vmem:[%s486 + $0x2d0] sm:$0xff]
        %v5359 = vld [vmem:[%s486 + $0x2d8] sm:$0xff]
        %v5360 = vld [vmem:[%s486 + $0x2e0] sm:$0xff]
        %v5361 = vld [vmem:[%s486 + $0x2e8] sm:$0xff]
        %v5362 = vld [vmem:[%s486 + $0x2f0] sm:$0xff]
        %v5363 = vld [vmem:[%s486 + $0x2f8] sm:$0xff]
        %v5364 = vld [vmem:[%s486 + $0x300] sm:$0xff]
        %v5365 = vld [vmem:[%s486 + $0x308] sm:$0xff]
        %v5366 = vld [vmem:[%s486 + $0x310] sm:$0xff]
        %v5367 = vld [vmem:[%s486 + $0x318] sm:$0xff]
        %v5368 = vld [vmem:[%s486 + $0x320] sm:$0xff]
        %v5369 = vld [vmem:[%s486 + $0x328] sm:$0xff]
        %v5370 = vld [vmem:[%s486 + $0x330] sm:$0xff]
        %v5371 = vld [vmem:[%s486 + $0x338] sm:$0xff]
        %v5372 = vld [vmem:[%s486 + $0x340] sm:$0xff]
        %v5373 = vld [vmem:[%s486 + $0x348] sm:$0xff]
        %v5374 = vld [vmem:[%s486 + $0x350] sm:$0xff]
        %v5375 = vld [vmem:[%s486 + $0x358] sm:$0xff]
        %v5376 = vld [vmem:[%s486 + $0x360] sm:$0xff]
        %v5377 = vld [vmem:[%s486 + $0x368] sm:$0xff]
        %v5378 = vld [vmem:[%s486 + $0x370] sm:$0xff]
        %v5379 = vld [vmem:[%s486 + $0x378] sm:$0xff]
        %v5380 = vld [vmem:[%s486 + $0x380] sm:$0xff]
        %v5381 = vld [vmem:[%s486 + $0x388] sm:$0xff]
        %v5382 = vld [vmem:[%s486 + $0x390] sm:$0xff]
        %v5383 = vld [vmem:[%s486 + $0x398] sm:$0xff]
        %v5384 = vld [vmem:[%s486 + $0x3a0] sm:$0xff]
        %v5385 = vld [vmem:[%s486 + $0x3a8] sm:$0xff]
        %v5386 = vld [vmem:[%s486 + $0x3b0] sm:$0xff]
        %v5387 = vld [vmem:[%s486 + $0x3b8] sm:$0xff]
        %v5388 = vld [vmem:[%s486 + $0x3c0] sm:$0xff]
        %v5389 = vld [vmem:[%s486 + $0x3c8] sm:$0xff]
        %v5390 = vld [vmem:[%s486 + $0x3d0] sm:$0xff]
        %v5391 = vld [vmem:[%s486 + $0x3d8] sm:$0xff]
        %v5392 = vld [vmem:[%s486 + $0x3e0] sm:$0xff]
        %v5393 = vld [vmem:[%s486 + $0x3e8] sm:$0xff]
        %v5394 = vld [vmem:[%s486 + $0x3f0] sm:$0xff]
        %v5395 = vld [vmem:[%s486 + $0x3f8] sm:$0xff]
        %v5524 = vunpack.c.l.b16 %v5268
        %v5525 = vunpack.c.h.b16 %v5268
        %v5526 = vunpack.c.l.b16 %v5269
        %v5527 = vunpack.c.h.b16 %v5269
        %v5528 = vunpack.c.l.b16 %v5270
        %v5529 = vunpack.c.h.b16 %v5270
        %v5530 = vunpack.c.l.b16 %v5271
        %v5531 = vunpack.c.h.b16 %v5271
        %v5532 = vunpack.c.l.b16 %v5272
        %v5533 = vunpack.c.h.b16 %v5272
        %v5534 = vunpack.c.l.b16 %v5273
        %v5535 = vunpack.c.h.b16 %v5273
        %v5536 = vunpack.c.l.b16 %v5274
        %v5537 = vunpack.c.h.b16 %v5274
        %v5538 = vunpack.c.l.b16 %v5275
        %v5539 = vunpack.c.h.b16 %v5275
        %v5540 = vunpack.c.l.b16 %v5276
        %v5541 = vunpack.c.h.b16 %v5276
        %v5542 = vunpack.c.l.b16 %v5277
        %v5543 = vunpack.c.h.b16 %v5277
        %v5544 = vunpack.c.l.b16 %v5278
        %v5545 = vunpack.c.h.b16 %v5278
        %v5546 = vunpack.c.l.b16 %v5279
        %v5547 = vunpack.c.h.b16 %v5279
        %v5548 = vunpack.c.l.b16 %v5280
        %v5549 = vunpack.c.h.b16 %v5280
        %v5550 = vunpack.c.l.b16 %v5281
        %v5551 = vunpack.c.h.b16 %v5281
        %v5552 = vunpack.c.l.b16 %v5282
        %v5553 = vunpack.c.h.b16 %v5282
        %v5554 = vunpack.c.l.b16 %v5283
        %v5555 = vunpack.c.h.b16 %v5283
        %v5556 = vunpack.c.l.b16 %v5284
        %v5557 = vunpack.c.h.b16 %v5284
        %v5558 = vunpack.c.l.b16 %v5285
        %v5559 = vunpack.c.h.b16 %v5285
        %v5560 = vunpack.c.l.b16 %v5286
        %v5561 = vunpack.c.h.b16 %v5286
        %v5562 = vunpack.c.l.b16 %v5287
        %v5563 = vunpack.c.h.b16 %v5287
        %v5564 = vunpack.c.l.b16 %v5288
        %v5565 = vunpack.c.h.b16 %v5288
        %v5566 = vunpack.c.l.b16 %v5289
        %v5567 = vunpack.c.h.b16 %v5289
        %v5568 = vunpack.c.l.b16 %v5290
        %v5569 = vunpack.c.h.b16 %v5290
        %v5570 = vunpack.c.l.b16 %v5291
        %v5571 = vunpack.c.h.b16 %v5291
        %v5572 = vunpack.c.l.b16 %v5292
        %v5573 = vunpack.c.h.b16 %v5292
        %v5574 = vunpack.c.l.b16 %v5293
        %v5575 = vunpack.c.h.b16 %v5293
        %v5576 = vunpack.c.l.b16 %v5294
        %v5577 = vunpack.c.h.b16 %v5294
        %v5578 = vunpack.c.l.b16 %v5295
        %v5579 = vunpack.c.h.b16 %v5295
        %v5580 = vunpack.c.l.b16 %v5296
        %v5581 = vunpack.c.h.b16 %v5296
        %v5582 = vunpack.c.l.b16 %v5297
        %v5583 = vunpack.c.h.b16 %v5297
        %v5584 = vunpack.c.l.b16 %v5298
        %v5585 = vunpack.c.h.b16 %v5298
        %v5586 = vunpack.c.l.b16 %v5299
        %v5587 = vunpack.c.h.b16 %v5299
        %v5588 = vunpack.c.l.b16 %v5300
        %v5589 = vunpack.c.h.b16 %v5300
        %v5590 = vunpack.c.l.b16 %v5301
        %v5591 = vunpack.c.h.b16 %v5301
        %v5592 = vunpack.c.l.b16 %v5302
        %v5593 = vunpack.c.h.b16 %v5302
        %v5594 = vunpack.c.l.b16 %v5303
        %v5595 = vunpack.c.h.b16 %v5303
        %v5596 = vunpack.c.l.b16 %v5304
        %v5597 = vunpack.c.h.b16 %v5304
        %v5598 = vunpack.c.l.b16 %v5305
        %v5599 = vunpack.c.h.b16 %v5305
        %v5600 = vunpack.c.l.b16 %v5306
        %v5601 = vunpack.c.h.b16 %v5306
        %v5602 = vunpack.c.l.b16 %v5307
        %v5603 = vunpack.c.h.b16 %v5307
        %v5604 = vunpack.c.l.b16 %v5308
        %v5605 = vunpack.c.h.b16 %v5308
        %v5606 = vunpack.c.l.b16 %v5309
        %v5607 = vunpack.c.h.b16 %v5309
        %v5608 = vunpack.c.l.b16 %v5310
        %v5609 = vunpack.c.h.b16 %v5310
        %v5610 = vunpack.c.l.b16 %v5311
        %v5611 = vunpack.c.h.b16 %v5311
        %v5612 = vunpack.c.l.b16 %v5312
        %v5613 = vunpack.c.h.b16 %v5312
        %v5614 = vunpack.c.l.b16 %v5313
        %v5615 = vunpack.c.h.b16 %v5313
        %v5616 = vunpack.c.l.b16 %v5314
        %v5617 = vunpack.c.h.b16 %v5314
        %v5618 = vunpack.c.l.b16 %v5315
        %v5619 = vunpack.c.h.b16 %v5315
        %v5620 = vunpack.c.l.b16 %v5316
        %v5621 = vunpack.c.h.b16 %v5316
        %v5622 = vunpack.c.l.b16 %v5317
        %v5623 = vunpack.c.h.b16 %v5317
        %v5624 = vunpack.c.l.b16 %v5318
        %v5625 = vunpack.c.h.b16 %v5318
        %v5626 = vunpack.c.l.b16 %v5319
        %v5627 = vunpack.c.h.b16 %v5319
        %v5628 = vunpack.c.l.b16 %v5320
        %v5629 = vunpack.c.h.b16 %v5320
        %v5630 = vunpack.c.l.b16 %v5321
        %v5631 = vunpack.c.h.b16 %v5321
        %v5632 = vunpack.c.l.b16 %v5322
        %v5633 = vunpack.c.h.b16 %v5322
        %v5634 = vunpack.c.l.b16 %v5323
        %v5635 = vunpack.c.h.b16 %v5323
        %v5636 = vunpack.c.l.b16 %v5324
        %v5637 = vunpack.c.h.b16 %v5324
        %v5638 = vunpack.c.l.b16 %v5325
        %v5639 = vunpack.c.h.b16 %v5325
        %v5640 = vunpack.c.l.b16 %v5326
        %v5641 = vunpack.c.h.b16 %v5326
        %v5642 = vunpack.c.l.b16 %v5327
        %v5643 = vunpack.c.h.b16 %v5327
        %v5644 = vunpack.c.l.b16 %v5328
        %v5645 = vunpack.c.h.b16 %v5328
        %v5646 = vunpack.c.l.b16 %v5329
        %v5647 = vunpack.c.h.b16 %v5329
        %v5648 = vunpack.c.l.b16 %v5330
        %v5649 = vunpack.c.h.b16 %v5330
        %v5650 = vunpack.c.l.b16 %v5331
        %v5651 = vunpack.c.h.b16 %v5331
        %v5652 = vunpack.c.l.b16 %v5332
        %v5653 = vunpack.c.h.b16 %v5332
        %v5654 = vunpack.c.l.b16 %v5333
        %v5655 = vunpack.c.h.b16 %v5333
        %v5656 = vunpack.c.l.b16 %v5334
        %v5657 = vunpack.c.h.b16 %v5334
        %v5658 = vunpack.c.l.b16 %v5335
        %v5659 = vunpack.c.h.b16 %v5335
        %v5660 = vunpack.c.l.b16 %v5336
        %v5661 = vunpack.c.h.b16 %v5336
        %v5662 = vunpack.c.l.b16 %v5337
        %v5663 = vunpack.c.h.b16 %v5337
        %v5664 = vunpack.c.l.b16 %v5338
        %v5665 = vunpack.c.h.b16 %v5338
        %v5666 = vunpack.c.l.b16 %v5339
        %v5667 = vunpack.c.h.b16 %v5339
        %v5668 = vunpack.c.l.b16 %v5340
        %v5669 = vunpack.c.h.b16 %v5340
        %v5670 = vunpack.c.l.b16 %v5341
        %v5671 = vunpack.c.h.b16 %v5341
        %v5672 = vunpack.c.l.b16 %v5342
        %v5673 = vunpack.c.h.b16 %v5342
        %v5674 = vunpack.c.l.b16 %v5343
        %v5675 = vunpack.c.h.b16 %v5343
        %v5676 = vunpack.c.l.b16 %v5344
        %v5677 = vunpack.c.h.b16 %v5344
        %v5678 = vunpack.c.l.b16 %v5345
        %v5679 = vunpack.c.h.b16 %v5345
        %v5680 = vunpack.c.l.b16 %v5346
        %v5681 = vunpack.c.h.b16 %v5346
        %v5682 = vunpack.c.l.b16 %v5347
        %v5683 = vunpack.c.h.b16 %v5347
        %v5684 = vunpack.c.l.b16 %v5348
        %v5685 = vunpack.c.h.b16 %v5348
        %v5686 = vunpack.c.l.b16 %v5349
        %v5687 = vunpack.c.h.b16 %v5349
        %v5688 = vunpack.c.l.b16 %v5350
        %v5689 = vunpack.c.h.b16 %v5350
        %v5690 = vunpack.c.l.b16 %v5351
        %v5691 = vunpack.c.h.b16 %v5351
        %v5692 = vunpack.c.l.b16 %v5352
        %v5693 = vunpack.c.h.b16 %v5352
        %v5694 = vunpack.c.l.b16 %v5353
        %v5695 = vunpack.c.h.b16 %v5353
        %v5696 = vunpack.c.l.b16 %v5354
        %v5697 = vunpack.c.h.b16 %v5354
        %v5698 = vunpack.c.l.b16 %v5355
        %v5699 = vunpack.c.h.b16 %v5355
        %v5700 = vunpack.c.l.b16 %v5356
        %v5701 = vunpack.c.h.b16 %v5356
        %v5702 = vunpack.c.l.b16 %v5357
        %v5703 = vunpack.c.h.b16 %v5357
        %v5704 = vunpack.c.l.b16 %v5358
        %v5705 = vunpack.c.h.b16 %v5358
        %v5706 = vunpack.c.l.b16 %v5359
        %v5707 = vunpack.c.h.b16 %v5359
        %v5708 = vunpack.c.l.b16 %v5360
        %v5709 = vunpack.c.h.b16 %v5360
        %v5710 = vunpack.c.l.b16 %v5361
        %v5711 = vunpack.c.h.b16 %v5361
        %v5712 = vunpack.c.l.b16 %v5362
        %v5713 = vunpack.c.h.b16 %v5362
        %v5714 = vunpack.c.l.b16 %v5363
        %v5715 = vunpack.c.h.b16 %v5363
        %v5716 = vunpack.c.l.b16 %v5364
        %v5717 = vunpack.c.h.b16 %v5364
        %v5718 = vunpack.c.l.b16 %v5365
        %v5719 = vunpack.c.h.b16 %v5365
        %v5720 = vunpack.c.l.b16 %v5366
        %v5721 = vunpack.c.h.b16 %v5366
        %v5722 = vunpack.c.l.b16 %v5367
        %v5723 = vunpack.c.h.b16 %v5367
        %v5724 = vunpack.c.l.b16 %v5368
        %v5725 = vunpack.c.h.b16 %v5368
        %v5726 = vunpack.c.l.b16 %v5369
        %v5727 = vunpack.c.h.b16 %v5369
        %v5728 = vunpack.c.l.b16 %v5370
        %v5729 = vunpack.c.h.b16 %v5370
        %v5730 = vunpack.c.l.b16 %v5371
        %v5731 = vunpack.c.h.b16 %v5371
        %v5732 = vunpack.c.l.b16 %v5372
        %v5733 = vunpack.c.h.b16 %v5372
        %v5734 = vunpack.c.l.b16 %v5373
        %v5735 = vunpack.c.h.b16 %v5373
        %v5736 = vunpack.c.l.b16 %v5374
        %v5737 = vunpack.c.h.b16 %v5374
        %v5738 = vunpack.c.l.b16 %v5375
        %v5739 = vunpack.c.h.b16 %v5375
        %v5740 = vunpack.c.l.b16 %v5376
        %v5741 = vunpack.c.h.b16 %v5376
        %v5742 = vunpack.c.l.b16 %v5377
        %v5743 = vunpack.c.h.b16 %v5377
        %v5744 = vunpack.c.l.b16 %v5378
        %v5745 = vunpack.c.h.b16 %v5378
        %v5746 = vunpack.c.l.b16 %v5379
        %v5747 = vunpack.c.h.b16 %v5379
        %v5748 = vunpack.c.l.b16 %v5380
        %v5749 = vunpack.c.h.b16 %v5380
        %v5750 = vunpack.c.l.b16 %v5381
        %v5751 = vunpack.c.h.b16 %v5381
        %v5752 = vunpack.c.l.b16 %v5382
        %v5753 = vunpack.c.h.b16 %v5382
        %v5754 = vunpack.c.l.b16 %v5383
        %v5755 = vunpack.c.h.b16 %v5383
        %v5756 = vunpack.c.l.b16 %v5384
        %v5757 = vunpack.c.h.b16 %v5384
        %v5758 = vunpack.c.l.b16 %v5385
        %v5759 = vunpack.c.h.b16 %v5385
        %v5760 = vunpack.c.l.b16 %v5386
        %v5761 = vunpack.c.h.b16 %v5386
        %v5762 = vunpack.c.l.b16 %v5387
        %v5763 = vunpack.c.h.b16 %v5387
        %v5764 = vunpack.c.l.b16 %v5388
        %v5765 = vunpack.c.h.b16 %v5388
        %v5766 = vunpack.c.l.b16 %v5389
        %v5767 = vunpack.c.h.b16 %v5389
        %v5768 = vunpack.c.l.b16 %v5390
        %v5769 = vunpack.c.h.b16 %v5390
        %v5770 = vunpack.c.l.b16 %v5391
        %v5771 = vunpack.c.h.b16 %v5391
        %v5772 = vunpack.c.l.b16 %v5392
        %v5773 = vunpack.c.h.b16 %v5392
        %v5774 = vunpack.c.l.b16 %v5393
        %v5775 = vunpack.c.h.b16 %v5393
        %v5776 = vunpack.c.l.b16 %v5394
        %v5777 = vunpack.c.h.b16 %v5394
        %v5778 = vunpack.c.l.b16 %v5395
        %v5779 = vunpack.c.h.b16 %v5395
        %v5780 = vpack.c.b16 %v5532, %v5524
        %v5781 = vpack.c.b16 %v5533, %v5525
        %v5782 = vpack.c.b16 %v5534, %v5526
        %v5783 = vpack.c.b16 %v5535, %v5527
        %v5784 = vpack.c.b16 %v5536, %v5528
        %v5785 = vpack.c.b16 %v5537, %v5529
        %v5786 = vpack.c.b16 %v5538, %v5530
        %v5787 = vpack.c.b16 %v5539, %v5531
        %v5788 = vpack.c.b16 %v5548, %v5540
        %v5789 = vpack.c.b16 %v5549, %v5541
        %v5790 = vpack.c.b16 %v5550, %v5542
        %v5791 = vpack.c.b16 %v5551, %v5543
        %v5792 = vpack.c.b16 %v5552, %v5544
        %v5793 = vpack.c.b16 %v5553, %v5545
        %v5794 = vpack.c.b16 %v5554, %v5546
        %v5795 = vpack.c.b16 %v5555, %v5547
        %v5796 = vpack.c.b16 %v5564, %v5556
        %v5797 = vpack.c.b16 %v5565, %v5557
        %v5798 = vpack.c.b16 %v5566, %v5558
        %v5799 = vpack.c.b16 %v5567, %v5559
        %v5800 = vpack.c.b16 %v5568, %v5560
        %v5801 = vpack.c.b16 %v5569, %v5561
        %v5802 = vpack.c.b16 %v5570, %v5562
        %v5803 = vpack.c.b16 %v5571, %v5563
        %v5804 = vpack.c.b16 %v5580, %v5572
        %v5805 = vpack.c.b16 %v5581, %v5573
        %v5806 = vpack.c.b16 %v5582, %v5574
        %v5807 = vpack.c.b16 %v5583, %v5575
        %v5808 = vpack.c.b16 %v5584, %v5576
        %v5809 = vpack.c.b16 %v5585, %v5577
        %v5810 = vpack.c.b16 %v5586, %v5578
        %v5811 = vpack.c.b16 %v5587, %v5579
        %v5812 = vpack.c.b16 %v5596, %v5588
        %v5813 = vpack.c.b16 %v5597, %v5589
        %v5814 = vpack.c.b16 %v5598, %v5590
        %v5815 = vpack.c.b16 %v5599, %v5591
        %v5816 = vpack.c.b16 %v5600, %v5592
        %v5817 = vpack.c.b16 %v5601, %v5593
        %v5818 = vpack.c.b16 %v5602, %v5594
        %v5819 = vpack.c.b16 %v5603, %v5595
        %v5820 = vpack.c.b16 %v5612, %v5604
        %v5821 = vpack.c.b16 %v5613, %v5605
        %v5822 = vpack.c.b16 %v5614, %v5606
        %v5823 = vpack.c.b16 %v5615, %v5607
        %v5824 = vpack.c.b16 %v5616, %v5608
        %v5825 = vpack.c.b16 %v5617, %v5609
        %v5826 = vpack.c.b16 %v5618, %v5610
        %v5827 = vpack.c.b16 %v5619, %v5611
        %v5828 = vpack.c.b16 %v5628, %v5620
        %v5829 = vpack.c.b16 %v5629, %v5621
        %v5830 = vpack.c.b16 %v5630, %v5622
        %v5831 = vpack.c.b16 %v5631, %v5623
        %v5832 = vpack.c.b16 %v5632, %v5624
        %v5833 = vpack.c.b16 %v5633, %v5625
        %v5834 = vpack.c.b16 %v5634, %v5626
        %v5835 = vpack.c.b16 %v5635, %v5627
        %v5836 = vpack.c.b16 %v5644, %v5636
        %v5837 = vpack.c.b16 %v5645, %v5637
        %v5838 = vpack.c.b16 %v5646, %v5638
        %v5839 = vpack.c.b16 %v5647, %v5639
        %v5840 = vpack.c.b16 %v5648, %v5640
        %v5841 = vpack.c.b16 %v5649, %v5641
        %v5842 = vpack.c.b16 %v5650, %v5642
        %v5843 = vpack.c.b16 %v5651, %v5643
        %v5844 = vpack.c.b16 %v5660, %v5652
        %v5845 = vpack.c.b16 %v5661, %v5653
        %v5846 = vpack.c.b16 %v5662, %v5654
        %v5847 = vpack.c.b16 %v5663, %v5655
        %v5848 = vpack.c.b16 %v5664, %v5656
        %v5849 = vpack.c.b16 %v5665, %v5657
        %v5850 = vpack.c.b16 %v5666, %v5658
        %v5851 = vpack.c.b16 %v5667, %v5659
        %v5852 = vpack.c.b16 %v5676, %v5668
        %v5853 = vpack.c.b16 %v5677, %v5669
        %v5854 = vpack.c.b16 %v5678, %v5670
        %v5855 = vpack.c.b16 %v5679, %v5671
        %v5856 = vpack.c.b16 %v5680, %v5672
        %v5857 = vpack.c.b16 %v5681, %v5673
        %v5858 = vpack.c.b16 %v5682, %v5674
        %v5859 = vpack.c.b16 %v5683, %v5675
        %v5860 = vpack.c.b16 %v5692, %v5684
        %v5861 = vpack.c.b16 %v5693, %v5685
        %v5862 = vpack.c.b16 %v5694, %v5686
        %v5863 = vpack.c.b16 %v5695, %v5687
        %v5864 = vpack.c.b16 %v5696, %v5688
        %v5865 = vpack.c.b16 %v5697, %v5689
        %v5866 = vpack.c.b16 %v5698, %v5690
        %v5867 = vpack.c.b16 %v5699, %v5691
        %v5868 = vpack.c.b16 %v5708, %v5700
        %v5869 = vpack.c.b16 %v5709, %v5701
        %v5870 = vpack.c.b16 %v5710, %v5702
        %v5871 = vpack.c.b16 %v5711, %v5703
        %v5872 = vpack.c.b16 %v5712, %v5704
        %v5873 = vpack.c.b16 %v5713, %v5705
        %v5874 = vpack.c.b16 %v5714, %v5706
        %v5875 = vpack.c.b16 %v5715, %v5707
        %v5876 = vpack.c.b16 %v5724, %v5716
        %v5877 = vpack.c.b16 %v5725, %v5717
        %v5878 = vpack.c.b16 %v5726, %v5718
        %v5879 = vpack.c.b16 %v5727, %v5719
        %v5880 = vpack.c.b16 %v5728, %v5720
        %v5881 = vpack.c.b16 %v5729, %v5721
        %v5882 = vpack.c.b16 %v5730, %v5722
        %v5883 = vpack.c.b16 %v5731, %v5723
        %v5884 = vpack.c.b16 %v5740, %v5732
        %v5885 = vpack.c.b16 %v5741, %v5733
        %v5886 = vpack.c.b16 %v5742, %v5734
        %v5887 = vpack.c.b16 %v5743, %v5735
        %v5888 = vpack.c.b16 %v5744, %v5736
        %v5889 = vpack.c.b16 %v5745, %v5737
        %v5890 = vpack.c.b16 %v5746, %v5738
        %v5891 = vpack.c.b16 %v5747, %v5739
        %v5892 = vpack.c.b16 %v5756, %v5748
        %v5893 = vpack.c.b16 %v5757, %v5749
        %v5894 = vpack.c.b16 %v5758, %v5750
        %v5895 = vpack.c.b16 %v5759, %v5751
        %v5896 = vpack.c.b16 %v5760, %v5752
        %v5897 = vpack.c.b16 %v5761, %v5753
        %v5898 = vpack.c.b16 %v5762, %v5754
        %v5899 = vpack.c.b16 %v5763, %v5755
        %v5900 = vpack.c.b16 %v5772, %v5764
        %v5901 = vpack.c.b16 %v5773, %v5765
        %v5902 = vpack.c.b16 %v5774, %v5766
        %v5903 = vpack.c.b16 %v5775, %v5767
        %v5904 = vpack.c.b16 %v5776, %v5768
        %v5905 = vpack.c.b16 %v5777, %v5769
        %v5906 = vpack.c.b16 %v5778, %v5770
        %v5907 = vpack.c.b16 %v5779, %v5771
        %6036 = vmatpush.bf16.msra.mxu0 %v5836
        %6037 = vmatpush.bf16.msra.mxu0 %v5828
        %6038 = vmatpush.bf16.msra.mxu0 %v5820
        %6039 = vmatpush.bf16.msra.mxu0 %v5812
        %6040 = vmatpush.bf16.msra.mxu0 %v5804
        %6041 = vmatpush.bf16.msra.mxu0 %v5796
        %6042 = vmatpush.bf16.msra.mxu0 %v5788
        %6043 = vmatpush.bf16.msra.mxu0 %v5780
        %6044 = vmatmul.bf16.gmra.mxu0 %v5252
        %v6045 = vpop.f32.mrf.mxu0
        %v6046 = vadd.f32 0.0, %v6045
        %v6047 = vpop.f32.mrf.mxu0
        %v6048 = vadd.f32 0.0, %v6047
        %6049 = vmatmul.bf16.gmra.mxu0 %v5254
        %v6050 = vpop.f32.mrf.mxu0
        %v6051 = vadd.f32 0.0, %v6050
        %v6052 = vpop.f32.mrf.mxu0
        %v6053 = vadd.f32 0.0, %v6052
        %6054 = vmatmul.bf16.gmra.mxu0 %v5256
        %v6055 = vpop.f32.mrf.mxu0
        %v6056 = vadd.f32 0.0, %v6055
        %v6057 = vpop.f32.mrf.mxu0
        %v6058 = vadd.f32 0.0, %v6057
        %6059 = vmatmul.bf16.gmra.mxu0 %v5258
        %v6060 = vpop.f32.mrf.mxu0
        %v6061 = vadd.f32 0.0, %v6060
        %v6062 = vpop.f32.mrf.mxu0
        %v6063 = vadd.f32 0.0, %v6062
        %6064 = vmatmul.bf16.gmra.mxu0 %v5260
        %v6065 = vpop.f32.mrf.mxu0
        %v6066 = vadd.f32 0.0, %v6065
        %v6067 = vpop.f32.mrf.mxu0
        %v6068 = vadd.f32 0.0, %v6067
        %6069 = vmatmul.bf16.gmra.mxu0 %v5262
        %v6070 = vpop.f32.mrf.mxu0
        %v6071 = vadd.f32 0.0, %v6070
        %v6072 = vpop.f32.mrf.mxu0
        %v6073 = vadd.f32 0.0, %v6072
        %6074 = vmatmul.bf16.gmra.mxu0 %v5264
        %v6075 = vpop.f32.mrf.mxu0
        %v6076 = vadd.f32 0.0, %v6075
        %v6077 = vpop.f32.mrf.mxu0
        %v6078 = vadd.f32 0.0, %v6077
        %6079 = vmatmul.bf16.gmra.mxu0 %v5266
        %v6080 = vpop.f32.mrf.mxu0
        %v6081 = vadd.f32 0.0, %v6080
        %v6082 = vpop.f32.mrf.mxu0
        %v6083 = vadd.f32 0.0, %v6082
        %6084 = vdwg.mxu0
        %6085 = vmatpush.bf16.msra.mxu0 %v5900
        %6086 = vmatpush.bf16.msra.mxu0 %v5892
        %6087 = vmatpush.bf16.msra.mxu0 %v5884
        %6088 = vmatpush.bf16.msra.mxu0 %v5876
        %6089 = vmatpush.bf16.msra.mxu0 %v5868
        %6090 = vmatpush.bf16.msra.mxu0 %v5860
        %6091 = vmatpush.bf16.msra.mxu0 %v5852
        %6092 = vmatpush.bf16.msra.mxu0 %v5844
        %6093 = vmatmul.bf16.gmra.mxu0 %v5253
        %v6094 = vpop.f32.mrf.mxu0
        %v6095 = vadd.f32 %v6046, %v6094
        %v6096 = vpop.f32.mrf.mxu0
        %v6097 = vadd.f32 %v6048, %v6096
        %6098 = vmatmul.bf16.gmra.mxu0 %v5255
        %v6099 = vpop.f32.mrf.mxu0
        %v6100 = vadd.f32 %v6051, %v6099
        %v6101 = vpop.f32.mrf.mxu0
        %v6102 = vadd.f32 %v6053, %v6101
        %6103 = vmatmul.bf16.gmra.mxu0 %v5257
        %v6104 = vpop.f32.mrf.mxu0
        %v6105 = vadd.f32 %v6056, %v6104
        %v6106 = vpop.f32.mrf.mxu0
        %v6107 = vadd.f32 %v6058, %v6106
        %6108 = vmatmul.bf16.gmra.mxu0 %v5259
        %v6109 = vpop.f32.mrf.mxu0
        %v6110 = vadd.f32 %v6061, %v6109
        %v6111 = vpop.f32.mrf.mxu0
        %v6112 = vadd.f32 %v6063, %v6111
        %6113 = vmatmul.bf16.gmra.mxu0 %v5261
        %v6114 = vpop.f32.mrf.mxu0
        %v6115 = vadd.f32 %v6066, %v6114
        %v6116 = vpop.f32.mrf.mxu0
        %v6117 = vadd.f32 %v6068, %v6116
        %6118 = vmatmul.bf16.gmra.mxu0 %v5263
        %v6119 = vpop.f32.mrf.mxu0
        %v6120 = vadd.f32 %v6071, %v6119
        %v6121 = vpop.f32.mrf.mxu0
        %v6122 = vadd.f32 %v6073, %v6121
        %6123 = vmatmul.bf16.gmra.mxu0 %v5265
        %v6124 = vpop.f32.mrf.mxu0
        %v6125 = vadd.f32 %v6076, %v6124
        %v6126 = vpop.f32.mrf.mxu0
        %v6127 = vadd.f32 %v6078, %v6126
        %6128 = vmatmul.bf16.gmra.mxu0 %v5267
        %v6129 = vpop.f32.mrf.mxu0
        %v6130 = vadd.f32 %v6081, %v6129
        %v6131 = vpop.f32.mrf.mxu0
        %v6132 = vadd.f32 %v6083, %v6131
        %6133 = vdwg.mxu0
        %6134 = vmatpush.bf16.msra.mxu0 %v5837
        %6135 = vmatpush.bf16.msra.mxu0 %v5829
        %6136 = vmatpush.bf16.msra.mxu0 %v5821
        %6137 = vmatpush.bf16.msra.mxu0 %v5813
        %6138 = vmatpush.bf16.msra.mxu0 %v5805
        %6139 = vmatpush.bf16.msra.mxu0 %v5797
        %6140 = vmatpush.bf16.msra.mxu0 %v5789
        %6141 = vmatpush.bf16.msra.mxu0 %v5781
        %6142 = vmatmul.bf16.gmra.mxu0 %v5252
        %v6143 = vpop.f32.mrf.mxu0
        %v6144 = vadd.f32 0.0, %v6143
        %v6145 = vpop.f32.mrf.mxu0
        %v6146 = vadd.f32 0.0, %v6145
        %6147 = vmatmul.bf16.gmra.mxu0 %v5254
        %v6148 = vpop.f32.mrf.mxu0
        %v6149 = vadd.f32 0.0, %v6148
        %v6150 = vpop.f32.mrf.mxu0
        %v6151 = vadd.f32 0.0, %v6150
        %6152 = vmatmul.bf16.gmra.mxu0 %v5256
        %v6153 = vpop.f32.mrf.mxu0
        %v6154 = vadd.f32 0.0, %v6153
        %v6155 = vpop.f32.mrf.mxu0
        %v6156 = vadd.f32 0.0, %v6155
        %6157 = vmatmul.bf16.gmra.mxu0 %v5258
        %v6158 = vpop.f32.mrf.mxu0
        %v6159 = vadd.f32 0.0, %v6158
        %v6160 = vpop.f32.mrf.mxu0
        %v6161 = vadd.f32 0.0, %v6160
        %6162 = vmatmul.bf16.gmra.mxu0 %v5260
        %v6163 = vpop.f32.mrf.mxu0
        %v6164 = vadd.f32 0.0, %v6163
        %v6165 = vpop.f32.mrf.mxu0
        %v6166 = vadd.f32 0.0, %v6165
        %6167 = vmatmul.bf16.gmra.mxu0 %v5262
        %v6168 = vpop.f32.mrf.mxu0
        %v6169 = vadd.f32 0.0, %v6168
        %v6170 = vpop.f32.mrf.mxu0
        %v6171 = vadd.f32 0.0, %v6170
        %6172 = vmatmul.bf16.gmra.mxu0 %v5264
        %v6173 = vpop.f32.mrf.mxu0
        %v6174 = vadd.f32 0.0, %v6173
        %v6175 = vpop.f32.mrf.mxu0
        %v6176 = vadd.f32 0.0, %v6175
        %6177 = vmatmul.bf16.gmra.mxu0 %v5266
        %v6178 = vpop.f32.mrf.mxu0
        %v6179 = vadd.f32 0.0, %v6178
        %v6180 = vpop.f32.mrf.mxu0
        %v6181 = vadd.f32 0.0, %v6180
        %6182 = vdwg.mxu0
        %6183 = vmatpush.bf16.msra.mxu0 %v5901
        %6184 = vmatpush.bf16.msra.mxu0 %v5893
        %6185 = vmatpush.bf16.msra.mxu0 %v5885
        %6186 = vmatpush.bf16.msra.mxu0 %v5877
        %6187 = vmatpush.bf16.msra.mxu0 %v5869
        %6188 = vmatpush.bf16.msra.mxu0 %v5861
        %6189 = vmatpush.bf16.msra.mxu0 %v5853
        %6190 = vmatpush.bf16.msra.mxu0 %v5845
        %6191 = vmatmul.bf16.gmra.mxu0 %v5253
        %v6192 = vpop.f32.mrf.mxu0
        %v6193 = vadd.f32 %v6144, %v6192
        %v6194 = vpop.f32.mrf.mxu0
        %v6195 = vadd.f32 %v6146, %v6194
        %6196 = vmatmul.bf16.gmra.mxu0 %v5255
        %v6197 = vpop.f32.mrf.mxu0
        %v6198 = vadd.f32 %v6149, %v6197
        %v6199 = vpop.f32.mrf.mxu0
        %v6200 = vadd.f32 %v6151, %v6199
        %6201 = vmatmul.bf16.gmra.mxu0 %v5257
        %v6202 = vpop.f32.mrf.mxu0
        %v6203 = vadd.f32 %v6154, %v6202
        %v6204 = vpop.f32.mrf.mxu0
        %v6205 = vadd.f32 %v6156, %v6204
        %6206 = vmatmul.bf16.gmra.mxu0 %v5259
        %v6207 = vpop.f32.mrf.mxu0
        %v6208 = vadd.f32 %v6159, %v6207
        %v6209 = vpop.f32.mrf.mxu0
        %v6210 = vadd.f32 %v6161, %v6209
        %6211 = vmatmul.bf16.gmra.mxu0 %v5261
        %v6212 = vpop.f32.mrf.mxu0
        %v6213 = vadd.f32 %v6164, %v6212
        %v6214 = vpop.f32.mrf.mxu0
        %v6215 = vadd.f32 %v6166, %v6214
        %6216 = vmatmul.bf16.gmra.mxu0 %v5263
        %v6217 = vpop.f32.mrf.mxu0
        %v6218 = vadd.f32 %v6169, %v6217
        %v6219 = vpop.f32.mrf.mxu0
        %v6220 = vadd.f32 %v6171, %v6219
        %6221 = vmatmul.bf16.gmra.mxu0 %v5265
        %v6222 = vpop.f32.mrf.mxu0
        %v6223 = vadd.f32 %v6174, %v6222
        %v6224 = vpop.f32.mrf.mxu0
        %v6225 = vadd.f32 %v6176, %v6224
        %6226 = vmatmul.bf16.gmra.mxu0 %v5267
        %v6227 = vpop.f32.mrf.mxu0
        %v6228 = vadd.f32 %v6179, %v6227
        %v6229 = vpop.f32.mrf.mxu0
        %v6230 = vadd.f32 %v6181, %v6229
        %6231 = vdwg.mxu0
        %6232 = vmatpush.bf16.msra.mxu0 %v5838
        %6233 = vmatpush.bf16.msra.mxu0 %v5830
        %6234 = vmatpush.bf16.msra.mxu0 %v5822
        %6235 = vmatpush.bf16.msra.mxu0 %v5814
        %6236 = vmatpush.bf16.msra.mxu0 %v5806
        %6237 = vmatpush.bf16.msra.mxu0 %v5798
        %6238 = vmatpush.bf16.msra.mxu0 %v5790
        %6239 = vmatpush.bf16.msra.mxu0 %v5782
        %6240 = vmatmul.bf16.gmra.mxu0 %v5252
        %v6241 = vpop.f32.mrf.mxu0
        %v6242 = vadd.f32 0.0, %v6241
        %v6243 = vpop.f32.mrf.mxu0
        %v6244 = vadd.f32 0.0, %v6243
        %6245 = vmatmul.bf16.gmra.mxu0 %v5254
        %v6246 = vpop.f32.mrf.mxu0
        %v6247 = vadd.f32 0.0, %v6246
        %v6248 = vpop.f32.mrf.mxu0
        %v6249 = vadd.f32 0.0, %v6248
        %6250 = vmatmul.bf16.gmra.mxu0 %v5256
        %v6251 = vpop.f32.mrf.mxu0
        %v6252 = vadd.f32 0.0, %v6251
        %v6253 = vpop.f32.mrf.mxu0
        %v6254 = vadd.f32 0.0, %v6253
        %6255 = vmatmul.bf16.gmra.mxu0 %v5258
        %v6256 = vpop.f32.mrf.mxu0
        %v6257 = vadd.f32 0.0, %v6256
        %v6258 = vpop.f32.mrf.mxu0
        %v6259 = vadd.f32 0.0, %v6258
        %6260 = vmatmul.bf16.gmra.mxu0 %v5260
        %v6261 = vpop.f32.mrf.mxu0
        %v6262 = vadd.f32 0.0, %v6261
        %v6263 = vpop.f32.mrf.mxu0
        %v6264 = vadd.f32 0.0, %v6263
        %6265 = vmatmul.bf16.gmra.mxu0 %v5262
        %v6266 = vpop.f32.mrf.mxu0
        %v6267 = vadd.f32 0.0, %v6266
        %v6268 = vpop.f32.mrf.mxu0
        %v6269 = vadd.f32 0.0, %v6268
        %6270 = vmatmul.bf16.gmra.mxu0 %v5264
        %v6271 = vpop.f32.mrf.mxu0
        %v6272 = vadd.f32 0.0, %v6271
        %v6273 = vpop.f32.mrf.mxu0
        %v6274 = vadd.f32 0.0, %v6273
        %6275 = vmatmul.bf16.gmra.mxu0 %v5266
        %v6276 = vpop.f32.mrf.mxu0
        %v6277 = vadd.f32 0.0, %v6276
        %v6278 = vpop.f32.mrf.mxu0
        %v6279 = vadd.f32 0.0, %v6278
        %6280 = vdwg.mxu0
        %6281 = vmatpush.bf16.msra.mxu0 %v5902
        %6282 = vmatpush.bf16.msra.mxu0 %v5894
        %6283 = vmatpush.bf16.msra.mxu0 %v5886
        %6284 = vmatpush.bf16.msra.mxu0 %v5878
        %6285 = vmatpush.bf16.msra.mxu0 %v5870
        %6286 = vmatpush.bf16.msra.mxu0 %v5862
        %6287 = vmatpush.bf16.msra.mxu0 %v5854
        %6288 = vmatpush.bf16.msra.mxu0 %v5846
        %6289 = vmatmul.bf16.gmra.mxu0 %v5253
        %v6290 = vpop.f32.mrf.mxu0
        %v6291 = vadd.f32 %v6242, %v6290
        %v6292 = vpop.f32.mrf.mxu0
        %v6293 = vadd.f32 %v6244, %v6292
        %6294 = vmatmul.bf16.gmra.mxu0 %v5255
        %v6295 = vpop.f32.mrf.mxu0
        %v6296 = vadd.f32 %v6247, %v6295
        %v6297 = vpop.f32.mrf.mxu0
        %v6298 = vadd.f32 %v6249, %v6297
        %6299 = vmatmul.bf16.gmra.mxu0 %v5257
        %v6300 = vpop.f32.mrf.mxu0
        %v6301 = vadd.f32 %v6252, %v6300
        %v6302 = vpop.f32.mrf.mxu0
        %v6303 = vadd.f32 %v6254, %v6302
        %6304 = vmatmul.bf16.gmra.mxu0 %v5259
        %v6305 = vpop.f32.mrf.mxu0
        %v6306 = vadd.f32 %v6257, %v6305
        %v6307 = vpop.f32.mrf.mxu0
        %v6308 = vadd.f32 %v6259, %v6307
        %6309 = vmatmul.bf16.gmra.mxu0 %v5261
        %v6310 = vpop.f32.mrf.mxu0
        %v6311 = vadd.f32 %v6262, %v6310
        %v6312 = vpop.f32.mrf.mxu0
        %v6313 = vadd.f32 %v6264, %v6312
        %6314 = vmatmul.bf16.gmra.mxu0 %v5263
        %v6315 = vpop.f32.mrf.mxu0
        %v6316 = vadd.f32 %v6267, %v6315
        %v6317 = vpop.f32.mrf.mxu0
        %v6318 = vadd.f32 %v6269, %v6317
        %6319 = vmatmul.bf16.gmra.mxu0 %v5265
        %v6320 = vpop.f32.mrf.mxu0
        %v6321 = vadd.f32 %v6272, %v6320
        %v6322 = vpop.f32.mrf.mxu0
        %v6323 = vadd.f32 %v6274, %v6322
        %6324 = vmatmul.bf16.gmra.mxu0 %v5267
        %v6325 = vpop.f32.mrf.mxu0
        %v6326 = vadd.f32 %v6277, %v6325
        %v6327 = vpop.f32.mrf.mxu0
        %v6328 = vadd.f32 %v6279, %v6327
        %6329 = vdwg.mxu0
        %6330 = vmatpush.bf16.msra.mxu0 %v5839
        %6331 = vmatpush.bf16.msra.mxu0 %v5831
        %6332 = vmatpush.bf16.msra.mxu0 %v5823
        %6333 = vmatpush.bf16.msra.mxu0 %v5815
        %6334 = vmatpush.bf16.msra.mxu0 %v5807
        %6335 = vmatpush.bf16.msra.mxu0 %v5799
        %6336 = vmatpush.bf16.msra.mxu0 %v5791
        %6337 = vmatpush.bf16.msra.mxu0 %v5783
        %6338 = vmatmul.bf16.gmra.mxu0 %v5252
        %v6339 = vpop.f32.mrf.mxu0
        %v6340 = vadd.f32 0.0, %v6339
        %v6341 = vpop.f32.mrf.mxu0
        %v6342 = vadd.f32 0.0, %v6341
        %6343 = vmatmul.bf16.gmra.mxu0 %v5254
        %v6344 = vpop.f32.mrf.mxu0
        %v6345 = vadd.f32 0.0, %v6344
        %v6346 = vpop.f32.mrf.mxu0
        %v6347 = vadd.f32 0.0, %v6346
        %6348 = vmatmul.bf16.gmra.mxu0 %v5256
        %v6349 = vpop.f32.mrf.mxu0
        %v6350 = vadd.f32 0.0, %v6349
        %v6351 = vpop.f32.mrf.mxu0
        %v6352 = vadd.f32 0.0, %v6351
        %6353 = vmatmul.bf16.gmra.mxu0 %v5258
        %v6354 = vpop.f32.mrf.mxu0
        %v6355 = vadd.f32 0.0, %v6354
        %v6356 = vpop.f32.mrf.mxu0
        %v6357 = vadd.f32 0.0, %v6356
        %6358 = vmatmul.bf16.gmra.mxu0 %v5260
        %v6359 = vpop.f32.mrf.mxu0
        %v6360 = vadd.f32 0.0, %v6359
        %v6361 = vpop.f32.mrf.mxu0
        %v6362 = vadd.f32 0.0, %v6361
        %6363 = vmatmul.bf16.gmra.mxu0 %v5262
        %v6364 = vpop.f32.mrf.mxu0
        %v6365 = vadd.f32 0.0, %v6364
        %v6366 = vpop.f32.mrf.mxu0
        %v6367 = vadd.f32 0.0, %v6366
        %6368 = vmatmul.bf16.gmra.mxu0 %v5264
        %v6369 = vpop.f32.mrf.mxu0
        %v6370 = vadd.f32 0.0, %v6369
        %v6371 = vpop.f32.mrf.mxu0
        %v6372 = vadd.f32 0.0, %v6371
        %6373 = vmatmul.bf16.gmra.mxu0 %v5266
        %v6374 = vpop.f32.mrf.mxu0
        %v6375 = vadd.f32 0.0, %v6374
        %v6376 = vpop.f32.mrf.mxu0
        %v6377 = vadd.f32 0.0, %v6376
        %6378 = vdwg.mxu0
        %6379 = vmatpush.bf16.msra.mxu0 %v5903
        %6380 = vmatpush.bf16.msra.mxu0 %v5895
        %6381 = vmatpush.bf16.msra.mxu0 %v5887
        %6382 = vmatpush.bf16.msra.mxu0 %v5879
        %6383 = vmatpush.bf16.msra.mxu0 %v5871
        %6384 = vmatpush.bf16.msra.mxu0 %v5863
        %6385 = vmatpush.bf16.msra.mxu0 %v5855
        %6386 = vmatpush.bf16.msra.mxu0 %v5847
        %6387 = vmatmul.bf16.gmra.mxu0 %v5253
        %v6388 = vpop.f32.mrf.mxu0
        %v6389 = vadd.f32 %v6340, %v6388
        %v6390 = vpop.f32.mrf.mxu0
        %v6391 = vadd.f32 %v6342, %v6390
        %6392 = vmatmul.bf16.gmra.mxu0 %v5255
        %v6393 = vpop.f32.mrf.mxu0
        %v6394 = vadd.f32 %v6345, %v6393
        %v6395 = vpop.f32.mrf.mxu0
        %v6396 = vadd.f32 %v6347, %v6395
        %6397 = vmatmul.bf16.gmra.mxu0 %v5257
        %v6398 = vpop.f32.mrf.mxu0
        %v6399 = vadd.f32 %v6350, %v6398
        %v6400 = vpop.f32.mrf.mxu0
        %v6401 = vadd.f32 %v6352, %v6400
        %6402 = vmatmul.bf16.gmra.mxu0 %v5259
        %v6403 = vpop.f32.mrf.mxu0
        %v6404 = vadd.f32 %v6355, %v6403
        %v6405 = vpop.f32.mrf.mxu0
        %v6406 = vadd.f32 %v6357, %v6405
        %6407 = vmatmul.bf16.gmra.mxu0 %v5261
        %v6408 = vpop.f32.mrf.mxu0
        %v6409 = vadd.f32 %v6360, %v6408
        %v6410 = vpop.f32.mrf.mxu0
        %v6411 = vadd.f32 %v6362, %v6410
        %6412 = vmatmul.bf16.gmra.mxu0 %v5263
        %v6413 = vpop.f32.mrf.mxu0
        %v6414 = vadd.f32 %v6365, %v6413
        %v6415 = vpop.f32.mrf.mxu0
        %v6416 = vadd.f32 %v6367, %v6415
        %6417 = vmatmul.bf16.gmra.mxu0 %v5265
        %v6418 = vpop.f32.mrf.mxu0
        %v6419 = vadd.f32 %v6370, %v6418
        %v6420 = vpop.f32.mrf.mxu0
        %v6421 = vadd.f32 %v6372, %v6420
        %6422 = vmatmul.bf16.gmra.mxu0 %v5267
        %v6423 = vpop.f32.mrf.mxu0
        %v6424 = vadd.f32 %v6375, %v6423
        %v6425 = vpop.f32.mrf.mxu0
        %v6426 = vadd.f32 %v6377, %v6425
        %6427 = vdwg.mxu0
        %6428 = vmatpush.bf16.msra.mxu0 %v5840
        %6429 = vmatpush.bf16.msra.mxu0 %v5832
        %6430 = vmatpush.bf16.msra.mxu0 %v5824
        %6431 = vmatpush.bf16.msra.mxu0 %v5816
        %6432 = vmatpush.bf16.msra.mxu0 %v5808
        %6433 = vmatpush.bf16.msra.mxu0 %v5800
        %6434 = vmatpush.bf16.msra.mxu0 %v5792
        %6435 = vmatpush.bf16.msra.mxu0 %v5784
        %6436 = vmatmul.bf16.gmra.mxu0 %v5252
        %v6437 = vpop.f32.mrf.mxu0
        %v6438 = vadd.f32 0.0, %v6437
        %v6439 = vpop.f32.mrf.mxu0
        %v6440 = vadd.f32 0.0, %v6439
        %6441 = vmatmul.bf16.gmra.mxu0 %v5254
        %v6442 = vpop.f32.mrf.mxu0
        %v6443 = vadd.f32 0.0, %v6442
        %v6444 = vpop.f32.mrf.mxu0
        %v6445 = vadd.f32 0.0, %v6444
        %6446 = vmatmul.bf16.gmra.mxu0 %v5256
        %v6447 = vpop.f32.mrf.mxu0
        %v6448 = vadd.f32 0.0, %v6447
        %v6449 = vpop.f32.mrf.mxu0
        %v6450 = vadd.f32 0.0, %v6449
        %6451 = vmatmul.bf16.gmra.mxu0 %v5258
        %v6452 = vpop.f32.mrf.mxu0
        %v6453 = vadd.f32 0.0, %v6452
        %v6454 = vpop.f32.mrf.mxu0
        %v6455 = vadd.f32 0.0, %v6454
        %6456 = vmatmul.bf16.gmra.mxu0 %v5260
        %v6457 = vpop.f32.mrf.mxu0
        %v6458 = vadd.f32 0.0, %v6457
        %v6459 = vpop.f32.mrf.mxu0
        %v6460 = vadd.f32 0.0, %v6459
        %6461 = vmatmul.bf16.gmra.mxu0 %v5262
        %v6462 = vpop.f32.mrf.mxu0
        %v6463 = vadd.f32 0.0, %v6462
        %v6464 = vpop.f32.mrf.mxu0
        %v6465 = vadd.f32 0.0, %v6464
        %6466 = vmatmul.bf16.gmra.mxu0 %v5264
        %v6467 = vpop.f32.mrf.mxu0
        %v6468 = vadd.f32 0.0, %v6467
        %v6469 = vpop.f32.mrf.mxu0
        %v6470 = vadd.f32 0.0, %v6469
        %6471 = vmatmul.bf16.gmra.mxu0 %v5266
        %v6472 = vpop.f32.mrf.mxu0
        %v6473 = vadd.f32 0.0, %v6472
        %v6474 = vpop.f32.mrf.mxu0
        %v6475 = vadd.f32 0.0, %v6474
        %6476 = vdwg.mxu0
        %6477 = vmatpush.bf16.msra.mxu0 %v5904
        %6478 = vmatpush.bf16.msra.mxu0 %v5896
        %6479 = vmatpush.bf16.msra.mxu0 %v5888
        %6480 = vmatpush.bf16.msra.mxu0 %v5880
        %6481 = vmatpush.bf16.msra.mxu0 %v5872
        %6482 = vmatpush.bf16.msra.mxu0 %v5864
        %6483 = vmatpush.bf16.msra.mxu0 %v5856
        %6484 = vmatpush.bf16.msra.mxu0 %v5848
        %6485 = vmatmul.bf16.gmra.mxu0 %v5253
        %v6486 = vpop.f32.mrf.mxu0
        %v6487 = vadd.f32 %v6438, %v6486
        %v6488 = vpop.f32.mrf.mxu0
        %v6489 = vadd.f32 %v6440, %v6488
        %6490 = vmatmul.bf16.gmra.mxu0 %v5255
        %v6491 = vpop.f32.mrf.mxu0
        %v6492 = vadd.f32 %v6443, %v6491
        %v6493 = vpop.f32.mrf.mxu0
        %v6494 = vadd.f32 %v6445, %v6493
        %6495 = vmatmul.bf16.gmra.mxu0 %v5257
        %v6496 = vpop.f32.mrf.mxu0
        %v6497 = vadd.f32 %v6448, %v6496
        %v6498 = vpop.f32.mrf.mxu0
        %v6499 = vadd.f32 %v6450, %v6498
        %6500 = vmatmul.bf16.gmra.mxu0 %v5259
        %v6501 = vpop.f32.mrf.mxu0
        %v6502 = vadd.f32 %v6453, %v6501
        %v6503 = vpop.f32.mrf.mxu0
        %v6504 = vadd.f32 %v6455, %v6503
        %6505 = vmatmul.bf16.gmra.mxu0 %v5261
        %v6506 = vpop.f32.mrf.mxu0
        %v6507 = vadd.f32 %v6458, %v6506
        %v6508 = vpop.f32.mrf.mxu0
        %v6509 = vadd.f32 %v6460, %v6508
        %6510 = vmatmul.bf16.gmra.mxu0 %v5263
        %v6511 = vpop.f32.mrf.mxu0
        %v6512 = vadd.f32 %v6463, %v6511
        %v6513 = vpop.f32.mrf.mxu0
        %v6514 = vadd.f32 %v6465, %v6513
        %6515 = vmatmul.bf16.gmra.mxu0 %v5265
        %v6516 = vpop.f32.mrf.mxu0
        %v6517 = vadd.f32 %v6468, %v6516
        %v6518 = vpop.f32.mrf.mxu0
        %v6519 = vadd.f32 %v6470, %v6518
        %6520 = vmatmul.bf16.gmra.mxu0 %v5267
        %v6521 = vpop.f32.mrf.mxu0
        %v6522 = vadd.f32 %v6473, %v6521
        %v6523 = vpop.f32.mrf.mxu0
        %v6524 = vadd.f32 %v6475, %v6523
        %6525 = vdwg.mxu0
        %6526 = vmatpush.bf16.msra.mxu0 %v5841
        %6527 = vmatpush.bf16.msra.mxu0 %v5833
        %6528 = vmatpush.bf16.msra.mxu0 %v5825
        %6529 = vmatpush.bf16.msra.mxu0 %v5817
        %6530 = vmatpush.bf16.msra.mxu0 %v5809
        %6531 = vmatpush.bf16.msra.mxu0 %v5801
        %6532 = vmatpush.bf16.msra.mxu0 %v5793
        %6533 = vmatpush.bf16.msra.mxu0 %v5785
        %6534 = vmatmul.bf16.gmra.mxu0 %v5252
        %v6535 = vpop.f32.mrf.mxu0
        %v6536 = vadd.f32 0.0, %v6535
        %v6537 = vpop.f32.mrf.mxu0
        %v6538 = vadd.f32 0.0, %v6537
        %6539 = vmatmul.bf16.gmra.mxu0 %v5254
        %v6540 = vpop.f32.mrf.mxu0
        %v6541 = vadd.f32 0.0, %v6540
        %v6542 = vpop.f32.mrf.mxu0
        %v6543 = vadd.f32 0.0, %v6542
        %6544 = vmatmul.bf16.gmra.mxu0 %v5256
        %v6545 = vpop.f32.mrf.mxu0
        %v6546 = vadd.f32 0.0, %v6545
        %v6547 = vpop.f32.mrf.mxu0
        %v6548 = vadd.f32 0.0, %v6547
        %6549 = vmatmul.bf16.gmra.mxu0 %v5258
        %v6550 = vpop.f32.mrf.mxu0
        %v6551 = vadd.f32 0.0, %v6550
        %v6552 = vpop.f32.mrf.mxu0
        %v6553 = vadd.f32 0.0, %v6552
        %6554 = vmatmul.bf16.gmra.mxu0 %v5260
        %v6555 = vpop.f32.mrf.mxu0
        %v6556 = vadd.f32 0.0, %v6555
        %v6557 = vpop.f32.mrf.mxu0
        %v6558 = vadd.f32 0.0, %v6557
        %6559 = vmatmul.bf16.gmra.mxu0 %v5262
        %v6560 = vpop.f32.mrf.mxu0
        %v6561 = vadd.f32 0.0, %v6560
        %v6562 = vpop.f32.mrf.mxu0
        %v6563 = vadd.f32 0.0, %v6562
        %6564 = vmatmul.bf16.gmra.mxu0 %v5264
        %v6565 = vpop.f32.mrf.mxu0
        %v6566 = vadd.f32 0.0, %v6565
        %v6567 = vpop.f32.mrf.mxu0
        %v6568 = vadd.f32 0.0, %v6567
        %6569 = vmatmul.bf16.gmra.mxu0 %v5266
        %v6570 = vpop.f32.mrf.mxu0
        %v6571 = vadd.f32 0.0, %v6570
        %v6572 = vpop.f32.mrf.mxu0
        %v6573 = vadd.f32 0.0, %v6572
        %6574 = vdwg.mxu0
        %6575 = vmatpush.bf16.msra.mxu0 %v5905
        %6576 = vmatpush.bf16.msra.mxu0 %v5897
        %6577 = vmatpush.bf16.msra.mxu0 %v5889
        %6578 = vmatpush.bf16.msra.mxu0 %v5881
        %6579 = vmatpush.bf16.msra.mxu0 %v5873
        %6580 = vmatpush.bf16.msra.mxu0 %v5865
        %6581 = vmatpush.bf16.msra.mxu0 %v5857
        %6582 = vmatpush.bf16.msra.mxu0 %v5849
        %6583 = vmatmul.bf16.gmra.mxu0 %v5253
        %v6584 = vpop.f32.mrf.mxu0
        %v6585 = vadd.f32 %v6536, %v6584
        %v6586 = vpop.f32.mrf.mxu0
        %v6587 = vadd.f32 %v6538, %v6586
        %6588 = vmatmul.bf16.gmra.mxu0 %v5255
        %v6589 = vpop.f32.mrf.mxu0
        %v6590 = vadd.f32 %v6541, %v6589
        %v6591 = vpop.f32.mrf.mxu0
        %v6592 = vadd.f32 %v6543, %v6591
        %6593 = vmatmul.bf16.gmra.mxu0 %v5257
        %v6594 = vpop.f32.mrf.mxu0
        %v6595 = vadd.f32 %v6546, %v6594
        %v6596 = vpop.f32.mrf.mxu0
        %v6597 = vadd.f32 %v6548, %v6596
        %6598 = vmatmul.bf16.gmra.mxu0 %v5259
        %v6599 = vpop.f32.mrf.mxu0
        %v6600 = vadd.f32 %v6551, %v6599
        %v6601 = vpop.f32.mrf.mxu0
        %v6602 = vadd.f32 %v6553, %v6601
        %6603 = vmatmul.bf16.gmra.mxu0 %v5261
        %v6604 = vpop.f32.mrf.mxu0
        %v6605 = vadd.f32 %v6556, %v6604
        %v6606 = vpop.f32.mrf.mxu0
        %v6607 = vadd.f32 %v6558, %v6606
        %6608 = vmatmul.bf16.gmra.mxu0 %v5263
        %v6609 = vpop.f32.mrf.mxu0
        %v6610 = vadd.f32 %v6561, %v6609
        %v6611 = vpop.f32.mrf.mxu0
        %v6612 = vadd.f32 %v6563, %v6611
        %6613 = vmatmul.bf16.gmra.mxu0 %v5265
        %v6614 = vpop.f32.mrf.mxu0
        %v6615 = vadd.f32 %v6566, %v6614
        %v6616 = vpop.f32.mrf.mxu0
        %v6617 = vadd.f32 %v6568, %v6616
        %6618 = vmatmul.bf16.gmra.mxu0 %v5267
        %v6619 = vpop.f32.mrf.mxu0
        %v6620 = vadd.f32 %v6571, %v6619
        %v6621 = vpop.f32.mrf.mxu0
        %v6622 = vadd.f32 %v6573, %v6621
        %6623 = vdwg.mxu0
        %6624 = vmatpush.bf16.msra.mxu0 %v5842
        %6625 = vmatpush.bf16.msra.mxu0 %v5834
        %6626 = vmatpush.bf16.msra.mxu0 %v5826
        %6627 = vmatpush.bf16.msra.mxu0 %v5818
        %6628 = vmatpush.bf16.msra.mxu0 %v5810
        %6629 = vmatpush.bf16.msra.mxu0 %v5802
        %6630 = vmatpush.bf16.msra.mxu0 %v5794
        %6631 = vmatpush.bf16.msra.mxu0 %v5786
        %6632 = vmatmul.bf16.gmra.mxu0 %v5252
        %v6633 = vpop.f32.mrf.mxu0
        %v6634 = vadd.f32 0.0, %v6633
        %v6635 = vpop.f32.mrf.mxu0
        %v6636 = vadd.f32 0.0, %v6635
        %6637 = vmatmul.bf16.gmra.mxu0 %v5254
        %v6638 = vpop.f32.mrf.mxu0
        %v6639 = vadd.f32 0.0, %v6638
        %v6640 = vpop.f32.mrf.mxu0
        %v6641 = vadd.f32 0.0, %v6640
        %6642 = vmatmul.bf16.gmra.mxu0 %v5256
        %v6643 = vpop.f32.mrf.mxu0
        %v6644 = vadd.f32 0.0, %v6643
        %v6645 = vpop.f32.mrf.mxu0
        %v6646 = vadd.f32 0.0, %v6645
        %6647 = vmatmul.bf16.gmra.mxu0 %v5258
        %v6648 = vpop.f32.mrf.mxu0
        %v6649 = vadd.f32 0.0, %v6648
        %v6650 = vpop.f32.mrf.mxu0
        %v6651 = vadd.f32 0.0, %v6650
        %6652 = vmatmul.bf16.gmra.mxu0 %v5260
        %v6653 = vpop.f32.mrf.mxu0
        %v6654 = vadd.f32 0.0, %v6653
        %v6655 = vpop.f32.mrf.mxu0
        %v6656 = vadd.f32 0.0, %v6655
        %6657 = vmatmul.bf16.gmra.mxu0 %v5262
        %v6658 = vpop.f32.mrf.mxu0
        %v6659 = vadd.f32 0.0, %v6658
        %v6660 = vpop.f32.mrf.mxu0
        %v6661 = vadd.f32 0.0, %v6660
        %6662 = vmatmul.bf16.gmra.mxu0 %v5264
        %v6663 = vpop.f32.mrf.mxu0
        %v6664 = vadd.f32 0.0, %v6663
        %v6665 = vpop.f32.mrf.mxu0
        %v6666 = vadd.f32 0.0, %v6665
        %6667 = vmatmul.bf16.gmra.mxu0 %v5266
        %v6668 = vpop.f32.mrf.mxu0
        %v6669 = vadd.f32 0.0, %v6668
        %v6670 = vpop.f32.mrf.mxu0
        %v6671 = vadd.f32 0.0, %v6670
        %6672 = vdwg.mxu0
        %6673 = vmatpush.bf16.msra.mxu0 %v5906
        %6674 = vmatpush.bf16.msra.mxu0 %v5898
        %6675 = vmatpush.bf16.msra.mxu0 %v5890
        %6676 = vmatpush.bf16.msra.mxu0 %v5882
        %6677 = vmatpush.bf16.msra.mxu0 %v5874
        %6678 = vmatpush.bf16.msra.mxu0 %v5866
        %6679 = vmatpush.bf16.msra.mxu0 %v5858
        %6680 = vmatpush.bf16.msra.mxu0 %v5850
        %6681 = vmatmul.bf16.gmra.mxu0 %v5253
        %v6682 = vpop.f32.mrf.mxu0
        %v6683 = vadd.f32 %v6634, %v6682
        %v6684 = vpop.f32.mrf.mxu0
        %v6685 = vadd.f32 %v6636, %v6684
        %6686 = vmatmul.bf16.gmra.mxu0 %v5255
        %v6687 = vpop.f32.mrf.mxu0
        %v6688 = vadd.f32 %v6639, %v6687
        %v6689 = vpop.f32.mrf.mxu0
        %v6690 = vadd.f32 %v6641, %v6689
        %6691 = vmatmul.bf16.gmra.mxu0 %v5257
        %v6692 = vpop.f32.mrf.mxu0
        %v6693 = vadd.f32 %v6644, %v6692
        %v6694 = vpop.f32.mrf.mxu0
        %v6695 = vadd.f32 %v6646, %v6694
        %6696 = vmatmul.bf16.gmra.mxu0 %v5259
        %v6697 = vpop.f32.mrf.mxu0
        %v6698 = vadd.f32 %v6649, %v6697
        %v6699 = vpop.f32.mrf.mxu0
        %v6700 = vadd.f32 %v6651, %v6699
        %6701 = vmatmul.bf16.gmra.mxu0 %v5261
        %v6702 = vpop.f32.mrf.mxu0
        %v6703 = vadd.f32 %v6654, %v6702
        %v6704 = vpop.f32.mrf.mxu0
        %v6705 = vadd.f32 %v6656, %v6704
        %6706 = vmatmul.bf16.gmra.mxu0 %v5263
        %v6707 = vpop.f32.mrf.mxu0
        %v6708 = vadd.f32 %v6659, %v6707
        %v6709 = vpop.f32.mrf.mxu0
        %v6710 = vadd.f32 %v6661, %v6709
        %6711 = vmatmul.bf16.gmra.mxu0 %v5265
        %v6712 = vpop.f32.mrf.mxu0
        %v6713 = vadd.f32 %v6664, %v6712
        %v6714 = vpop.f32.mrf.mxu0
        %v6715 = vadd.f32 %v6666, %v6714
        %6716 = vmatmul.bf16.gmra.mxu0 %v5267
        %v6717 = vpop.f32.mrf.mxu0
        %v6718 = vadd.f32 %v6669, %v6717
        %v6719 = vpop.f32.mrf.mxu0
        %v6720 = vadd.f32 %v6671, %v6719
        %6721 = vdwg.mxu0
        %6722 = vmatpush.bf16.msra.mxu0 %v5843
        %6723 = vmatpush.bf16.msra.mxu0 %v5835
        %6724 = vmatpush.bf16.msra.mxu0 %v5827
        %6725 = vmatpush.bf16.msra.mxu0 %v5819
        %6726 = vmatpush.bf16.msra.mxu0 %v5811
        %6727 = vmatpush.bf16.msra.mxu0 %v5803
        %6728 = vmatpush.bf16.msra.mxu0 %v5795
        %6729 = vmatpush.bf16.msra.mxu0 %v5787
        %6730 = vmatmul.bf16.gmra.mxu0 %v5252
        %v6731 = vpop.f32.mrf.mxu0
        %v6732 = vadd.f32 0.0, %v6731
        %v6733 = vpop.f32.mrf.mxu0
        %v6734 = vadd.f32 0.0, %v6733
        %6735 = vmatmul.bf16.gmra.mxu0 %v5254
        %v6736 = vpop.f32.mrf.mxu0
        %v6737 = vadd.f32 0.0, %v6736
        %v6738 = vpop.f32.mrf.mxu0
        %v6739 = vadd.f32 0.0, %v6738
        %6740 = vmatmul.bf16.gmra.mxu0 %v5256
        %v6741 = vpop.f32.mrf.mxu0
        %v6742 = vadd.f32 0.0, %v6741
        %v6743 = vpop.f32.mrf.mxu0
        %v6744 = vadd.f32 0.0, %v6743
        %6745 = vmatmul.bf16.gmra.mxu0 %v5258
        %v6746 = vpop.f32.mrf.mxu0
        %v6747 = vadd.f32 0.0, %v6746
        %v6748 = vpop.f32.mrf.mxu0
        %v6749 = vadd.f32 0.0, %v6748
        %6750 = vmatmul.bf16.gmra.mxu0 %v5260
        %v6751 = vpop.f32.mrf.mxu0
        %v6752 = vadd.f32 0.0, %v6751
        %v6753 = vpop.f32.mrf.mxu0
        %v6754 = vadd.f32 0.0, %v6753
        %6755 = vmatmul.bf16.gmra.mxu0 %v5262
        %v6756 = vpop.f32.mrf.mxu0
        %v6757 = vadd.f32 0.0, %v6756
        %v6758 = vpop.f32.mrf.mxu0
        %v6759 = vadd.f32 0.0, %v6758
        %6760 = vmatmul.bf16.gmra.mxu0 %v5264
        %v6761 = vpop.f32.mrf.mxu0
        %v6762 = vadd.f32 0.0, %v6761
        %v6763 = vpop.f32.mrf.mxu0
        %v6764 = vadd.f32 0.0, %v6763
        %6765 = vmatmul.bf16.gmra.mxu0 %v5266
        %v6766 = vpop.f32.mrf.mxu0
        %v6767 = vadd.f32 0.0, %v6766
        %v6768 = vpop.f32.mrf.mxu0
        %v6769 = vadd.f32 0.0, %v6768
        %6770 = vdwg.mxu0
        %6771 = vmatpush.bf16.msra.mxu0 %v5907
        %6772 = vmatpush.bf16.msra.mxu0 %v5899
        %6773 = vmatpush.bf16.msra.mxu0 %v5891
        %6774 = vmatpush.bf16.msra.mxu0 %v5883
        %6775 = vmatpush.bf16.msra.mxu0 %v5875
        %6776 = vmatpush.bf16.msra.mxu0 %v5867
        %6777 = vmatpush.bf16.msra.mxu0 %v5859
        %6778 = vmatpush.bf16.msra.mxu0 %v5851
        %6779 = vmatmul.bf16.gmra.mxu0 %v5253
        %v6780 = vpop.f32.mrf.mxu0
        %v6781 = vadd.f32 %v6732, %v6780
        %v6782 = vpop.f32.mrf.mxu0
        %v6783 = vadd.f32 %v6734, %v6782
        %6784 = vmatmul.bf16.gmra.mxu0 %v5255
        %v6785 = vpop.f32.mrf.mxu0
        %v6786 = vadd.f32 %v6737, %v6785
        %v6787 = vpop.f32.mrf.mxu0
        %v6788 = vadd.f32 %v6739, %v6787
        %6789 = vmatmul.bf16.gmra.mxu0 %v5257
        %v6790 = vpop.f32.mrf.mxu0
        %v6791 = vadd.f32 %v6742, %v6790
        %v6792 = vpop.f32.mrf.mxu0
        %v6793 = vadd.f32 %v6744, %v6792
        %6794 = vmatmul.bf16.gmra.mxu0 %v5259
        %v6795 = vpop.f32.mrf.mxu0
        %v6796 = vadd.f32 %v6747, %v6795
        %v6797 = vpop.f32.mrf.mxu0
        %v6798 = vadd.f32 %v6749, %v6797
        %6799 = vmatmul.bf16.gmra.mxu0 %v5261
        %v6800 = vpop.f32.mrf.mxu0
        %v6801 = vadd.f32 %v6752, %v6800
        %v6802 = vpop.f32.mrf.mxu0
        %v6803 = vadd.f32 %v6754, %v6802
        %6804 = vmatmul.bf16.gmra.mxu0 %v5263
        %v6805 = vpop.f32.mrf.mxu0
        %v6806 = vadd.f32 %v6757, %v6805
        %v6807 = vpop.f32.mrf.mxu0
        %v6808 = vadd.f32 %v6759, %v6807
        %6809 = vmatmul.bf16.gmra.mxu0 %v5265
        %v6810 = vpop.f32.mrf.mxu0
        %v6811 = vadd.f32 %v6762, %v6810
        %v6812 = vpop.f32.mrf.mxu0
        %v6813 = vadd.f32 %v6764, %v6812
        %6814 = vmatmul.bf16.gmra.mxu0 %v5267
        %v6815 = vpop.f32.mrf.mxu0
        %v6816 = vadd.f32 %v6767, %v6815
        %v6817 = vpop.f32.mrf.mxu0
        %v6818 = vadd.f32 %v6769, %v6817
        %6819 = vdwg.mxu0
        %v6820 = vmax.f32 %v6095, 0.0
        %v6821 = vmax.f32 %v6193, 0.0
        %v6822 = vmax.f32 %v6291, 0.0
        %v6823 = vmax.f32 %v6389, 0.0
        %v6824 = vmax.f32 %v6487, 0.0
        %v6825 = vmax.f32 %v6585, 0.0
        %v6826 = vmax.f32 %v6683, 0.0
        %v6827 = vmax.f32 %v6781, 0.0
        %v6828 = vmax.f32 %v6097, 0.0
        %v6829 = vmax.f32 %v6195, 0.0
        %v6830 = vmax.f32 %v6293, 0.0
        %v6831 = vmax.f32 %v6391, 0.0
        %v6832 = vmax.f32 %v6489, 0.0
        %v6833 = vmax.f32 %v6587, 0.0
        %v6834 = vmax.f32 %v6685, 0.0
        %v6835 = vmax.f32 %v6783, 0.0
        %v6836 = vmax.f32 %v6100, 0.0
        %v6837 = vmax.f32 %v6198, 0.0
        %v6838 = vmax.f32 %v6296, 0.0
        %v6839 = vmax.f32 %v6394, 0.0
        %v6840 = vmax.f32 %v6492, 0.0
        %v6841 = vmax.f32 %v6590, 0.0
        %v6842 = vmax.f32 %v6688, 0.0
        %v6843 = vmax.f32 %v6786, 0.0
        %v6844 = vmax.f32 %v6102, 0.0
        %v6845 = vmax.f32 %v6200, 0.0
        %v6846 = vmax.f32 %v6298, 0.0
        %v6847 = vmax.f32 %v6396, 0.0
        %v6848 = vmax.f32 %v6494, 0.0
        %v6849 = vmax.f32 %v6592, 0.0
        %v6850 = vmax.f32 %v6690, 0.0
        %v6851 = vmax.f32 %v6788, 0.0
        %v6852 = vmax.f32 %v6105, 0.0
        %v6853 = vmax.f32 %v6203, 0.0
        %v6854 = vmax.f32 %v6301, 0.0
        %v6855 = vmax.f32 %v6399, 0.0
        %v6856 = vmax.f32 %v6497, 0.0
        %v6857 = vmax.f32 %v6595, 0.0
        %v6858 = vmax.f32 %v6693, 0.0
        %v6859 = vmax.f32 %v6791, 0.0
        %v6860 = vmax.f32 %v6107, 0.0
        %v6861 = vmax.f32 %v6205, 0.0
        %v6862 = vmax.f32 %v6303, 0.0
        %v6863 = vmax.f32 %v6401, 0.0
        %v6864 = vmax.f32 %v6499, 0.0
        %v6865 = vmax.f32 %v6597, 0.0
        %v6866 = vmax.f32 %v6695, 0.0
        %v6867 = vmax.f32 %v6793, 0.0
        %v6868 = vmax.f32 %v6110, 0.0
        %v6869 = vmax.f32 %v6208, 0.0
        %v6870 = vmax.f32 %v6306, 0.0
        %v6871 = vmax.f32 %v6404, 0.0
        %v6872 = vmax.f32 %v6502, 0.0
        %v6873 = vmax.f32 %v6600, 0.0
        %v6874 = vmax.f32 %v6698, 0.0
        %v6875 = vmax.f32 %v6796, 0.0
        %v6876 = vmax.f32 %v6112, 0.0
        %v6877 = vmax.f32 %v6210, 0.0
        %v6878 = vmax.f32 %v6308, 0.0
        %v6879 = vmax.f32 %v6406, 0.0
        %v6880 = vmax.f32 %v6504, 0.0
        %v6881 = vmax.f32 %v6602, 0.0
        %v6882 = vmax.f32 %v6700, 0.0
        %v6883 = vmax.f32 %v6798, 0.0
        %v6884 = vmax.f32 %v6115, 0.0
        %v6885 = vmax.f32 %v6213, 0.0
        %v6886 = vmax.f32 %v6311, 0.0
        %v6887 = vmax.f32 %v6409, 0.0
        %v6888 = vmax.f32 %v6507, 0.0
        %v6889 = vmax.f32 %v6605, 0.0
        %v6890 = vmax.f32 %v6703, 0.0
        %v6891 = vmax.f32 %v6801, 0.0
        %v6892 = vmax.f32 %v6117, 0.0
        %v6893 = vmax.f32 %v6215, 0.0
        %v6894 = vmax.f32 %v6313, 0.0
        %v6895 = vmax.f32 %v6411, 0.0
        %v6896 = vmax.f32 %v6509, 0.0
        %v6897 = vmax.f32 %v6607, 0.0
        %v6898 = vmax.f32 %v6705, 0.0
        %v6899 = vmax.f32 %v6803, 0.0
        %v6900 = vmax.f32 %v6120, 0.0
        %v6901 = vmax.f32 %v6218, 0.0
        %v6902 = vmax.f32 %v6316, 0.0
        %v6903 = vmax.f32 %v6414, 0.0
        %v6904 = vmax.f32 %v6512, 0.0
        %v6905 = vmax.f32 %v6610, 0.0
        %v6906 = vmax.f32 %v6708, 0.0
        %v6907 = vmax.f32 %v6806, 0.0
        %v6908 = vmax.f32 %v6122, 0.0
        %v6909 = vmax.f32 %v6220, 0.0
        %v6910 = vmax.f32 %v6318, 0.0
        %v6911 = vmax.f32 %v6416, 0.0
        %v6912 = vmax.f32 %v6514, 0.0
        %v6913 = vmax.f32 %v6612, 0.0
        %v6914 = vmax.f32 %v6710, 0.0
        %v6915 = vmax.f32 %v6808, 0.0
        %v6916 = vmax.f32 %v6125, 0.0
        %v6917 = vmax.f32 %v6223, 0.0
        %v6918 = vmax.f32 %v6321, 0.0
        %v6919 = vmax.f32 %v6419, 0.0
        %v6920 = vmax.f32 %v6517, 0.0
        %v6921 = vmax.f32 %v6615, 0.0
        %v6922 = vmax.f32 %v6713, 0.0
        %v6923 = vmax.f32 %v6811, 0.0
        %v6924 = vmax.f32 %v6127, 0.0
        %v6925 = vmax.f32 %v6225, 0.0
        %v6926 = vmax.f32 %v6323, 0.0
        %v6927 = vmax.f32 %v6421, 0.0
        %v6928 = vmax.f32 %v6519, 0.0
        %v6929 = vmax.f32 %v6617, 0.0
        %v6930 = vmax.f32 %v6715, 0.0
        %v6931 = vmax.f32 %v6813, 0.0
        %v6932 = vmax.f32 %v6130, 0.0
        %v6933 = vmax.f32 %v6228, 0.0
        %v6934 = vmax.f32 %v6326, 0.0
        %v6935 = vmax.f32 %v6424, 0.0
        %v6936 = vmax.f32 %v6522, 0.0
        %v6937 = vmax.f32 %v6620, 0.0
        %v6938 = vmax.f32 %v6718, 0.0
        %v6939 = vmax.f32 %v6816, 0.0
        %v6940 = vmax.f32 %v6132, 0.0
        %v6941 = vmax.f32 %v6230, 0.0
        %v6942 = vmax.f32 %v6328, 0.0
        %v6943 = vmax.f32 %v6426, 0.0
        %v6944 = vmax.f32 %v6524, 0.0
        %v6945 = vmax.f32 %v6622, 0.0
        %v6946 = vmax.f32 %v6720, 0.0
        %v6947 = vmax.f32 %v6818, 0.0
        %v6948 = vpack.c.bf16 %v6821, %v6820
        %v6949 = vpack.c.bf16 %v6823, %v6822
        %v6950 = vpack.c.bf16 %v6825, %v6824
        %v6951 = vpack.c.bf16 %v6827, %v6826
        %v6952 = vpack.c.bf16 %v6829, %v6828
        %v6953 = vpack.c.bf16 %v6831, %v6830
        %v6954 = vpack.c.bf16 %v6833, %v6832
        %v6955 = vpack.c.bf16 %v6835, %v6834
        %v6956 = vpack.c.bf16 %v6837, %v6836
        %v6957 = vpack.c.bf16 %v6839, %v6838
        %v6958 = vpack.c.bf16 %v6841, %v6840
        %v6959 = vpack.c.bf16 %v6843, %v6842
        %v6960 = vpack.c.bf16 %v6845, %v6844
        %v6961 = vpack.c.bf16 %v6847, %v6846
        %v6962 = vpack.c.bf16 %v6849, %v6848
        %v6963 = vpack.c.bf16 %v6851, %v6850
        %v6964 = vpack.c.bf16 %v6853, %v6852
        %v6965 = vpack.c.bf16 %v6855, %v6854
        %v6966 = vpack.c.bf16 %v6857, %v6856
        %v6967 = vpack.c.bf16 %v6859, %v6858
        %v6968 = vpack.c.bf16 %v6861, %v6860
        %v6969 = vpack.c.bf16 %v6863, %v6862
        %v6970 = vpack.c.bf16 %v6865, %v6864
        %v6971 = vpack.c.bf16 %v6867, %v6866
        %v6972 = vpack.c.bf16 %v6869, %v6868
        %v6973 = vpack.c.bf16 %v6871, %v6870
        %v6974 = vpack.c.bf16 %v6873, %v6872
        %v6975 = vpack.c.bf16 %v6875, %v6874
        %v6976 = vpack.c.bf16 %v6877, %v6876
        %v6977 = vpack.c.bf16 %v6879, %v6878
        %v6978 = vpack.c.bf16 %v6881, %v6880
        %v6979 = vpack.c.bf16 %v6883, %v6882
        %v6980 = vpack.c.bf16 %v6885, %v6884
        %v6981 = vpack.c.bf16 %v6887, %v6886
        %v6982 = vpack.c.bf16 %v6889, %v6888
        %v6983 = vpack.c.bf16 %v6891, %v6890
        %v6984 = vpack.c.bf16 %v6893, %v6892
        %v6985 = vpack.c.bf16 %v6895, %v6894
        %v6986 = vpack.c.bf16 %v6897, %v6896
        %v6987 = vpack.c.bf16 %v6899, %v6898
        %v6988 = vpack.c.bf16 %v6901, %v6900
        %v6989 = vpack.c.bf16 %v6903, %v6902
        %v6990 = vpack.c.bf16 %v6905, %v6904
        %v6991 = vpack.c.bf16 %v6907, %v6906
        %v6992 = vpack.c.bf16 %v6909, %v6908
        %v6993 = vpack.c.bf16 %v6911, %v6910
        %v6994 = vpack.c.bf16 %v6913, %v6912
        %v6995 = vpack.c.bf16 %v6915, %v6914
        %v6996 = vpack.c.bf16 %v6917, %v6916
        %v6997 = vpack.c.bf16 %v6919, %v6918
        %v6998 = vpack.c.bf16 %v6921, %v6920
        %v6999 = vpack.c.bf16 %v6923, %v6922
        %v7000 = vpack.c.bf16 %v6925, %v6924
        %v7001 = vpack.c.bf16 %v6927, %v6926
        %v7002 = vpack.c.bf16 %v6929, %v6928
        %v7003 = vpack.c.bf16 %v6931, %v6930
        %v7004 = vpack.c.bf16 %v6933, %v6932
        %v7005 = vpack.c.bf16 %v6935, %v6934
        %v7006 = vpack.c.bf16 %v6937, %v6936
        %v7007 = vpack.c.bf16 %v6939, %v6938
        %v7008 = vpack.c.bf16 %v6941, %v6940
        %v7009 = vpack.c.bf16 %v6943, %v6942
        %v7010 = vpack.c.bf16 %v6945, %v6944
        %v7011 = vpack.c.bf16 %v6947, %v6946
        %v7012 = vunpack.c.l.bf16 %v6948
        %v7013 = vunpack.c.h.bf16 %v6948
        %v7014 = vunpack.c.l.bf16 %v6949
        %v7015 = vunpack.c.h.bf16 %v6949
        %v7016 = vunpack.c.l.bf16 %v6950
        %v7017 = vunpack.c.h.bf16 %v6950
        %v7018 = vunpack.c.l.bf16 %v6951
        %v7019 = vunpack.c.h.bf16 %v6951
        %v7020 = vunpack.c.l.bf16 %v6952
        %v7021 = vunpack.c.h.bf16 %v6952
        %v7022 = vunpack.c.l.bf16 %v6953
        %v7023 = vunpack.c.h.bf16 %v6953
        %v7024 = vunpack.c.l.bf16 %v6954
        %v7025 = vunpack.c.h.bf16 %v6954
        %v7026 = vunpack.c.l.bf16 %v6955
        %v7027 = vunpack.c.h.bf16 %v6955
        %v7028 = vunpack.c.l.bf16 %v6956
        %v7029 = vunpack.c.h.bf16 %v6956
        %v7030 = vunpack.c.l.bf16 %v6957
        %v7031 = vunpack.c.h.bf16 %v6957
        %v7032 = vunpack.c.l.bf16 %v6958
        %v7033 = vunpack.c.h.bf16 %v6958
        %v7034 = vunpack.c.l.bf16 %v6959
        %v7035 = vunpack.c.h.bf16 %v6959
        %v7036 = vunpack.c.l.bf16 %v6960
        %v7037 = vunpack.c.h.bf16 %v6960
        %v7038 = vunpack.c.l.bf16 %v6961
        %v7039 = vunpack.c.h.bf16 %v6961
        %v7040 = vunpack.c.l.bf16 %v6962
        %v7041 = vunpack.c.h.bf16 %v6962
        %v7042 = vunpack.c.l.bf16 %v6963
        %v7043 = vunpack.c.h.bf16 %v6963
        %v7044 = vunpack.c.l.bf16 %v6964
        %v7045 = vunpack.c.h.bf16 %v6964
        %v7046 = vunpack.c.l.bf16 %v6965
        %v7047 = vunpack.c.h.bf16 %v6965
        %v7048 = vunpack.c.l.bf16 %v6966
        %v7049 = vunpack.c.h.bf16 %v6966
        %v7050 = vunpack.c.l.bf16 %v6967
        %v7051 = vunpack.c.h.bf16 %v6967
        %v7052 = vunpack.c.l.bf16 %v6968
        %v7053 = vunpack.c.h.bf16 %v6968
        %v7054 = vunpack.c.l.bf16 %v6969
        %v7055 = vunpack.c.h.bf16 %v6969
        %v7056 = vunpack.c.l.bf16 %v6970
        %v7057 = vunpack.c.h.bf16 %v6970
        %v7058 = vunpack.c.l.bf16 %v6971
        %v7059 = vunpack.c.h.bf16 %v6971
        %v7060 = vunpack.c.l.bf16 %v6972
        %v7061 = vunpack.c.h.bf16 %v6972
        %v7062 = vunpack.c.l.bf16 %v6973
        %v7063 = vunpack.c.h.bf16 %v6973
        %v7064 = vunpack.c.l.bf16 %v6974
        %v7065 = vunpack.c.h.bf16 %v6974
        %v7066 = vunpack.c.l.bf16 %v6975
        %v7067 = vunpack.c.h.bf16 %v6975
        %v7068 = vunpack.c.l.bf16 %v6976
        %v7069 = vunpack.c.h.bf16 %v6976
        %v7070 = vunpack.c.l.bf16 %v6977
        %v7071 = vunpack.c.h.bf16 %v6977
        %v7072 = vunpack.c.l.bf16 %v6978
        %v7073 = vunpack.c.h.bf16 %v6978
        %v7074 = vunpack.c.l.bf16 %v6979
        %v7075 = vunpack.c.h.bf16 %v6979
        %v7076 = vunpack.c.l.bf16 %v6980
        %v7077 = vunpack.c.h.bf16 %v6980
        %v7078 = vunpack.c.l.bf16 %v6981
        %v7079 = vunpack.c.h.bf16 %v6981
        %v7080 = vunpack.c.l.bf16 %v6982
        %v7081 = vunpack.c.h.bf16 %v6982
        %v7082 = vunpack.c.l.bf16 %v6983
        %v7083 = vunpack.c.h.bf16 %v6983
        %v7084 = vunpack.c.l.bf16 %v6984
        %v7085 = vunpack.c.h.bf16 %v6984
        %v7086 = vunpack.c.l.bf16 %v6985
        %v7087 = vunpack.c.h.bf16 %v6985
        %v7088 = vunpack.c.l.bf16 %v6986
        %v7089 = vunpack.c.h.bf16 %v6986
        %v7090 = vunpack.c.l.bf16 %v6987
        %v7091 = vunpack.c.h.bf16 %v6987
        %v7092 = vunpack.c.l.bf16 %v6988
        %v7093 = vunpack.c.h.bf16 %v6988
        %v7094 = vunpack.c.l.bf16 %v6989
        %v7095 = vunpack.c.h.bf16 %v6989
        %v7096 = vunpack.c.l.bf16 %v6990
        %v7097 = vunpack.c.h.bf16 %v6990
        %v7098 = vunpack.c.l.bf16 %v6991
        %v7099 = vunpack.c.h.bf16 %v6991
        %v7100 = vunpack.c.l.bf16 %v6992
        %v7101 = vunpack.c.h.bf16 %v6992
        %v7102 = vunpack.c.l.bf16 %v6993
        %v7103 = vunpack.c.h.bf16 %v6993
        %v7104 = vunpack.c.l.bf16 %v6994
        %v7105 = vunpack.c.h.bf16 %v6994
        %v7106 = vunpack.c.l.bf16 %v6995
        %v7107 = vunpack.c.h.bf16 %v6995
        %v7108 = vunpack.c.l.bf16 %v6996
        %v7109 = vunpack.c.h.bf16 %v6996
        %v7110 = vunpack.c.l.bf16 %v6997
        %v7111 = vunpack.c.h.bf16 %v6997
        %v7112 = vunpack.c.l.bf16 %v6998
        %v7113 = vunpack.c.h.bf16 %v6998
        %v7114 = vunpack.c.l.bf16 %v6999
        %v7115 = vunpack.c.h.bf16 %v6999
        %v7116 = vunpack.c.l.bf16 %v7000
        %v7117 = vunpack.c.h.bf16 %v7000
        %v7118 = vunpack.c.l.bf16 %v7001
        %v7119 = vunpack.c.h.bf16 %v7001
        %v7120 = vunpack.c.l.bf16 %v7002
        %v7121 = vunpack.c.h.bf16 %v7002
        %v7122 = vunpack.c.l.bf16 %v7003
        %v7123 = vunpack.c.h.bf16 %v7003
        %v7124 = vunpack.c.l.bf16 %v7004
        %v7125 = vunpack.c.h.bf16 %v7004
        %v7126 = vunpack.c.l.bf16 %v7005
        %v7127 = vunpack.c.h.bf16 %v7005
        %v7128 = vunpack.c.l.bf16 %v7006
        %v7129 = vunpack.c.h.bf16 %v7006
        %v7130 = vunpack.c.l.bf16 %v7007
        %v7131 = vunpack.c.h.bf16 %v7007
        %v7132 = vunpack.c.l.bf16 %v7008
        %v7133 = vunpack.c.h.bf16 %v7008
        %v7134 = vunpack.c.l.bf16 %v7009
        %v7135 = vunpack.c.h.bf16 %v7009
        %v7136 = vunpack.c.l.bf16 %v7010
        %v7137 = vunpack.c.h.bf16 %v7010
        %v7138 = vunpack.c.l.bf16 %v7011
        %v7139 = vunpack.c.h.bf16 %v7011
        %v7140 = vmul.f32 %v7012, %v7012
        %v7141 = vmul.f32 %v7013, %v7013
        %v7142 = vmul.f32 %v7014, %v7014
        %v7143 = vmul.f32 %v7015, %v7015
        %v7144 = vmul.f32 %v7016, %v7016
        %v7145 = vmul.f32 %v7017, %v7017
        %v7146 = vmul.f32 %v7018, %v7018
        %v7147 = vmul.f32 %v7019, %v7019
        %v7148 = vmul.f32 %v7020, %v7020
        %v7149 = vmul.f32 %v7021, %v7021
        %v7150 = vmul.f32 %v7022, %v7022
        %v7151 = vmul.f32 %v7023, %v7023
        %v7152 = vmul.f32 %v7024, %v7024
        %v7153 = vmul.f32 %v7025, %v7025
        %v7154 = vmul.f32 %v7026, %v7026
        %v7155 = vmul.f32 %v7027, %v7027
        %v7156 = vmul.f32 %v7028, %v7028
        %v7157 = vmul.f32 %v7029, %v7029
        %v7158 = vmul.f32 %v7030, %v7030
        %v7159 = vmul.f32 %v7031, %v7031
        %v7160 = vmul.f32 %v7032, %v7032
        %v7161 = vmul.f32 %v7033, %v7033
        %v7162 = vmul.f32 %v7034, %v7034
        %v7163 = vmul.f32 %v7035, %v7035
        %v7164 = vmul.f32 %v7036, %v7036
        %v7165 = vmul.f32 %v7037, %v7037
        %v7166 = vmul.f32 %v7038, %v7038
        %v7167 = vmul.f32 %v7039, %v7039
        %v7168 = vmul.f32 %v7040, %v7040
        %v7169 = vmul.f32 %v7041, %v7041
        %v7170 = vmul.f32 %v7042, %v7042
        %v7171 = vmul.f32 %v7043, %v7043
        %v7172 = vmul.f32 %v7044, %v7044
        %v7173 = vmul.f32 %v7045, %v7045
        %v7174 = vmul.f32 %v7046, %v7046
        %v7175 = vmul.f32 %v7047, %v7047
        %v7176 = vmul.f32 %v7048, %v7048
        %v7177 = vmul.f32 %v7049, %v7049
        %v7178 = vmul.f32 %v7050, %v7050
        %v7179 = vmul.f32 %v7051, %v7051
        %v7180 = vmul.f32 %v7052, %v7052
        %v7181 = vmul.f32 %v7053, %v7053
        %v7182 = vmul.f32 %v7054, %v7054
        %v7183 = vmul.f32 %v7055, %v7055
        %v7184 = vmul.f32 %v7056, %v7056
        %v7185 = vmul.f32 %v7057, %v7057
        %v7186 = vmul.f32 %v7058, %v7058
        %v7187 = vmul.f32 %v7059, %v7059
        %v7188 = vmul.f32 %v7060, %v7060
        %v7189 = vmul.f32 %v7061, %v7061
        %v7190 = vmul.f32 %v7062, %v7062
        %v7191 = vmul.f32 %v7063, %v7063
        %v7192 = vmul.f32 %v7064, %v7064
        %v7193 = vmul.f32 %v7065, %v7065
        %v7194 = vmul.f32 %v7066, %v7066
        %v7195 = vmul.f32 %v7067, %v7067
        %v7196 = vmul.f32 %v7068, %v7068
        %v7197 = vmul.f32 %v7069, %v7069
        %v7198 = vmul.f32 %v7070, %v7070
        %v7199 = vmul.f32 %v7071, %v7071
        %v7200 = vmul.f32 %v7072, %v7072
        %v7201 = vmul.f32 %v7073, %v7073
        %v7202 = vmul.f32 %v7074, %v7074
        %v7203 = vmul.f32 %v7075, %v7075
        %v7204 = vmul.f32 %v7076, %v7076
        %v7205 = vmul.f32 %v7077, %v7077
        %v7206 = vmul.f32 %v7078, %v7078
        %v7207 = vmul.f32 %v7079, %v7079
        %v7208 = vmul.f32 %v7080, %v7080
        %v7209 = vmul.f32 %v7081, %v7081
        %v7210 = vmul.f32 %v7082, %v7082
        %v7211 = vmul.f32 %v7083, %v7083
        %v7212 = vmul.f32 %v7084, %v7084
        %v7213 = vmul.f32 %v7085, %v7085
        %v7214 = vmul.f32 %v7086, %v7086
        %v7215 = vmul.f32 %v7087, %v7087
        %v7216 = vmul.f32 %v7088, %v7088
        %v7217 = vmul.f32 %v7089, %v7089
        %v7218 = vmul.f32 %v7090, %v7090
        %v7219 = vmul.f32 %v7091, %v7091
        %v7220 = vmul.f32 %v7092, %v7092
        %v7221 = vmul.f32 %v7093, %v7093
        %v7222 = vmul.f32 %v7094, %v7094
        %v7223 = vmul.f32 %v7095, %v7095
        %v7224 = vmul.f32 %v7096, %v7096
        %v7225 = vmul.f32 %v7097, %v7097
        %v7226 = vmul.f32 %v7098, %v7098
        %v7227 = vmul.f32 %v7099, %v7099
        %v7228 = vmul.f32 %v7100, %v7100
        %v7229 = vmul.f32 %v7101, %v7101
        %v7230 = vmul.f32 %v7102, %v7102
        %v7231 = vmul.f32 %v7103, %v7103
        %v7232 = vmul.f32 %v7104, %v7104
        %v7233 = vmul.f32 %v7105, %v7105
        %v7234 = vmul.f32 %v7106, %v7106
        %v7235 = vmul.f32 %v7107, %v7107
        %v7236 = vmul.f32 %v7108, %v7108
        %v7237 = vmul.f32 %v7109, %v7109
        %v7238 = vmul.f32 %v7110, %v7110
        %v7239 = vmul.f32 %v7111, %v7111
        %v7240 = vmul.f32 %v7112, %v7112
        %v7241 = vmul.f32 %v7113, %v7113
        %v7242 = vmul.f32 %v7114, %v7114
        %v7243 = vmul.f32 %v7115, %v7115
        %v7244 = vmul.f32 %v7116, %v7116
        %v7245 = vmul.f32 %v7117, %v7117
        %v7246 = vmul.f32 %v7118, %v7118
        %v7247 = vmul.f32 %v7119, %v7119
        %v7248 = vmul.f32 %v7120, %v7120
        %v7249 = vmul.f32 %v7121, %v7121
        %v7250 = vmul.f32 %v7122, %v7122
        %v7251 = vmul.f32 %v7123, %v7123
        %v7252 = vmul.f32 %v7124, %v7124
        %v7253 = vmul.f32 %v7125, %v7125
        %v7254 = vmul.f32 %v7126, %v7126
        %v7255 = vmul.f32 %v7127, %v7127
        %v7256 = vmul.f32 %v7128, %v7128
        %v7257 = vmul.f32 %v7129, %v7129
        %v7258 = vmul.f32 %v7130, %v7130
        %v7259 = vmul.f32 %v7131, %v7131
        %v7260 = vmul.f32 %v7132, %v7132
        %v7261 = vmul.f32 %v7133, %v7133
        %v7262 = vmul.f32 %v7134, %v7134
        %v7263 = vmul.f32 %v7135, %v7135
        %v7264 = vmul.f32 %v7136, %v7136
        %v7265 = vmul.f32 %v7137, %v7137
        %v7266 = vmul.f32 %v7138, %v7138
        %v7267 = vmul.f32 %v7139, %v7139
        %v7268 = vpack.c.bf16 %v7148, %v7140
        %v7269 = vpack.c.bf16 %v7149, %v7141
        %v7270 = vpack.c.bf16 %v7150, %v7142
        %v7271 = vpack.c.bf16 %v7151, %v7143
        %v7272 = vpack.c.bf16 %v7152, %v7144
        %v7273 = vpack.c.bf16 %v7153, %v7145
        %v7274 = vpack.c.bf16 %v7154, %v7146
        %v7275 = vpack.c.bf16 %v7155, %v7147
        %v7276 = vpack.c.bf16 %v7164, %v7156
        %v7277 = vpack.c.bf16 %v7165, %v7157
        %v7278 = vpack.c.bf16 %v7166, %v7158
        %v7279 = vpack.c.bf16 %v7167, %v7159
        %v7280 = vpack.c.bf16 %v7168, %v7160
        %v7281 = vpack.c.bf16 %v7169, %v7161
        %v7282 = vpack.c.bf16 %v7170, %v7162
        %v7283 = vpack.c.bf16 %v7171, %v7163
        %v7284 = vpack.c.bf16 %v7180, %v7172
        %v7285 = vpack.c.bf16 %v7181, %v7173
        %v7286 = vpack.c.bf16 %v7182, %v7174
        %v7287 = vpack.c.bf16 %v7183, %v7175
        %v7288 = vpack.c.bf16 %v7184, %v7176
        %v7289 = vpack.c.bf16 %v7185, %v7177
        %v7290 = vpack.c.bf16 %v7186, %v7178
        %v7291 = vpack.c.bf16 %v7187, %v7179
        %v7292 = vpack.c.bf16 %v7196, %v7188
        %v7293 = vpack.c.bf16 %v7197, %v7189
        %v7294 = vpack.c.bf16 %v7198, %v7190
        %v7295 = vpack.c.bf16 %v7199, %v7191
        %v7296 = vpack.c.bf16 %v7200, %v7192
        %v7297 = vpack.c.bf16 %v7201, %v7193
        %v7298 = vpack.c.bf16 %v7202, %v7194
        %v7299 = vpack.c.bf16 %v7203, %v7195
        %v7300 = vpack.c.bf16 %v7212, %v7204
        %v7301 = vpack.c.bf16 %v7213, %v7205
        %v7302 = vpack.c.bf16 %v7214, %v7206
        %v7303 = vpack.c.bf16 %v7215, %v7207
        %v7304 = vpack.c.bf16 %v7216, %v7208
        %v7305 = vpack.c.bf16 %v7217, %v7209
        %v7306 = vpack.c.bf16 %v7218, %v7210
        %v7307 = vpack.c.bf16 %v7219, %v7211
        %v7308 = vpack.c.bf16 %v7228, %v7220
        %v7309 = vpack.c.bf16 %v7229, %v7221
        %v7310 = vpack.c.bf16 %v7230, %v7222
        %v7311 = vpack.c.bf16 %v7231, %v7223
        %v7312 = vpack.c.bf16 %v7232, %v7224
        %v7313 = vpack.c.bf16 %v7233, %v7225
        %v7314 = vpack.c.bf16 %v7234, %v7226
        %v7315 = vpack.c.bf16 %v7235, %v7227
        %v7316 = vpack.c.bf16 %v7244, %v7236
        %v7317 = vpack.c.bf16 %v7245, %v7237
        %v7318 = vpack.c.bf16 %v7246, %v7238
        %v7319 = vpack.c.bf16 %v7247, %v7239
        %v7320 = vpack.c.bf16 %v7248, %v7240
        %v7321 = vpack.c.bf16 %v7249, %v7241
        %v7322 = vpack.c.bf16 %v7250, %v7242
        %v7323 = vpack.c.bf16 %v7251, %v7243
        %v7324 = vpack.c.bf16 %v7260, %v7252
        %v7325 = vpack.c.bf16 %v7261, %v7253
        %v7326 = vpack.c.bf16 %v7262, %v7254
        %v7327 = vpack.c.bf16 %v7263, %v7255
        %v7328 = vpack.c.bf16 %v7264, %v7256
        %v7329 = vpack.c.bf16 %v7265, %v7257
        %v7330 = vpack.c.bf16 %v7266, %v7258
        %v7331 = vpack.c.bf16 %v7267, %v7259
        %v7332 = vld [vmem:[%s496] sm:$0xff]
        %v7333 = vld [vmem:[%s496 + $0x8] sm:$0xff]
        %v7334 = vld [vmem:[%s496 + $0x10] sm:$0xff]
        %v7335 = vld [vmem:[%s496 + $0x18] sm:$0xff]
        %v7336 = vld [vmem:[%s496 + $0x20] sm:$0xff]
        %v7337 = vld [vmem:[%s496 + $0x28] sm:$0xff]
        %v7338 = vld [vmem:[%s496 + $0x30] sm:$0xff]
        %v7339 = vld [vmem:[%s496 + $0x38] sm:$0xff]
        %v7340 = vld [vmem:[%s496 + $0x40] sm:$0xff]
        %v7341 = vld [vmem:[%s496 + $0x48] sm:$0xff]
        %v7342 = vld [vmem:[%s496 + $0x50] sm:$0xff]
        %v7343 = vld [vmem:[%s496 + $0x58] sm:$0xff]
        %v7344 = vld [vmem:[%s496 + $0x60] sm:$0xff]
        %v7345 = vld [vmem:[%s496 + $0x68] sm:$0xff]
        %v7346 = vld [vmem:[%s496 + $0x70] sm:$0xff]
        %v7347 = vld [vmem:[%s496 + $0x78] sm:$0xff]
        %v7348 = vld [vmem:[%s496 + $0x80] sm:$0xff]
        %v7349 = vld [vmem:[%s496 + $0x88] sm:$0xff]
        %v7350 = vld [vmem:[%s496 + $0x90] sm:$0xff]
        %v7351 = vld [vmem:[%s496 + $0x98] sm:$0xff]
        %v7352 = vld [vmem:[%s496 + $0xa0] sm:$0xff]
        %v7353 = vld [vmem:[%s496 + $0xa8] sm:$0xff]
        %v7354 = vld [vmem:[%s496 + $0xb0] sm:$0xff]
        %v7355 = vld [vmem:[%s496 + $0xb8] sm:$0xff]
        %v7356 = vld [vmem:[%s496 + $0xc0] sm:$0xff]
        %v7357 = vld [vmem:[%s496 + $0xc8] sm:$0xff]
        %v7358 = vld [vmem:[%s496 + $0xd0] sm:$0xff]
        %v7359 = vld [vmem:[%s496 + $0xd8] sm:$0xff]
        %v7360 = vld [vmem:[%s496 + $0xe0] sm:$0xff]
        %v7361 = vld [vmem:[%s496 + $0xe8] sm:$0xff]
        %v7362 = vld [vmem:[%s496 + $0xf0] sm:$0xff]
        %v7363 = vld [vmem:[%s496 + $0xf8] sm:$0xff]
        %v7364 = vld [vmem:[%s496 + $0x100] sm:$0xff]
        %v7365 = vld [vmem:[%s496 + $0x108] sm:$0xff]
        %v7366 = vld [vmem:[%s496 + $0x110] sm:$0xff]
        %v7367 = vld [vmem:[%s496 + $0x118] sm:$0xff]
        %v7368 = vld [vmem:[%s496 + $0x120] sm:$0xff]
        %v7369 = vld [vmem:[%s496 + $0x128] sm:$0xff]
        %v7370 = vld [vmem:[%s496 + $0x130] sm:$0xff]
        %v7371 = vld [vmem:[%s496 + $0x138] sm:$0xff]
        %v7372 = vld [vmem:[%s496 + $0x140] sm:$0xff]
        %v7373 = vld [vmem:[%s496 + $0x148] sm:$0xff]
        %v7374 = vld [vmem:[%s496 + $0x150] sm:$0xff]
        %v7375 = vld [vmem:[%s496 + $0x158] sm:$0xff]
        %v7376 = vld [vmem:[%s496 + $0x160] sm:$0xff]
        %v7377 = vld [vmem:[%s496 + $0x168] sm:$0xff]
        %v7378 = vld [vmem:[%s496 + $0x170] sm:$0xff]
        %v7379 = vld [vmem:[%s496 + $0x178] sm:$0xff]
        %v7380 = vld [vmem:[%s496 + $0x180] sm:$0xff]
        %v7381 = vld [vmem:[%s496 + $0x188] sm:$0xff]
        %v7382 = vld [vmem:[%s496 + $0x190] sm:$0xff]
        %v7383 = vld [vmem:[%s496 + $0x198] sm:$0xff]
        %v7384 = vld [vmem:[%s496 + $0x1a0] sm:$0xff]
        %v7385 = vld [vmem:[%s496 + $0x1a8] sm:$0xff]
        %v7386 = vld [vmem:[%s496 + $0x1b0] sm:$0xff]
        %v7387 = vld [vmem:[%s496 + $0x1b8] sm:$0xff]
        %v7388 = vld [vmem:[%s496 + $0x1c0] sm:$0xff]
        %v7389 = vld [vmem:[%s496 + $0x1c8] sm:$0xff]
        %v7390 = vld [vmem:[%s496 + $0x1d0] sm:$0xff]
        %v7391 = vld [vmem:[%s496 + $0x1d8] sm:$0xff]
        %v7392 = vld [vmem:[%s496 + $0x1e0] sm:$0xff]
        %v7393 = vld [vmem:[%s496 + $0x1e8] sm:$0xff]
        %v7394 = vld [vmem:[%s496 + $0x1f0] sm:$0xff]
        %v7395 = vld [vmem:[%s496 + $0x1f8] sm:$0xff]
        %v7396 = vld [vmem:[%s496 + $0x200] sm:$0xff]
        %v7397 = vld [vmem:[%s496 + $0x208] sm:$0xff]
        %v7398 = vld [vmem:[%s496 + $0x210] sm:$0xff]
        %v7399 = vld [vmem:[%s496 + $0x218] sm:$0xff]
        %v7400 = vld [vmem:[%s496 + $0x220] sm:$0xff]
        %v7401 = vld [vmem:[%s496 + $0x228] sm:$0xff]
        %v7402 = vld [vmem:[%s496 + $0x230] sm:$0xff]
        %v7403 = vld [vmem:[%s496 + $0x238] sm:$0xff]
        %v7404 = vld [vmem:[%s496 + $0x240] sm:$0xff]
        %v7405 = vld [vmem:[%s496 + $0x248] sm:$0xff]
        %v7406 = vld [vmem:[%s496 + $0x250] sm:$0xff]
        %v7407 = vld [vmem:[%s496 + $0x258] sm:$0xff]
        %v7408 = vld [vmem:[%s496 + $0x260] sm:$0xff]
        %v7409 = vld [vmem:[%s496 + $0x268] sm:$0xff]
        %v7410 = vld [vmem:[%s496 + $0x270] sm:$0xff]
        %v7411 = vld [vmem:[%s496 + $0x278] sm:$0xff]
        %v7412 = vld [vmem:[%s496 + $0x280] sm:$0xff]
        %v7413 = vld [vmem:[%s496 + $0x288] sm:$0xff]
        %v7414 = vld [vmem:[%s496 + $0x290] sm:$0xff]
        %v7415 = vld [vmem:[%s496 + $0x298] sm:$0xff]
        %v7416 = vld [vmem:[%s496 + $0x2a0] sm:$0xff]
        %v7417 = vld [vmem:[%s496 + $0x2a8] sm:$0xff]
        %v7418 = vld [vmem:[%s496 + $0x2b0] sm:$0xff]
        %v7419 = vld [vmem:[%s496 + $0x2b8] sm:$0xff]
        %v7420 = vld [vmem:[%s496 + $0x2c0] sm:$0xff]
        %v7421 = vld [vmem:[%s496 + $0x2c8] sm:$0xff]
        %v7422 = vld [vmem:[%s496 + $0x2d0] sm:$0xff]
        %v7423 = vld [vmem:[%s496 + $0x2d8] sm:$0xff]
        %v7424 = vld [vmem:[%s496 + $0x2e0] sm:$0xff]
        %v7425 = vld [vmem:[%s496 + $0x2e8] sm:$0xff]
        %v7426 = vld [vmem:[%s496 + $0x2f0] sm:$0xff]
        %v7427 = vld [vmem:[%s496 + $0x2f8] sm:$0xff]
        %v7428 = vld [vmem:[%s496 + $0x300] sm:$0xff]
        %v7429 = vld [vmem:[%s496 + $0x308] sm:$0xff]
        %v7430 = vld [vmem:[%s496 + $0x310] sm:$0xff]
        %v7431 = vld [vmem:[%s496 + $0x318] sm:$0xff]
        %v7432 = vld [vmem:[%s496 + $0x320] sm:$0xff]
        %v7433 = vld [vmem:[%s496 + $0x328] sm:$0xff]
        %v7434 = vld [vmem:[%s496 + $0x330] sm:$0xff]
        %v7435 = vld [vmem:[%s496 + $0x338] sm:$0xff]
        %v7436 = vld [vmem:[%s496 + $0x340] sm:$0xff]
        %v7437 = vld [vmem:[%s496 + $0x348] sm:$0xff]
        %v7438 = vld [vmem:[%s496 + $0x350] sm:$0xff]
        %v7439 = vld [vmem:[%s496 + $0x358] sm:$0xff]
        %v7440 = vld [vmem:[%s496 + $0x360] sm:$0xff]
        %v7441 = vld [vmem:[%s496 + $0x368] sm:$0xff]
        %v7442 = vld [vmem:[%s496 + $0x370] sm:$0xff]
        %v7443 = vld [vmem:[%s496 + $0x378] sm:$0xff]
        %v7444 = vld [vmem:[%s496 + $0x380] sm:$0xff]
        %v7445 = vld [vmem:[%s496 + $0x388] sm:$0xff]
        %v7446 = vld [vmem:[%s496 + $0x390] sm:$0xff]
        %v7447 = vld [vmem:[%s496 + $0x398] sm:$0xff]
        %v7448 = vld [vmem:[%s496 + $0x3a0] sm:$0xff]
        %v7449 = vld [vmem:[%s496 + $0x3a8] sm:$0xff]
        %v7450 = vld [vmem:[%s496 + $0x3b0] sm:$0xff]
        %v7451 = vld [vmem:[%s496 + $0x3b8] sm:$0xff]
        %v7452 = vld [vmem:[%s496 + $0x3c0] sm:$0xff]
        %v7453 = vld [vmem:[%s496 + $0x3c8] sm:$0xff]
        %v7454 = vld [vmem:[%s496 + $0x3d0] sm:$0xff]
        %v7455 = vld [vmem:[%s496 + $0x3d8] sm:$0xff]
        %v7456 = vld [vmem:[%s496 + $0x3e0] sm:$0xff]
        %v7457 = vld [vmem:[%s496 + $0x3e8] sm:$0xff]
        %v7458 = vld [vmem:[%s496 + $0x3f0] sm:$0xff]
        %v7459 = vld [vmem:[%s496 + $0x3f8] sm:$0xff]
        %v7588 = vunpack.c.l.b16 %v7332
        %v7589 = vunpack.c.h.b16 %v7332
        %v7590 = vunpack.c.l.b16 %v7333
        %v7591 = vunpack.c.h.b16 %v7333
        %v7592 = vunpack.c.l.b16 %v7334
        %v7593 = vunpack.c.h.b16 %v7334
        %v7594 = vunpack.c.l.b16 %v7335
        %v7595 = vunpack.c.h.b16 %v7335
        %v7596 = vunpack.c.l.b16 %v7336
        %v7597 = vunpack.c.h.b16 %v7336
        %v7598 = vunpack.c.l.b16 %v7337
        %v7599 = vunpack.c.h.b16 %v7337
        %v7600 = vunpack.c.l.b16 %v7338
        %v7601 = vunpack.c.h.b16 %v7338
        %v7602 = vunpack.c.l.b16 %v7339
        %v7603 = vunpack.c.h.b16 %v7339
        %v7604 = vunpack.c.l.b16 %v7340
        %v7605 = vunpack.c.h.b16 %v7340
        %v7606 = vunpack.c.l.b16 %v7341
        %v7607 = vunpack.c.h.b16 %v7341
        %v7608 = vunpack.c.l.b16 %v7342
        %v7609 = vunpack.c.h.b16 %v7342
        %v7610 = vunpack.c.l.b16 %v7343
        %v7611 = vunpack.c.h.b16 %v7343
        %v7612 = vunpack.c.l.b16 %v7344
        %v7613 = vunpack.c.h.b16 %v7344
        %v7614 = vunpack.c.l.b16 %v7345
        %v7615 = vunpack.c.h.b16 %v7345
        %v7616 = vunpack.c.l.b16 %v7346
        %v7617 = vunpack.c.h.b16 %v7346
        %v7618 = vunpack.c.l.b16 %v7347
        %v7619 = vunpack.c.h.b16 %v7347
        %v7620 = vunpack.c.l.b16 %v7348
        %v7621 = vunpack.c.h.b16 %v7348
        %v7622 = vunpack.c.l.b16 %v7349
        %v7623 = vunpack.c.h.b16 %v7349
        %v7624 = vunpack.c.l.b16 %v7350
        %v7625 = vunpack.c.h.b16 %v7350
        %v7626 = vunpack.c.l.b16 %v7351
        %v7627 = vunpack.c.h.b16 %v7351
        %v7628 = vunpack.c.l.b16 %v7352
        %v7629 = vunpack.c.h.b16 %v7352
        %v7630 = vunpack.c.l.b16 %v7353
        %v7631 = vunpack.c.h.b16 %v7353
        %v7632 = vunpack.c.l.b16 %v7354
        %v7633 = vunpack.c.h.b16 %v7354
        %v7634 = vunpack.c.l.b16 %v7355
        %v7635 = vunpack.c.h.b16 %v7355
        %v7636 = vunpack.c.l.b16 %v7356
        %v7637 = vunpack.c.h.b16 %v7356
        %v7638 = vunpack.c.l.b16 %v7357
        %v7639 = vunpack.c.h.b16 %v7357
        %v7640 = vunpack.c.l.b16 %v7358
        %v7641 = vunpack.c.h.b16 %v7358
        %v7642 = vunpack.c.l.b16 %v7359
        %v7643 = vunpack.c.h.b16 %v7359
        %v7644 = vunpack.c.l.b16 %v7360
        %v7645 = vunpack.c.h.b16 %v7360
        %v7646 = vunpack.c.l.b16 %v7361
        %v7647 = vunpack.c.h.b16 %v7361
        %v7648 = vunpack.c.l.b16 %v7362
        %v7649 = vunpack.c.h.b16 %v7362
        %v7650 = vunpack.c.l.b16 %v7363
        %v7651 = vunpack.c.h.b16 %v7363
        %v7652 = vunpack.c.l.b16 %v7364
        %v7653 = vunpack.c.h.b16 %v7364
        %v7654 = vunpack.c.l.b16 %v7365
        %v7655 = vunpack.c.h.b16 %v7365
        %v7656 = vunpack.c.l.b16 %v7366
        %v7657 = vunpack.c.h.b16 %v7366
        %v7658 = vunpack.c.l.b16 %v7367
        %v7659 = vunpack.c.h.b16 %v7367
        %v7660 = vunpack.c.l.b16 %v7368
        %v7661 = vunpack.c.h.b16 %v7368
        %v7662 = vunpack.c.l.b16 %v7369
        %v7663 = vunpack.c.h.b16 %v7369
        %v7664 = vunpack.c.l.b16 %v7370
        %v7665 = vunpack.c.h.b16 %v7370
        %v7666 = vunpack.c.l.b16 %v7371
        %v7667 = vunpack.c.h.b16 %v7371
        %v7668 = vunpack.c.l.b16 %v7372
        %v7669 = vunpack.c.h.b16 %v7372
        %v7670 = vunpack.c.l.b16 %v7373
        %v7671 = vunpack.c.h.b16 %v7373
        %v7672 = vunpack.c.l.b16 %v7374
        %v7673 = vunpack.c.h.b16 %v7374
        %v7674 = vunpack.c.l.b16 %v7375
        %v7675 = vunpack.c.h.b16 %v7375
        %v7676 = vunpack.c.l.b16 %v7376
        %v7677 = vunpack.c.h.b16 %v7376
        %v7678 = vunpack.c.l.b16 %v7377
        %v7679 = vunpack.c.h.b16 %v7377
        %v7680 = vunpack.c.l.b16 %v7378
        %v7681 = vunpack.c.h.b16 %v7378
        %v7682 = vunpack.c.l.b16 %v7379
        %v7683 = vunpack.c.h.b16 %v7379
        %v7684 = vunpack.c.l.b16 %v7380
        %v7685 = vunpack.c.h.b16 %v7380
        %v7686 = vunpack.c.l.b16 %v7381
        %v7687 = vunpack.c.h.b16 %v7381
        %v7688 = vunpack.c.l.b16 %v7382
        %v7689 = vunpack.c.h.b16 %v7382
        %v7690 = vunpack.c.l.b16 %v7383
        %v7691 = vunpack.c.h.b16 %v7383
        %v7692 = vunpack.c.l.b16 %v7384
        %v7693 = vunpack.c.h.b16 %v7384
        %v7694 = vunpack.c.l.b16 %v7385
        %v7695 = vunpack.c.h.b16 %v7385
        %v7696 = vunpack.c.l.b16 %v7386
        %v7697 = vunpack.c.h.b16 %v7386
        %v7698 = vunpack.c.l.b16 %v7387
        %v7699 = vunpack.c.h.b16 %v7387
        %v7700 = vunpack.c.l.b16 %v7388
        %v7701 = vunpack.c.h.b16 %v7388
        %v7702 = vunpack.c.l.b16 %v7389
        %v7703 = vunpack.c.h.b16 %v7389
        %v7704 = vunpack.c.l.b16 %v7390
        %v7705 = vunpack.c.h.b16 %v7390
        %v7706 = vunpack.c.l.b16 %v7391
        %v7707 = vunpack.c.h.b16 %v7391
        %v7708 = vunpack.c.l.b16 %v7392
        %v7709 = vunpack.c.h.b16 %v7392
        %v7710 = vunpack.c.l.b16 %v7393
        %v7711 = vunpack.c.h.b16 %v7393
        %v7712 = vunpack.c.l.b16 %v7394
        %v7713 = vunpack.c.h.b16 %v7394
        %v7714 = vunpack.c.l.b16 %v7395
        %v7715 = vunpack.c.h.b16 %v7395
        %v7716 = vunpack.c.l.b16 %v7396
        %v7717 = vunpack.c.h.b16 %v7396
        %v7718 = vunpack.c.l.b16 %v7397
        %v7719 = vunpack.c.h.b16 %v7397
        %v7720 = vunpack.c.l.b16 %v7398
        %v7721 = vunpack.c.h.b16 %v7398
        %v7722 = vunpack.c.l.b16 %v7399
        %v7723 = vunpack.c.h.b16 %v7399
        %v7724 = vunpack.c.l.b16 %v7400
        %v7725 = vunpack.c.h.b16 %v7400
        %v7726 = vunpack.c.l.b16 %v7401
        %v7727 = vunpack.c.h.b16 %v7401
        %v7728 = vunpack.c.l.b16 %v7402
        %v7729 = vunpack.c.h.b16 %v7402
        %v7730 = vunpack.c.l.b16 %v7403
        %v7731 = vunpack.c.h.b16 %v7403
        %v7732 = vunpack.c.l.b16 %v7404
        %v7733 = vunpack.c.h.b16 %v7404
        %v7734 = vunpack.c.l.b16 %v7405
        %v7735 = vunpack.c.h.b16 %v7405
        %v7736 = vunpack.c.l.b16 %v7406
        %v7737 = vunpack.c.h.b16 %v7406
        %v7738 = vunpack.c.l.b16 %v7407
        %v7739 = vunpack.c.h.b16 %v7407
        %v7740 = vunpack.c.l.b16 %v7408
        %v7741 = vunpack.c.h.b16 %v7408
        %v7742 = vunpack.c.l.b16 %v7409
        %v7743 = vunpack.c.h.b16 %v7409
        %v7744 = vunpack.c.l.b16 %v7410
        %v7745 = vunpack.c.h.b16 %v7410
        %v7746 = vunpack.c.l.b16 %v7411
        %v7747 = vunpack.c.h.b16 %v7411
        %v7748 = vunpack.c.l.b16 %v7412
        %v7749 = vunpack.c.h.b16 %v7412
        %v7750 = vunpack.c.l.b16 %v7413
        %v7751 = vunpack.c.h.b16 %v7413
        %v7752 = vunpack.c.l.b16 %v7414
        %v7753 = vunpack.c.h.b16 %v7414
        %v7754 = vunpack.c.l.b16 %v7415
        %v7755 = vunpack.c.h.b16 %v7415
        %v7756 = vunpack.c.l.b16 %v7416
        %v7757 = vunpack.c.h.b16 %v7416
        %v7758 = vunpack.c.l.b16 %v7417
        %v7759 = vunpack.c.h.b16 %v7417
        %v7760 = vunpack.c.l.b16 %v7418
        %v7761 = vunpack.c.h.b16 %v7418
        %v7762 = vunpack.c.l.b16 %v7419
        %v7763 = vunpack.c.h.b16 %v7419
        %v7764 = vunpack.c.l.b16 %v7420
        %v7765 = vunpack.c.h.b16 %v7420
        %v7766 = vunpack.c.l.b16 %v7421
        %v7767 = vunpack.c.h.b16 %v7421
        %v7768 = vunpack.c.l.b16 %v7422
        %v7769 = vunpack.c.h.b16 %v7422
        %v7770 = vunpack.c.l.b16 %v7423
        %v7771 = vunpack.c.h.b16 %v7423
        %v7772 = vunpack.c.l.b16 %v7424
        %v7773 = vunpack.c.h.b16 %v7424
        %v7774 = vunpack.c.l.b16 %v7425
        %v7775 = vunpack.c.h.b16 %v7425
        %v7776 = vunpack.c.l.b16 %v7426
        %v7777 = vunpack.c.h.b16 %v7426
        %v7778 = vunpack.c.l.b16 %v7427
        %v7779 = vunpack.c.h.b16 %v7427
        %v7780 = vunpack.c.l.b16 %v7428
        %v7781 = vunpack.c.h.b16 %v7428
        %v7782 = vunpack.c.l.b16 %v7429
        %v7783 = vunpack.c.h.b16 %v7429
        %v7784 = vunpack.c.l.b16 %v7430
        %v7785 = vunpack.c.h.b16 %v7430
        %v7786 = vunpack.c.l.b16 %v7431
        %v7787 = vunpack.c.h.b16 %v7431
        %v7788 = vunpack.c.l.b16 %v7432
        %v7789 = vunpack.c.h.b16 %v7432
        %v7790 = vunpack.c.l.b16 %v7433
        %v7791 = vunpack.c.h.b16 %v7433
        %v7792 = vunpack.c.l.b16 %v7434
        %v7793 = vunpack.c.h.b16 %v7434
        %v7794 = vunpack.c.l.b16 %v7435
        %v7795 = vunpack.c.h.b16 %v7435
        %v7796 = vunpack.c.l.b16 %v7436
        %v7797 = vunpack.c.h.b16 %v7436
        %v7798 = vunpack.c.l.b16 %v7437
        %v7799 = vunpack.c.h.b16 %v7437
        %v7800 = vunpack.c.l.b16 %v7438
        %v7801 = vunpack.c.h.b16 %v7438
        %v7802 = vunpack.c.l.b16 %v7439
        %v7803 = vunpack.c.h.b16 %v7439
        %v7804 = vunpack.c.l.b16 %v7440
        %v7805 = vunpack.c.h.b16 %v7440
        %v7806 = vunpack.c.l.b16 %v7441
        %v7807 = vunpack.c.h.b16 %v7441
        %v7808 = vunpack.c.l.b16 %v7442
        %v7809 = vunpack.c.h.b16 %v7442
        %v7810 = vunpack.c.l.b16 %v7443
        %v7811 = vunpack.c.h.b16 %v7443
        %v7812 = vunpack.c.l.b16 %v7444
        %v7813 = vunpack.c.h.b16 %v7444
        %v7814 = vunpack.c.l.b16 %v7445
        %v7815 = vunpack.c.h.b16 %v7445
        %v7816 = vunpack.c.l.b16 %v7446
        %v7817 = vunpack.c.h.b16 %v7446
        %v7818 = vunpack.c.l.b16 %v7447
        %v7819 = vunpack.c.h.b16 %v7447
        %v7820 = vunpack.c.l.b16 %v7448
        %v7821 = vunpack.c.h.b16 %v7448
        %v7822 = vunpack.c.l.b16 %v7449
        %v7823 = vunpack.c.h.b16 %v7449
        %v7824 = vunpack.c.l.b16 %v7450
        %v7825 = vunpack.c.h.b16 %v7450
        %v7826 = vunpack.c.l.b16 %v7451
        %v7827 = vunpack.c.h.b16 %v7451
        %v7828 = vunpack.c.l.b16 %v7452
        %v7829 = vunpack.c.h.b16 %v7452
        %v7830 = vunpack.c.l.b16 %v7453
        %v7831 = vunpack.c.h.b16 %v7453
        %v7832 = vunpack.c.l.b16 %v7454
        %v7833 = vunpack.c.h.b16 %v7454
        %v7834 = vunpack.c.l.b16 %v7455
        %v7835 = vunpack.c.h.b16 %v7455
        %v7836 = vunpack.c.l.b16 %v7456
        %v7837 = vunpack.c.h.b16 %v7456
        %v7838 = vunpack.c.l.b16 %v7457
        %v7839 = vunpack.c.h.b16 %v7457
        %v7840 = vunpack.c.l.b16 %v7458
        %v7841 = vunpack.c.h.b16 %v7458
        %v7842 = vunpack.c.l.b16 %v7459
        %v7843 = vunpack.c.h.b16 %v7459
        %v7844 = vpack.c.b16 %v7590, %v7588
        %v7845 = vpack.c.b16 %v7591, %v7589
        %v7846 = vpack.c.b16 %v7594, %v7592
        %v7847 = vpack.c.b16 %v7595, %v7593
        %v7848 = vpack.c.b16 %v7598, %v7596
        %v7849 = vpack.c.b16 %v7599, %v7597
        %v7850 = vpack.c.b16 %v7602, %v7600
        %v7851 = vpack.c.b16 %v7603, %v7601
        %v7852 = vpack.c.b16 %v7606, %v7604
        %v7853 = vpack.c.b16 %v7607, %v7605
        %v7854 = vpack.c.b16 %v7610, %v7608
        %v7855 = vpack.c.b16 %v7611, %v7609
        %v7856 = vpack.c.b16 %v7614, %v7612
        %v7857 = vpack.c.b16 %v7615, %v7613
        %v7858 = vpack.c.b16 %v7618, %v7616
        %v7859 = vpack.c.b16 %v7619, %v7617
        %v7860 = vpack.c.b16 %v7622, %v7620
        %v7861 = vpack.c.b16 %v7623, %v7621
        %v7862 = vpack.c.b16 %v7626, %v7624
        %v7863 = vpack.c.b16 %v7627, %v7625
        %v7864 = vpack.c.b16 %v7630, %v7628
        %v7865 = vpack.c.b16 %v7631, %v7629
        %v7866 = vpack.c.b16 %v7634, %v7632
        %v7867 = vpack.c.b16 %v7635, %v7633
        %v7868 = vpack.c.b16 %v7638, %v7636
        %v7869 = vpack.c.b16 %v7639, %v7637
        %v7870 = vpack.c.b16 %v7642, %v7640
        %v7871 = vpack.c.b16 %v7643, %v7641
        %v7872 = vpack.c.b16 %v7646, %v7644
        %v7873 = vpack.c.b16 %v7647, %v7645
        %v7874 = vpack.c.b16 %v7650, %v7648
        %v7875 = vpack.c.b16 %v7651, %v7649
        %v7876 = vpack.c.b16 %v7654, %v7652
        %v7877 = vpack.c.b16 %v7655, %v7653
        %v7878 = vpack.c.b16 %v7658, %v7656
        %v7879 = vpack.c.b16 %v7659, %v7657
        %v7880 = vpack.c.b16 %v7662, %v7660
        %v7881 = vpack.c.b16 %v7663, %v7661
        %v7882 = vpack.c.b16 %v7666, %v7664
        %v7883 = vpack.c.b16 %v7667, %v7665
        %v7884 = vpack.c.b16 %v7670, %v7668
        %v7885 = vpack.c.b16 %v7671, %v7669
        %v7886 = vpack.c.b16 %v7674, %v7672
        %v7887 = vpack.c.b16 %v7675, %v7673
        %v7888 = vpack.c.b16 %v7678, %v7676
        %v7889 = vpack.c.b16 %v7679, %v7677
        %v7890 = vpack.c.b16 %v7682, %v7680
        %v7891 = vpack.c.b16 %v7683, %v7681
        %v7892 = vpack.c.b16 %v7686, %v7684
        %v7893 = vpack.c.b16 %v7687, %v7685
        %v7894 = vpack.c.b16 %v7690, %v7688
        %v7895 = vpack.c.b16 %v7691, %v7689
        %v7896 = vpack.c.b16 %v7694, %v7692
        %v7897 = vpack.c.b16 %v7695, %v7693
        %v7898 = vpack.c.b16 %v7698, %v7696
        %v7899 = vpack.c.b16 %v7699, %v7697
        %v7900 = vpack.c.b16 %v7702, %v7700
        %v7901 = vpack.c.b16 %v7703, %v7701
        %v7902 = vpack.c.b16 %v7706, %v7704
        %v7903 = vpack.c.b16 %v7707, %v7705
        %v7904 = vpack.c.b16 %v7710, %v7708
        %v7905 = vpack.c.b16 %v7711, %v7709
        %v7906 = vpack.c.b16 %v7714, %v7712
        %v7907 = vpack.c.b16 %v7715, %v7713
        %v7908 = vpack.c.b16 %v7718, %v7716
        %v7909 = vpack.c.b16 %v7719, %v7717
        %v7910 = vpack.c.b16 %v7722, %v7720
        %v7911 = vpack.c.b16 %v7723, %v7721
        %v7912 = vpack.c.b16 %v7726, %v7724
        %v7913 = vpack.c.b16 %v7727, %v7725
        %v7914 = vpack.c.b16 %v7730, %v7728
        %v7915 = vpack.c.b16 %v7731, %v7729
        %v7916 = vpack.c.b16 %v7734, %v7732
        %v7917 = vpack.c.b16 %v7735, %v7733
        %v7918 = vpack.c.b16 %v7738, %v7736
        %v7919 = vpack.c.b16 %v7739, %v7737
        %v7920 = vpack.c.b16 %v7742, %v7740
        %v7921 = vpack.c.b16 %v7743, %v7741
        %v7922 = vpack.c.b16 %v7746, %v7744
        %v7923 = vpack.c.b16 %v7747, %v7745
        %v7924 = vpack.c.b16 %v7750, %v7748
        %v7925 = vpack.c.b16 %v7751, %v7749
        %v7926 = vpack.c.b16 %v7754, %v7752
        %v7927 = vpack.c.b16 %v7755, %v7753
        %v7928 = vpack.c.b16 %v7758, %v7756
        %v7929 = vpack.c.b16 %v7759, %v7757
        %v7930 = vpack.c.b16 %v7762, %v7760
        %v7931 = vpack.c.b16 %v7763, %v7761
        %v7932 = vpack.c.b16 %v7766, %v7764
        %v7933 = vpack.c.b16 %v7767, %v7765
        %v7934 = vpack.c.b16 %v7770, %v7768
        %v7935 = vpack.c.b16 %v7771, %v7769
        %v7936 = vpack.c.b16 %v7774, %v7772
        %v7937 = vpack.c.b16 %v7775, %v7773
        %v7938 = vpack.c.b16 %v7778, %v7776
        %v7939 = vpack.c.b16 %v7779, %v7777
        %v7940 = vpack.c.b16 %v7782, %v7780
        %v7941 = vpack.c.b16 %v7783, %v7781
        %v7942 = vpack.c.b16 %v7786, %v7784
        %v7943 = vpack.c.b16 %v7787, %v7785
        %v7944 = vpack.c.b16 %v7790, %v7788
        %v7945 = vpack.c.b16 %v7791, %v7789
        %v7946 = vpack.c.b16 %v7794, %v7792
        %v7947 = vpack.c.b16 %v7795, %v7793
        %v7948 = vpack.c.b16 %v7798, %v7796
        %v7949 = vpack.c.b16 %v7799, %v7797
        %v7950 = vpack.c.b16 %v7802, %v7800
        %v7951 = vpack.c.b16 %v7803, %v7801
        %v7952 = vpack.c.b16 %v7806, %v7804
        %v7953 = vpack.c.b16 %v7807, %v7805
        %v7954 = vpack.c.b16 %v7810, %v7808
        %v7955 = vpack.c.b16 %v7811, %v7809
        %v7956 = vpack.c.b16 %v7814, %v7812
        %v7957 = vpack.c.b16 %v7815, %v7813
        %v7958 = vpack.c.b16 %v7818, %v7816
        %v7959 = vpack.c.b16 %v7819, %v7817
        %v7960 = vpack.c.b16 %v7822, %v7820
        %v7961 = vpack.c.b16 %v7823, %v7821
        %v7962 = vpack.c.b16 %v7826, %v7824
        %v7963 = vpack.c.b16 %v7827, %v7825
        %v7964 = vpack.c.b16 %v7830, %v7828
        %v7965 = vpack.c.b16 %v7831, %v7829
        %v7966 = vpack.c.b16 %v7834, %v7832
        %v7967 = vpack.c.b16 %v7835, %v7833
        %v7968 = vpack.c.b16 %v7838, %v7836
        %v7969 = vpack.c.b16 %v7839, %v7837
        %v7970 = vpack.c.b16 %v7842, %v7840
        %v7971 = vpack.c.b16 %v7843, %v7841
        %8100 = vmatpush.bf16.msra.mxu0 %v7858
        %8101 = vmatpush.bf16.msra.mxu0 %v7856
        %8102 = vmatpush.bf16.msra.mxu0 %v7854
        %8103 = vmatpush.bf16.msra.mxu0 %v7852
        %8104 = vmatpush.bf16.msra.mxu0 %v7850
        %8105 = vmatpush.bf16.msra.mxu0 %v7848
        %8106 = vmatpush.bf16.msra.mxu0 %v7846
        %8107 = vmatpush.bf16.msra.mxu0 %v7844
        %8108 = vmatmul.bf16.gmra.mxu0 %v7268
        %v8109 = vpop.f32.mrf.mxu0
        %v8110 = vadd.f32 0.0, %v8109
        %v8111 = vpop.f32.mrf.mxu0
        %v8112 = vadd.f32 0.0, %v8111
        %8113 = vmatmul.bf16.gmra.mxu0 %v7276
        %v8114 = vpop.f32.mrf.mxu0
        %v8115 = vadd.f32 0.0, %v8114
        %v8116 = vpop.f32.mrf.mxu0
        %v8117 = vadd.f32 0.0, %v8116
        %8118 = vmatmul.bf16.gmra.mxu0 %v7284
        %v8119 = vpop.f32.mrf.mxu0
        %v8120 = vadd.f32 0.0, %v8119
        %v8121 = vpop.f32.mrf.mxu0
        %v8122 = vadd.f32 0.0, %v8121
        %8123 = vmatmul.bf16.gmra.mxu0 %v7292
        %v8124 = vpop.f32.mrf.mxu0
        %v8125 = vadd.f32 0.0, %v8124
        %v8126 = vpop.f32.mrf.mxu0
        %v8127 = vadd.f32 0.0, %v8126
        %8128 = vmatmul.bf16.gmra.mxu0 %v7300
        %v8129 = vpop.f32.mrf.mxu0
        %v8130 = vadd.f32 0.0, %v8129
        %v8131 = vpop.f32.mrf.mxu0
        %v8132 = vadd.f32 0.0, %v8131
        %8133 = vmatmul.bf16.gmra.mxu0 %v7308
        %v8134 = vpop.f32.mrf.mxu0
        %v8135 = vadd.f32 0.0, %v8134
        %v8136 = vpop.f32.mrf.mxu0
        %v8137 = vadd.f32 0.0, %v8136
        %8138 = vmatmul.bf16.gmra.mxu0 %v7316
        %v8139 = vpop.f32.mrf.mxu0
        %v8140 = vadd.f32 0.0, %v8139
        %v8141 = vpop.f32.mrf.mxu0
        %v8142 = vadd.f32 0.0, %v8141
        %8143 = vmatmul.bf16.gmra.mxu0 %v7324
        %v8144 = vpop.f32.mrf.mxu0
        %v8145 = vadd.f32 0.0, %v8144
        %v8146 = vpop.f32.mrf.mxu0
        %v8147 = vadd.f32 0.0, %v8146
        %8148 = vdwg.mxu0
        %8149 = vmatpush.bf16.msra.mxu0 %v7874
        %8150 = vmatpush.bf16.msra.mxu0 %v7872
        %8151 = vmatpush.bf16.msra.mxu0 %v7870
        %8152 = vmatpush.bf16.msra.mxu0 %v7868
        %8153 = vmatpush.bf16.msra.mxu0 %v7866
        %8154 = vmatpush.bf16.msra.mxu0 %v7864
        %8155 = vmatpush.bf16.msra.mxu0 %v7862
        %8156 = vmatpush.bf16.msra.mxu0 %v7860
        %8157 = vmatmul.bf16.gmra.mxu0 %v7269
        %v8158 = vpop.f32.mrf.mxu0
        %v8159 = vadd.f32 %v8110, %v8158
        %v8160 = vpop.f32.mrf.mxu0
        %v8161 = vadd.f32 %v8112, %v8160
        %8162 = vmatmul.bf16.gmra.mxu0 %v7277
        %v8163 = vpop.f32.mrf.mxu0
        %v8164 = vadd.f32 %v8115, %v8163
        %v8165 = vpop.f32.mrf.mxu0
        %v8166 = vadd.f32 %v8117, %v8165
        %8167 = vmatmul.bf16.gmra.mxu0 %v7285
        %v8168 = vpop.f32.mrf.mxu0
        %v8169 = vadd.f32 %v8120, %v8168
        %v8170 = vpop.f32.mrf.mxu0
        %v8171 = vadd.f32 %v8122, %v8170
        %8172 = vmatmul.bf16.gmra.mxu0 %v7293
        %v8173 = vpop.f32.mrf.mxu0
        %v8174 = vadd.f32 %v8125, %v8173
        %v8175 = vpop.f32.mrf.mxu0
        %v8176 = vadd.f32 %v8127, %v8175
        %8177 = vmatmul.bf16.gmra.mxu0 %v7301
        %v8178 = vpop.f32.mrf.mxu0
        %v8179 = vadd.f32 %v8130, %v8178
        %v8180 = vpop.f32.mrf.mxu0
        %v8181 = vadd.f32 %v8132, %v8180
        %8182 = vmatmul.bf16.gmra.mxu0 %v7309
        %v8183 = vpop.f32.mrf.mxu0
        %v8184 = vadd.f32 %v8135, %v8183
        %v8185 = vpop.f32.mrf.mxu0
        %v8186 = vadd.f32 %v8137, %v8185
        %8187 = vmatmul.bf16.gmra.mxu0 %v7317
        %v8188 = vpop.f32.mrf.mxu0
        %v8189 = vadd.f32 %v8140, %v8188
        %v8190 = vpop.f32.mrf.mxu0
        %v8191 = vadd.f32 %v8142, %v8190
        %8192 = vmatmul.bf16.gmra.mxu0 %v7325
        %v8193 = vpop.f32.mrf.mxu0
        %v8194 = vadd.f32 %v8145, %v8193
        %v8195 = vpop.f32.mrf.mxu0
        %v8196 = vadd.f32 %v8147, %v8195
        %8197 = vdwg.mxu0
        %8198 = vmatpush.bf16.msra.mxu0 %v7890
        %8199 = vmatpush.bf16.msra.mxu0 %v7888
        %8200 = vmatpush.bf16.msra.mxu0 %v7886
        %8201 = vmatpush.bf16.msra.mxu0 %v7884
        %8202 = vmatpush.bf16.msra.mxu0 %v7882
        %8203 = vmatpush.bf16.msra.mxu0 %v7880
        %8204 = vmatpush.bf16.msra.mxu0 %v7878
        %8205 = vmatpush.bf16.msra.mxu0 %v7876
        %8206 = vmatmul.bf16.gmra.mxu0 %v7270
        %v8207 = vpop.f32.mrf.mxu0
        %v8208 = vadd.f32 %v8159, %v8207
        %v8209 = vpop.f32.mrf.mxu0
        %v8210 = vadd.f32 %v8161, %v8209
        %8211 = vmatmul.bf16.gmra.mxu0 %v7278
        %v8212 = vpop.f32.mrf.mxu0
        %v8213 = vadd.f32 %v8164, %v8212
        %v8214 = vpop.f32.mrf.mxu0
        %v8215 = vadd.f32 %v8166, %v8214
        %8216 = vmatmul.bf16.gmra.mxu0 %v7286
        %v8217 = vpop.f32.mrf.mxu0
        %v8218 = vadd.f32 %v8169, %v8217
        %v8219 = vpop.f32.mrf.mxu0
        %v8220 = vadd.f32 %v8171, %v8219
        %8221 = vmatmul.bf16.gmra.mxu0 %v7294
        %v8222 = vpop.f32.mrf.mxu0
        %v8223 = vadd.f32 %v8174, %v8222
        %v8224 = vpop.f32.mrf.mxu0
        %v8225 = vadd.f32 %v8176, %v8224
        %8226 = vmatmul.bf16.gmra.mxu0 %v7302
        %v8227 = vpop.f32.mrf.mxu0
        %v8228 = vadd.f32 %v8179, %v8227
        %v8229 = vpop.f32.mrf.mxu0
        %v8230 = vadd.f32 %v8181, %v8229
        %8231 = vmatmul.bf16.gmra.mxu0 %v7310
        %v8232 = vpop.f32.mrf.mxu0
        %v8233 = vadd.f32 %v8184, %v8232
        %v8234 = vpop.f32.mrf.mxu0
        %v8235 = vadd.f32 %v8186, %v8234
        %8236 = vmatmul.bf16.gmra.mxu0 %v7318
        %v8237 = vpop.f32.mrf.mxu0
        %v8238 = vadd.f32 %v8189, %v8237
        %v8239 = vpop.f32.mrf.mxu0
        %v8240 = vadd.f32 %v8191, %v8239
        %8241 = vmatmul.bf16.gmra.mxu0 %v7326
        %v8242 = vpop.f32.mrf.mxu0
        %v8243 = vadd.f32 %v8194, %v8242
        %v8244 = vpop.f32.mrf.mxu0
        %v8245 = vadd.f32 %v8196, %v8244
        %8246 = vdwg.mxu0
        %8247 = vmatpush.bf16.msra.mxu0 %v7906
        %8248 = vmatpush.bf16.msra.mxu0 %v7904
        %8249 = vmatpush.bf16.msra.mxu0 %v7902
        %8250 = vmatpush.bf16.msra.mxu0 %v7900
        %8251 = vmatpush.bf16.msra.mxu0 %v7898
        %8252 = vmatpush.bf16.msra.mxu0 %v7896
        %8253 = vmatpush.bf16.msra.mxu0 %v7894
        %8254 = vmatpush.bf16.msra.mxu0 %v7892
        %8255 = vmatmul.bf16.gmra.mxu0 %v7271
        %v8256 = vpop.f32.mrf.mxu0
        %v8257 = vadd.f32 %v8208, %v8256
        %v8258 = vpop.f32.mrf.mxu0
        %v8259 = vadd.f32 %v8210, %v8258
        %8260 = vmatmul.bf16.gmra.mxu0 %v7279
        %v8261 = vpop.f32.mrf.mxu0
        %v8262 = vadd.f32 %v8213, %v8261
        %v8263 = vpop.f32.mrf.mxu0
        %v8264 = vadd.f32 %v8215, %v8263
        %8265 = vmatmul.bf16.gmra.mxu0 %v7287
        %v8266 = vpop.f32.mrf.mxu0
        %v8267 = vadd.f32 %v8218, %v8266
        %v8268 = vpop.f32.mrf.mxu0
        %v8269 = vadd.f32 %v8220, %v8268
        %8270 = vmatmul.bf16.gmra.mxu0 %v7295
        %v8271 = vpop.f32.mrf.mxu0
        %v8272 = vadd.f32 %v8223, %v8271
        %v8273 = vpop.f32.mrf.mxu0
        %v8274 = vadd.f32 %v8225, %v8273
        %8275 = vmatmul.bf16.gmra.mxu0 %v7303
        %v8276 = vpop.f32.mrf.mxu0
        %v8277 = vadd.f32 %v8228, %v8276
        %v8278 = vpop.f32.mrf.mxu0
        %v8279 = vadd.f32 %v8230, %v8278
        %8280 = vmatmul.bf16.gmra.mxu0 %v7311
        %v8281 = vpop.f32.mrf.mxu0
        %v8282 = vadd.f32 %v8233, %v8281
        %v8283 = vpop.f32.mrf.mxu0
        %v8284 = vadd.f32 %v8235, %v8283
        %8285 = vmatmul.bf16.gmra.mxu0 %v7319
        %v8286 = vpop.f32.mrf.mxu0
        %v8287 = vadd.f32 %v8238, %v8286
        %v8288 = vpop.f32.mrf.mxu0
        %v8289 = vadd.f32 %v8240, %v8288
        %8290 = vmatmul.bf16.gmra.mxu0 %v7327
        %v8291 = vpop.f32.mrf.mxu0
        %v8292 = vadd.f32 %v8243, %v8291
        %v8293 = vpop.f32.mrf.mxu0
        %v8294 = vadd.f32 %v8245, %v8293
        %8295 = vdwg.mxu0
        %8296 = vmatpush.bf16.msra.mxu0 %v7922
        %8297 = vmatpush.bf16.msra.mxu0 %v7920
        %8298 = vmatpush.bf16.msra.mxu0 %v7918
        %8299 = vmatpush.bf16.msra.mxu0 %v7916
        %8300 = vmatpush.bf16.msra.mxu0 %v7914
        %8301 = vmatpush.bf16.msra.mxu0 %v7912
        %8302 = vmatpush.bf16.msra.mxu0 %v7910
        %8303 = vmatpush.bf16.msra.mxu0 %v7908
        %8304 = vmatmul.bf16.gmra.mxu0 %v7272
        %v8305 = vpop.f32.mrf.mxu0
        %v8306 = vadd.f32 %v8257, %v8305
        %v8307 = vpop.f32.mrf.mxu0
        %v8308 = vadd.f32 %v8259, %v8307
        %8309 = vmatmul.bf16.gmra.mxu0 %v7280
        %v8310 = vpop.f32.mrf.mxu0
        %v8311 = vadd.f32 %v8262, %v8310
        %v8312 = vpop.f32.mrf.mxu0
        %v8313 = vadd.f32 %v8264, %v8312
        %8314 = vmatmul.bf16.gmra.mxu0 %v7288
        %v8315 = vpop.f32.mrf.mxu0
        %v8316 = vadd.f32 %v8267, %v8315
        %v8317 = vpop.f32.mrf.mxu0
        %v8318 = vadd.f32 %v8269, %v8317
        %8319 = vmatmul.bf16.gmra.mxu0 %v7296
        %v8320 = vpop.f32.mrf.mxu0
        %v8321 = vadd.f32 %v8272, %v8320
        %v8322 = vpop.f32.mrf.mxu0
        %v8323 = vadd.f32 %v8274, %v8322
        %8324 = vmatmul.bf16.gmra.mxu0 %v7304
        %v8325 = vpop.f32.mrf.mxu0
        %v8326 = vadd.f32 %v8277, %v8325
        %v8327 = vpop.f32.mrf.mxu0
        %v8328 = vadd.f32 %v8279, %v8327
        %8329 = vmatmul.bf16.gmra.mxu0 %v7312
        %v8330 = vpop.f32.mrf.mxu0
        %v8331 = vadd.f32 %v8282, %v8330
        %v8332 = vpop.f32.mrf.mxu0
        %v8333 = vadd.f32 %v8284, %v8332
        %8334 = vmatmul.bf16.gmra.mxu0 %v7320
        %v8335 = vpop.f32.mrf.mxu0
        %v8336 = vadd.f32 %v8287, %v8335
        %v8337 = vpop.f32.mrf.mxu0
        %v8338 = vadd.f32 %v8289, %v8337
        %8339 = vmatmul.bf16.gmra.mxu0 %v7328
        %v8340 = vpop.f32.mrf.mxu0
        %v8341 = vadd.f32 %v8292, %v8340
        %v8342 = vpop.f32.mrf.mxu0
        %v8343 = vadd.f32 %v8294, %v8342
        %8344 = vdwg.mxu0
        %8345 = vmatpush.bf16.msra.mxu0 %v7938
        %8346 = vmatpush.bf16.msra.mxu0 %v7936
        %8347 = vmatpush.bf16.msra.mxu0 %v7934
        %8348 = vmatpush.bf16.msra.mxu0 %v7932
        %8349 = vmatpush.bf16.msra.mxu0 %v7930
        %8350 = vmatpush.bf16.msra.mxu0 %v7928
        %8351 = vmatpush.bf16.msra.mxu0 %v7926
        %8352 = vmatpush.bf16.msra.mxu0 %v7924
        %8353 = vmatmul.bf16.gmra.mxu0 %v7273
        %v8354 = vpop.f32.mrf.mxu0
        %v8355 = vadd.f32 %v8306, %v8354
        %v8356 = vpop.f32.mrf.mxu0
        %v8357 = vadd.f32 %v8308, %v8356
        %8358 = vmatmul.bf16.gmra.mxu0 %v7281
        %v8359 = vpop.f32.mrf.mxu0
        %v8360 = vadd.f32 %v8311, %v8359
        %v8361 = vpop.f32.mrf.mxu0
        %v8362 = vadd.f32 %v8313, %v8361
        %8363 = vmatmul.bf16.gmra.mxu0 %v7289
        %v8364 = vpop.f32.mrf.mxu0
        %v8365 = vadd.f32 %v8316, %v8364
        %v8366 = vpop.f32.mrf.mxu0
        %v8367 = vadd.f32 %v8318, %v8366
        %8368 = vmatmul.bf16.gmra.mxu0 %v7297
        %v8369 = vpop.f32.mrf.mxu0
        %v8370 = vadd.f32 %v8321, %v8369
        %v8371 = vpop.f32.mrf.mxu0
        %v8372 = vadd.f32 %v8323, %v8371
        %8373 = vmatmul.bf16.gmra.mxu0 %v7305
        %v8374 = vpop.f32.mrf.mxu0
        %v8375 = vadd.f32 %v8326, %v8374
        %v8376 = vpop.f32.mrf.mxu0
        %v8377 = vadd.f32 %v8328, %v8376
        %8378 = vmatmul.bf16.gmra.mxu0 %v7313
        %v8379 = vpop.f32.mrf.mxu0
        %v8380 = vadd.f32 %v8331, %v8379
        %v8381 = vpop.f32.mrf.mxu0
        %v8382 = vadd.f32 %v8333, %v8381
        %8383 = vmatmul.bf16.gmra.mxu0 %v7321
        %v8384 = vpop.f32.mrf.mxu0
        %v8385 = vadd.f32 %v8336, %v8384
        %v8386 = vpop.f32.mrf.mxu0
        %v8387 = vadd.f32 %v8338, %v8386
        %8388 = vmatmul.bf16.gmra.mxu0 %v7329
        %v8389 = vpop.f32.mrf.mxu0
        %v8390 = vadd.f32 %v8341, %v8389
        %v8391 = vpop.f32.mrf.mxu0
        %v8392 = vadd.f32 %v8343, %v8391
        %8393 = vdwg.mxu0
        %8394 = vmatpush.bf16.msra.mxu0 %v7954
        %8395 = vmatpush.bf16.msra.mxu0 %v7952
        %8396 = vmatpush.bf16.msra.mxu0 %v7950
        %8397 = vmatpush.bf16.msra.mxu0 %v7948
        %8398 = vmatpush.bf16.msra.mxu0 %v7946
        %8399 = vmatpush.bf16.msra.mxu0 %v7944
        %8400 = vmatpush.bf16.msra.mxu0 %v7942
        %8401 = vmatpush.bf16.msra.mxu0 %v7940
        %8402 = vmatmul.bf16.gmra.mxu0 %v7274
        %v8403 = vpop.f32.mrf.mxu0
        %v8404 = vadd.f32 %v8355, %v8403
        %v8405 = vpop.f32.mrf.mxu0
        %v8406 = vadd.f32 %v8357, %v8405
        %8407 = vmatmul.bf16.gmra.mxu0 %v7282
        %v8408 = vpop.f32.mrf.mxu0
        %v8409 = vadd.f32 %v8360, %v8408
        %v8410 = vpop.f32.mrf.mxu0
        %v8411 = vadd.f32 %v8362, %v8410
        %8412 = vmatmul.bf16.gmra.mxu0 %v7290
        %v8413 = vpop.f32.mrf.mxu0
        %v8414 = vadd.f32 %v8365, %v8413
        %v8415 = vpop.f32.mrf.mxu0
        %v8416 = vadd.f32 %v8367, %v8415
        %8417 = vmatmul.bf16.gmra.mxu0 %v7298
        %v8418 = vpop.f32.mrf.mxu0
        %v8419 = vadd.f32 %v8370, %v8418
        %v8420 = vpop.f32.mrf.mxu0
        %v8421 = vadd.f32 %v8372, %v8420
        %8422 = vmatmul.bf16.gmra.mxu0 %v7306
        %v8423 = vpop.f32.mrf.mxu0
        %v8424 = vadd.f32 %v8375, %v8423
        %v8425 = vpop.f32.mrf.mxu0
        %v8426 = vadd.f32 %v8377, %v8425
        %8427 = vmatmul.bf16.gmra.mxu0 %v7314
        %v8428 = vpop.f32.mrf.mxu0
        %v8429 = vadd.f32 %v8380, %v8428
        %v8430 = vpop.f32.mrf.mxu0
        %v8431 = vadd.f32 %v8382, %v8430
        %8432 = vmatmul.bf16.gmra.mxu0 %v7322
        %v8433 = vpop.f32.mrf.mxu0
        %v8434 = vadd.f32 %v8385, %v8433
        %v8435 = vpop.f32.mrf.mxu0
        %v8436 = vadd.f32 %v8387, %v8435
        %8437 = vmatmul.bf16.gmra.mxu0 %v7330
        %v8438 = vpop.f32.mrf.mxu0
        %v8439 = vadd.f32 %v8390, %v8438
        %v8440 = vpop.f32.mrf.mxu0
        %v8441 = vadd.f32 %v8392, %v8440
        %8442 = vdwg.mxu0
        %8443 = vmatpush.bf16.msra.mxu0 %v7970
        %8444 = vmatpush.bf16.msra.mxu0 %v7968
        %8445 = vmatpush.bf16.msra.mxu0 %v7966
        %8446 = vmatpush.bf16.msra.mxu0 %v7964
        %8447 = vmatpush.bf16.msra.mxu0 %v7962
        %8448 = vmatpush.bf16.msra.mxu0 %v7960
        %8449 = vmatpush.bf16.msra.mxu0 %v7958
        %8450 = vmatpush.bf16.msra.mxu0 %v7956
        %8451 = vmatmul.bf16.gmra.mxu0 %v7275
        %v8452 = vpop.f32.mrf.mxu0
        %v8453 = vadd.f32 %v8404, %v8452
        %v8454 = vpop.f32.mrf.mxu0
        %v8455 = vadd.f32 %v8406, %v8454
        %8456 = vmatmul.bf16.gmra.mxu0 %v7283
        %v8457 = vpop.f32.mrf.mxu0
        %v8458 = vadd.f32 %v8409, %v8457
        %v8459 = vpop.f32.mrf.mxu0
        %v8460 = vadd.f32 %v8411, %v8459
        %8461 = vmatmul.bf16.gmra.mxu0 %v7291
        %v8462 = vpop.f32.mrf.mxu0
        %v8463 = vadd.f32 %v8414, %v8462
        %v8464 = vpop.f32.mrf.mxu0
        %v8465 = vadd.f32 %v8416, %v8464
        %8466 = vmatmul.bf16.gmra.mxu0 %v7299
        %v8467 = vpop.f32.mrf.mxu0
        %v8468 = vadd.f32 %v8419, %v8467
        %v8469 = vpop.f32.mrf.mxu0
        %v8470 = vadd.f32 %v8421, %v8469
        %8471 = vmatmul.bf16.gmra.mxu0 %v7307
        %v8472 = vpop.f32.mrf.mxu0
        %v8473 = vadd.f32 %v8424, %v8472
        %v8474 = vpop.f32.mrf.mxu0
        %v8475 = vadd.f32 %v8426, %v8474
        %8476 = vmatmul.bf16.gmra.mxu0 %v7315
        %v8477 = vpop.f32.mrf.mxu0
        %v8478 = vadd.f32 %v8429, %v8477
        %v8479 = vpop.f32.mrf.mxu0
        %v8480 = vadd.f32 %v8431, %v8479
        %8481 = vmatmul.bf16.gmra.mxu0 %v7323
        %v8482 = vpop.f32.mrf.mxu0
        %v8483 = vadd.f32 %v8434, %v8482
        %v8484 = vpop.f32.mrf.mxu0
        %v8485 = vadd.f32 %v8436, %v8484
        %8486 = vmatmul.bf16.gmra.mxu0 %v7331
        %v8487 = vpop.f32.mrf.mxu0
        %v8488 = vadd.f32 %v8439, %v8487
        %v8489 = vpop.f32.mrf.mxu0
        %v8490 = vadd.f32 %v8441, %v8489
        %8491 = vdwg.mxu0
        %8492 = vmatpush.bf16.msra.mxu0 %v7859
        %8493 = vmatpush.bf16.msra.mxu0 %v7857
        %8494 = vmatpush.bf16.msra.mxu0 %v7855
        %8495 = vmatpush.bf16.msra.mxu0 %v7853
        %8496 = vmatpush.bf16.msra.mxu0 %v7851
        %8497 = vmatpush.bf16.msra.mxu0 %v7849
        %8498 = vmatpush.bf16.msra.mxu0 %v7847
        %8499 = vmatpush.bf16.msra.mxu0 %v7845
        %8500 = vmatmul.bf16.gmra.mxu0 %v7268
        %v8501 = vpop.f32.mrf.mxu0
        %v8502 = vadd.f32 0.0, %v8501
        %v8503 = vpop.f32.mrf.mxu0
        %v8504 = vadd.f32 0.0, %v8503
        %8505 = vmatmul.bf16.gmra.mxu0 %v7276
        %v8506 = vpop.f32.mrf.mxu0
        %v8507 = vadd.f32 0.0, %v8506
        %v8508 = vpop.f32.mrf.mxu0
        %v8509 = vadd.f32 0.0, %v8508
        %8510 = vmatmul.bf16.gmra.mxu0 %v7284
        %v8511 = vpop.f32.mrf.mxu0
        %v8512 = vadd.f32 0.0, %v8511
        %v8513 = vpop.f32.mrf.mxu0
        %v8514 = vadd.f32 0.0, %v8513
        %8515 = vmatmul.bf16.gmra.mxu0 %v7292
        %v8516 = vpop.f32.mrf.mxu0
        %v8517 = vadd.f32 0.0, %v8516
        %v8518 = vpop.f32.mrf.mxu0
        %v8519 = vadd.f32 0.0, %v8518
        %8520 = vmatmul.bf16.gmra.mxu0 %v7300
        %v8521 = vpop.f32.mrf.mxu0
        %v8522 = vadd.f32 0.0, %v8521
        %v8523 = vpop.f32.mrf.mxu0
        %v8524 = vadd.f32 0.0, %v8523
        %8525 = vmatmul.bf16.gmra.mxu0 %v7308
        %v8526 = vpop.f32.mrf.mxu0
        %v8527 = vadd.f32 0.0, %v8526
        %v8528 = vpop.f32.mrf.mxu0
        %v8529 = vadd.f32 0.0, %v8528
        %8530 = vmatmul.bf16.gmra.mxu0 %v7316
        %v8531 = vpop.f32.mrf.mxu0
        %v8532 = vadd.f32 0.0, %v8531
        %v8533 = vpop.f32.mrf.mxu0
        %v8534 = vadd.f32 0.0, %v8533
        %8535 = vmatmul.bf16.gmra.mxu0 %v7324
        %v8536 = vpop.f32.mrf.mxu0
        %v8537 = vadd.f32 0.0, %v8536
        %v8538 = vpop.f32.mrf.mxu0
        %v8539 = vadd.f32 0.0, %v8538
        %8540 = vdwg.mxu0
        %8541 = vmatpush.bf16.msra.mxu0 %v7875
        %8542 = vmatpush.bf16.msra.mxu0 %v7873
        %8543 = vmatpush.bf16.msra.mxu0 %v7871
        %8544 = vmatpush.bf16.msra.mxu0 %v7869
        %8545 = vmatpush.bf16.msra.mxu0 %v7867
        %8546 = vmatpush.bf16.msra.mxu0 %v7865
        %8547 = vmatpush.bf16.msra.mxu0 %v7863
        %8548 = vmatpush.bf16.msra.mxu0 %v7861
        %8549 = vmatmul.bf16.gmra.mxu0 %v7269
        %v8550 = vpop.f32.mrf.mxu0
        %v8551 = vadd.f32 %v8502, %v8550
        %v8552 = vpop.f32.mrf.mxu0
        %v8553 = vadd.f32 %v8504, %v8552
        %8554 = vmatmul.bf16.gmra.mxu0 %v7277
        %v8555 = vpop.f32.mrf.mxu0
        %v8556 = vadd.f32 %v8507, %v8555
        %v8557 = vpop.f32.mrf.mxu0
        %v8558 = vadd.f32 %v8509, %v8557
        %8559 = vmatmul.bf16.gmra.mxu0 %v7285
        %v8560 = vpop.f32.mrf.mxu0
        %v8561 = vadd.f32 %v8512, %v8560
        %v8562 = vpop.f32.mrf.mxu0
        %v8563 = vadd.f32 %v8514, %v8562
        %8564 = vmatmul.bf16.gmra.mxu0 %v7293
        %v8565 = vpop.f32.mrf.mxu0
        %v8566 = vadd.f32 %v8517, %v8565
        %v8567 = vpop.f32.mrf.mxu0
        %v8568 = vadd.f32 %v8519, %v8567
        %8569 = vmatmul.bf16.gmra.mxu0 %v7301
        %v8570 = vpop.f32.mrf.mxu0
        %v8571 = vadd.f32 %v8522, %v8570
        %v8572 = vpop.f32.mrf.mxu0
        %v8573 = vadd.f32 %v8524, %v8572
        %8574 = vmatmul.bf16.gmra.mxu0 %v7309
        %v8575 = vpop.f32.mrf.mxu0
        %v8576 = vadd.f32 %v8527, %v8575
        %v8577 = vpop.f32.mrf.mxu0
        %v8578 = vadd.f32 %v8529, %v8577
        %8579 = vmatmul.bf16.gmra.mxu0 %v7317
        %v8580 = vpop.f32.mrf.mxu0
        %v8581 = vadd.f32 %v8532, %v8580
        %v8582 = vpop.f32.mrf.mxu0
        %v8583 = vadd.f32 %v8534, %v8582
        %8584 = vmatmul.bf16.gmra.mxu0 %v7325
        %v8585 = vpop.f32.mrf.mxu0
        %v8586 = vadd.f32 %v8537, %v8585
        %v8587 = vpop.f32.mrf.mxu0
        %v8588 = vadd.f32 %v8539, %v8587
        %8589 = vdwg.mxu0
        %8590 = vmatpush.bf16.msra.mxu0 %v7891
        %8591 = vmatpush.bf16.msra.mxu0 %v7889
        %8592 = vmatpush.bf16.msra.mxu0 %v7887
        %8593 = vmatpush.bf16.msra.mxu0 %v7885
        %8594 = vmatpush.bf16.msra.mxu0 %v7883
        %8595 = vmatpush.bf16.msra.mxu0 %v7881
        %8596 = vmatpush.bf16.msra.mxu0 %v7879
        %8597 = vmatpush.bf16.msra.mxu0 %v7877
        %8598 = vmatmul.bf16.gmra.mxu0 %v7270
        %v8599 = vpop.f32.mrf.mxu0
        %v8600 = vadd.f32 %v8551, %v8599
        %v8601 = vpop.f32.mrf.mxu0
        %v8602 = vadd.f32 %v8553, %v8601
        %8603 = vmatmul.bf16.gmra.mxu0 %v7278
        %v8604 = vpop.f32.mrf.mxu0
        %v8605 = vadd.f32 %v8556, %v8604
        %v8606 = vpop.f32.mrf.mxu0
        %v8607 = vadd.f32 %v8558, %v8606
        %8608 = vmatmul.bf16.gmra.mxu0 %v7286
        %v8609 = vpop.f32.mrf.mxu0
        %v8610 = vadd.f32 %v8561, %v8609
        %v8611 = vpop.f32.mrf.mxu0
        %v8612 = vadd.f32 %v8563, %v8611
        %8613 = vmatmul.bf16.gmra.mxu0 %v7294
        %v8614 = vpop.f32.mrf.mxu0
        %v8615 = vadd.f32 %v8566, %v8614
        %v8616 = vpop.f32.mrf.mxu0
        %v8617 = vadd.f32 %v8568, %v8616
        %8618 = vmatmul.bf16.gmra.mxu0 %v7302
        %v8619 = vpop.f32.mrf.mxu0
        %v8620 = vadd.f32 %v8571, %v8619
        %v8621 = vpop.f32.mrf.mxu0
        %v8622 = vadd.f32 %v8573, %v8621
        %8623 = vmatmul.bf16.gmra.mxu0 %v7310
        %v8624 = vpop.f32.mrf.mxu0
        %v8625 = vadd.f32 %v8576, %v8624
        %v8626 = vpop.f32.mrf.mxu0
        %v8627 = vadd.f32 %v8578, %v8626
        %8628 = vmatmul.bf16.gmra.mxu0 %v7318
        %v8629 = vpop.f32.mrf.mxu0
        %v8630 = vadd.f32 %v8581, %v8629
        %v8631 = vpop.f32.mrf.mxu0
        %v8632 = vadd.f32 %v8583, %v8631
        %8633 = vmatmul.bf16.gmra.mxu0 %v7326
        %v8634 = vpop.f32.mrf.mxu0
        %v8635 = vadd.f32 %v8586, %v8634
        %v8636 = vpop.f32.mrf.mxu0
        %v8637 = vadd.f32 %v8588, %v8636
        %8638 = vdwg.mxu0
        %8639 = vmatpush.bf16.msra.mxu0 %v7907
        %8640 = vmatpush.bf16.msra.mxu0 %v7905
        %8641 = vmatpush.bf16.msra.mxu0 %v7903
        %8642 = vmatpush.bf16.msra.mxu0 %v7901
        %8643 = vmatpush.bf16.msra.mxu0 %v7899
        %8644 = vmatpush.bf16.msra.mxu0 %v7897
        %8645 = vmatpush.bf16.msra.mxu0 %v7895
        %8646 = vmatpush.bf16.msra.mxu0 %v7893
        %8647 = vmatmul.bf16.gmra.mxu0 %v7271
        %v8648 = vpop.f32.mrf.mxu0
        %v8649 = vadd.f32 %v8600, %v8648
        %v8650 = vpop.f32.mrf.mxu0
        %v8651 = vadd.f32 %v8602, %v8650
        %8652 = vmatmul.bf16.gmra.mxu0 %v7279
        %v8653 = vpop.f32.mrf.mxu0
        %v8654 = vadd.f32 %v8605, %v8653
        %v8655 = vpop.f32.mrf.mxu0
        %v8656 = vadd.f32 %v8607, %v8655
        %8657 = vmatmul.bf16.gmra.mxu0 %v7287
        %v8658 = vpop.f32.mrf.mxu0
        %v8659 = vadd.f32 %v8610, %v8658
        %v8660 = vpop.f32.mrf.mxu0
        %v8661 = vadd.f32 %v8612, %v8660
        %8662 = vmatmul.bf16.gmra.mxu0 %v7295
        %v8663 = vpop.f32.mrf.mxu0
        %v8664 = vadd.f32 %v8615, %v8663
        %v8665 = vpop.f32.mrf.mxu0
        %v8666 = vadd.f32 %v8617, %v8665
        %8667 = vmatmul.bf16.gmra.mxu0 %v7303
        %v8668 = vpop.f32.mrf.mxu0
        %v8669 = vadd.f32 %v8620, %v8668
        %v8670 = vpop.f32.mrf.mxu0
        %v8671 = vadd.f32 %v8622, %v8670
        %8672 = vmatmul.bf16.gmra.mxu0 %v7311
        %v8673 = vpop.f32.mrf.mxu0
        %v8674 = vadd.f32 %v8625, %v8673
        %v8675 = vpop.f32.mrf.mxu0
        %v8676 = vadd.f32 %v8627, %v8675
        %8677 = vmatmul.bf16.gmra.mxu0 %v7319
        %v8678 = vpop.f32.mrf.mxu0
        %v8679 = vadd.f32 %v8630, %v8678
        %v8680 = vpop.f32.mrf.mxu0
        %v8681 = vadd.f32 %v8632, %v8680
        %8682 = vmatmul.bf16.gmra.mxu0 %v7327
        %v8683 = vpop.f32.mrf.mxu0
        %v8684 = vadd.f32 %v8635, %v8683
        %v8685 = vpop.f32.mrf.mxu0
        %v8686 = vadd.f32 %v8637, %v8685
        %8687 = vdwg.mxu0
        %8688 = vmatpush.bf16.msra.mxu0 %v7923
        %8689 = vmatpush.bf16.msra.mxu0 %v7921
        %8690 = vmatpush.bf16.msra.mxu0 %v7919
        %8691 = vmatpush.bf16.msra.mxu0 %v7917
        %8692 = vmatpush.bf16.msra.mxu0 %v7915
        %8693 = vmatpush.bf16.msra.mxu0 %v7913
        %8694 = vmatpush.bf16.msra.mxu0 %v7911
        %8695 = vmatpush.bf16.msra.mxu0 %v7909
        %8696 = vmatmul.bf16.gmra.mxu0 %v7272
        %v8697 = vpop.f32.mrf.mxu0
        %v8698 = vadd.f32 %v8649, %v8697
        %v8699 = vpop.f32.mrf.mxu0
        %v8700 = vadd.f32 %v8651, %v8699
        %8701 = vmatmul.bf16.gmra.mxu0 %v7280
        %v8702 = vpop.f32.mrf.mxu0
        %v8703 = vadd.f32 %v8654, %v8702
        %v8704 = vpop.f32.mrf.mxu0
        %v8705 = vadd.f32 %v8656, %v8704
        %8706 = vmatmul.bf16.gmra.mxu0 %v7288
        %v8707 = vpop.f32.mrf.mxu0
        %v8708 = vadd.f32 %v8659, %v8707
        %v8709 = vpop.f32.mrf.mxu0
        %v8710 = vadd.f32 %v8661, %v8709
        %8711 = vmatmul.bf16.gmra.mxu0 %v7296
        %v8712 = vpop.f32.mrf.mxu0
        %v8713 = vadd.f32 %v8664, %v8712
        %v8714 = vpop.f32.mrf.mxu0
        %v8715 = vadd.f32 %v8666, %v8714
        %8716 = vmatmul.bf16.gmra.mxu0 %v7304
        %v8717 = vpop.f32.mrf.mxu0
        %v8718 = vadd.f32 %v8669, %v8717
        %v8719 = vpop.f32.mrf.mxu0
        %v8720 = vadd.f32 %v8671, %v8719
        %8721 = vmatmul.bf16.gmra.mxu0 %v7312
        %v8722 = vpop.f32.mrf.mxu0
        %v8723 = vadd.f32 %v8674, %v8722
        %v8724 = vpop.f32.mrf.mxu0
        %v8725 = vadd.f32 %v8676, %v8724
        %8726 = vmatmul.bf16.gmra.mxu0 %v7320
        %v8727 = vpop.f32.mrf.mxu0
        %v8728 = vadd.f32 %v8679, %v8727
        %v8729 = vpop.f32.mrf.mxu0
        %v8730 = vadd.f32 %v8681, %v8729
        %8731 = vmatmul.bf16.gmra.mxu0 %v7328
        %v8732 = vpop.f32.mrf.mxu0
        %v8733 = vadd.f32 %v8684, %v8732
        %v8734 = vpop.f32.mrf.mxu0
        %v8735 = vadd.f32 %v8686, %v8734
        %8736 = vdwg.mxu0
        %8737 = vmatpush.bf16.msra.mxu0 %v7939
        %8738 = vmatpush.bf16.msra.mxu0 %v7937
        %8739 = vmatpush.bf16.msra.mxu0 %v7935
        %8740 = vmatpush.bf16.msra.mxu0 %v7933
        %8741 = vmatpush.bf16.msra.mxu0 %v7931
        %8742 = vmatpush.bf16.msra.mxu0 %v7929
        %8743 = vmatpush.bf16.msra.mxu0 %v7927
        %8744 = vmatpush.bf16.msra.mxu0 %v7925
        %8745 = vmatmul.bf16.gmra.mxu0 %v7273
        %v8746 = vpop.f32.mrf.mxu0
        %v8747 = vadd.f32 %v8698, %v8746
        %v8748 = vpop.f32.mrf.mxu0
        %v8749 = vadd.f32 %v8700, %v8748
        %8750 = vmatmul.bf16.gmra.mxu0 %v7281
        %v8751 = vpop.f32.mrf.mxu0
        %v8752 = vadd.f32 %v8703, %v8751
        %v8753 = vpop.f32.mrf.mxu0
        %v8754 = vadd.f32 %v8705, %v8753
        %8755 = vmatmul.bf16.gmra.mxu0 %v7289
        %v8756 = vpop.f32.mrf.mxu0
        %v8757 = vadd.f32 %v8708, %v8756
        %v8758 = vpop.f32.mrf.mxu0
        %v8759 = vadd.f32 %v8710, %v8758
        %8760 = vmatmul.bf16.gmra.mxu0 %v7297
        %v8761 = vpop.f32.mrf.mxu0
        %v8762 = vadd.f32 %v8713, %v8761
        %v8763 = vpop.f32.mrf.mxu0
        %v8764 = vadd.f32 %v8715, %v8763
        %8765 = vmatmul.bf16.gmra.mxu0 %v7305
        %v8766 = vpop.f32.mrf.mxu0
        %v8767 = vadd.f32 %v8718, %v8766
        %v8768 = vpop.f32.mrf.mxu0
        %v8769 = vadd.f32 %v8720, %v8768
        %8770 = vmatmul.bf16.gmra.mxu0 %v7313
        %v8771 = vpop.f32.mrf.mxu0
        %v8772 = vadd.f32 %v8723, %v8771
        %v8773 = vpop.f32.mrf.mxu0
        %v8774 = vadd.f32 %v8725, %v8773
        %8775 = vmatmul.bf16.gmra.mxu0 %v7321
        %v8776 = vpop.f32.mrf.mxu0
        %v8777 = vadd.f32 %v8728, %v8776
        %v8778 = vpop.f32.mrf.mxu0
        %v8779 = vadd.f32 %v8730, %v8778
        %8780 = vmatmul.bf16.gmra.mxu0 %v7329
        %v8781 = vpop.f32.mrf.mxu0
        %v8782 = vadd.f32 %v8733, %v8781
        %v8783 = vpop.f32.mrf.mxu0
        %v8784 = vadd.f32 %v8735, %v8783
        %8785 = vdwg.mxu0
        %8786 = vmatpush.bf16.msra.mxu0 %v7955
        %8787 = vmatpush.bf16.msra.mxu0 %v7953
        %8788 = vmatpush.bf16.msra.mxu0 %v7951
        %8789 = vmatpush.bf16.msra.mxu0 %v7949
        %8790 = vmatpush.bf16.msra.mxu0 %v7947
        %8791 = vmatpush.bf16.msra.mxu0 %v7945
        %8792 = vmatpush.bf16.msra.mxu0 %v7943
        %8793 = vmatpush.bf16.msra.mxu0 %v7941
        %8794 = vmatmul.bf16.gmra.mxu0 %v7274
        %v8795 = vpop.f32.mrf.mxu0
        %v8796 = vadd.f32 %v8747, %v8795
        %v8797 = vpop.f32.mrf.mxu0
        %v8798 = vadd.f32 %v8749, %v8797
        %8799 = vmatmul.bf16.gmra.mxu0 %v7282
        %v8800 = vpop.f32.mrf.mxu0
        %v8801 = vadd.f32 %v8752, %v8800
        %v8802 = vpop.f32.mrf.mxu0
        %v8803 = vadd.f32 %v8754, %v8802
        %8804 = vmatmul.bf16.gmra.mxu0 %v7290
        %v8805 = vpop.f32.mrf.mxu0
        %v8806 = vadd.f32 %v8757, %v8805
        %v8807 = vpop.f32.mrf.mxu0
        %v8808 = vadd.f32 %v8759, %v8807
        %8809 = vmatmul.bf16.gmra.mxu0 %v7298
        %v8810 = vpop.f32.mrf.mxu0
        %v8811 = vadd.f32 %v8762, %v8810
        %v8812 = vpop.f32.mrf.mxu0
        %v8813 = vadd.f32 %v8764, %v8812
        %8814 = vmatmul.bf16.gmra.mxu0 %v7306
        %v8815 = vpop.f32.mrf.mxu0
        %v8816 = vadd.f32 %v8767, %v8815
        %v8817 = vpop.f32.mrf.mxu0
        %v8818 = vadd.f32 %v8769, %v8817
        %8819 = vmatmul.bf16.gmra.mxu0 %v7314
        %v8820 = vpop.f32.mrf.mxu0
        %v8821 = vadd.f32 %v8772, %v8820
        %v8822 = vpop.f32.mrf.mxu0
        %v8823 = vadd.f32 %v8774, %v8822
        %8824 = vmatmul.bf16.gmra.mxu0 %v7322
        %v8825 = vpop.f32.mrf.mxu0
        %v8826 = vadd.f32 %v8777, %v8825
        %v8827 = vpop.f32.mrf.mxu0
        %v8828 = vadd.f32 %v8779, %v8827
        %8829 = vmatmul.bf16.gmra.mxu0 %v7330
        %v8830 = vpop.f32.mrf.mxu0
        %v8831 = vadd.f32 %v8782, %v8830
        %v8832 = vpop.f32.mrf.mxu0
        %v8833 = vadd.f32 %v8784, %v8832
        %8834 = vdwg.mxu0
        %8835 = vmatpush.bf16.msra.mxu0 %v7971
        %8836 = vmatpush.bf16.msra.mxu0 %v7969
        %8837 = vmatpush.bf16.msra.mxu0 %v7967
        %8838 = vmatpush.bf16.msra.mxu0 %v7965
        %8839 = vmatpush.bf16.msra.mxu0 %v7963
        %8840 = vmatpush.bf16.msra.mxu0 %v7961
        %8841 = vmatpush.bf16.msra.mxu0 %v7959
        %8842 = vmatpush.bf16.msra.mxu0 %v7957
        %8843 = vmatmul.bf16.gmra.mxu0 %v7275
        %v8844 = vpop.f32.mrf.mxu0
        %v8845 = vadd.f32 %v8796, %v8844
        %v8846 = vpop.f32.mrf.mxu0
        %v8847 = vadd.f32 %v8798, %v8846
        %8848 = vmatmul.bf16.gmra.mxu0 %v7283
        %v8849 = vpop.f32.mrf.mxu0
        %v8850 = vadd.f32 %v8801, %v8849
        %v8851 = vpop.f32.mrf.mxu0
        %v8852 = vadd.f32 %v8803, %v8851
        %8853 = vmatmul.bf16.gmra.mxu0 %v7291
        %v8854 = vpop.f32.mrf.mxu0
        %v8855 = vadd.f32 %v8806, %v8854
        %v8856 = vpop.f32.mrf.mxu0
        %v8857 = vadd.f32 %v8808, %v8856
        %8858 = vmatmul.bf16.gmra.mxu0 %v7299
        %v8859 = vpop.f32.mrf.mxu0
        %v8860 = vadd.f32 %v8811, %v8859
        %v8861 = vpop.f32.mrf.mxu0
        %v8862 = vadd.f32 %v8813, %v8861
        %8863 = vmatmul.bf16.gmra.mxu0 %v7307
        %v8864 = vpop.f32.mrf.mxu0
        %v8865 = vadd.f32 %v8816, %v8864
        %v8866 = vpop.f32.mrf.mxu0
        %v8867 = vadd.f32 %v8818, %v8866
        %8868 = vmatmul.bf16.gmra.mxu0 %v7315
        %v8869 = vpop.f32.mrf.mxu0
        %v8870 = vadd.f32 %v8821, %v8869
        %v8871 = vpop.f32.mrf.mxu0
        %v8872 = vadd.f32 %v8823, %v8871
        %8873 = vmatmul.bf16.gmra.mxu0 %v7323
        %v8874 = vpop.f32.mrf.mxu0
        %v8875 = vadd.f32 %v8826, %v8874
        %v8876 = vpop.f32.mrf.mxu0
        %v8877 = vadd.f32 %v8828, %v8876
        %8878 = vmatmul.bf16.gmra.mxu0 %v7331
        %v8879 = vpop.f32.mrf.mxu0
        %v8880 = vadd.f32 %v8831, %v8879
        %v8881 = vpop.f32.mrf.mxu0
        %v8882 = vadd.f32 %v8833, %v8881
        %8883 = vdwg.mxu0
        %v8884 = vadd.f32 %v4916, %v8453
        %v8885 = vadd.f32 %v4917, %v8845
        %v8886 = vadd.f32 %v4918, %v8455
        %v8887 = vadd.f32 %v4919, %v8847
        %v8888 = vadd.f32 %v4920, %v8458
        %v8889 = vadd.f32 %v4921, %v8850
        %v8890 = vadd.f32 %v4922, %v8460
        %v8891 = vadd.f32 %v4923, %v8852
        %v8892 = vadd.f32 %v4924, %v8463
        %v8893 = vadd.f32 %v4925, %v8855
        %v8894 = vadd.f32 %v4926, %v8465
        %v8895 = vadd.f32 %v4927, %v8857
        %v8896 = vadd.f32 %v4928, %v8468
        %v8897 = vadd.f32 %v4929, %v8860
        %v8898 = vadd.f32 %v4930, %v8470
        %v8899 = vadd.f32 %v4931, %v8862
        %v8900 = vadd.f32 %v4932, %v8473
        %v8901 = vadd.f32 %v4933, %v8865
        %v8902 = vadd.f32 %v4934, %v8475
        %v8903 = vadd.f32 %v4935, %v8867
        %v8904 = vadd.f32 %v4936, %v8478
        %v8905 = vadd.f32 %v4937, %v8870
        %v8906 = vadd.f32 %v4938, %v8480
        %v8907 = vadd.f32 %v4939, %v8872
        %v8908 = vadd.f32 %v4940, %v8483
        %v8909 = vadd.f32 %v4941, %v8875
        %v8910 = vadd.f32 %v4942, %v8485
        %v8911 = vadd.f32 %v4943, %v8877
        %v8912 = vadd.f32 %v4944, %v8488
        %v8913 = vadd.f32 %v4945, %v8880
        %v8914 = vadd.f32 %v4946, %v8490
        %v8915 = vadd.f32 %v4947, %v8882
        %8916 = vst [vmem:[#allocation15] sm:$0xff] %v8884
        %8917 = vst [vmem:[#allocation15 + $0x8] sm:$0xff] %v8885
        %8918 = vst [vmem:[#allocation15 + $0x10] sm:$0xff] %v8886
        %8919 = vst [vmem:[#allocation15 + $0x18] sm:$0xff] %v8887
        %8920 = vst [vmem:[#allocation15 + $0x20] sm:$0xff] %v8888
        %8921 = vst [vmem:[#allocation15 + $0x28] sm:$0xff] %v8889
        %8922 = vst [vmem:[#allocation15 + $0x30] sm:$0xff] %v8890
        %8923 = vst [vmem:[#allocation15 + $0x38] sm:$0xff] %v8891
        %8924 = vst [vmem:[#allocation15 + $0x40] sm:$0xff] %v8892
        %8925 = vst [vmem:[#allocation15 + $0x48] sm:$0xff] %v8893
        %8926 = vst [vmem:[#allocation15 + $0x50] sm:$0xff] %v8894
        %8927 = vst [vmem:[#allocation15 + $0x58] sm:$0xff] %v8895
        %8928 = vst [vmem:[#allocation15 + $0x60] sm:$0xff] %v8896
        %8929 = vst [vmem:[#allocation15 + $0x68] sm:$0xff] %v8897
        %8930 = vst [vmem:[#allocation15 + $0x70] sm:$0xff] %v8898
        %8931 = vst [vmem:[#allocation15 + $0x78] sm:$0xff] %v8899
        %8932 = vst [vmem:[#allocation15 + $0x80] sm:$0xff] %v8900
        %8933 = vst [vmem:[#allocation15 + $0x88] sm:$0xff] %v8901
        %8934 = vst [vmem:[#allocation15 + $0x90] sm:$0xff] %v8902
        %8935 = vst [vmem:[#allocation15 + $0x98] sm:$0xff] %v8903
        %8936 = vst [vmem:[#allocation15 + $0xa0] sm:$0xff] %v8904
        %8937 = vst [vmem:[#allocation15 + $0xa8] sm:$0xff] %v8905
        %8938 = vst [vmem:[#allocation15 + $0xb0] sm:$0xff] %v8906
        %8939 = vst [vmem:[#allocation15 + $0xb8] sm:$0xff] %v8907
        %8940 = vst [vmem:[#allocation15 + $0xc0] sm:$0xff] %v8908
        %8941 = vst [vmem:[#allocation15 + $0xc8] sm:$0xff] %v8909
        %8942 = vst [vmem:[#allocation15 + $0xd0] sm:$0xff] %v8910
        %8943 = vst [vmem:[#allocation15 + $0xd8] sm:$0xff] %v8911
        %8944 = vst [vmem:[#allocation15 + $0xe0] sm:$0xff] %v8912
        %8945 = vst [vmem:[#allocation15 + $0xe8] sm:$0xff] %v8913
        %8946 = vst [vmem:[#allocation15 + $0xf0] sm:$0xff] %v8914
        %8947 = vst [vmem:[#allocation15 + $0xf8] sm:$0xff] %v8915
        // Predicated region
        $region97: #{block_stack_forward.1} parent=55 // pred_check
          %p8948 = pneg %p251
        $region98: #{block_stack_forward.1} parent=55 // pred_check_branch
          %8950 = sbr.rel (%p8948) target = $region100
        $region99: #{block_stack_forward.1} parent=55 // pred_region
          %8952 = vsyncadd [#allocation4], 0
          %s8953 = sshll.u32 [#allocation15], 4
          %s8954 = int_to_ptr.vmem [resolvable:$true] %s8953
          %s8955 = sshll.u32 %s9, 4
          %s8956 = int_to_ptr.hbm [resolvable:$true] %s8955
          %8961 = dma.vmem_to_hbm [thread:$0]  %s8954, 4096, %s8956, [#allocation4], 256, 256, 16
        $region100: #{block_stack_forward.1} parent=55 // pred_fallthru
          _
        // Predicated region
        $region101: #{block_stack_forward.1} parent=55 // pred_check
          %p8962 = pneg %p251
        $region102: #{block_stack_forward.1} parent=55 // pred_check_branch
          %8964 = sbr.rel (%p8962) target = $region104
        $region103: #{block_stack_forward.1} parent=55 // pred_region
          %8966 = dma.done [#allocation4], 4096
        $region104: #{block_stack_forward.1} parent=55 // pred_fallthru
          _
      $region56: #{block_stack_forward.1} parent=5 // pred_fallthru
        _
      %p8967 = scmp.le.s32.totalorder 2, %s19
      // Predicated region
      $region105: #{block_stack_forward.1} parent=5 // pred_check
        %p8968 = pneg %p8967
      $region106: #{block_stack_forward.1} parent=5 // pred_check_branch
        %8970 = sbr.rel (%p8968) target = $region108
      $region107: #{block_stack_forward.1} parent=5 // pred_region
        %s8971 = ssub.s32 %s19, 2
      $region108: #{block_stack_forward.1} parent=5 // pred_fallthru
        _
    $region6: #{block_stack_forward.1} parent=1 // loop_footer
      %s23 = sadd.s32 1, %s19
    $region7: #{block_stack_forward.1} parent=1 // loop_footer_branch
      %18 = sbr.rel target = $region3
    $region8: #{block_stack_forward.1} parent=1 // loop_exit
      _
    %8972 = vsyncpa [#allocation3], 1
    %s8973 = scalar_lea.sflag [#allocation3], 1
    %8974 = vsyncpa %s8973, 1
    %8975 = vsyncpa [#allocation7], 1
    %8976 = vsyncpa [#allocation4], 1
    %s8977 = scalar_lea.sflag [#allocation4], 1
    %8978 = vsyncpa %s8977, 1
    %8979 = vsyncpa [#allocation5], 1
    %s8980 = scalar_lea.sflag [#allocation5], 1
    %8981 = vsyncpa %s8980, 1

</llo_original>
